<compile_context>
chip_gen: v5e
topology: v5e:2x2
jax: 0.10.0
libtpu: 0.0.40
codegen_flags: <defaults>
</compile_context>

<pallas_src>
import numpy as np
import jax
import jax.numpy as jnp
from jax.experimental import pallas as pl
from jax.experimental.pallas import tpu as pltpu

# ----------------------------- model hyper-params (small, synthetic) ----------
IN_FEATS = 8          # data.nb_params feature dim  (CONFIG.model.in_feats)
LIG_ENC = 16          # CONFIG.model.lig_enc_feats
REC_ENC = 16          # CONFIG.model.rec_enc_feats
BOTH_ENC = 16         # CONFIG.model.both_enc_feats
HIDDEN = 32           # CONFIG.model.hidden_dim
GRID_DS = (8, 6)      # control points per axis for each receptor grid (create_grid)
GRID_CS = (5, 3)      # channels of each receptor grid
TOT_REC_C = sum(GRID_CS)
POCKET_RADIUS = 7.0   # CONFIG.dataset.pocket.grid_radius
TN = 2048             # atoms per kernel tile (lane-dense: multiple of 128)
D2_PAD = tuple(-(-d * d // 8) * 8 for d in GRID_DS)     # (64, 40): D^2 padded to x8

CUBIC_B_SPLINE_MATRIX = (1.0 / 6.0) * jnp.array(
    [[ 1.,  4.,  1., 0.],
     [-3.,  0.,  3., 0.],
     [ 3., -6.,  3., 0.],
     [-1.,  3., -3., 1.]], dtype=jnp.float32)


# ----------------------------- in-kernel interpolation helpers ----------------
def _axis_weights8(i0_row, b0, b1, b2, b3, tn):
    """Dense per-axis B-spline weights, shape (8, tn), rows >= D stay zero."""
    sub = jax.lax.broadcasted_iota(jnp.int32, (8, tn), 0)     # sublane index 0..7
    rel = sub - i0_row                                        # (8, tn)
    return (jnp.where(rel == 0, b0, 0.0)
            + jnp.where(rel == 1, b1, 0.0)
            + jnp.where(rel == 2, b2, 0.0)
            + jnp.where(rel == 3, b3, 0.0))


def _rec_interp(pos_norm, D, ey_ref, ez_ref, gfold_ref):
    """Separable 3-D interpolation against a rec_encoder-folded grid.

    Returns (REC_ENC, tn) = rec_w_g.T @ interp3d(grid_g, pos_norm).T
    """
    tn = pos_norm.shape[-1]
    f32 = jnp.float32
    mxu_dtype = gfold_ref.dtype

    u = pos_norm * float(D - 3)                               # (3, tn)
    i0f = jnp.clip(jnp.floor(u), 0.0, float(D - 4))
    t = u - i0f                                               # (3, tn) in [0, 1]
    i0 = i0f.astype(jnp.int32)

    # Cubic B-spline basis via Horner on the VPU (f32 everywhere).
    s = 1.0 - t
    b0 = s * s * s * (1.0 / 6.0)
    b1 = ((3.0 * t - 6.0) * t * t + 4.0) * (1.0 / 6.0)
    b2 = (((-3.0 * t + 3.0) * t + 3.0) * t + 1.0) * (1.0 / 6.0)
    b3 = t * t * t * (1.0 / 6.0)

    def wrow(a):
        return _axis_weights8(i0[a:a + 1, :], b0[a:a + 1, :], b1[a:a + 1, :],
                              b2[a:a + 1, :], b3[a:a + 1, :], tn)

    wx = wrow(0)                                              # (8, tn) f32
    wy = wrow(1).astype(mxu_dtype)
    wz = wrow(2).astype(mxu_dtype)

    # yz-plane weights (D^2_pad, tn): tiny 0/1 expansion matmuls + VPU product.
    gy = jnp.dot(ey_ref[...], wy, preferred_element_type=f32)
    gz = jnp.dot(ez_ref[...], wz, preferred_element_type=f32)
    wyz = (gy * gz).astype(mxu_dtype)                         # (D2_pad, tn)

    # One matmul against the folded grid: rows are (ix, enc) pairs.
    y = jnp.dot(gfold_ref[...], wyz, preferred_element_type=f32)   # (D*REC_ENC, tn)

    # Contract the x axis: short unrolled weighted sum (sublane-aligned slices).
    acc = wx[0:1, :] * y[0:REC_ENC, :]
    for ix in range(1, D):
        acc = acc + wx[ix:ix + 1, :] * y[ix * REC_ENC:(ix + 1) * REC_ENC, :]
    return acc                                                # (REC_ENC, tn) f32


# ----------------------------- Pallas kernel -----------------------------------
def grid_net_kernel(pos_ref, nb_ref, center_ref,
                    g0_ref, e0y_ref, e0z_ref,
                    g1_ref, e1y_ref, e1z_ref,
                    wlig_ref, blig_ref, wrec_ref, brec_ref, fwboth_ref,
                    out_ref):
    f32 = jnp.float32

    pos = pos_ref[...]                                        # (3, tn)
    center = center_ref[...]                                  # (3, 1)
    # pos_norm = 0.5 + 0.5 * ((pos - poc_center) / pocket_radius), clamped to [0,1]
    pos_norm = jnp.clip(0.5 + (0.5 / POCKET_RADIUS) * (pos - center), 0.0, 1.0)

    # --- receptor path: separable interpolation of both pre-folded grids ------
    rec = _rec_interp(pos_norm, GRID_DS[0], e0y_ref, e0z_ref, g0_ref)
    rec = rec + _rec_interp(pos_norm, GRID_DS[1], e1y_ref, e1z_ref, g1_ref)
    # rec == rec_w.T @ rec_cat.T (rec_b folded into brec below), shape (REC_ENC, tn)

    # --- ligand + stacked encoders (dropout layers are identity in eval mode) --
    # lig_stack = [lig_both_encoder ; final_lig] of lig_x, lig_encoder folded in.
    lig_stack = (jnp.dot(wlig_ref[...], nb_ref[...], preferred_element_type=f32)
                 + blig_ref[...])                             # (BOTH_ENC+HIDDEN, tn)
    # rec_stack = [rec_both_encoder ; final_rec] of rec_x (rec_b folded into bias).
    rec_stack = (jnp.dot(wrec_ref[...], rec, preferred_element_type=f32)
                 + brec_ref[...])                             # (BOTH_ENC+HIDDEN, tn)

    both_x = lig_stack[:BOTH_ENC, :] * rec_stack[:BOTH_ENC, :]
    out_ref[...] = (lig_stack[BOTH_ENC:, :] + rec_stack[BOTH_ENC:, :]
                    + jnp.dot(fwboth_ref[...], both_x, preferred_element_type=f32))
    # TODO(synk): downstream self.net (TorchMD_ET / TensorNet equivariant GNN with
    # neighbor lists) has no clean Pallas equivalent; the kernel returns the fused
    # per-atom feature tensor that would be fed into it.


# ----------------------------- offline parameter prep --------------------------
def _expansion_matrices(D, d2p, dtype):
    """Constant 0/1 matrices (d2p, 8) mapping per-axis weights to the flat D^2 axis."""
    jk = np.arange(d2p)
    valid = jk < D * D
    jy, jz = jk // D, jk % D
    cols = np.arange(8)
    ey = ((jy[:, None] == cols[None, :]) & valid[:, None]).astype(np.float32)
    ez = ((jz[:, None] == cols[None, :]) & valid[:, None]).astype(np.float32)
    return jnp.asarray(ey, dtype), jnp.asarray(ez, dtype)


def _fold_grid(g, rec_w_block, D, d2p, dtype):
    """rec_encoder-folded grid restructured to (D*REC_ENC, D^2_pad):
    row = ix*REC_ENC + enc, col = iy*D + iz."""
    p = g @ rec_w_block                                        # (D^3, REC_ENC)
    p = p.reshape(D, D * D, REC_ENC).transpose(0, 2, 1).reshape(D * REC_ENC, D * D)
    p = jnp.pad(p, ((0, 0), (0, d2p - D * D)))
    return p.astype(dtype)


def prepare_kernel_params(params, mxu_dtype=jnp.bfloat16):
    """Fold rec_encoder into the grids (separable layout), stack/fold the small
    encoders, transpose all weights for the atoms-on-lanes layout."""
    (poc_center, _interp, g0, g1,
     rec_w, rec_b, lig_w, lig_b, lb_w, lb_b, rb_w, rb_b, f_w, f_b) = params

    fw_lig = f_w[:LIG_ENC, :]
    fw_rec = f_w[LIG_ENC:LIG_ENC + REC_ENC, :]
    fw_both = f_w[LIG_ENC + REC_ENC:, :]

    g0f = _fold_grid(g0, rec_w[:GRID_CS[0], :], GRID_DS[0], D2_PAD[0], mxu_dtype)
    g1f = _fold_grid(g1, rec_w[GRID_CS[0]:, :], GRID_DS[1], D2_PAD[1], mxu_dtype)
    e0y, e0z = _expansion_matrices(GRID_DS[0], D2_PAD[0], mxu_dtype)
    e1y, e1z = _expansion_matrices(GRID_DS[1], D2_PAD[1], mxu_dtype)

    # Stacked ligand path: [lb_w.T ; fw_lig.T] folded through the lig_encoder.
    w_ls = jnp.concatenate([lb_w.T, fw_lig.T], axis=0)                 # (48, LIG_ENC)
    w_lig_fold = w_ls @ lig_w.T                                        # (48, IN_FEATS)
    b_lig_fold = w_ls @ lig_b.T + jnp.concatenate([lb_b.T, f_b.T], 0)  # (48, 1)

    # Stacked receptor path: [rb_w.T ; fw_rec.T]; rec_b folded into the bias.
    w_rec_stack = jnp.concatenate([rb_w.T, fw_rec.T], axis=0)          # (48, REC_ENC)
    b_rec_stack = (w_rec_stack @ rec_b.T
                   + jnp.concatenate([rb_b.T, jnp.zeros((HIDDEN, 1), jnp.float32)], 0))

    return (poc_center.T,                                              # (3, 1)
            g0f, e0y, e0z, g1f, e1y, e1z,
            w_lig_fold, b_lig_fold, w_rec_stack, b_rec_stack, fw_both.T)


# ----------------------------- wrapper ------------------------------------------
def grid_net_forward(pos, nb_params, kernel_params, *, tn=TN):
    n = pos.shape[0]
    steps = max(pl.cdiv(n, tn), 2)
    steps += steps % 2            # even step count -> splits evenly over v7x's 2 TCs
    n_pad = steps * tn

    # Atoms-on-lanes layout; zero-pad ragged N (padded atoms sliced off below).
    # NOTE: for a features-major consumer, pass pos/nb pre-transposed and take the
    # (HIDDEN, N) output directly to skip these (tiny here) HBM layout passes.
    pos_t = jnp.pad(pos, ((0, n_pad - n), (0, 0))).T            # (3, n_pad)
    nb_t = jnp.pad(nb_params, ((0, n_pad - n), (0, 0))).T       # (IN_FEATS, n_pad)

    const_specs = [pl.BlockSpec(p.shape, lambda i: (0, 0)) for p in kernel_params]
    in_specs = [pl.BlockSpec((3, tn), lambda i: (0, i)),
                pl.BlockSpec((IN_FEATS, tn), lambda i: (0, i))] + const_specs

    out_t = pl.pallas_call(
        grid_net_kernel,
        out_shape=jax.ShapeDtypeStruct((HIDDEN, n_pad), jnp.float32),
        grid_spec=pltpu.PrefetchScalarGridSpec(
            num_scalar_prefetch=0,
            grid=(steps,),
            in_specs=in_specs,
            out_specs=pl.BlockSpec((HIDDEN, tn), lambda i: (0, i)),
        ),
        compiler_params=pltpu.CompilerParams(
            dimension_semantics=("parallel",)),   # tiles shard across v7x's 2 TCs
    )(pos_t, nb_t, *kernel_params)

    return out_t[:, :n].T


# ----------------------------- plain-JAX reference ------------------------------
def _axis_weights_ref(u, D, interp_mat, n):
    i0f = jnp.clip(jnp.floor(u), 0.0, float(D - 4))
    t = u - i0f
    tvec = jnp.concatenate([jnp.ones_like(t), t, t * t, t * t * t], axis=-1)
    w4 = tvec @ interp_mat
    idx = jax.lax.broadcasted_iota(jnp.int32, (n, D), 1)
    rel = idx - i0f.astype(jnp.int32)
    w = jnp.zeros((n, D), jnp.float32)
    for a in range(4):
        w = w + jnp.where(rel == a, w4[:, a:a + 1], 0.0)
    return w


def _interp3d_ref(pos_norm, grid_flat, D, interp_mat, n):
    u = pos_norm * float(D - 3)
    wx = _axis_weights_ref(u[:, 0:1], D, interp_mat, n)
    wy = _axis_weights_ref(u[:, 1:2], D, interp_mat, n)
    wz = _axis_weights_ref(u[:, 2:3], D, interp_mat, n)
    wxy = (wx[:, :, None] * wy[:, None, :]).reshape(n, D * D)
    w3 = (wxy[:, :, None] * wz[:, None, :]).reshape(n, D * D * D)
    return w3 @ grid_flat


def grid_net_reference(pos, nb_params, params):
    (poc_center, interp, g0, g1,
     rec_w, rec_b, lig_w, lig_b, lb_w, lb_b, rb_w, rb_b, f_w, f_b) = params
    n = pos.shape[0]
    pos_norm = jnp.clip(0.5 + 0.5 * ((pos - poc_center) / POCKET_RADIUS), 0.0, 1.0)
    rec_cat = jnp.concatenate(
        [_interp3d_ref(pos_norm, g0, GRID_DS[0], interp, n),
         _interp3d_ref(pos_norm, g1, GRID_DS[1], interp, n)], axis=-1)
    rec_x = rec_cat @ rec_w + rec_b
    lig_x = nb_params @ lig_w + lig_b
    both_x = (lig_x @ lb_w + lb_b) * (rec_x @ rb_w + rb_b)
    return jnp.concatenate([lig_x, rec_x, both_x], axis=-1) @ f_w + f_b


# ----------------------------- deterministic params & demo ----------------------
def make_params(key):
    ks = jax.random.split(key, 16)
    scale = 0.1
    poc_center = jnp.array([[1.0, -0.5, 0.25]], dtype=jnp.float32)
    interp = CUBIC_B_SPLINE_MATRIX
    g0 = scale * jax.random.normal(ks[0], (GRID_DS[0] ** 3, GRID_CS[0]), jnp.float32)
    g1 = scale * jax.random.normal(ks[1], (GRID_DS[1] ** 3, GRID_CS[1]), jnp.float32)
    rec_w = scale * jax.random.normal(ks[2], (TOT_REC_C, REC_ENC), jnp.float32)
    rec_b = scale * jax.random.normal(ks[3], (1, REC_ENC), jnp.float32)
    lig_w = scale * jax.random.normal(ks[4], (IN_FEATS, LIG_ENC), jnp.float32)
    lig_b = scale * jax.random.normal(ks[5], (1, LIG_ENC), jnp.float32)
    lb_w = scale * jax.random.normal(ks[6], (LIG_ENC, BOTH_ENC), jnp.float32)
    lb_b = scale * jax.random.normal(ks[7], (1, BOTH_ENC), jnp.float32)
    rb_w = scale * jax.random.normal(ks[8], (REC_ENC, BOTH_ENC), jnp.float32)
    rb_b = scale * jax.random.normal(ks[9], (1, BOTH_ENC), jnp.float32)
    f_w = scale * jax.random.normal(ks[10], (LIG_ENC + REC_ENC + BOTH_ENC, HIDDEN), jnp.float32)
    f_b = scale * jax.random.normal(ks[11], (1, HIDDEN), jnp.float32)
    return (poc_center, interp, g0, g1,
            rec_w, rec_b, lig_w, lig_b, lb_w, lb_b, rb_w, rb_b, f_w, f_b)


if __name__ == "__main__":
    key = jax.random.PRNGKey(0)
    kp, kpos, knb = jax.random.split(key, 3)
    params = make_params(kp)

    # Ragged on purpose: 4000 atoms -> padded to 2 tiles of 2048 (one per v7x TC).
    N = 4000
    pos = params[0] + 5.0 * jax.random.normal(kpos, (N, 3), jnp.float32)  # around poc_center
    nb_params = jax.random.normal(knb, (N, IN_FEATS), jnp.float32)

    kernel_params = prepare_kernel_params(params)          # offline fold / stack / pad
    out = jax.block_until_ready(grid_net_forward(pos, nb_params, kernel_params))
    ref = jax.block_until_ready(grid_net_reference(pos, nb_params, params))

    assert out.shape == (N, HIDDEN)
    assert bool(jnp.all(jnp.isfinite(out)))
    assert jnp.allclose(out, ref, atol=5e-2, rtol=5e-2)
    print("KERNEL_OK")
</pallas_src>

<mosaic_0001>
module attributes {stable_mosaic.version = 11 : i64} {
  func.func @grid_net_kernel(%arg0: i32, %arg1: memref<3x2048xf32, #tpu.memory_space<vmem>>, %arg2: memref<8x2048xf32, #tpu.memory_space<vmem>>, %arg3: memref<3x1xf32, #tpu.memory_space<vmem>>, %arg4: memref<128x64xbf16, #tpu.memory_space<vmem>>, %arg5: memref<64x8xbf16, #tpu.memory_space<vmem>>, %arg6: memref<64x8xbf16, #tpu.memory_space<vmem>>, %arg7: memref<96x40xbf16, #tpu.memory_space<vmem>>, %arg8: memref<40x8xbf16, #tpu.memory_space<vmem>>, %arg9: memref<40x8xbf16, #tpu.memory_space<vmem>>, %arg10: memref<48x8xf32, #tpu.memory_space<vmem>>, %arg11: memref<48x1xf32, #tpu.memory_space<vmem>>, %arg12: memref<48x16xf32, #tpu.memory_space<vmem>>, %arg13: memref<48x1xf32, #tpu.memory_space<vmem>>, %arg14: memref<32x16xf32, #tpu.memory_space<vmem>>, %arg15: memref<32x2048xf32, #tpu.memory_space<vmem>>) attributes {dimension_semantics = [#tpu.dimension_semantics<parallel>], iteration_bounds = array<i64: 2>, scalar_prefetch = 0 : i64, scratch_operands = 0 : i64, tpu.core_type = #tpu.core_type<tc>, window_params = [{transform_indices = @transform_0, window_bounds = array<i64: 3, 2048>}, {transform_indices = @transform_1, window_bounds = array<i64: 8, 2048>}, {pipeline_mode = #tpu.pipeline_mode<synchronous>, transform_indices = @transform_2, window_bounds = array<i64: 3, 1>}, {pipeline_mode = #tpu.pipeline_mode<synchronous>, transform_indices = @transform_3, window_bounds = array<i64: 128, 64>}, {pipeline_mode = #tpu.pipeline_mode<synchronous>, transform_indices = @transform_4, window_bounds = array<i64: 64, 8>}, {pipeline_mode = #tpu.pipeline_mode<synchronous>, transform_indices = @transform_5, window_bounds = array<i64: 64, 8>}, {pipeline_mode = #tpu.pipeline_mode<synchronous>, transform_indices = @transform_6, window_bounds = array<i64: 96, 40>}, {pipeline_mode = #tpu.pipeline_mode<synchronous>, transform_indices = @transform_7, window_bounds = array<i64: 40, 8>}, {pipeline_mode = #tpu.pipeline_mode<synchronous>, transform_indices = @transform_8, window_bounds = array<i64: 40, 8>}, {pipeline_mode = #tpu.pipeline_mode<synchronous>, transform_indices = @transform_9, window_bounds = array<i64: 48, 8>}, {pipeline_mode = #tpu.pipeline_mode<synchronous>, transform_indices = @transform_10, window_bounds = array<i64: 48, 1>}, {pipeline_mode = #tpu.pipeline_mode<synchronous>, transform_indices = @transform_11, window_bounds = array<i64: 48, 16>}, {pipeline_mode = #tpu.pipeline_mode<synchronous>, transform_indices = @transform_12, window_bounds = array<i64: 48, 1>}, {pipeline_mode = #tpu.pipeline_mode<synchronous>, transform_indices = @transform_13, window_bounds = array<i64: 32, 16>}, {transform_indices = @transform_14, window_bounds = array<i64: 32, 2048>}]} {
    %c0 = arith.constant 0 : index
    %c0_0 = arith.constant 0 : index
    %0 = vector.load %arg1[%c0, %c0_0] : memref<3x2048xf32, #tpu.memory_space<vmem>>, vector<3x2048xf32>
    %c0_1 = arith.constant 0 : index
    %c0_2 = arith.constant 0 : index
    %1 = vector.load %arg3[%c0_1, %c0_2] : memref<3x1xf32, #tpu.memory_space<vmem>>, vector<3x1xf32>
    %2 = vector.broadcast %1 : vector<3x1xf32> to vector<3x2048xf32>
    %3 = arith.subf %0, %2 : vector<3x2048xf32>
    %cst = arith.constant 0.0714285746 : f32
    %4 = vector.broadcast %cst : f32 to vector<3x2048xf32>
    %5 = arith.mulf %4, %3 : vector<3x2048xf32>
    %cst_3 = arith.constant 5.000000e-01 : f32
    %6 = vector.broadcast %cst_3 : f32 to vector<3x2048xf32>
    %7 = arith.addf %6, %5 : vector<3x2048xf32>
    %cst_4 = arith.constant 0.000000e+00 : f32
    %cst_5 = arith.constant 1.000000e+00 : f32
    %8 = vector.broadcast %cst_4 : f32 to vector<3x2048xf32>
    %9 = arith.maximumf %8, %7 : vector<3x2048xf32>
    %10 = vector.broadcast %cst_5 : f32 to vector<3x2048xf32>
    %11 = arith.minimumf %10, %9 : vector<3x2048xf32>
    %cst_6 = arith.constant 5.000000e+00 : f32
    %12 = vector.broadcast %cst_6 : f32 to vector<3x2048xf32>
    %13 = arith.mulf %11, %12 : vector<3x2048xf32>
    %14 = math.floor %13 : vector<3x2048xf32>
    %cst_7 = arith.constant 0.000000e+00 : f32
    %cst_8 = arith.constant 4.000000e+00 : f32
    %15 = vector.broadcast %cst_7 : f32 to vector<3x2048xf32>
    %16 = arith.maximumf %15, %14 : vector<3x2048xf32>
    %17 = vector.broadcast %cst_8 : f32 to vector<3x2048xf32>
    %18 = arith.minimumf %17, %16 : vector<3x2048xf32>
    %19 = arith.subf %13, %18 : vector<3x2048xf32>
    %20 = arith.fptosi %18 : vector<3x2048xf32> to vector<3x2048xi32>
    %cst_9 = arith.constant 1.000000e+00 : f32
    %21 = vector.broadcast %cst_9 : f32 to vector<3x2048xf32>
    %22 = arith.subf %21, %19 : vector<3x2048xf32>
    %23 = arith.mulf %22, %22 : vector<3x2048xf32>
    %24 = arith.mulf %23, %22 : vector<3x2048xf32>
    %cst_10 = arith.constant 0.166666672 : f32
    %25 = vector.broadcast %cst_10 : f32 to vector<3x2048xf32>
    %26 = arith.mulf %24, %25 : vector<3x2048xf32>
    %cst_11 = arith.constant 3.000000e+00 : f32
    %27 = vector.broadcast %cst_11 : f32 to vector<3x2048xf32>
    %28 = arith.mulf %27, %19 : vector<3x2048xf32>
    %cst_12 = arith.constant 6.000000e+00 : f32
    %29 = vector.broadcast %cst_12 : f32 to vector<3x2048xf32>
    %30 = arith.subf %28, %29 : vector<3x2048xf32>
    %31 = arith.mulf %30, %19 : vector<3x2048xf32>
    %32 = arith.mulf %31, %19 : vector<3x2048xf32>
    %cst_13 = arith.constant 4.000000e+00 : f32
    %33 = vector.broadcast %cst_13 : f32 to vector<3x2048xf32>
    %34 = arith.addf %32, %33 : vector<3x2048xf32>
    %cst_14 = arith.constant 0.166666672 : f32
    %35 = vector.broadcast %cst_14 : f32 to vector<3x2048xf32>
    %36 = arith.mulf %34, %35 : vector<3x2048xf32>
    %cst_15 = arith.constant -3.000000e+00 : f32
    %37 = vector.broadcast %cst_15 : f32 to vector<3x2048xf32>
    %38 = arith.mulf %37, %19 : vector<3x2048xf32>
    %cst_16 = arith.constant 3.000000e+00 : f32
    %39 = vector.broadcast %cst_16 : f32 to vector<3x2048xf32>
    %40 = arith.addf %38, %39 : vector<3x2048xf32>
    %41 = arith.mulf %40, %19 : vector<3x2048xf32>
    %cst_17 = arith.constant 3.000000e+00 : f32
    %42 = vector.broadcast %cst_17 : f32 to vector<3x2048xf32>
    %43 = arith.addf %41, %42 : vector<3x2048xf32>
    %44 = arith.mulf %43, %19 : vector<3x2048xf32>
    %cst_18 = arith.constant 1.000000e+00 : f32
    %45 = vector.broadcast %cst_18 : f32 to vector<3x2048xf32>
    %46 = arith.addf %44, %45 : vector<3x2048xf32>
    %cst_19 = arith.constant 0.166666672 : f32
    %47 = vector.broadcast %cst_19 : f32 to vector<3x2048xf32>
    %48 = arith.mulf %46, %47 : vector<3x2048xf32>
    %49 = arith.mulf %19, %19 : vector<3x2048xf32>
    %50 = arith.mulf %49, %19 : vector<3x2048xf32>
    %cst_20 = arith.constant 0.166666672 : f32
    %51 = vector.broadcast %cst_20 : f32 to vector<3x2048xf32>
    %52 = arith.mulf %50, %51 : vector<3x2048xf32>
    %53 = vector.extract_strided_slice %20 {offsets = [0, 0], sizes = [1, 2048], strides = [1, 1]} : vector<3x2048xi32> to vector<1x2048xi32>
    %54 = vector.extract_strided_slice %26 {offsets = [0, 0], sizes = [1, 2048], strides = [1, 1]} : vector<3x2048xf32> to vector<1x2048xf32>
    %55 = vector.extract_strided_slice %36 {offsets = [0, 0], sizes = [1, 2048], strides = [1, 1]} : vector<3x2048xf32> to vector<1x2048xf32>
    %56 = vector.extract_strided_slice %48 {offsets = [0, 0], sizes = [1, 2048], strides = [1, 1]} : vector<3x2048xf32> to vector<1x2048xf32>
    %57 = vector.extract_strided_slice %52 {offsets = [0, 0], sizes = [1, 2048], strides = [1, 1]} : vector<3x2048xf32> to vector<1x2048xf32>
    %58 = tpu.iota {dimensions = array<i32: 0>} : vector<8x2048xi32>
    %59 = vector.broadcast %53 : vector<1x2048xi32> to vector<8x2048xi32>
    %60 = arith.subi %58, %59 : vector<8x2048xi32>
    %c0_i32 = arith.constant 0 : i32
    %61 = vector.broadcast %c0_i32 : i32 to vector<8x2048xi32>
    %62 = arith.cmpi eq, %60, %61 : vector<8x2048xi32>
    %cst_21 = arith.constant 0.000000e+00 : f32
    %63 = vector.shape_cast %54 : vector<1x2048xf32> to vector<1x2048xf32>
    %64 = vector.broadcast %63 : vector<1x2048xf32> to vector<8x2048xf32>
    %65 = vector.broadcast %cst_21 : f32 to vector<8x2048xf32>
    %66 = arith.select %62, %64, %65 : vector<8x2048xi1>, vector<8x2048xf32>
    %c1_i32 = arith.constant 1 : i32
    %67 = vector.broadcast %c1_i32 : i32 to vector<8x2048xi32>
    %68 = arith.cmpi eq, %60, %67 : vector<8x2048xi32>
    %cst_22 = arith.constant 0.000000e+00 : f32
    %69 = vector.shape_cast %55 : vector<1x2048xf32> to vector<1x2048xf32>
    %70 = vector.broadcast %69 : vector<1x2048xf32> to vector<8x2048xf32>
    %71 = vector.broadcast %cst_22 : f32 to vector<8x2048xf32>
    %72 = arith.select %68, %70, %71 : vector<8x2048xi1>, vector<8x2048xf32>
    %73 = arith.addf %66, %72 : vector<8x2048xf32>
    %c2_i32 = arith.constant 2 : i32
    %74 = vector.broadcast %c2_i32 : i32 to vector<8x2048xi32>
    %75 = arith.cmpi eq, %60, %74 : vector<8x2048xi32>
    %cst_23 = arith.constant 0.000000e+00 : f32
    %76 = vector.shape_cast %56 : vector<1x2048xf32> to vector<1x2048xf32>
    %77 = vector.broadcast %76 : vector<1x2048xf32> to vector<8x2048xf32>
    %78 = vector.broadcast %cst_23 : f32 to vector<8x2048xf32>
    %79 = arith.select %75, %77, %78 : vector<8x2048xi1>, vector<8x2048xf32>
    %80 = arith.addf %73, %79 : vector<8x2048xf32>
    %c3_i32 = arith.constant 3 : i32
    %81 = vector.broadcast %c3_i32 : i32 to vector<8x2048xi32>
    %82 = arith.cmpi eq, %60, %81 : vector<8x2048xi32>
    %cst_24 = arith.constant 0.000000e+00 : f32
    %83 = vector.shape_cast %57 : vector<1x2048xf32> to vector<1x2048xf32>
    %84 = vector.broadcast %83 : vector<1x2048xf32> to vector<8x2048xf32>
    %85 = vector.broadcast %cst_24 : f32 to vector<8x2048xf32>
    %86 = arith.select %82, %84, %85 : vector<8x2048xi1>, vector<8x2048xf32>
    %87 = arith.addf %80, %86 : vector<8x2048xf32>
    %88 = vector.extract_strided_slice %20 {offsets = [1, 0], sizes = [1, 2048], strides = [1, 1]} : vector<3x2048xi32> to vector<1x2048xi32>
    %89 = vector.extract_strided_slice %26 {offsets = [1, 0], sizes = [1, 2048], strides = [1, 1]} : vector<3x2048xf32> to vector<1x2048xf32>
    %90 = vector.extract_strided_slice %36 {offsets = [1, 0], sizes = [1, 2048], strides = [1, 1]} : vector<3x2048xf32> to vector<1x2048xf32>
    %91 = vector.extract_strided_slice %48 {offsets = [1, 0], sizes = [1, 2048], strides = [1, 1]} : vector<3x2048xf32> to vector<1x2048xf32>
    %92 = vector.extract_strided_slice %52 {offsets = [1, 0], sizes = [1, 2048], strides = [1, 1]} : vector<3x2048xf32> to vector<1x2048xf32>
    %93 = tpu.iota {dimensions = array<i32: 0>} : vector<8x2048xi32>
    %94 = vector.broadcast %88 : vector<1x2048xi32> to vector<8x2048xi32>
    %95 = arith.subi %93, %94 : vector<8x2048xi32>
    %c0_i32_25 = arith.constant 0 : i32
    %96 = vector.broadcast %c0_i32_25 : i32 to vector<8x2048xi32>
    %97 = arith.cmpi eq, %95, %96 : vector<8x2048xi32>
    %cst_26 = arith.constant 0.000000e+00 : f32
    %98 = vector.shape_cast %89 : vector<1x2048xf32> to vector<1x2048xf32>
    %99 = vector.broadcast %98 : vector<1x2048xf32> to vector<8x2048xf32>
    %100 = vector.broadcast %cst_26 : f32 to vector<8x2048xf32>
    %101 = arith.select %97, %99, %100 : vector<8x2048xi1>, vector<8x2048xf32>
    %c1_i32_27 = arith.constant 1 : i32
    %102 = vector.broadcast %c1_i32_27 : i32 to vector<8x2048xi32>
    %103 = arith.cmpi eq, %95, %102 : vector<8x2048xi32>
    %cst_28 = arith.constant 0.000000e+00 : f32
    %104 = vector.shape_cast %90 : vector<1x2048xf32> to vector<1x2048xf32>
    %105 = vector.broadcast %104 : vector<1x2048xf32> to vector<8x2048xf32>
    %106 = vector.broadcast %cst_28 : f32 to vector<8x2048xf32>
    %107 = arith.select %103, %105, %106 : vector<8x2048xi1>, vector<8x2048xf32>
    %108 = arith.addf %101, %107 : vector<8x2048xf32>
    %c2_i32_29 = arith.constant 2 : i32
    %109 = vector.broadcast %c2_i32_29 : i32 to vector<8x2048xi32>
    %110 = arith.cmpi eq, %95, %109 : vector<8x2048xi32>
    %cst_30 = arith.constant 0.000000e+00 : f32
    %111 = vector.shape_cast %91 : vector<1x2048xf32> to vector<1x2048xf32>
    %112 = vector.broadcast %111 : vector<1x2048xf32> to vector<8x2048xf32>
    %113 = vector.broadcast %cst_30 : f32 to vector<8x2048xf32>
    %114 = arith.select %110, %112, %113 : vector<8x2048xi1>, vector<8x2048xf32>
    %115 = arith.addf %108, %114 : vector<8x2048xf32>
    %c3_i32_31 = arith.constant 3 : i32
    %116 = vector.broadcast %c3_i32_31 : i32 to vector<8x2048xi32>
    %117 = arith.cmpi eq, %95, %116 : vector<8x2048xi32>
    %cst_32 = arith.constant 0.000000e+00 : f32
    %118 = vector.shape_cast %92 : vector<1x2048xf32> to vector<1x2048xf32>
    %119 = vector.broadcast %118 : vector<1x2048xf32> to vector<8x2048xf32>
    %120 = vector.broadcast %cst_32 : f32 to vector<8x2048xf32>
    %121 = arith.select %117, %119, %120 : vector<8x2048xi1>, vector<8x2048xf32>
    %122 = arith.addf %115, %121 : vector<8x2048xf32>
    %123 = arith.truncf %122 : vector<8x2048xf32> to vector<8x2048xbf16>
    %124 = vector.extract_strided_slice %20 {offsets = [2, 0], sizes = [1, 2048], strides = [1, 1]} : vector<3x2048xi32> to vector<1x2048xi32>
    %125 = vector.extract_strided_slice %26 {offsets = [2, 0], sizes = [1, 2048], strides = [1, 1]} : vector<3x2048xf32> to vector<1x2048xf32>
    %126 = vector.extract_strided_slice %36 {offsets = [2, 0], sizes = [1, 2048], strides = [1, 1]} : vector<3x2048xf32> to vector<1x2048xf32>
    %127 = vector.extract_strided_slice %48 {offsets = [2, 0], sizes = [1, 2048], strides = [1, 1]} : vector<3x2048xf32> to vector<1x2048xf32>
    %128 = vector.extract_strided_slice %52 {offsets = [2, 0], sizes = [1, 2048], strides = [1, 1]} : vector<3x2048xf32> to vector<1x2048xf32>
    %129 = tpu.iota {dimensions = array<i32: 0>} : vector<8x2048xi32>
    %130 = vector.broadcast %124 : vector<1x2048xi32> to vector<8x2048xi32>
    %131 = arith.subi %129, %130 : vector<8x2048xi32>
    %c0_i32_33 = arith.constant 0 : i32
    %132 = vector.broadcast %c0_i32_33 : i32 to vector<8x2048xi32>
    %133 = arith.cmpi eq, %131, %132 : vector<8x2048xi32>
    %cst_34 = arith.constant 0.000000e+00 : f32
    %134 = vector.shape_cast %125 : vector<1x2048xf32> to vector<1x2048xf32>
    %135 = vector.broadcast %134 : vector<1x2048xf32> to vector<8x2048xf32>
    %136 = vector.broadcast %cst_34 : f32 to vector<8x2048xf32>
    %137 = arith.select %133, %135, %136 : vector<8x2048xi1>, vector<8x2048xf32>
    %c1_i32_35 = arith.constant 1 : i32
    %138 = vector.broadcast %c1_i32_35 : i32 to vector<8x2048xi32>
    %139 = arith.cmpi eq, %131, %138 : vector<8x2048xi32>
    %cst_36 = arith.constant 0.000000e+00 : f32
    %140 = vector.shape_cast %126 : vector<1x2048xf32> to vector<1x2048xf32>
    %141 = vector.broadcast %140 : vector<1x2048xf32> to vector<8x2048xf32>
    %142 = vector.broadcast %cst_36 : f32 to vector<8x2048xf32>
    %143 = arith.select %139, %141, %142 : vector<8x2048xi1>, vector<8x2048xf32>
    %144 = arith.addf %137, %143 : vector<8x2048xf32>
    %c2_i32_37 = arith.constant 2 : i32
    %145 = vector.broadcast %c2_i32_37 : i32 to vector<8x2048xi32>
    %146 = arith.cmpi eq, %131, %145 : vector<8x2048xi32>
    %cst_38 = arith.constant 0.000000e+00 : f32
    %147 = vector.shape_cast %127 : vector<1x2048xf32> to vector<1x2048xf32>
    %148 = vector.broadcast %147 : vector<1x2048xf32> to vector<8x2048xf32>
    %149 = vector.broadcast %cst_38 : f32 to vector<8x2048xf32>
    %150 = arith.select %146, %148, %149 : vector<8x2048xi1>, vector<8x2048xf32>
    %151 = arith.addf %144, %150 : vector<8x2048xf32>
    %c3_i32_39 = arith.constant 3 : i32
    %152 = vector.broadcast %c3_i32_39 : i32 to vector<8x2048xi32>
    %153 = arith.cmpi eq, %131, %152 : vector<8x2048xi32>
    %cst_40 = arith.constant 0.000000e+00 : f32
    %154 = vector.shape_cast %128 : vector<1x2048xf32> to vector<1x2048xf32>
    %155 = vector.broadcast %154 : vector<1x2048xf32> to vector<8x2048xf32>
    %156 = vector.broadcast %cst_40 : f32 to vector<8x2048xf32>
    %157 = arith.select %153, %155, %156 : vector<8x2048xi1>, vector<8x2048xf32>
    %158 = arith.addf %151, %157 : vector<8x2048xf32>
    %159 = arith.truncf %158 : vector<8x2048xf32> to vector<8x2048xbf16>
    %c0_41 = arith.constant 0 : index
    %c0_42 = arith.constant 0 : index
    %160 = vector.load %arg5[%c0_41, %c0_42] : memref<64x8xbf16, #tpu.memory_space<vmem>>, vector<64x8xbf16>
    %cst_43 = arith.constant dense<0.000000e+00> : vector<64x2048xf32>
    %161 = tpu.matmul %160, %123, %cst_43 {dimension_numbers = #tpu.dot_dimension_numbers<[1], [0], [0], [1], [0, 0, 1, 1], [], []>} : vector<64x8xbf16>, vector<8x2048xbf16>, vector<64x2048xf32> -> vector<64x2048xf32>
    %c0_44 = arith.constant 0 : index
    %c0_45 = arith.constant 0 : index
    %162 = vector.load %arg6[%c0_44, %c0_45] : memref<64x8xbf16, #tpu.memory_space<vmem>>, vector<64x8xbf16>
    %cst_46 = arith.constant dense<0.000000e+00> : vector<64x2048xf32>
    %163 = tpu.matmul %162, %159, %cst_46 {dimension_numbers = #tpu.dot_dimension_numbers<[1], [0], [0], [1], [0, 0, 1, 1], [], []>} : vector<64x8xbf16>, vector<8x2048xbf16>, vector<64x2048xf32> -> vector<64x2048xf32>
    %164 = arith.mulf %161, %163 : vector<64x2048xf32>
    %165 = arith.truncf %164 : vector<64x2048xf32> to vector<64x2048xbf16>
    %c0_47 = arith.constant 0 : index
    %c0_48 = arith.constant 0 : index
    %166 = vector.load %arg4[%c0_47, %c0_48] : memref<128x64xbf16, #tpu.memory_space<vmem>>, vector<128x64xbf16>
    %cst_49 = arith.constant dense<0.000000e+00> : vector<128x2048xf32>
    %167 = tpu.matmul %166, %165, %cst_49 {dimension_numbers = #tpu.dot_dimension_numbers<[1], [0], [0], [1], [0, 0, 1, 1], [], []>} : vector<128x64xbf16>, vector<64x2048xbf16>, vector<128x2048xf32> -> vector<128x2048xf32>
    %168 = vector.extract_strided_slice %87 {offsets = [0, 0], sizes = [1, 2048], strides = [1, 1]} : vector<8x2048xf32> to vector<1x2048xf32>
    %169 = vector.extract_strided_slice %167 {offsets = [0, 0], sizes = [16, 2048], strides = [1, 1]} : vector<128x2048xf32> to vector<16x2048xf32>
    %170 = vector.broadcast %168 : vector<1x2048xf32> to vector<16x2048xf32>
    %171 = arith.mulf %170, %169 : vector<16x2048xf32>
    %172 = vector.extract_strided_slice %87 {offsets = [1, 0], sizes = [1, 2048], strides = [1, 1]} : vector<8x2048xf32> to vector<1x2048xf32>
    %173 = vector.extract_strided_slice %167 {offsets = [16, 0], sizes = [16, 2048], strides = [1, 1]} : vector<128x2048xf32> to vector<16x2048xf32>
    %174 = vector.broadcast %172 : vector<1x2048xf32> to vector<16x2048xf32>
    %175 = arith.mulf %174, %173 : vector<16x2048xf32>
    %176 = arith.addf %171, %175 : vector<16x2048xf32>
    %177 = vector.extract_strided_slice %87 {offsets = [2, 0], sizes = [1, 2048], strides = [1, 1]} : vector<8x2048xf32> to vector<1x2048xf32>
    %178 = vector.extract_strided_slice %167 {offsets = [32, 0], sizes = [16, 2048], strides = [1, 1]} : vector<128x2048xf32> to vector<16x2048xf32>
    %179 = vector.broadcast %177 : vector<1x2048xf32> to vector<16x2048xf32>
    %180 = arith.mulf %179, %178 : vector<16x2048xf32>
    %181 = arith.addf %176, %180 : vector<16x2048xf32>
    %182 = vector.extract_strided_slice %87 {offsets = [3, 0], sizes = [1, 2048], strides = [1, 1]} : vector<8x2048xf32> to vector<1x2048xf32>
    %183 = vector.extract_strided_slice %167 {offsets = [48, 0], sizes = [16, 2048], strides = [1, 1]} : vector<128x2048xf32> to vector<16x2048xf32>
    %184 = vector.broadcast %182 : vector<1x2048xf32> to vector<16x2048xf32>
    %185 = arith.mulf %184, %183 : vector<16x2048xf32>
    %186 = arith.addf %181, %185 : vector<16x2048xf32>
    %187 = vector.extract_strided_slice %87 {offsets = [4, 0], sizes = [1, 2048], strides = [1, 1]} : vector<8x2048xf32> to vector<1x2048xf32>
    %188 = vector.extract_strided_slice %167 {offsets = [64, 0], sizes = [16, 2048], strides = [1, 1]} : vector<128x2048xf32> to vector<16x2048xf32>
    %189 = vector.broadcast %187 : vector<1x2048xf32> to vector<16x2048xf32>
    %190 = arith.mulf %189, %188 : vector<16x2048xf32>
    %191 = arith.addf %186, %190 : vector<16x2048xf32>
    %192 = vector.extract_strided_slice %87 {offsets = [5, 0], sizes = [1, 2048], strides = [1, 1]} : vector<8x2048xf32> to vector<1x2048xf32>
    %193 = vector.extract_strided_slice %167 {offsets = [80, 0], sizes = [16, 2048], strides = [1, 1]} : vector<128x2048xf32> to vector<16x2048xf32>
    %194 = vector.broadcast %192 : vector<1x2048xf32> to vector<16x2048xf32>
    %195 = arith.mulf %194, %193 : vector<16x2048xf32>
    %196 = arith.addf %191, %195 : vector<16x2048xf32>
    %197 = vector.extract_strided_slice %87 {offsets = [6, 0], sizes = [1, 2048], strides = [1, 1]} : vector<8x2048xf32> to vector<1x2048xf32>
    %198 = vector.extract_strided_slice %167 {offsets = [96, 0], sizes = [16, 2048], strides = [1, 1]} : vector<128x2048xf32> to vector<16x2048xf32>
    %199 = vector.broadcast %197 : vector<1x2048xf32> to vector<16x2048xf32>
    %200 = arith.mulf %199, %198 : vector<16x2048xf32>
    %201 = arith.addf %196, %200 : vector<16x2048xf32>
    %202 = vector.extract_strided_slice %87 {offsets = [7, 0], sizes = [1, 2048], strides = [1, 1]} : vector<8x2048xf32> to vector<1x2048xf32>
    %203 = vector.extract_strided_slice %167 {offsets = [112, 0], sizes = [16, 2048], strides = [1, 1]} : vector<128x2048xf32> to vector<16x2048xf32>
    %204 = vector.broadcast %202 : vector<1x2048xf32> to vector<16x2048xf32>
    %205 = arith.mulf %204, %203 : vector<16x2048xf32>
    %206 = arith.addf %201, %205 : vector<16x2048xf32>
    %cst_50 = arith.constant 3.000000e+00 : f32
    %207 = vector.broadcast %cst_50 : f32 to vector<3x2048xf32>
    %208 = arith.mulf %11, %207 : vector<3x2048xf32>
    %209 = math.floor %208 : vector<3x2048xf32>
    %cst_51 = arith.constant 0.000000e+00 : f32
    %cst_52 = arith.constant 2.000000e+00 : f32
    %210 = vector.broadcast %cst_51 : f32 to vector<3x2048xf32>
    %211 = arith.maximumf %210, %209 : vector<3x2048xf32>
    %212 = vector.broadcast %cst_52 : f32 to vector<3x2048xf32>
    %213 = arith.minimumf %212, %211 : vector<3x2048xf32>
    %214 = arith.subf %208, %213 : vector<3x2048xf32>
    %215 = arith.fptosi %213 : vector<3x2048xf32> to vector<3x2048xi32>
    %cst_53 = arith.constant 1.000000e+00 : f32
    %216 = vector.broadcast %cst_53 : f32 to vector<3x2048xf32>
    %217 = arith.subf %216, %214 : vector<3x2048xf32>
    %218 = arith.mulf %217, %217 : vector<3x2048xf32>
    %219 = arith.mulf %218, %217 : vector<3x2048xf32>
    %cst_54 = arith.constant 0.166666672 : f32
    %220 = vector.broadcast %cst_54 : f32 to vector<3x2048xf32>
    %221 = arith.mulf %219, %220 : vector<3x2048xf32>
    %cst_55 = arith.constant 3.000000e+00 : f32
    %222 = vector.broadcast %cst_55 : f32 to vector<3x2048xf32>
    %223 = arith.mulf %222, %214 : vector<3x2048xf32>
    %cst_56 = arith.constant 6.000000e+00 : f32
    %224 = vector.broadcast %cst_56 : f32 to vector<3x2048xf32>
    %225 = arith.subf %223, %224 : vector<3x2048xf32>
    %226 = arith.mulf %225, %214 : vector<3x2048xf32>
    %227 = arith.mulf %226, %214 : vector<3x2048xf32>
    %cst_57 = arith.constant 4.000000e+00 : f32
    %228 = vector.broadcast %cst_57 : f32 to vector<3x2048xf32>
    %229 = arith.addf %227, %228 : vector<3x2048xf32>
    %cst_58 = arith.constant 0.166666672 : f32
    %230 = vector.broadcast %cst_58 : f32 to vector<3x2048xf32>
    %231 = arith.mulf %229, %230 : vector<3x2048xf32>
    %cst_59 = arith.constant -3.000000e+00 : f32
    %232 = vector.broadcast %cst_59 : f32 to vector<3x2048xf32>
    %233 = arith.mulf %232, %214 : vector<3x2048xf32>
    %cst_60 = arith.constant 3.000000e+00 : f32
    %234 = vector.broadcast %cst_60 : f32 to vector<3x2048xf32>
    %235 = arith.addf %233, %234 : vector<3x2048xf32>
    %236 = arith.mulf %235, %214 : vector<3x2048xf32>
    %cst_61 = arith.constant 3.000000e+00 : f32
    %237 = vector.broadcast %cst_61 : f32 to vector<3x2048xf32>
    %238 = arith.addf %236, %237 : vector<3x2048xf32>
    %239 = arith.mulf %238, %214 : vector<3x2048xf32>
    %cst_62 = arith.constant 1.000000e+00 : f32
    %240 = vector.broadcast %cst_62 : f32 to vector<3x2048xf32>
    %241 = arith.addf %239, %240 : vector<3x2048xf32>
    %cst_63 = arith.constant 0.166666672 : f32
    %242 = vector.broadcast %cst_63 : f32 to vector<3x2048xf32>
    %243 = arith.mulf %241, %242 : vector<3x2048xf32>
    %244 = arith.mulf %214, %214 : vector<3x2048xf32>
    %245 = arith.mulf %244, %214 : vector<3x2048xf32>
    %cst_64 = arith.constant 0.166666672 : f32
    %246 = vector.broadcast %cst_64 : f32 to vector<3x2048xf32>
    %247 = arith.mulf %245, %246 : vector<3x2048xf32>
    %248 = vector.extract_strided_slice %215 {offsets = [0, 0], sizes = [1, 2048], strides = [1, 1]} : vector<3x2048xi32> to vector<1x2048xi32>
    %249 = vector.extract_strided_slice %221 {offsets = [0, 0], sizes = [1, 2048], strides = [1, 1]} : vector<3x2048xf32> to vector<1x2048xf32>
    %250 = vector.extract_strided_slice %231 {offsets = [0, 0], sizes = [1, 2048], strides = [1, 1]} : vector<3x2048xf32> to vector<1x2048xf32>
    %251 = vector.extract_strided_slice %243 {offsets = [0, 0], sizes = [1, 2048], strides = [1, 1]} : vector<3x2048xf32> to vector<1x2048xf32>
    %252 = vector.extract_strided_slice %247 {offsets = [0, 0], sizes = [1, 2048], strides = [1, 1]} : vector<3x2048xf32> to vector<1x2048xf32>
    %253 = tpu.iota {dimensions = array<i32: 0>} : vector<8x2048xi32>
    %254 = vector.broadcast %248 : vector<1x2048xi32> to vector<8x2048xi32>
    %255 = arith.subi %253, %254 : vector<8x2048xi32>
    %c0_i32_65 = arith.constant 0 : i32
    %256 = vector.broadcast %c0_i32_65 : i32 to vector<8x2048xi32>
    %257 = arith.cmpi eq, %255, %256 : vector<8x2048xi32>
    %cst_66 = arith.constant 0.000000e+00 : f32
    %258 = vector.shape_cast %249 : vector<1x2048xf32> to vector<1x2048xf32>
    %259 = vector.broadcast %258 : vector<1x2048xf32> to vector<8x2048xf32>
    %260 = vector.broadcast %cst_66 : f32 to vector<8x2048xf32>
    %261 = arith.select %257, %259, %260 : vector<8x2048xi1>, vector<8x2048xf32>
    %c1_i32_67 = arith.constant 1 : i32
    %262 = vector.broadcast %c1_i32_67 : i32 to vector<8x2048xi32>
    %263 = arith.cmpi eq, %255, %262 : vector<8x2048xi32>
    %cst_68 = arith.constant 0.000000e+00 : f32
    %264 = vector.shape_cast %250 : vector<1x2048xf32> to vector<1x2048xf32>
    %265 = vector.broadcast %264 : vector<1x2048xf32> to vector<8x2048xf32>
    %266 = vector.broadcast %cst_68 : f32 to vector<8x2048xf32>
    %267 = arith.select %263, %265, %266 : vector<8x2048xi1>, vector<8x2048xf32>
    %268 = arith.addf %261, %267 : vector<8x2048xf32>
    %c2_i32_69 = arith.constant 2 : i32
    %269 = vector.broadcast %c2_i32_69 : i32 to vector<8x2048xi32>
    %270 = arith.cmpi eq, %255, %269 : vector<8x2048xi32>
    %cst_70 = arith.constant 0.000000e+00 : f32
    %271 = vector.shape_cast %251 : vector<1x2048xf32> to vector<1x2048xf32>
    %272 = vector.broadcast %271 : vector<1x2048xf32> to vector<8x2048xf32>
    %273 = vector.broadcast %cst_70 : f32 to vector<8x2048xf32>
    %274 = arith.select %270, %272, %273 : vector<8x2048xi1>, vector<8x2048xf32>
    %275 = arith.addf %268, %274 : vector<8x2048xf32>
    %c3_i32_71 = arith.constant 3 : i32
    %276 = vector.broadcast %c3_i32_71 : i32 to vector<8x2048xi32>
    %277 = arith.cmpi eq, %255, %276 : vector<8x2048xi32>
    %cst_72 = arith.constant 0.000000e+00 : f32
    %278 = vector.shape_cast %252 : vector<1x2048xf32> to vector<1x2048xf32>
    %279 = vector.broadcast %278 : vector<1x2048xf32> to vector<8x2048xf32>
    %280 = vector.broadcast %cst_72 : f32 to vector<8x2048xf32>
    %281 = arith.select %277, %279, %280 : vector<8x2048xi1>, vector<8x2048xf32>
    %282 = arith.addf %275, %281 : vector<8x2048xf32>
    %283 = vector.extract_strided_slice %215 {offsets = [1, 0], sizes = [1, 2048], strides = [1, 1]} : vector<3x2048xi32> to vector<1x2048xi32>
    %284 = vector.extract_strided_slice %221 {offsets = [1, 0], sizes = [1, 2048], strides = [1, 1]} : vector<3x2048xf32> to vector<1x2048xf32>
    %285 = vector.extract_strided_slice %231 {offsets = [1, 0], sizes = [1, 2048], strides = [1, 1]} : vector<3x2048xf32> to vector<1x2048xf32>
    %286 = vector.extract_strided_slice %243 {offsets = [1, 0], sizes = [1, 2048], strides = [1, 1]} : vector<3x2048xf32> to vector<1x2048xf32>
    %287 = vector.extract_strided_slice %247 {offsets = [1, 0], sizes = [1, 2048], strides = [1, 1]} : vector<3x2048xf32> to vector<1x2048xf32>
    %288 = tpu.iota {dimensions = array<i32: 0>} : vector<8x2048xi32>
    %289 = vector.broadcast %283 : vector<1x2048xi32> to vector<8x2048xi32>
    %290 = arith.subi %288, %289 : vector<8x2048xi32>
    %c0_i32_73 = arith.constant 0 : i32
    %291 = vector.broadcast %c0_i32_73 : i32 to vector<8x2048xi32>
    %292 = arith.cmpi eq, %290, %291 : vector<8x2048xi32>
    %cst_74 = arith.constant 0.000000e+00 : f32
    %293 = vector.shape_cast %284 : vector<1x2048xf32> to vector<1x2048xf32>
    %294 = vector.broadcast %293 : vector<1x2048xf32> to vector<8x2048xf32>
    %295 = vector.broadcast %cst_74 : f32 to vector<8x2048xf32>
    %296 = arith.select %292, %294, %295 : vector<8x2048xi1>, vector<8x2048xf32>
    %c1_i32_75 = arith.constant 1 : i32
    %297 = vector.broadcast %c1_i32_75 : i32 to vector<8x2048xi32>
    %298 = arith.cmpi eq, %290, %297 : vector<8x2048xi32>
    %cst_76 = arith.constant 0.000000e+00 : f32
    %299 = vector.shape_cast %285 : vector<1x2048xf32> to vector<1x2048xf32>
    %300 = vector.broadcast %299 : vector<1x2048xf32> to vector<8x2048xf32>
    %301 = vector.broadcast %cst_76 : f32 to vector<8x2048xf32>
    %302 = arith.select %298, %300, %301 : vector<8x2048xi1>, vector<8x2048xf32>
    %303 = arith.addf %296, %302 : vector<8x2048xf32>
    %c2_i32_77 = arith.constant 2 : i32
    %304 = vector.broadcast %c2_i32_77 : i32 to vector<8x2048xi32>
    %305 = arith.cmpi eq, %290, %304 : vector<8x2048xi32>
    %cst_78 = arith.constant 0.000000e+00 : f32
    %306 = vector.shape_cast %286 : vector<1x2048xf32> to vector<1x2048xf32>
    %307 = vector.broadcast %306 : vector<1x2048xf32> to vector<8x2048xf32>
    %308 = vector.broadcast %cst_78 : f32 to vector<8x2048xf32>
    %309 = arith.select %305, %307, %308 : vector<8x2048xi1>, vector<8x2048xf32>
    %310 = arith.addf %303, %309 : vector<8x2048xf32>
    %c3_i32_79 = arith.constant 3 : i32
    %311 = vector.broadcast %c3_i32_79 : i32 to vector<8x2048xi32>
    %312 = arith.cmpi eq, %290, %311 : vector<8x2048xi32>
    %cst_80 = arith.constant 0.000000e+00 : f32
    %313 = vector.shape_cast %287 : vector<1x2048xf32> to vector<1x2048xf32>
    %314 = vector.broadcast %313 : vector<1x2048xf32> to vector<8x2048xf32>
    %315 = vector.broadcast %cst_80 : f32 to vector<8x2048xf32>
    %316 = arith.select %312, %314, %315 : vector<8x2048xi1>, vector<8x2048xf32>
    %317 = arith.addf %310, %316 : vector<8x2048xf32>
    %318 = arith.truncf %317 : vector<8x2048xf32> to vector<8x2048xbf16>
    %319 = vector.extract_strided_slice %215 {offsets = [2, 0], sizes = [1, 2048], strides = [1, 1]} : vector<3x2048xi32> to vector<1x2048xi32>
    %320 = vector.extract_strided_slice %221 {offsets = [2, 0], sizes = [1, 2048], strides = [1, 1]} : vector<3x2048xf32> to vector<1x2048xf32>
    %321 = vector.extract_strided_slice %231 {offsets = [2, 0], sizes = [1, 2048], strides = [1, 1]} : vector<3x2048xf32> to vector<1x2048xf32>
    %322 = vector.extract_strided_slice %243 {offsets = [2, 0], sizes = [1, 2048], strides = [1, 1]} : vector<3x2048xf32> to vector<1x2048xf32>
    %323 = vector.extract_strided_slice %247 {offsets = [2, 0], sizes = [1, 2048], strides = [1, 1]} : vector<3x2048xf32> to vector<1x2048xf32>
    %324 = tpu.iota {dimensions = array<i32: 0>} : vector<8x2048xi32>
    %325 = vector.broadcast %319 : vector<1x2048xi32> to vector<8x2048xi32>
    %326 = arith.subi %324, %325 : vector<8x2048xi32>
    %c0_i32_81 = arith.constant 0 : i32
    %327 = vector.broadcast %c0_i32_81 : i32 to vector<8x2048xi32>
    %328 = arith.cmpi eq, %326, %327 : vector<8x2048xi32>
    %cst_82 = arith.constant 0.000000e+00 : f32
    %329 = vector.shape_cast %320 : vector<1x2048xf32> to vector<1x2048xf32>
    %330 = vector.broadcast %329 : vector<1x2048xf32> to vector<8x2048xf32>
    %331 = vector.broadcast %cst_82 : f32 to vector<8x2048xf32>
    %332 = arith.select %328, %330, %331 : vector<8x2048xi1>, vector<8x2048xf32>
    %c1_i32_83 = arith.constant 1 : i32
    %333 = vector.broadcast %c1_i32_83 : i32 to vector<8x2048xi32>
    %334 = arith.cmpi eq, %326, %333 : vector<8x2048xi32>
    %cst_84 = arith.constant 0.000000e+00 : f32
    %335 = vector.shape_cast %321 : vector<1x2048xf32> to vector<1x2048xf32>
    %336 = vector.broadcast %335 : vector<1x2048xf32> to vector<8x2048xf32>
    %337 = vector.broadcast %cst_84 : f32 to vector<8x2048xf32>
    %338 = arith.select %334, %336, %337 : vector<8x2048xi1>, vector<8x2048xf32>
    %339 = arith.addf %332, %338 : vector<8x2048xf32>
    %c2_i32_85 = arith.constant 2 : i32
    %340 = vector.broadcast %c2_i32_85 : i32 to vector<8x2048xi32>
    %341 = arith.cmpi eq, %326, %340 : vector<8x2048xi32>
    %cst_86 = arith.constant 0.000000e+00 : f32
    %342 = vector.shape_cast %322 : vector<1x2048xf32> to vector<1x2048xf32>
    %343 = vector.broadcast %342 : vector<1x2048xf32> to vector<8x2048xf32>
    %344 = vector.broadcast %cst_86 : f32 to vector<8x2048xf32>
    %345 = arith.select %341, %343, %344 : vector<8x2048xi1>, vector<8x2048xf32>
    %346 = arith.addf %339, %345 : vector<8x2048xf32>
    %c3_i32_87 = arith.constant 3 : i32
    %347 = vector.broadcast %c3_i32_87 : i32 to vector<8x2048xi32>
    %348 = arith.cmpi eq, %326, %347 : vector<8x2048xi32>
    %cst_88 = arith.constant 0.000000e+00 : f32
    %349 = vector.shape_cast %323 : vector<1x2048xf32> to vector<1x2048xf32>
    %350 = vector.broadcast %349 : vector<1x2048xf32> to vector<8x2048xf32>
    %351 = vector.broadcast %cst_88 : f32 to vector<8x2048xf32>
    %352 = arith.select %348, %350, %351 : vector<8x2048xi1>, vector<8x2048xf32>
    %353 = arith.addf %346, %352 : vector<8x2048xf32>
    %354 = arith.truncf %353 : vector<8x2048xf32> to vector<8x2048xbf16>
    %c0_89 = arith.constant 0 : index
    %c0_90 = arith.constant 0 : index
    %355 = vector.load %arg8[%c0_89, %c0_90] : memref<40x8xbf16, #tpu.memory_space<vmem>>, vector<40x8xbf16>
    %cst_91 = arith.constant dense<0.000000e+00> : vector<40x2048xf32>
    %356 = tpu.matmul %355, %318, %cst_91 {dimension_numbers = #tpu.dot_dimension_numbers<[1], [0], [0], [1], [0, 0, 1, 1], [], []>} : vector<40x8xbf16>, vector<8x2048xbf16>, vector<40x2048xf32> -> vector<40x2048xf32>
    %c0_92 = arith.constant 0 : index
    %c0_93 = arith.constant 0 : index
    %357 = vector.load %arg9[%c0_92, %c0_93] : memref<40x8xbf16, #tpu.memory_space<vmem>>, vector<40x8xbf16>
    %cst_94 = arith.constant dense<0.000000e+00> : vector<40x2048xf32>
    %358 = tpu.matmul %357, %354, %cst_94 {dimension_numbers = #tpu.dot_dimension_numbers<[1], [0], [0], [1], [0, 0, 1, 1], [], []>} : vector<40x8xbf16>, vector<8x2048xbf16>, vector<40x2048xf32> -> vector<40x2048xf32>
    %359 = arith.mulf %356, %358 : vector<40x2048xf32>
    %360 = arith.truncf %359 : vector<40x2048xf32> to vector<40x2048xbf16>
    %c0_95 = arith.constant 0 : index
    %c0_96 = arith.constant 0 : index
    %361 = vector.load %arg7[%c0_95, %c0_96] : memref<96x40xbf16, #tpu.memory_space<vmem>>, vector<96x40xbf16>
    %cst_97 = arith.constant dense<0.000000e+00> : vector<96x2048xf32>
    %362 = tpu.matmul %361, %360, %cst_97 {dimension_numbers = #tpu.dot_dimension_numbers<[1], [0], [0], [1], [0, 0, 1, 1], [], []>} : vector<96x40xbf16>, vector<40x2048xbf16>, vector<96x2048xf32> -> vector<96x2048xf32>
    %363 = vector.extract_strided_slice %282 {offsets = [0, 0], sizes = [1, 2048], strides = [1, 1]} : vector<8x2048xf32> to vector<1x2048xf32>
    %364 = vector.extract_strided_slice %362 {offsets = [0, 0], sizes = [16, 2048], strides = [1, 1]} : vector<96x2048xf32> to vector<16x2048xf32>
    %365 = vector.broadcast %363 : vector<1x2048xf32> to vector<16x2048xf32>
    %366 = arith.mulf %365, %364 : vector<16x2048xf32>
    %367 = vector.extract_strided_slice %282 {offsets = [1, 0], sizes = [1, 2048], strides = [1, 1]} : vector<8x2048xf32> to vector<1x2048xf32>
    %368 = vector.extract_strided_slice %362 {offsets = [16, 0], sizes = [16, 2048], strides = [1, 1]} : vector<96x2048xf32> to vector<16x2048xf32>
    %369 = vector.broadcast %367 : vector<1x2048xf32> to vector<16x2048xf32>
    %370 = arith.mulf %369, %368 : vector<16x2048xf32>
    %371 = arith.addf %366, %370 : vector<16x2048xf32>
    %372 = vector.extract_strided_slice %282 {offsets = [2, 0], sizes = [1, 2048], strides = [1, 1]} : vector<8x2048xf32> to vector<1x2048xf32>
    %373 = vector.extract_strided_slice %362 {offsets = [32, 0], sizes = [16, 2048], strides = [1, 1]} : vector<96x2048xf32> to vector<16x2048xf32>
    %374 = vector.broadcast %372 : vector<1x2048xf32> to vector<16x2048xf32>
    %375 = arith.mulf %374, %373 : vector<16x2048xf32>
    %376 = arith.addf %371, %375 : vector<16x2048xf32>
    %377 = vector.extract_strided_slice %282 {offsets = [3, 0], sizes = [1, 2048], strides = [1, 1]} : vector<8x2048xf32> to vector<1x2048xf32>
    %378 = vector.extract_strided_slice %362 {offsets = [48, 0], sizes = [16, 2048], strides = [1, 1]} : vector<96x2048xf32> to vector<16x2048xf32>
    %379 = vector.broadcast %377 : vector<1x2048xf32> to vector<16x2048xf32>
    %380 = arith.mulf %379, %378 : vector<16x2048xf32>
    %381 = arith.addf %376, %380 : vector<16x2048xf32>
    %382 = vector.extract_strided_slice %282 {offsets = [4, 0], sizes = [1, 2048], strides = [1, 1]} : vector<8x2048xf32> to vector<1x2048xf32>
    %383 = vector.extract_strided_slice %362 {offsets = [64, 0], sizes = [16, 2048], strides = [1, 1]} : vector<96x2048xf32> to vector<16x2048xf32>
    %384 = vector.broadcast %382 : vector<1x2048xf32> to vector<16x2048xf32>
    %385 = arith.mulf %384, %383 : vector<16x2048xf32>
    %386 = arith.addf %381, %385 : vector<16x2048xf32>
    %387 = vector.extract_strided_slice %282 {offsets = [5, 0], sizes = [1, 2048], strides = [1, 1]} : vector<8x2048xf32> to vector<1x2048xf32>
    %388 = vector.extract_strided_slice %362 {offsets = [80, 0], sizes = [16, 2048], strides = [1, 1]} : vector<96x2048xf32> to vector<16x2048xf32>
    %389 = vector.broadcast %387 : vector<1x2048xf32> to vector<16x2048xf32>
    %390 = arith.mulf %389, %388 : vector<16x2048xf32>
    %391 = arith.addf %386, %390 : vector<16x2048xf32>
    %392 = arith.addf %206, %391 : vector<16x2048xf32>
    %c0_98 = arith.constant 0 : index
    %c0_99 = arith.constant 0 : index
    %393 = vector.load %arg10[%c0_98, %c0_99] : memref<48x8xf32, #tpu.memory_space<vmem>>, vector<48x8xf32>
    %c0_100 = arith.constant 0 : index
    %c0_101 = arith.constant 0 : index
    %394 = vector.load %arg2[%c0_100, %c0_101] : memref<8x2048xf32, #tpu.memory_space<vmem>>, vector<8x2048xf32>
    %cst_102 = arith.constant dense<0.000000e+00> : vector<48x2048xf32>
    %395 = tpu.matmul %393, %394, %cst_102 {dimension_numbers = #tpu.dot_dimension_numbers<[1], [0], [0], [1], [0, 0, 1, 1], [], []>} : vector<48x8xf32>, vector<8x2048xf32>, vector<48x2048xf32> -> vector<48x2048xf32>
    %c0_103 = arith.constant 0 : index
    %c0_104 = arith.constant 0 : index
    %396 = vector.load %arg11[%c0_103, %c0_104] : memref<48x1xf32, #tpu.memory_space<vmem>>, vector<48x1xf32>
    %397 = vector.broadcast %396 : vector<48x1xf32> to vector<48x2048xf32>
    %398 = arith.addf %395, %397 : vector<48x2048xf32>
    %c0_105 = arith.constant 0 : index
    %c0_106 = arith.constant 0 : index
    %399 = vector.load %arg12[%c0_105, %c0_106] : memref<48x16xf32, #tpu.memory_space<vmem>>, vector<48x16xf32>
    %cst_107 = arith.constant dense<0.000000e+00> : vector<48x2048xf32>
    %400 = tpu.matmul %399, %392, %cst_107 {dimension_numbers = #tpu.dot_dimension_numbers<[1], [0], [0], [1], [0, 0, 1, 1], [], []>} : vector<48x16xf32>, vector<16x2048xf32>, vector<48x2048xf32> -> vector<48x2048xf32>
    %c0_108 = arith.constant 0 : index
    %c0_109 = arith.constant 0 : index
    %401 = vector.load %arg13[%c0_108, %c0_109] : memref<48x1xf32, #tpu.memory_space<vmem>>, vector<48x1xf32>
    %402 = vector.broadcast %401 : vector<48x1xf32> to vector<48x2048xf32>
    %403 = arith.addf %400, %402 : vector<48x2048xf32>
    %404 = vector.extract_strided_slice %398 {offsets = [0, 0], sizes = [16, 2048], strides = [1, 1]} : vector<48x2048xf32> to vector<16x2048xf32>
    %405 = vector.extract_strided_slice %403 {offsets = [0, 0], sizes = [16, 2048], strides = [1, 1]} : vector<48x2048xf32> to vector<16x2048xf32>
    %406 = arith.mulf %404, %405 : vector<16x2048xf32>
    %407 = vector.extract_strided_slice %398 {offsets = [16, 0], sizes = [32, 2048], strides = [1, 1]} : vector<48x2048xf32> to vector<32x2048xf32>
    %408 = vector.extract_strided_slice %403 {offsets = [16, 0], sizes = [32, 2048], strides = [1, 1]} : vector<48x2048xf32> to vector<32x2048xf32>
    %409 = arith.addf %407, %408 : vector<32x2048xf32>
    %c0_110 = arith.constant 0 : index
    %c0_111 = arith.constant 0 : index
    %410 = vector.load %arg14[%c0_110, %c0_111] : memref<32x16xf32, #tpu.memory_space<vmem>>, vector<32x16xf32>
    %cst_112 = arith.constant dense<0.000000e+00> : vector<32x2048xf32>
    %411 = tpu.matmul %410, %406, %cst_112 {dimension_numbers = #tpu.dot_dimension_numbers<[1], [0], [0], [1], [0, 0, 1, 1], [], []>} : vector<32x16xf32>, vector<16x2048xf32>, vector<32x2048xf32> -> vector<32x2048xf32>
    %412 = arith.addf %409, %411 : vector<32x2048xf32>
    %c0_113 = arith.constant 0 : index
    %c0_114 = arith.constant 0 : index
    %413 = vector.load %arg15[%c0_113, %c0_114] : memref<32x2048xf32, #tpu.memory_space<vmem>>, vector<32x2048xf32>
    tpu.vector_store %arg15[%c0_113, %c0_114], %412 {strides = array<i32>} : memref<32x2048xf32, #tpu.memory_space<vmem>>, vector<32x2048xf32>,
    return
  }
  func.func @transform_0(%arg0: i32) -> (i32, i32) {
    %c0_i32 = arith.constant 0 : i32
    %c0_i32_0 = arith.constant 0 : i32
    return %c0_i32, %arg0 : i32, i32
  }
  func.func @transform_1(%arg0: i32) -> (i32, i32) {
    %c0_i32 = arith.constant 0 : i32
    %c0_i32_0 = arith.constant 0 : i32
    return %c0_i32, %arg0 : i32, i32
  }
  func.func @transform_2(%arg0: i32) -> (i32, i32) {
    %c0_i32 = arith.constant 0 : i32
    %c0_i32_0 = arith.constant 0 : i32
    %c0_i32_1 = arith.constant 0 : i32
    return %c0_i32, %c0_i32_0 : i32, i32
  }
  func.func @transform_3(%arg0: i32) -> (i32, i32) {
    %c0_i32 = arith.constant 0 : i32
    %c0_i32_0 = arith.constant 0 : i32
    %c0_i32_1 = arith.constant 0 : i32
    return %c0_i32, %c0_i32_0 : i32, i32
  }
  func.func @transform_4(%arg0: i32) -> (i32, i32) {
    %c0_i32 = arith.constant 0 : i32
    %c0_i32_0 = arith.constant 0 : i32
    %c0_i32_1 = arith.constant 0 : i32
    return %c0_i32, %c0_i32_0 : i32, i32
  }
  func.func @transform_5(%arg0: i32) -> (i32, i32) {
    %c0_i32 = arith.constant 0 : i32
    %c0_i32_0 = arith.constant 0 : i32
    %c0_i32_1 = arith.constant 0 : i32
    return %c0_i32, %c0_i32_0 : i32, i32
  }
  func.func @transform_6(%arg0: i32) -> (i32, i32) {
    %c0_i32 = arith.constant 0 : i32
    %c0_i32_0 = arith.constant 0 : i32
    %c0_i32_1 = arith.constant 0 : i32
    return %c0_i32, %c0_i32_0 : i32, i32
  }
  func.func @transform_7(%arg0: i32) -> (i32, i32) {
    %c0_i32 = arith.constant 0 : i32
    %c0_i32_0 = arith.constant 0 : i32
    %c0_i32_1 = arith.constant 0 : i32
    return %c0_i32, %c0_i32_0 : i32, i32
  }
  func.func @transform_8(%arg0: i32) -> (i32, i32) {
    %c0_i32 = arith.constant 0 : i32
    %c0_i32_0 = arith.constant 0 : i32
    %c0_i32_1 = arith.constant 0 : i32
    return %c0_i32, %c0_i32_0 : i32, i32
  }
  func.func @transform_9(%arg0: i32) -> (i32, i32) {
    %c0_i32 = arith.constant 0 : i32
    %c0_i32_0 = arith.constant 0 : i32
    %c0_i32_1 = arith.constant 0 : i32
    return %c0_i32, %c0_i32_0 : i32, i32
  }
  func.func @transform_10(%arg0: i32) -> (i32, i32) {
    %c0_i32 = arith.constant 0 : i32
    %c0_i32_0 = arith.constant 0 : i32
    %c0_i32_1 = arith.constant 0 : i32
    return %c0_i32, %c0_i32_0 : i32, i32
  }
  func.func @transform_11(%arg0: i32) -> (i32, i32) {
    %c0_i32 = arith.constant 0 : i32
    %c0_i32_0 = arith.constant 0 : i32
    %c0_i32_1 = arith.constant 0 : i32
    return %c0_i32, %c0_i32_0 : i32, i32
  }
  func.func @transform_12(%arg0: i32) -> (i32, i32) {
    %c0_i32 = arith.constant 0 : i32
    %c0_i32_0 = arith.constant 0 : i32
    %c0_i32_1 = arith.constant 0 : i32
    return %c0_i32, %c0_i32_0 : i32, i32
  }
  func.func @transform_13(%arg0: i32) -> (i32, i32) {
    %c0_i32 = arith.constant 0 : i32
    %c0_i32_0 = arith.constant 0 : i32
    %c0_i32_1 = arith.constant 0 : i32
    return %c0_i32, %c0_i32_0 : i32, i32
  }
  func.func @transform_14(%arg0: i32) -> (i32, i32) {
    %c0_i32 = arith.constant 0 : i32
    %c0_i32_0 = arith.constant 0 : i32
    return %c0_i32, %arg0 : i32, i32
  }
}

</mosaic_0001>

<llo_original>
// kernel: tpu_custom_call.1
$region0: #{tpu_custom_call.1}
  #allocation0 [shape = 'u32[]', space=smem, size = 0x4, offset = 0x4, fixed_abs, tag = 'smem constant byte address 0x4 - core index']
  #allocation1 [shape = 'u32[72,128]{1,0:T(1,128)}', space=vmem, size = 0x9000, scoped, tag = 'internal scratch']
  %s0 = inlined_call_operand.hbm [shape: f32[3,4096], index: 0, kind: input, shape index: {}]
  %s1 = inlined_call_operand.hbm [shape: f32[8,4096], index: 1, kind: input, shape index: {}]
  %s2 = inlined_call_operand.vmem [shape: f32[3,1], index: 2, kind: input, shape index: {}]
  %s3 = inlined_call_operand.vmem [shape: bf16[128,64], index: 3, kind: input, shape index: {}]
  %s4 = inlined_call_operand.vmem [shape: bf16[64,8], index: 4, kind: input, shape index: {}]
  %s5 = inlined_call_operand.vmem [shape: bf16[64,8], index: 5, kind: input, shape index: {}]
  %s6 = inlined_call_operand.vmem [shape: bf16[96,40], index: 6, kind: input, shape index: {}]
  %s7 = inlined_call_operand.vmem [shape: bf16[40,8], index: 7, kind: input, shape index: {}]
  %s8 = inlined_call_operand.vmem [shape: bf16[40,8], index: 8, kind: input, shape index: {}]
  %s9 = inlined_call_operand.vmem [shape: f32[48,8], index: 9, kind: input, shape index: {}]
  %s10 = inlined_call_operand.vmem [shape: f32[48,1], index: 10, kind: input, shape index: {}]
  %s11 = inlined_call_operand.vmem [shape: f32[48,16], index: 11, kind: input, shape index: {}]
  %s12 = inlined_call_operand.vmem [shape: f32[48,1], index: 12, kind: input, shape index: {}]
  %s13 = inlined_call_operand.vmem [shape: f32[32,16], index: 13, kind: input, shape index: {}]
  %s14 = inlined_call_operand.hbm [shape: f32[32,4096], index: 14, kind: output, shape index: {}]
  %s15 = sld [smem:[#allocation0]]
  $region97: #{tpu_custom_call.1} parent=0
    _
  %s17 = ssub.s32 1, %s15
  %s18 = scalar_select 0, %s17, %s15
  $region1: #{tpu_custom_call.1} parent=0
    #allocation2 [shape = 'u8[65536]{0}', space=vmem, size = 0x10000, scoped, tag = 'input window, operand 0']
    #allocation3 [shape = 's32[2]{0}', space=sflag, size = 0x8, scoped, tag = 'scoped memory for tpu_custom_call.1']
    #allocation4 [shape = 's32[2]{0}', space=sflag, size = 0x8, scoped, tag = 'scoped memory for tpu_custom_call.1']
    #allocation5 [shape = 'u8[131072]{0}', space=vmem, size = 0x20000, scoped, tag = 'input window, operand 1']
    #allocation6 [shape = 's32[2]{0}', space=sflag, size = 0x8, scoped, tag = 'scoped memory for tpu_custom_call.1']
    #allocation7 [shape = 'u8[524288]{0}', space=vmem, size = 0x80000, scoped, tag = 'output window, operand 0']
    %19 = vsyncpa [#allocation3], 0
    %s20 = scalar_lea.sflag [#allocation3], 1
    %21 = vsyncpa %s20, 0
    %22 = vsyncpa [#allocation6], 0
    %s23 = scalar_lea.sflag [#allocation6], 1
    %24 = vsyncpa %s23, 0
    %25 = vsyncpa [#allocation4], 0
    %s26 = scalar_lea.sflag [#allocation4], 1
    %27 = vsyncpa %s26, 0
    loop: start=0, step=1, limit=4
    $region2: #{tpu_custom_call.1} parent=1 // loop_pre_header
      _
    $region3: #{tpu_custom_call.1} parent=1 // loop_header
      %s29 = sphi 0, %s33
      %p30 = scmp.ge.s32.totalorder %s29, 4
      %s39 = sphi 0, %s41
      %s42 = sphi 0, %s39
      %s43 = sphi 0, %s42
      %s59 = sphi 0, %s43
      %s65 = sphi 0, %s67
      %s68 = sphi 0, %s65
      %s69 = sphi 0, %s68
      %s85 = sphi 0, %s69
      %s89 = sphi 0, %s89
      %s91 = sphi 0, %s89
      %s92 = sphi 0, %s91
      %s106 = sphi 0, %s92
      %s110 = sphi 0, %s110
      %s112 = sphi 0, %s110
      %s113 = sphi 0, %s112
      %s127 = sphi 0, %s113
      %s131 = sphi 0, %s131
      %s133 = sphi 0, %s131
      %s134 = sphi 0, %s133
      %s148 = sphi 0, %s134
      %s152 = sphi 0, %s152
      %s154 = sphi 0, %s152
      %s155 = sphi 0, %s154
      %s169 = sphi 0, %s155
      %s173 = sphi 0, %s173
      %s175 = sphi 0, %s173
      %s176 = sphi 0, %s175
      %s190 = sphi 0, %s176
      %s194 = sphi 0, %s194
      %s196 = sphi 0, %s194
      %s197 = sphi 0, %s196
      %s211 = sphi 0, %s197
      %s215 = sphi 0, %s215
      %s217 = sphi 0, %s215
      %s218 = sphi 0, %s217
      %s232 = sphi 0, %s218
      %s236 = sphi 0, %s236
      %s238 = sphi 0, %s236
      %s239 = sphi 0, %s238
      %s253 = sphi 0, %s239
      %s257 = sphi 0, %s257
      %s259 = sphi 0, %s257
      %s260 = sphi 0, %s259
      %s274 = sphi 0, %s260
      %s278 = sphi 0, %s278
      %s280 = sphi 0, %s278
      %s281 = sphi 0, %s280
      %s295 = sphi 0, %s281
      %s299 = sphi 0, %s299
      %s301 = sphi 0, %s299
      %s302 = sphi 0, %s301
      %s316 = sphi 0, %s302
      %s320 = sphi 0, %s320
      %s322 = sphi 0, %s320
      %s323 = sphi 0, %s322
      %s337 = sphi 0, %s323
      %s343 = sphi 0, %s345
      %s346 = sphi 0, %s343
      %s347 = sphi 0, %s346
      %s363 = sphi 0, %s347
    $region4: #{tpu_custom_call.1} parent=1 // loop_header_branch
      %32 = sbr.rel (%p30) target = $region8
    $region5: #{tpu_custom_call.1} parent=1 // loop_body
      %s34 = ssub.s32 %s29, 1
      %s35 = ssub.s32 %s29, 2
      %s36 = sadd.s32 %s29, 1
      %s37 = ssub.s32 %s29, %s36
      %p38 = scmp.eq.s32.totalorder %s37, 0
      %s40 = sadd.s32 %s39, 1
      %s41 = scalar_select %p38, %s39, %s40
      %p44 = pneg %p38
      %p45 = scmp.eq.s32.totalorder %s29, 1
      %p46 = por %p44, %p45
      %p47 = scmp.ne.s32.totalorder %s39, %s42
      %p48 = scmp.eq.s32.totalorder %s29, 0
      %p49 = por %p47, %p48
      %p50 = scmp.ne.s32.totalorder %s39, %s42
      %p51 = scmp.eq.s32.totalorder %s34, 1
      %p52 = por %p50, %p51
      %p53 = scmp.ne.s32.totalorder %s42, %s43
      %p54 = scmp.eq.s32.totalorder %s34, 0
      %p55 = por %p53, %p54
      %p56 = scmp.ne.s32.totalorder %s42, %s43
      %p57 = scmp.eq.s32.totalorder %s35, 1
      %p58 = por %p56, %p57
      %p60 = scmp.ne.s32.totalorder %s43, %s59
      %p61 = scmp.eq.s32.totalorder %s35, 0
      %p62 = por %p60, %p61
      %s63 = ssub.s32 %s29, %s36
      %p64 = scmp.eq.s32.totalorder %s63, 0
      %s66 = sadd.s32 %s65, 1
      %s67 = scalar_select %p64, %s65, %s66
      %p70 = pneg %p64
      %p71 = scmp.eq.s32.totalorder %s29, 1
      %p72 = por %p70, %p71
      %p73 = scmp.ne.s32.totalorder %s65, %s68
      %p74 = scmp.eq.s32.totalorder %s29, 0
      %p75 = por %p73, %p74
      %p76 = scmp.ne.s32.totalorder %s65, %s68
      %p77 = scmp.eq.s32.totalorder %s34, 1
      %p78 = por %p76, %p77
      %p79 = scmp.ne.s32.totalorder %s68, %s69
      %p80 = scmp.eq.s32.totalorder %s34, 0
      %p81 = por %p79, %p80
      %p82 = scmp.ne.s32.totalorder %s68, %s69
      %p83 = scmp.eq.s32.totalorder %s35, 1
      %p84 = por %p82, %p83
      %p86 = scmp.ne.s32.totalorder %s69, %s85
      %p87 = scmp.eq.s32.totalorder %s35, 0
      %p88 = por %p86, %p87
      %s90 = sadd.s32 %s89, 1
      %p93 = scmp.eq.s32.totalorder %s29, 1
      %p94 = scmp.ne.s32.totalorder %s89, %s91
      %p95 = scmp.eq.s32.totalorder %s29, 0
      %p96 = por %p94, %p95
      %p97 = scmp.ne.s32.totalorder %s89, %s91
      %p98 = scmp.eq.s32.totalorder %s34, 1
      %p99 = por %p97, %p98
      %p100 = scmp.ne.s32.totalorder %s91, %s92
      %p101 = scmp.eq.s32.totalorder %s34, 0
      %p102 = por %p100, %p101
      %p103 = scmp.ne.s32.totalorder %s91, %s92
      %p104 = scmp.eq.s32.totalorder %s35, 1
      %p105 = por %p103, %p104
      %p107 = scmp.ne.s32.totalorder %s92, %s106
      %p108 = scmp.eq.s32.totalorder %s35, 0
      %p109 = por %p107, %p108
      %s111 = sadd.s32 %s110, 1
      %p114 = scmp.eq.s32.totalorder %s29, 1
      %p115 = scmp.ne.s32.totalorder %s110, %s112
      %p116 = scmp.eq.s32.totalorder %s29, 0
      %p117 = por %p115, %p116
      %p118 = scmp.ne.s32.totalorder %s110, %s112
      %p119 = scmp.eq.s32.totalorder %s34, 1
      %p120 = por %p118, %p119
      %p121 = scmp.ne.s32.totalorder %s112, %s113
      %p122 = scmp.eq.s32.totalorder %s34, 0
      %p123 = por %p121, %p122
      %p124 = scmp.ne.s32.totalorder %s112, %s113
      %p125 = scmp.eq.s32.totalorder %s35, 1
      %p126 = por %p124, %p125
      %p128 = scmp.ne.s32.totalorder %s113, %s127
      %p129 = scmp.eq.s32.totalorder %s35, 0
      %p130 = por %p128, %p129
      %s132 = sadd.s32 %s131, 1
      %p135 = scmp.eq.s32.totalorder %s29, 1
      %p136 = scmp.ne.s32.totalorder %s131, %s133
      %p137 = scmp.eq.s32.totalorder %s29, 0
      %p138 = por %p136, %p137
      %p139 = scmp.ne.s32.totalorder %s131, %s133
      %p140 = scmp.eq.s32.totalorder %s34, 1
      %p141 = por %p139, %p140
      %p142 = scmp.ne.s32.totalorder %s133, %s134
      %p143 = scmp.eq.s32.totalorder %s34, 0
      %p144 = por %p142, %p143
      %p145 = scmp.ne.s32.totalorder %s133, %s134
      %p146 = scmp.eq.s32.totalorder %s35, 1
      %p147 = por %p145, %p146
      %p149 = scmp.ne.s32.totalorder %s134, %s148
      %p150 = scmp.eq.s32.totalorder %s35, 0
      %p151 = por %p149, %p150
      %s153 = sadd.s32 %s152, 1
      %p156 = scmp.eq.s32.totalorder %s29, 1
      %p157 = scmp.ne.s32.totalorder %s152, %s154
      %p158 = scmp.eq.s32.totalorder %s29, 0
      %p159 = por %p157, %p158
      %p160 = scmp.ne.s32.totalorder %s152, %s154
      %p161 = scmp.eq.s32.totalorder %s34, 1
      %p162 = por %p160, %p161
      %p163 = scmp.ne.s32.totalorder %s154, %s155
      %p164 = scmp.eq.s32.totalorder %s34, 0
      %p165 = por %p163, %p164
      %p166 = scmp.ne.s32.totalorder %s154, %s155
      %p167 = scmp.eq.s32.totalorder %s35, 1
      %p168 = por %p166, %p167
      %p170 = scmp.ne.s32.totalorder %s155, %s169
      %p171 = scmp.eq.s32.totalorder %s35, 0
      %p172 = por %p170, %p171
      %s174 = sadd.s32 %s173, 1
      %p177 = scmp.eq.s32.totalorder %s29, 1
      %p178 = scmp.ne.s32.totalorder %s173, %s175
      %p179 = scmp.eq.s32.totalorder %s29, 0
      %p180 = por %p178, %p179
      %p181 = scmp.ne.s32.totalorder %s173, %s175
      %p182 = scmp.eq.s32.totalorder %s34, 1
      %p183 = por %p181, %p182
      %p184 = scmp.ne.s32.totalorder %s175, %s176
      %p185 = scmp.eq.s32.totalorder %s34, 0
      %p186 = por %p184, %p185
      %p187 = scmp.ne.s32.totalorder %s175, %s176
      %p188 = scmp.eq.s32.totalorder %s35, 1
      %p189 = por %p187, %p188
      %p191 = scmp.ne.s32.totalorder %s176, %s190
      %p192 = scmp.eq.s32.totalorder %s35, 0
      %p193 = por %p191, %p192
      %s195 = sadd.s32 %s194, 1
      %p198 = scmp.eq.s32.totalorder %s29, 1
      %p199 = scmp.ne.s32.totalorder %s194, %s196
      %p200 = scmp.eq.s32.totalorder %s29, 0
      %p201 = por %p199, %p200
      %p202 = scmp.ne.s32.totalorder %s194, %s196
      %p203 = scmp.eq.s32.totalorder %s34, 1
      %p204 = por %p202, %p203
      %p205 = scmp.ne.s32.totalorder %s196, %s197
      %p206 = scmp.eq.s32.totalorder %s34, 0
      %p207 = por %p205, %p206
      %p208 = scmp.ne.s32.totalorder %s196, %s197
      %p209 = scmp.eq.s32.totalorder %s35, 1
      %p210 = por %p208, %p209
      %p212 = scmp.ne.s32.totalorder %s197, %s211
      %p213 = scmp.eq.s32.totalorder %s35, 0
      %p214 = por %p212, %p213
      %s216 = sadd.s32 %s215, 1
      %p219 = scmp.eq.s32.totalorder %s29, 1
      %p220 = scmp.ne.s32.totalorder %s215, %s217
      %p221 = scmp.eq.s32.totalorder %s29, 0
      %p222 = por %p220, %p221
      %p223 = scmp.ne.s32.totalorder %s215, %s217
      %p224 = scmp.eq.s32.totalorder %s34, 1
      %p225 = por %p223, %p224
      %p226 = scmp.ne.s32.totalorder %s217, %s218
      %p227 = scmp.eq.s32.totalorder %s34, 0
      %p228 = por %p226, %p227
      %p229 = scmp.ne.s32.totalorder %s217, %s218
      %p230 = scmp.eq.s32.totalorder %s35, 1
      %p231 = por %p229, %p230
      %p233 = scmp.ne.s32.totalorder %s218, %s232
      %p234 = scmp.eq.s32.totalorder %s35, 0
      %p235 = por %p233, %p234
      %s237 = sadd.s32 %s236, 1
      %p240 = scmp.eq.s32.totalorder %s29, 1
      %p241 = scmp.ne.s32.totalorder %s236, %s238
      %p242 = scmp.eq.s32.totalorder %s29, 0
      %p243 = por %p241, %p242
      %p244 = scmp.ne.s32.totalorder %s236, %s238
      %p245 = scmp.eq.s32.totalorder %s34, 1
      %p246 = por %p244, %p245
      %p247 = scmp.ne.s32.totalorder %s238, %s239
      %p248 = scmp.eq.s32.totalorder %s34, 0
      %p249 = por %p247, %p248
      %p250 = scmp.ne.s32.totalorder %s238, %s239
      %p251 = scmp.eq.s32.totalorder %s35, 1
      %p252 = por %p250, %p251
      %p254 = scmp.ne.s32.totalorder %s239, %s253
      %p255 = scmp.eq.s32.totalorder %s35, 0
      %p256 = por %p254, %p255
      %s258 = sadd.s32 %s257, 1
      %p261 = scmp.eq.s32.totalorder %s29, 1
      %p262 = scmp.ne.s32.totalorder %s257, %s259
      %p263 = scmp.eq.s32.totalorder %s29, 0
      %p264 = por %p262, %p263
      %p265 = scmp.ne.s32.totalorder %s257, %s259
      %p266 = scmp.eq.s32.totalorder %s34, 1
      %p267 = por %p265, %p266
      %p268 = scmp.ne.s32.totalorder %s259, %s260
      %p269 = scmp.eq.s32.totalorder %s34, 0
      %p270 = por %p268, %p269
      %p271 = scmp.ne.s32.totalorder %s259, %s260
      %p272 = scmp.eq.s32.totalorder %s35, 1
      %p273 = por %p271, %p272
      %p275 = scmp.ne.s32.totalorder %s260, %s274
      %p276 = scmp.eq.s32.totalorder %s35, 0
      %p277 = por %p275, %p276
      %s279 = sadd.s32 %s278, 1
      %p282 = scmp.eq.s32.totalorder %s29, 1
      %p283 = scmp.ne.s32.totalorder %s278, %s280
      %p284 = scmp.eq.s32.totalorder %s29, 0
      %p285 = por %p283, %p284
      %p286 = scmp.ne.s32.totalorder %s278, %s280
      %p287 = scmp.eq.s32.totalorder %s34, 1
      %p288 = por %p286, %p287
      %p289 = scmp.ne.s32.totalorder %s280, %s281
      %p290 = scmp.eq.s32.totalorder %s34, 0
      %p291 = por %p289, %p290
      %p292 = scmp.ne.s32.totalorder %s280, %s281
      %p293 = scmp.eq.s32.totalorder %s35, 1
      %p294 = por %p292, %p293
      %p296 = scmp.ne.s32.totalorder %s281, %s295
      %p297 = scmp.eq.s32.totalorder %s35, 0
      %p298 = por %p296, %p297
      %s300 = sadd.s32 %s299, 1
      %p303 = scmp.eq.s32.totalorder %s29, 1
      %p304 = scmp.ne.s32.totalorder %s299, %s301
      %p305 = scmp.eq.s32.totalorder %s29, 0
      %p306 = por %p304, %p305
      %p307 = scmp.ne.s32.totalorder %s299, %s301
      %p308 = scmp.eq.s32.totalorder %s34, 1
      %p309 = por %p307, %p308
      %p310 = scmp.ne.s32.totalorder %s301, %s302
      %p311 = scmp.eq.s32.totalorder %s34, 0
      %p312 = por %p310, %p311
      %p313 = scmp.ne.s32.totalorder %s301, %s302
      %p314 = scmp.eq.s32.totalorder %s35, 1
      %p315 = por %p313, %p314
      %p317 = scmp.ne.s32.totalorder %s302, %s316
      %p318 = scmp.eq.s32.totalorder %s35, 0
      %p319 = por %p317, %p318
      %s321 = sadd.s32 %s320, 1
      %p324 = scmp.eq.s32.totalorder %s29, 1
      %p325 = scmp.ne.s32.totalorder %s320, %s322
      %p326 = scmp.eq.s32.totalorder %s29, 0
      %p327 = por %p325, %p326
      %p328 = scmp.ne.s32.totalorder %s320, %s322
      %p329 = scmp.eq.s32.totalorder %s34, 1
      %p330 = por %p328, %p329
      %p331 = scmp.ne.s32.totalorder %s322, %s323
      %p332 = scmp.eq.s32.totalorder %s34, 0
      %p333 = por %p331, %p332
      %p334 = scmp.ne.s32.totalorder %s322, %s323
      %p335 = scmp.eq.s32.totalorder %s35, 1
      %p336 = por %p334, %p335
      %p338 = scmp.ne.s32.totalorder %s323, %s337
      %p339 = scmp.eq.s32.totalorder %s35, 0
      %p340 = por %p338, %p339
      %s341 = ssub.s32 %s29, %s36
      %p342 = scmp.eq.s32.totalorder %s341, 0
      %s344 = sadd.s32 %s343, 1
      %s345 = scalar_select %p342, %s343, %s344
      %p348 = pneg %p342
      %p349 = scmp.eq.s32.totalorder %s29, 1
      %p350 = por %p348, %p349
      %p351 = scmp.ne.s32.totalorder %s343, %s346
      %p352 = scmp.eq.s32.totalorder %s29, 0
      %p353 = por %p351, %p352
      %p354 = scmp.ne.s32.totalorder %s343, %s346
      %p355 = scmp.eq.s32.totalorder %s34, 1
      %p356 = por %p354, %p355
      %p357 = scmp.ne.s32.totalorder %s346, %s347
      %p358 = scmp.eq.s32.totalorder %s34, 0
      %p359 = por %p357, %p358
      %p360 = scmp.ne.s32.totalorder %s346, %s347
      %p361 = scmp.eq.s32.totalorder %s35, 1
      %p362 = por %p360, %p361
      %p364 = scmp.ne.s32.totalorder %s347, %s363
      %p365 = scmp.eq.s32.totalorder %s35, 0
      %p366 = por %p364, %p365
      %p367 = scmp.le.s32.totalorder 1, %s29
      %p368 = scmp.lt.s32.totalorder %s29, 3
      %p369 = pnand %p367, %p368
      %p370 = pneg %p369
      // Predicated region
      $region9: #{tpu_custom_call.1} parent=5 // pred_check
        _
      $region10: #{tpu_custom_call.1} parent=5 // pred_check_branch
        %372 = sbr.rel (%p369) target = $region12
      $region11: #{tpu_custom_call.1} parent=5 // pred_region
        %s373 = ssub.s32 %s29, 1
        // Predicated region
        $region13: #{tpu_custom_call.1} parent=11 // pred_check
          %p374 = pneg %p102
        $region14: #{tpu_custom_call.1} parent=11 // pred_check_branch
          %376 = sbr.rel (%p374) target = $region16
        $region15: #{tpu_custom_call.1} parent=11 // pred_region
          _
        $region16: #{tpu_custom_call.1} parent=11 // pred_fallthru
          _
        // Predicated region
        $region17: #{tpu_custom_call.1} parent=11 // pred_check
          %p377 = pneg %p123
        $region18: #{tpu_custom_call.1} parent=11 // pred_check_branch
          %379 = sbr.rel (%p377) target = $region20
        $region19: #{tpu_custom_call.1} parent=11 // pred_region
          _
        $region20: #{tpu_custom_call.1} parent=11 // pred_fallthru
          _
        // Predicated region
        $region21: #{tpu_custom_call.1} parent=11 // pred_check
          %p380 = pneg %p144
        $region22: #{tpu_custom_call.1} parent=11 // pred_check_branch
          %382 = sbr.rel (%p380) target = $region24
        $region23: #{tpu_custom_call.1} parent=11 // pred_region
          _
        $region24: #{tpu_custom_call.1} parent=11 // pred_fallthru
          _
        // Predicated region
        $region25: #{tpu_custom_call.1} parent=11 // pred_check
          %p383 = pneg %p165
        $region26: #{tpu_custom_call.1} parent=11 // pred_check_branch
          %385 = sbr.rel (%p383) target = $region28
        $region27: #{tpu_custom_call.1} parent=11 // pred_region
          _
        $region28: #{tpu_custom_call.1} parent=11 // pred_fallthru
          _
        // Predicated region
        $region29: #{tpu_custom_call.1} parent=11 // pred_check
          %p386 = pneg %p186
        $region30: #{tpu_custom_call.1} parent=11 // pred_check_branch
          %388 = sbr.rel (%p386) target = $region32
        $region31: #{tpu_custom_call.1} parent=11 // pred_region
          _
        $region32: #{tpu_custom_call.1} parent=11 // pred_fallthru
          _
        // Predicated region
        $region33: #{tpu_custom_call.1} parent=11 // pred_check
          %p389 = pneg %p207
        $region34: #{tpu_custom_call.1} parent=11 // pred_check_branch
          %391 = sbr.rel (%p389) target = $region36
        $region35: #{tpu_custom_call.1} parent=11 // pred_region
          _
        $region36: #{tpu_custom_call.1} parent=11 // pred_fallthru
          _
        // Predicated region
        $region37: #{tpu_custom_call.1} parent=11 // pred_check
          %p392 = pneg %p228
        $region38: #{tpu_custom_call.1} parent=11 // pred_check_branch
          %394 = sbr.rel (%p392) target = $region40
        $region39: #{tpu_custom_call.1} parent=11 // pred_region
          _
        $region40: #{tpu_custom_call.1} parent=11 // pred_fallthru
          _
        // Predicated region
        $region41: #{tpu_custom_call.1} parent=11 // pred_check
          %p395 = pneg %p249
        $region42: #{tpu_custom_call.1} parent=11 // pred_check_branch
          %397 = sbr.rel (%p395) target = $region44
        $region43: #{tpu_custom_call.1} parent=11 // pred_region
          _
        $region44: #{tpu_custom_call.1} parent=11 // pred_fallthru
          _
        // Predicated region
        $region45: #{tpu_custom_call.1} parent=11 // pred_check
          %p398 = pneg %p270
        $region46: #{tpu_custom_call.1} parent=11 // pred_check_branch
          %400 = sbr.rel (%p398) target = $region48
        $region47: #{tpu_custom_call.1} parent=11 // pred_region
          _
        $region48: #{tpu_custom_call.1} parent=11 // pred_fallthru
          _
        // Predicated region
        $region49: #{tpu_custom_call.1} parent=11 // pred_check
          %p401 = pneg %p291
        $region50: #{tpu_custom_call.1} parent=11 // pred_check_branch
          %403 = sbr.rel (%p401) target = $region52
        $region51: #{tpu_custom_call.1} parent=11 // pred_region
          _
        $region52: #{tpu_custom_call.1} parent=11 // pred_fallthru
          _
        // Predicated region
        $region53: #{tpu_custom_call.1} parent=11 // pred_check
          %p404 = pneg %p312
        $region54: #{tpu_custom_call.1} parent=11 // pred_check_branch
          %406 = sbr.rel (%p404) target = $region56
        $region55: #{tpu_custom_call.1} parent=11 // pred_region
          _
        $region56: #{tpu_custom_call.1} parent=11 // pred_fallthru
          _
        // Predicated region
        $region57: #{tpu_custom_call.1} parent=11 // pred_check
          %p407 = pneg %p333
        $region58: #{tpu_custom_call.1} parent=11 // pred_check_branch
          %409 = sbr.rel (%p407) target = $region60
        $region59: #{tpu_custom_call.1} parent=11 // pred_region
          _
        $region60: #{tpu_custom_call.1} parent=11 // pred_fallthru
          _
      $region12: #{tpu_custom_call.1} parent=5 // pred_fallthru
        _
      %p410 = scmp.lt.s32.totalorder %s29, 2
      // Predicated region
      $region61: #{tpu_custom_call.1} parent=5 // pred_check
        %p411 = pneg %p410
      $region62: #{tpu_custom_call.1} parent=5 // pred_check_branch
        %413 = sbr.rel (%p411) target = $region64
      $region63: #{tpu_custom_call.1} parent=5 // pred_region
        // Predicated region
        $region65: #{tpu_custom_call.1} parent=63 // pred_check
          %p414 = pneg %p49
        $region66: #{tpu_custom_call.1} parent=63 // pred_check_branch
          %416 = sbr.rel (%p414) target = $region68
        $region67: #{tpu_custom_call.1} parent=63 // pred_region
          %s417 = sand.u32 %s39, 1
          %s418 = scalar_lea.sflag [#allocation3], %s417
          %s419 = sand.u32 %s39, 1
          %s420 = smul.addr %s419, 64
          %s421 = scalar_lea.vmem [#allocation2], %s420
          %s422 = smul.u32 16, %s29
          %424 = vsyncadd %s418, 0
          %s425 = smul.addr %s422, 4
          %s426 = scalar_lea.hbm %s0, %s425
          %s428 = sshll.u32 %s426, 4
          %s429 = int_to_ptr.hbm [resolvable:$true] %s428
          %s430 = sshll.u32 %s421, 4
          %s431 = int_to_ptr.vmem [resolvable:$true] %s430
          %433 = dma.hbm_to_vmem [thread:$0]  %s429, 1024, %s431, %s418
        $region68: #{tpu_custom_call.1} parent=63 // pred_fallthru
          _
        // Predicated region
        $region69: #{tpu_custom_call.1} parent=63 // pred_check
          %p434 = pneg %p75
        $region70: #{tpu_custom_call.1} parent=63 // pred_check_branch
          %436 = sbr.rel (%p434) target = $region72
        $region71: #{tpu_custom_call.1} parent=63 // pred_region
          %s437 = sand.u32 %s65, 1
          %s438 = scalar_lea.sflag [#allocation6], %s437
          %s439 = sand.u32 %s65, 1
          %s440 = smul.addr %s439, 128
          %s441 = scalar_lea.vmem [#allocation5], %s440
          %s442 = smul.u32 16, %s29
          %444 = vsyncadd %s438, 0
          %s445 = smul.addr %s442, 8
          %s446 = scalar_lea.hbm %s1, %s445
          %s448 = sshll.u32 %s446, 4
          %s449 = int_to_ptr.hbm [resolvable:$true] %s448
          %s450 = sshll.u32 %s441, 4
          %s451 = int_to_ptr.vmem [resolvable:$true] %s450
          %453 = dma.hbm_to_vmem [thread:$0]  %s449, 2048, %s451, %s438
        $region72: #{tpu_custom_call.1} parent=63 // pred_fallthru
          _
      $region64: #{tpu_custom_call.1} parent=5 // pred_fallthru
        _
      %p454 = scmp.le.s32.totalorder 1, %s29
      %p455 = scmp.lt.s32.totalorder %s29, 3
      %p456 = pnand %p454, %p455
      %p457 = pneg %p456
      // Predicated region
      $region73: #{tpu_custom_call.1} parent=5 // pred_check
        _
      $region74: #{tpu_custom_call.1} parent=5 // pred_check_branch
        %459 = sbr.rel (%p456) target = $region76
      $region75: #{tpu_custom_call.1} parent=5 // pred_region
        %s460 = ssub.s32 %s29, 1
        %s461 = sand.u32 %s42, 1
        %s462 = scalar_lea.sflag [#allocation3], %s461
        %s463 = sand.u32 %s42, 1
        %s464 = smul.addr %s463, 64
        %s465 = scalar_lea.vmem [#allocation2], %s464
        // Predicated region
        $region77: #{tpu_custom_call.1} parent=75 // pred_check
          %p466 = pneg %p55
        $region78: #{tpu_custom_call.1} parent=75 // pred_check_branch
          %468 = sbr.rel (%p466) target = $region80
        $region79: #{tpu_custom_call.1} parent=75 // pred_region
          %470 = dma.done %s462, 1024
        $region80: #{tpu_custom_call.1} parent=75 // pred_fallthru
          _
        %s471 = sand.u32 %s68, 1
        %s472 = scalar_lea.sflag [#allocation6], %s471
        %s473 = sand.u32 %s68, 1
        %s474 = smul.addr %s473, 128
        %s475 = scalar_lea.vmem [#allocation5], %s474
        // Predicated region
        $region81: #{tpu_custom_call.1} parent=75 // pred_check
          %p476 = pneg %p81
        $region82: #{tpu_custom_call.1} parent=75 // pred_check_branch
          %478 = sbr.rel (%p476) target = $region84
        $region83: #{tpu_custom_call.1} parent=75 // pred_region
          %480 = dma.done %s472, 2048
        $region84: #{tpu_custom_call.1} parent=75 // pred_fallthru
          _
        %s481 = sand.u32 %s42, 1
        %s482 = scalar_lea.sflag [#allocation3], %s481
        %s483 = sand.u32 %s42, 1
        %s484 = smul.addr %s483, 64
        %s485 = scalar_lea.vmem [#allocation2], %s484
        %p486 = pneg %p55
        %p487 = pneg %p52
        %s488 = sand.u32 %s68, 1
        %s489 = scalar_lea.sflag [#allocation6], %s488
        %s490 = sand.u32 %s68, 1
        %s491 = smul.addr %s490, 128
        %s492 = scalar_lea.vmem [#allocation5], %s491
        %p493 = pneg %p81
        %p494 = pneg %p78
        %p495 = pneg %p102
        %p496 = pneg %p99
        %p497 = pneg %p123
        %p498 = pneg %p120
        %p499 = pneg %p144
        %p500 = pneg %p141
        %p501 = pneg %p165
        %p502 = pneg %p162
        %p503 = pneg %p186
        %p504 = pneg %p183
        %p505 = pneg %p207
        %p506 = pneg %p204
        %p507 = pneg %p228
        %p508 = pneg %p225
        %p509 = pneg %p249
        %p510 = pneg %p246
        %p511 = pneg %p270
        %p512 = pneg %p267
        %p513 = pneg %p291
        %p514 = pneg %p288
        %p515 = pneg %p312
        %p516 = pneg %p309
        %p517 = pneg %p333
        %p518 = pneg %p330
        %p519 = pneg %p359
        %p520 = pneg %p356
        %s521 = sand.u32 %s346, 1
        %s522 = scalar_lea.sflag [#allocation4], %s521
        %s523 = sand.u32 %s346, 1
        %s524 = smul.addr %s523, 512
        %s525 = scalar_lea.vmem [#allocation7], %s524
        %s526 = smul.u32 16, %s34
        %s527 = smul.u32 16, %s34
        %s528 = smul.u32 16, %s34
        %v530 = vld [vmem:[%s465] sm:$0x77]
        %v531 = vld [vmem:[%s465 + $0x8] sm:$0x77]
        %v532 = vld [vmem:[%s465 + $0x10] sm:$0x77]
        %v533 = vld [vmem:[%s465 + $0x18] sm:$0x77]
        %v534 = vld [vmem:[%s465 + $0x20] sm:$0x77]
        %v535 = vld [vmem:[%s465 + $0x28] sm:$0x77]
        %v536 = vld [vmem:[%s465 + $0x30] sm:$0x77]
        %v537 = vld [vmem:[%s465 + $0x38] sm:$0x77]
        %v538 = vld [vmem:[%s2] sm:$0x7]
        %540 = vset.pattern.permute.xlu0 0
        %541 = vperm.xlu0 %540, %v538
        %v542 = vpop.permute.xlu0 %541
        %v544 = vunpack.c.l.s4 839922192
        %v545 = vunpack.c.0.s8 %v544
        %v546 = vperm.slane %v542, %v545
        %v548 = vsub.f32 %v530, %v546
        %v549 = vsub.f32 %v531, %v546
        %v550 = vsub.f32 %v532, %v546
        %v551 = vsub.f32 %v533, %v546
        %v552 = vsub.f32 %v534, %v546
        %v553 = vsub.f32 %v535, %v546
        %v554 = vsub.f32 %v536, %v546
        %v555 = vsub.f32 %v537, %v546
        %v556 = vmul.f32 %v548, 0.071428575
        %v557 = vmul.f32 %v549, 0.071428575
        %v558 = vmul.f32 %v550, 0.071428575
        %v559 = vmul.f32 %v551, 0.071428575
        %v560 = vmul.f32 %v552, 0.071428575
        %v561 = vmul.f32 %v553, 0.071428575
        %v562 = vmul.f32 %v554, 0.071428575
        %v563 = vmul.f32 %v555, 0.071428575
        %v564 = vadd.f32 %v556, 0.5
        %v565 = vadd.f32 %v557, 0.5
        %v566 = vadd.f32 %v558, 0.5
        %v567 = vadd.f32 %v559, 0.5
        %v568 = vadd.f32 %v560, 0.5
        %v569 = vadd.f32 %v561, 0.5
        %v570 = vadd.f32 %v562, 0.5
        %v571 = vadd.f32 %v563, 0.5
        %v572 = vmax.f32 %v564, 0.0
        %v573 = vmax.f32 %v565, 0.0
        %v574 = vmax.f32 %v566, 0.0
        %v575 = vmax.f32 %v567, 0.0
        %v576 = vmax.f32 %v568, 0.0
        %v577 = vmax.f32 %v569, 0.0
        %v578 = vmax.f32 %v570, 0.0
        %v579 = vmax.f32 %v571, 0.0
        %v580 = vmin.f32 %v572, 1.0
        %v581 = vmin.f32 %v573, 1.0
        %v582 = vmin.f32 %v574, 1.0
        %v583 = vmin.f32 %v575, 1.0
        %v584 = vmin.f32 %v576, 1.0
        %v585 = vmin.f32 %v577, 1.0
        %v586 = vmin.f32 %v578, 1.0
        %v587 = vmin.f32 %v579, 1.0
        %v588 = vmul.f32 %v580, 5.0
        %v589 = vmul.f32 %v581, 5.0
        %v590 = vmul.f32 %v582, 5.0
        %v591 = vmul.f32 %v583, 5.0
        %v592 = vmul.f32 %v584, 5.0
        %v593 = vmul.f32 %v585, 5.0
        %v594 = vmul.f32 %v586, 5.0
        %v595 = vmul.f32 %v587, 5.0
        %v596 = vfloor.f32 %v588
        %v597 = vfloor.f32 %v589
        %v598 = vfloor.f32 %v590
        %v599 = vfloor.f32 %v591
        %v600 = vfloor.f32 %v592
        %v601 = vfloor.f32 %v593
        %v602 = vfloor.f32 %v594
        %v603 = vfloor.f32 %v595
        %v604 = vmax.f32 %v596, 0.0
        %v605 = vmax.f32 %v597, 0.0
        %v606 = vmax.f32 %v598, 0.0
        %v607 = vmax.f32 %v599, 0.0
        %v608 = vmax.f32 %v600, 0.0
        %v609 = vmax.f32 %v601, 0.0
        %v610 = vmax.f32 %v602, 0.0
        %v611 = vmax.f32 %v603, 0.0
        %v612 = vmin.f32 %v604, 4.0
        %v613 = vmin.f32 %v605, 4.0
        %v614 = vmin.f32 %v606, 4.0
        %v615 = vmin.f32 %v607, 4.0
        %v616 = vmin.f32 %v608, 4.0
        %v617 = vmin.f32 %v609, 4.0
        %v618 = vmin.f32 %v610, 4.0
        %v619 = vmin.f32 %v611, 4.0
        %v620 = vsub.f32 %v588, %v612
        %v621 = vsub.f32 %v589, %v613
        %v622 = vsub.f32 %v590, %v614
        %v623 = vsub.f32 %v591, %v615
        %v624 = vsub.f32 %v592, %v616
        %v625 = vsub.f32 %v593, %v617
        %v626 = vsub.f32 %v594, %v618
        %v627 = vsub.f32 %v595, %v619
        %v628 = vcvt.f32.s32.to.zero.pseudo %v612
        %v629 = vcvt.f32.s32.to.zero.pseudo %v613
        %v630 = vcvt.f32.s32.to.zero.pseudo %v614
        %v631 = vcvt.f32.s32.to.zero.pseudo %v615
        %v632 = vcvt.f32.s32.to.zero.pseudo %v616
        %v633 = vcvt.f32.s32.to.zero.pseudo %v617
        %v634 = vcvt.f32.s32.to.zero.pseudo %v618
        %v635 = vcvt.f32.s32.to.zero.pseudo %v619
        %v636 = vsub.f32 1.0, %v620
        %v637 = vsub.f32 1.0, %v621
        %v638 = vsub.f32 1.0, %v622
        %v639 = vsub.f32 1.0, %v623
        %v640 = vsub.f32 1.0, %v624
        %v641 = vsub.f32 1.0, %v625
        %v642 = vsub.f32 1.0, %v626
        %v643 = vsub.f32 1.0, %v627
        %v644 = vmul.f32 %v636, %v636
        %v645 = vmul.f32 %v637, %v637
        %v646 = vmul.f32 %v638, %v638
        %v647 = vmul.f32 %v639, %v639
        %v648 = vmul.f32 %v640, %v640
        %v649 = vmul.f32 %v641, %v641
        %v650 = vmul.f32 %v642, %v642
        %v651 = vmul.f32 %v643, %v643
        %v652 = vmul.f32 %v644, %v636
        %v653 = vmul.f32 %v645, %v637
        %v654 = vmul.f32 %v646, %v638
        %v655 = vmul.f32 %v647, %v639
        %v656 = vmul.f32 %v648, %v640
        %v657 = vmul.f32 %v649, %v641
        %v658 = vmul.f32 %v650, %v642
        %v659 = vmul.f32 %v651, %v643
        %v660 = vmul.f32 %v652, 0.16666667
        %v661 = vmul.f32 %v653, 0.16666667
        %v662 = vmul.f32 %v654, 0.16666667
        %v663 = vmul.f32 %v655, 0.16666667
        %v664 = vmul.f32 %v656, 0.16666667
        %v665 = vmul.f32 %v657, 0.16666667
        %v666 = vmul.f32 %v658, 0.16666667
        %v667 = vmul.f32 %v659, 0.16666667
        %v668 = vmul.f32 %v620, 3.0
        %v669 = vmul.f32 %v621, 3.0
        %v670 = vmul.f32 %v622, 3.0
        %v671 = vmul.f32 %v623, 3.0
        %v672 = vmul.f32 %v624, 3.0
        %v673 = vmul.f32 %v625, 3.0
        %v674 = vmul.f32 %v626, 3.0
        %v675 = vmul.f32 %v627, 3.0
        %v676 = vsub.f32 %v668, 6.0
        %v677 = vsub.f32 %v669, 6.0
        %v678 = vsub.f32 %v670, 6.0
        %v679 = vsub.f32 %v671, 6.0
        %v680 = vsub.f32 %v672, 6.0
        %v681 = vsub.f32 %v673, 6.0
        %v682 = vsub.f32 %v674, 6.0
        %v683 = vsub.f32 %v675, 6.0
        %v684 = vmul.f32 %v676, %v620
        %v685 = vmul.f32 %v677, %v621
        %v686 = vmul.f32 %v678, %v622
        %v687 = vmul.f32 %v679, %v623
        %v688 = vmul.f32 %v680, %v624
        %v689 = vmul.f32 %v681, %v625
        %v690 = vmul.f32 %v682, %v626
        %v691 = vmul.f32 %v683, %v627
        %v692 = vmul.f32 %v684, %v620
        %v693 = vmul.f32 %v685, %v621
        %v694 = vmul.f32 %v686, %v622
        %v695 = vmul.f32 %v687, %v623
        %v696 = vmul.f32 %v688, %v624
        %v697 = vmul.f32 %v689, %v625
        %v698 = vmul.f32 %v690, %v626
        %v699 = vmul.f32 %v691, %v627
        %v700 = vadd.f32 %v692, 4.0
        %v701 = vadd.f32 %v693, 4.0
        %v702 = vadd.f32 %v694, 4.0
        %v703 = vadd.f32 %v695, 4.0
        %v704 = vadd.f32 %v696, 4.0
        %v705 = vadd.f32 %v697, 4.0
        %v706 = vadd.f32 %v698, 4.0
        %v707 = vadd.f32 %v699, 4.0
        %v708 = vmul.f32 %v700, 0.16666667
        %v709 = vmul.f32 %v701, 0.16666667
        %v710 = vmul.f32 %v702, 0.16666667
        %v711 = vmul.f32 %v703, 0.16666667
        %v712 = vmul.f32 %v704, 0.16666667
        %v713 = vmul.f32 %v705, 0.16666667
        %v714 = vmul.f32 %v706, 0.16666667
        %v715 = vmul.f32 %v707, 0.16666667
        %v716 = vmul.f32 %v620, -3.0
        %v717 = vmul.f32 %v621, -3.0
        %v718 = vmul.f32 %v622, -3.0
        %v719 = vmul.f32 %v623, -3.0
        %v720 = vmul.f32 %v624, -3.0
        %v721 = vmul.f32 %v625, -3.0
        %v722 = vmul.f32 %v626, -3.0
        %v723 = vmul.f32 %v627, -3.0
        %v724 = vadd.f32 %v716, 3.0
        %v725 = vadd.f32 %v717, 3.0
        %v726 = vadd.f32 %v718, 3.0
        %v727 = vadd.f32 %v719, 3.0
        %v728 = vadd.f32 %v720, 3.0
        %v729 = vadd.f32 %v721, 3.0
        %v730 = vadd.f32 %v722, 3.0
        %v731 = vadd.f32 %v723, 3.0
        %v732 = vmul.f32 %v724, %v620
        %v733 = vmul.f32 %v725, %v621
        %v734 = vmul.f32 %v726, %v622
        %v735 = vmul.f32 %v727, %v623
        %v736 = vmul.f32 %v728, %v624
        %v737 = vmul.f32 %v729, %v625
        %v738 = vmul.f32 %v730, %v626
        %v739 = vmul.f32 %v731, %v627
        %v740 = vadd.f32 %v732, 3.0
        %v741 = vadd.f32 %v733, 3.0
        %v742 = vadd.f32 %v734, 3.0
        %v743 = vadd.f32 %v735, 3.0
        %v744 = vadd.f32 %v736, 3.0
        %v745 = vadd.f32 %v737, 3.0
        %v746 = vadd.f32 %v738, 3.0
        %v747 = vadd.f32 %v739, 3.0
        %v748 = vmul.f32 %v740, %v620
        %v749 = vmul.f32 %v741, %v621
        %v750 = vmul.f32 %v742, %v622
        %v751 = vmul.f32 %v743, %v623
        %v752 = vmul.f32 %v744, %v624
        %v753 = vmul.f32 %v745, %v625
        %v754 = vmul.f32 %v746, %v626
        %v755 = vmul.f32 %v747, %v627
        %v756 = vadd.f32 %v748, 1.0
        %v757 = vadd.f32 %v749, 1.0
        %v758 = vadd.f32 %v750, 1.0
        %v759 = vadd.f32 %v751, 1.0
        %v760 = vadd.f32 %v752, 1.0
        %v761 = vadd.f32 %v753, 1.0
        %v762 = vadd.f32 %v754, 1.0
        %v763 = vadd.f32 %v755, 1.0
        %v764 = vmul.f32 %v756, 0.16666667
        %v765 = vmul.f32 %v757, 0.16666667
        %v766 = vmul.f32 %v758, 0.16666667
        %v767 = vmul.f32 %v759, 0.16666667
        %v768 = vmul.f32 %v760, 0.16666667
        %v769 = vmul.f32 %v761, 0.16666667
        %v770 = vmul.f32 %v762, 0.16666667
        %v771 = vmul.f32 %v763, 0.16666667
        %v772 = vmul.f32 %v620, %v620
        %v773 = vmul.f32 %v621, %v621
        %v774 = vmul.f32 %v622, %v622
        %v775 = vmul.f32 %v623, %v623
        %v776 = vmul.f32 %v624, %v624
        %v777 = vmul.f32 %v625, %v625
        %v778 = vmul.f32 %v626, %v626
        %v779 = vmul.f32 %v627, %v627
        %v780 = vmul.f32 %v772, %v620
        %v781 = vmul.f32 %v773, %v621
        %v782 = vmul.f32 %v774, %v622
        %v783 = vmul.f32 %v775, %v623
        %v784 = vmul.f32 %v776, %v624
        %v785 = vmul.f32 %v777, %v625
        %v786 = vmul.f32 %v778, %v626
        %v787 = vmul.f32 %v779, %v627
        %v788 = vmul.f32 %v780, 0.16666667
        %v789 = vmul.f32 %v781, 0.16666667
        %v790 = vmul.f32 %v782, 0.16666667
        %v791 = vmul.f32 %v783, 0.16666667
        %v792 = vmul.f32 %v784, 0.16666667
        %v793 = vmul.f32 %v785, 0.16666667
        %v794 = vmul.f32 %v786, 0.16666667
        %v795 = vmul.f32 %v787, 0.16666667
        %v796 = vlaneseq
        %v797 = vshrl.u32 %v796, 7
        %v798 = vperm.slane %v628, 0
        %v799 = vperm.slane %v628, 4
        %v800 = vperm.slane %v629, 0
        %v801 = vperm.slane %v629, 4
        %v802 = vperm.slane %v630, 0
        %v803 = vperm.slane %v630, 4
        %v804 = vperm.slane %v631, 0
        %v805 = vperm.slane %v631, 4
        %v806 = vperm.slane %v632, 0
        %v807 = vperm.slane %v632, 4
        %v808 = vperm.slane %v633, 0
        %v809 = vperm.slane %v633, 4
        %v810 = vperm.slane %v634, 0
        %v811 = vperm.slane %v634, 4
        %v812 = vperm.slane %v635, 0
        %v813 = vperm.slane %v635, 4
        %v814 = vperm.slane %v798, 0
        %v815 = vperm.slane %v799, 0
        %v816 = vperm.slane %v800, 0
        %v817 = vperm.slane %v801, 0
        %v818 = vperm.slane %v802, 0
        %v819 = vperm.slane %v803, 0
        %v820 = vperm.slane %v804, 0
        %v821 = vperm.slane %v805, 0
        %v822 = vperm.slane %v806, 0
        %v823 = vperm.slane %v807, 0
        %v824 = vperm.slane %v808, 0
        %v825 = vperm.slane %v809, 0
        %v826 = vperm.slane %v810, 0
        %v827 = vperm.slane %v811, 0
        %v828 = vperm.slane %v812, 0
        %v829 = vperm.slane %v813, 0
        %v830 = vsub.s32 %v797, %v814
        %v831 = vsub.s32 %v797, %v815
        %v832 = vsub.s32 %v797, %v816
        %v833 = vsub.s32 %v797, %v817
        %v834 = vsub.s32 %v797, %v818
        %v835 = vsub.s32 %v797, %v819
        %v836 = vsub.s32 %v797, %v820
        %v837 = vsub.s32 %v797, %v821
        %v838 = vsub.s32 %v797, %v822
        %v839 = vsub.s32 %v797, %v823
        %v840 = vsub.s32 %v797, %v824
        %v841 = vsub.s32 %v797, %v825
        %v842 = vsub.s32 %v797, %v826
        %v843 = vsub.s32 %v797, %v827
        %v844 = vsub.s32 %v797, %v828
        %v845 = vsub.s32 %v797, %v829
        %vm846 = vcmp.eq.s32.totalorder %v830, 0
        %vm847 = vcmp.eq.s32.totalorder %v831, 0
        %vm848 = vcmp.eq.s32.totalorder %v832, 0
        %vm849 = vcmp.eq.s32.totalorder %v833, 0
        %vm850 = vcmp.eq.s32.totalorder %v834, 0
        %vm851 = vcmp.eq.s32.totalorder %v835, 0
        %vm852 = vcmp.eq.s32.totalorder %v836, 0
        %vm853 = vcmp.eq.s32.totalorder %v837, 0
        %vm854 = vcmp.eq.s32.totalorder %v838, 0
        %vm855 = vcmp.eq.s32.totalorder %v839, 0
        %vm856 = vcmp.eq.s32.totalorder %v840, 0
        %vm857 = vcmp.eq.s32.totalorder %v841, 0
        %vm858 = vcmp.eq.s32.totalorder %v842, 0
        %vm859 = vcmp.eq.s32.totalorder %v843, 0
        %vm860 = vcmp.eq.s32.totalorder %v844, 0
        %vm861 = vcmp.eq.s32.totalorder %v845, 0
        %v870 = vperm.slane %v660, 0
        %v871 = vperm.slane %v660, 4
        %v872 = vperm.slane %v661, 0
        %v873 = vperm.slane %v661, 4
        %v874 = vperm.slane %v662, 0
        %v875 = vperm.slane %v662, 4
        %v876 = vperm.slane %v663, 0
        %v877 = vperm.slane %v663, 4
        %v878 = vperm.slane %v664, 0
        %v879 = vperm.slane %v664, 4
        %v880 = vperm.slane %v665, 0
        %v881 = vperm.slane %v665, 4
        %v882 = vperm.slane %v666, 0
        %v883 = vperm.slane %v666, 4
        %v884 = vperm.slane %v667, 0
        %v885 = vperm.slane %v667, 4
        %v902 = vperm.slane %v870, 0
        %v903 = vperm.slane %v871, 0
        %v904 = vperm.slane %v872, 0
        %v905 = vperm.slane %v873, 0
        %v906 = vperm.slane %v874, 0
        %v907 = vperm.slane %v875, 0
        %v908 = vperm.slane %v876, 0
        %v909 = vperm.slane %v877, 0
        %v910 = vperm.slane %v878, 0
        %v911 = vperm.slane %v879, 0
        %v912 = vperm.slane %v880, 0
        %v913 = vperm.slane %v881, 0
        %v914 = vperm.slane %v882, 0
        %v915 = vperm.slane %v883, 0
        %v916 = vperm.slane %v884, 0
        %v917 = vperm.slane %v885, 0
        %v918 = vsel %vm846, %v902, 0.0
        %v919 = vsel %vm847, %v903, 0.0
        %v920 = vsel %vm848, %v904, 0.0
        %v921 = vsel %vm849, %v905, 0.0
        %v922 = vsel %vm850, %v906, 0.0
        %v923 = vsel %vm851, %v907, 0.0
        %v924 = vsel %vm852, %v908, 0.0
        %v925 = vsel %vm853, %v909, 0.0
        %v926 = vsel %vm854, %v910, 0.0
        %v927 = vsel %vm855, %v911, 0.0
        %v928 = vsel %vm856, %v912, 0.0
        %v929 = vsel %vm857, %v913, 0.0
        %v930 = vsel %vm858, %v914, 0.0
        %v931 = vsel %vm859, %v915, 0.0
        %v932 = vsel %vm860, %v916, 0.0
        %v933 = vsel %vm861, %v917, 0.0
        %vm934 = vcmp.eq.s32.totalorder %v830, 1
        %vm935 = vcmp.eq.s32.totalorder %v831, 1
        %vm936 = vcmp.eq.s32.totalorder %v832, 1
        %vm937 = vcmp.eq.s32.totalorder %v833, 1
        %vm938 = vcmp.eq.s32.totalorder %v834, 1
        %vm939 = vcmp.eq.s32.totalorder %v835, 1
        %vm940 = vcmp.eq.s32.totalorder %v836, 1
        %vm941 = vcmp.eq.s32.totalorder %v837, 1
        %vm942 = vcmp.eq.s32.totalorder %v838, 1
        %vm943 = vcmp.eq.s32.totalorder %v839, 1
        %vm944 = vcmp.eq.s32.totalorder %v840, 1
        %vm945 = vcmp.eq.s32.totalorder %v841, 1
        %vm946 = vcmp.eq.s32.totalorder %v842, 1
        %vm947 = vcmp.eq.s32.totalorder %v843, 1
        %vm948 = vcmp.eq.s32.totalorder %v844, 1
        %vm949 = vcmp.eq.s32.totalorder %v845, 1
        %v958 = vperm.slane %v708, 0
        %v959 = vperm.slane %v708, 4
        %v960 = vperm.slane %v709, 0
        %v961 = vperm.slane %v709, 4
        %v962 = vperm.slane %v710, 0
        %v963 = vperm.slane %v710, 4
        %v964 = vperm.slane %v711, 0
        %v965 = vperm.slane %v711, 4
        %v966 = vperm.slane %v712, 0
        %v967 = vperm.slane %v712, 4
        %v968 = vperm.slane %v713, 0
        %v969 = vperm.slane %v713, 4
        %v970 = vperm.slane %v714, 0
        %v971 = vperm.slane %v714, 4
        %v972 = vperm.slane %v715, 0
        %v973 = vperm.slane %v715, 4
        %v990 = vperm.slane %v958, 0
        %v991 = vperm.slane %v959, 0
        %v992 = vperm.slane %v960, 0
        %v993 = vperm.slane %v961, 0
        %v994 = vperm.slane %v962, 0
        %v995 = vperm.slane %v963, 0
        %v996 = vperm.slane %v964, 0
        %v997 = vperm.slane %v965, 0
        %v998 = vperm.slane %v966, 0
        %v999 = vperm.slane %v967, 0
        %v1000 = vperm.slane %v968, 0
        %v1001 = vperm.slane %v969, 0
        %v1002 = vperm.slane %v970, 0
        %v1003 = vperm.slane %v971, 0
        %v1004 = vperm.slane %v972, 0
        %v1005 = vperm.slane %v973, 0
        %v1006 = vsel %vm934, %v990, 0.0
        %v1007 = vsel %vm935, %v991, 0.0
        %v1008 = vsel %vm936, %v992, 0.0
        %v1009 = vsel %vm937, %v993, 0.0
        %v1010 = vsel %vm938, %v994, 0.0
        %v1011 = vsel %vm939, %v995, 0.0
        %v1012 = vsel %vm940, %v996, 0.0
        %v1013 = vsel %vm941, %v997, 0.0
        %v1014 = vsel %vm942, %v998, 0.0
        %v1015 = vsel %vm943, %v999, 0.0
        %v1016 = vsel %vm944, %v1000, 0.0
        %v1017 = vsel %vm945, %v1001, 0.0
        %v1018 = vsel %vm946, %v1002, 0.0
        %v1019 = vsel %vm947, %v1003, 0.0
        %v1020 = vsel %vm948, %v1004, 0.0
        %v1021 = vsel %vm949, %v1005, 0.0
        %v1022 = vadd.f32 %v918, %v1006
        %v1023 = vadd.f32 %v919, %v1007
        %v1024 = vadd.f32 %v920, %v1008
        %v1025 = vadd.f32 %v921, %v1009
        %v1026 = vadd.f32 %v922, %v1010
        %v1027 = vadd.f32 %v923, %v1011
        %v1028 = vadd.f32 %v924, %v1012
        %v1029 = vadd.f32 %v925, %v1013
        %v1030 = vadd.f32 %v926, %v1014
        %v1031 = vadd.f32 %v927, %v1015
        %v1032 = vadd.f32 %v928, %v1016
        %v1033 = vadd.f32 %v929, %v1017
        %v1034 = vadd.f32 %v930, %v1018
        %v1035 = vadd.f32 %v931, %v1019
        %v1036 = vadd.f32 %v932, %v1020
        %v1037 = vadd.f32 %v933, %v1021
        %vm1038 = vcmp.eq.s32.totalorder %v830, 2
        %vm1039 = vcmp.eq.s32.totalorder %v831, 2
        %vm1040 = vcmp.eq.s32.totalorder %v832, 2
        %vm1041 = vcmp.eq.s32.totalorder %v833, 2
        %vm1042 = vcmp.eq.s32.totalorder %v834, 2
        %vm1043 = vcmp.eq.s32.totalorder %v835, 2
        %vm1044 = vcmp.eq.s32.totalorder %v836, 2
        %vm1045 = vcmp.eq.s32.totalorder %v837, 2
        %vm1046 = vcmp.eq.s32.totalorder %v838, 2
        %vm1047 = vcmp.eq.s32.totalorder %v839, 2
        %vm1048 = vcmp.eq.s32.totalorder %v840, 2
        %vm1049 = vcmp.eq.s32.totalorder %v841, 2
        %vm1050 = vcmp.eq.s32.totalorder %v842, 2
        %vm1051 = vcmp.eq.s32.totalorder %v843, 2
        %vm1052 = vcmp.eq.s32.totalorder %v844, 2
        %vm1053 = vcmp.eq.s32.totalorder %v845, 2
        %v1062 = vperm.slane %v764, 0
        %v1063 = vperm.slane %v764, 4
        %v1064 = vperm.slane %v765, 0
        %v1065 = vperm.slane %v765, 4
        %v1066 = vperm.slane %v766, 0
        %v1067 = vperm.slane %v766, 4
        %v1068 = vperm.slane %v767, 0
        %v1069 = vperm.slane %v767, 4
        %v1070 = vperm.slane %v768, 0
        %v1071 = vperm.slane %v768, 4
        %v1072 = vperm.slane %v769, 0
        %v1073 = vperm.slane %v769, 4
        %v1074 = vperm.slane %v770, 0
        %v1075 = vperm.slane %v770, 4
        %v1076 = vperm.slane %v771, 0
        %v1077 = vperm.slane %v771, 4
        %v1094 = vperm.slane %v1062, 0
        %v1095 = vperm.slane %v1063, 0
        %v1096 = vperm.slane %v1064, 0
        %v1097 = vperm.slane %v1065, 0
        %v1098 = vperm.slane %v1066, 0
        %v1099 = vperm.slane %v1067, 0
        %v1100 = vperm.slane %v1068, 0
        %v1101 = vperm.slane %v1069, 0
        %v1102 = vperm.slane %v1070, 0
        %v1103 = vperm.slane %v1071, 0
        %v1104 = vperm.slane %v1072, 0
        %v1105 = vperm.slane %v1073, 0
        %v1106 = vperm.slane %v1074, 0
        %v1107 = vperm.slane %v1075, 0
        %v1108 = vperm.slane %v1076, 0
        %v1109 = vperm.slane %v1077, 0
        %v1110 = vsel %vm1038, %v1094, 0.0
        %v1111 = vsel %vm1039, %v1095, 0.0
        %v1112 = vsel %vm1040, %v1096, 0.0
        %v1113 = vsel %vm1041, %v1097, 0.0
        %v1114 = vsel %vm1042, %v1098, 0.0
        %v1115 = vsel %vm1043, %v1099, 0.0
        %v1116 = vsel %vm1044, %v1100, 0.0
        %v1117 = vsel %vm1045, %v1101, 0.0
        %v1118 = vsel %vm1046, %v1102, 0.0
        %v1119 = vsel %vm1047, %v1103, 0.0
        %v1120 = vsel %vm1048, %v1104, 0.0
        %v1121 = vsel %vm1049, %v1105, 0.0
        %v1122 = vsel %vm1050, %v1106, 0.0
        %v1123 = vsel %vm1051, %v1107, 0.0
        %v1124 = vsel %vm1052, %v1108, 0.0
        %v1125 = vsel %vm1053, %v1109, 0.0
        %v1126 = vadd.f32 %v1022, %v1110
        %v1127 = vadd.f32 %v1023, %v1111
        %v1128 = vadd.f32 %v1024, %v1112
        %v1129 = vadd.f32 %v1025, %v1113
        %v1130 = vadd.f32 %v1026, %v1114
        %v1131 = vadd.f32 %v1027, %v1115
        %v1132 = vadd.f32 %v1028, %v1116
        %v1133 = vadd.f32 %v1029, %v1117
        %v1134 = vadd.f32 %v1030, %v1118
        %v1135 = vadd.f32 %v1031, %v1119
        %v1136 = vadd.f32 %v1032, %v1120
        %v1137 = vadd.f32 %v1033, %v1121
        %v1138 = vadd.f32 %v1034, %v1122
        %v1139 = vadd.f32 %v1035, %v1123
        %v1140 = vadd.f32 %v1036, %v1124
        %v1141 = vadd.f32 %v1037, %v1125
        %vm1142 = vcmp.eq.s32.totalorder %v830, 3
        %vm1143 = vcmp.eq.s32.totalorder %v831, 3
        %vm1144 = vcmp.eq.s32.totalorder %v832, 3
        %vm1145 = vcmp.eq.s32.totalorder %v833, 3
        %vm1146 = vcmp.eq.s32.totalorder %v834, 3
        %vm1147 = vcmp.eq.s32.totalorder %v835, 3
        %vm1148 = vcmp.eq.s32.totalorder %v836, 3
        %vm1149 = vcmp.eq.s32.totalorder %v837, 3
        %vm1150 = vcmp.eq.s32.totalorder %v838, 3
        %vm1151 = vcmp.eq.s32.totalorder %v839, 3
        %vm1152 = vcmp.eq.s32.totalorder %v840, 3
        %vm1153 = vcmp.eq.s32.totalorder %v841, 3
        %vm1154 = vcmp.eq.s32.totalorder %v842, 3
        %vm1155 = vcmp.eq.s32.totalorder %v843, 3
        %vm1156 = vcmp.eq.s32.totalorder %v844, 3
        %vm1157 = vcmp.eq.s32.totalorder %v845, 3
        %v1166 = vperm.slane %v788, 0
        %v1167 = vperm.slane %v788, 4
        %v1168 = vperm.slane %v789, 0
        %v1169 = vperm.slane %v789, 4
        %v1170 = vperm.slane %v790, 0
        %v1171 = vperm.slane %v790, 4
        %v1172 = vperm.slane %v791, 0
        %v1173 = vperm.slane %v791, 4
        %v1174 = vperm.slane %v792, 0
        %v1175 = vperm.slane %v792, 4
        %v1176 = vperm.slane %v793, 0
        %v1177 = vperm.slane %v793, 4
        %v1178 = vperm.slane %v794, 0
        %v1179 = vperm.slane %v794, 4
        %v1180 = vperm.slane %v795, 0
        %v1181 = vperm.slane %v795, 4
        %v1198 = vperm.slane %v1166, 0
        %v1199 = vperm.slane %v1167, 0
        %v1200 = vperm.slane %v1168, 0
        %v1201 = vperm.slane %v1169, 0
        %v1202 = vperm.slane %v1170, 0
        %v1203 = vperm.slane %v1171, 0
        %v1204 = vperm.slane %v1172, 0
        %v1205 = vperm.slane %v1173, 0
        %v1206 = vperm.slane %v1174, 0
        %v1207 = vperm.slane %v1175, 0
        %v1208 = vperm.slane %v1176, 0
        %v1209 = vperm.slane %v1177, 0
        %v1210 = vperm.slane %v1178, 0
        %v1211 = vperm.slane %v1179, 0
        %v1212 = vperm.slane %v1180, 0
        %v1213 = vperm.slane %v1181, 0
        %v1214 = vsel %vm1142, %v1198, 0.0
        %v1215 = vsel %vm1143, %v1199, 0.0
        %v1216 = vsel %vm1144, %v1200, 0.0
        %v1217 = vsel %vm1145, %v1201, 0.0
        %v1218 = vsel %vm1146, %v1202, 0.0
        %v1219 = vsel %vm1147, %v1203, 0.0
        %v1220 = vsel %vm1148, %v1204, 0.0
        %v1221 = vsel %vm1149, %v1205, 0.0
        %v1222 = vsel %vm1150, %v1206, 0.0
        %v1223 = vsel %vm1151, %v1207, 0.0
        %v1224 = vsel %vm1152, %v1208, 0.0
        %v1225 = vsel %vm1153, %v1209, 0.0
        %v1226 = vsel %vm1154, %v1210, 0.0
        %v1227 = vsel %vm1155, %v1211, 0.0
        %v1228 = vsel %vm1156, %v1212, 0.0
        %v1229 = vsel %vm1157, %v1213, 0.0
        %v1230 = vadd.f32 %v1126, %v1214
        %v1231 = vadd.f32 %v1127, %v1215
        %v1232 = vadd.f32 %v1128, %v1216
        %v1233 = vadd.f32 %v1129, %v1217
        %v1234 = vadd.f32 %v1130, %v1218
        %v1235 = vadd.f32 %v1131, %v1219
        %v1236 = vadd.f32 %v1132, %v1220
        %v1237 = vadd.f32 %v1133, %v1221
        %v1238 = vadd.f32 %v1134, %v1222
        %v1239 = vadd.f32 %v1135, %v1223
        %v1240 = vadd.f32 %v1136, %v1224
        %v1241 = vadd.f32 %v1137, %v1225
        %v1242 = vadd.f32 %v1138, %v1226
        %v1243 = vadd.f32 %v1139, %v1227
        %v1244 = vadd.f32 %v1140, %v1228
        %v1245 = vadd.f32 %v1141, %v1229
        %v1246 = vperm.slane %v628, 1
        %v1247 = vperm.slane %v628, 5
        %v1248 = vperm.slane %v629, 1
        %v1249 = vperm.slane %v629, 5
        %v1250 = vperm.slane %v630, 1
        %v1251 = vperm.slane %v630, 5
        %v1252 = vperm.slane %v631, 1
        %v1253 = vperm.slane %v631, 5
        %v1254 = vperm.slane %v632, 1
        %v1255 = vperm.slane %v632, 5
        %v1256 = vperm.slane %v633, 1
        %v1257 = vperm.slane %v633, 5
        %v1258 = vperm.slane %v634, 1
        %v1259 = vperm.slane %v634, 5
        %v1260 = vperm.slane %v635, 1
        %v1261 = vperm.slane %v635, 5
        %v1262 = vperm.slane %v1246, 1
        %v1263 = vperm.slane %v1247, 1
        %v1264 = vperm.slane %v1248, 1
        %v1265 = vperm.slane %v1249, 1
        %v1266 = vperm.slane %v1250, 1
        %v1267 = vperm.slane %v1251, 1
        %v1268 = vperm.slane %v1252, 1
        %v1269 = vperm.slane %v1253, 1
        %v1270 = vperm.slane %v1254, 1
        %v1271 = vperm.slane %v1255, 1
        %v1272 = vperm.slane %v1256, 1
        %v1273 = vperm.slane %v1257, 1
        %v1274 = vperm.slane %v1258, 1
        %v1275 = vperm.slane %v1259, 1
        %v1276 = vperm.slane %v1260, 1
        %v1277 = vperm.slane %v1261, 1
        %v1278 = vsub.s32 %v797, %v1262
        %v1279 = vsub.s32 %v797, %v1263
        %v1280 = vsub.s32 %v797, %v1264
        %v1281 = vsub.s32 %v797, %v1265
        %v1282 = vsub.s32 %v797, %v1266
        %v1283 = vsub.s32 %v797, %v1267
        %v1284 = vsub.s32 %v797, %v1268
        %v1285 = vsub.s32 %v797, %v1269
        %v1286 = vsub.s32 %v797, %v1270
        %v1287 = vsub.s32 %v797, %v1271
        %v1288 = vsub.s32 %v797, %v1272
        %v1289 = vsub.s32 %v797, %v1273
        %v1290 = vsub.s32 %v797, %v1274
        %v1291 = vsub.s32 %v797, %v1275
        %v1292 = vsub.s32 %v797, %v1276
        %v1293 = vsub.s32 %v797, %v1277
        %vm1294 = vcmp.eq.s32.totalorder %v1278, 0
        %vm1295 = vcmp.eq.s32.totalorder %v1279, 0
        %vm1296 = vcmp.eq.s32.totalorder %v1280, 0
        %vm1297 = vcmp.eq.s32.totalorder %v1281, 0
        %vm1298 = vcmp.eq.s32.totalorder %v1282, 0
        %vm1299 = vcmp.eq.s32.totalorder %v1283, 0
        %vm1300 = vcmp.eq.s32.totalorder %v1284, 0
        %vm1301 = vcmp.eq.s32.totalorder %v1285, 0
        %vm1302 = vcmp.eq.s32.totalorder %v1286, 0
        %vm1303 = vcmp.eq.s32.totalorder %v1287, 0
        %vm1304 = vcmp.eq.s32.totalorder %v1288, 0
        %vm1305 = vcmp.eq.s32.totalorder %v1289, 0
        %vm1306 = vcmp.eq.s32.totalorder %v1290, 0
        %vm1307 = vcmp.eq.s32.totalorder %v1291, 0
        %vm1308 = vcmp.eq.s32.totalorder %v1292, 0
        %vm1309 = vcmp.eq.s32.totalorder %v1293, 0
        %v1310 = vperm.slane %v660, 1
        %v1311 = vperm.slane %v660, 5
        %v1312 = vperm.slane %v661, 1
        %v1313 = vperm.slane %v661, 5
        %v1314 = vperm.slane %v662, 1
        %v1315 = vperm.slane %v662, 5
        %v1316 = vperm.slane %v663, 1
        %v1317 = vperm.slane %v663, 5
        %v1318 = vperm.slane %v664, 1
        %v1319 = vperm.slane %v664, 5
        %v1320 = vperm.slane %v665, 1
        %v1321 = vperm.slane %v665, 5
        %v1322 = vperm.slane %v666, 1
        %v1323 = vperm.slane %v666, 5
        %v1324 = vperm.slane %v667, 1
        %v1325 = vperm.slane %v667, 5
        %v1342 = vperm.slane %v1310, 1
        %v1343 = vperm.slane %v1311, 1
        %v1344 = vperm.slane %v1312, 1
        %v1345 = vperm.slane %v1313, 1
        %v1346 = vperm.slane %v1314, 1
        %v1347 = vperm.slane %v1315, 1
        %v1348 = vperm.slane %v1316, 1
        %v1349 = vperm.slane %v1317, 1
        %v1350 = vperm.slane %v1318, 1
        %v1351 = vperm.slane %v1319, 1
        %v1352 = vperm.slane %v1320, 1
        %v1353 = vperm.slane %v1321, 1
        %v1354 = vperm.slane %v1322, 1
        %v1355 = vperm.slane %v1323, 1
        %v1356 = vperm.slane %v1324, 1
        %v1357 = vperm.slane %v1325, 1
        %v1358 = vsel %vm1294, %v1342, 0.0
        %v1359 = vsel %vm1295, %v1343, 0.0
        %v1360 = vsel %vm1296, %v1344, 0.0
        %v1361 = vsel %vm1297, %v1345, 0.0
        %v1362 = vsel %vm1298, %v1346, 0.0
        %v1363 = vsel %vm1299, %v1347, 0.0
        %v1364 = vsel %vm1300, %v1348, 0.0
        %v1365 = vsel %vm1301, %v1349, 0.0
        %v1366 = vsel %vm1302, %v1350, 0.0
        %v1367 = vsel %vm1303, %v1351, 0.0
        %v1368 = vsel %vm1304, %v1352, 0.0
        %v1369 = vsel %vm1305, %v1353, 0.0
        %v1370 = vsel %vm1306, %v1354, 0.0
        %v1371 = vsel %vm1307, %v1355, 0.0
        %v1372 = vsel %vm1308, %v1356, 0.0
        %v1373 = vsel %vm1309, %v1357, 0.0
        %vm1374 = vcmp.eq.s32.totalorder %v1278, 1
        %vm1375 = vcmp.eq.s32.totalorder %v1279, 1
        %vm1376 = vcmp.eq.s32.totalorder %v1280, 1
        %vm1377 = vcmp.eq.s32.totalorder %v1281, 1
        %vm1378 = vcmp.eq.s32.totalorder %v1282, 1
        %vm1379 = vcmp.eq.s32.totalorder %v1283, 1
        %vm1380 = vcmp.eq.s32.totalorder %v1284, 1
        %vm1381 = vcmp.eq.s32.totalorder %v1285, 1
        %vm1382 = vcmp.eq.s32.totalorder %v1286, 1
        %vm1383 = vcmp.eq.s32.totalorder %v1287, 1
        %vm1384 = vcmp.eq.s32.totalorder %v1288, 1
        %vm1385 = vcmp.eq.s32.totalorder %v1289, 1
        %vm1386 = vcmp.eq.s32.totalorder %v1290, 1
        %vm1387 = vcmp.eq.s32.totalorder %v1291, 1
        %vm1388 = vcmp.eq.s32.totalorder %v1292, 1
        %vm1389 = vcmp.eq.s32.totalorder %v1293, 1
        %v1390 = vperm.slane %v708, 1
        %v1391 = vperm.slane %v708, 5
        %v1392 = vperm.slane %v709, 1
        %v1393 = vperm.slane %v709, 5
        %v1394 = vperm.slane %v710, 1
        %v1395 = vperm.slane %v710, 5
        %v1396 = vperm.slane %v711, 1
        %v1397 = vperm.slane %v711, 5
        %v1398 = vperm.slane %v712, 1
        %v1399 = vperm.slane %v712, 5
        %v1400 = vperm.slane %v713, 1
        %v1401 = vperm.slane %v713, 5
        %v1402 = vperm.slane %v714, 1
        %v1403 = vperm.slane %v714, 5
        %v1404 = vperm.slane %v715, 1
        %v1405 = vperm.slane %v715, 5
        %v1422 = vperm.slane %v1390, 1
        %v1423 = vperm.slane %v1391, 1
        %v1424 = vperm.slane %v1392, 1
        %v1425 = vperm.slane %v1393, 1
        %v1426 = vperm.slane %v1394, 1
        %v1427 = vperm.slane %v1395, 1
        %v1428 = vperm.slane %v1396, 1
        %v1429 = vperm.slane %v1397, 1
        %v1430 = vperm.slane %v1398, 1
        %v1431 = vperm.slane %v1399, 1
        %v1432 = vperm.slane %v1400, 1
        %v1433 = vperm.slane %v1401, 1
        %v1434 = vperm.slane %v1402, 1
        %v1435 = vperm.slane %v1403, 1
        %v1436 = vperm.slane %v1404, 1
        %v1437 = vperm.slane %v1405, 1
        %v1438 = vsel %vm1374, %v1422, 0.0
        %v1439 = vsel %vm1375, %v1423, 0.0
        %v1440 = vsel %vm1376, %v1424, 0.0
        %v1441 = vsel %vm1377, %v1425, 0.0
        %v1442 = vsel %vm1378, %v1426, 0.0
        %v1443 = vsel %vm1379, %v1427, 0.0
        %v1444 = vsel %vm1380, %v1428, 0.0
        %v1445 = vsel %vm1381, %v1429, 0.0
        %v1446 = vsel %vm1382, %v1430, 0.0
        %v1447 = vsel %vm1383, %v1431, 0.0
        %v1448 = vsel %vm1384, %v1432, 0.0
        %v1449 = vsel %vm1385, %v1433, 0.0
        %v1450 = vsel %vm1386, %v1434, 0.0
        %v1451 = vsel %vm1387, %v1435, 0.0
        %v1452 = vsel %vm1388, %v1436, 0.0
        %v1453 = vsel %vm1389, %v1437, 0.0
        %v1454 = vadd.f32 %v1358, %v1438
        %v1455 = vadd.f32 %v1359, %v1439
        %v1456 = vadd.f32 %v1360, %v1440
        %v1457 = vadd.f32 %v1361, %v1441
        %v1458 = vadd.f32 %v1362, %v1442
        %v1459 = vadd.f32 %v1363, %v1443
        %v1460 = vadd.f32 %v1364, %v1444
        %v1461 = vadd.f32 %v1365, %v1445
        %v1462 = vadd.f32 %v1366, %v1446
        %v1463 = vadd.f32 %v1367, %v1447
        %v1464 = vadd.f32 %v1368, %v1448
        %v1465 = vadd.f32 %v1369, %v1449
        %v1466 = vadd.f32 %v1370, %v1450
        %v1467 = vadd.f32 %v1371, %v1451
        %v1468 = vadd.f32 %v1372, %v1452
        %v1469 = vadd.f32 %v1373, %v1453
        %vm1470 = vcmp.eq.s32.totalorder %v1278, 2
        %vm1471 = vcmp.eq.s32.totalorder %v1279, 2
        %vm1472 = vcmp.eq.s32.totalorder %v1280, 2
        %vm1473 = vcmp.eq.s32.totalorder %v1281, 2
        %vm1474 = vcmp.eq.s32.totalorder %v1282, 2
        %vm1475 = vcmp.eq.s32.totalorder %v1283, 2
        %vm1476 = vcmp.eq.s32.totalorder %v1284, 2
        %vm1477 = vcmp.eq.s32.totalorder %v1285, 2
        %vm1478 = vcmp.eq.s32.totalorder %v1286, 2
        %vm1479 = vcmp.eq.s32.totalorder %v1287, 2
        %vm1480 = vcmp.eq.s32.totalorder %v1288, 2
        %vm1481 = vcmp.eq.s32.totalorder %v1289, 2
        %vm1482 = vcmp.eq.s32.totalorder %v1290, 2
        %vm1483 = vcmp.eq.s32.totalorder %v1291, 2
        %vm1484 = vcmp.eq.s32.totalorder %v1292, 2
        %vm1485 = vcmp.eq.s32.totalorder %v1293, 2
        %v1486 = vperm.slane %v764, 1
        %v1487 = vperm.slane %v764, 5
        %v1488 = vperm.slane %v765, 1
        %v1489 = vperm.slane %v765, 5
        %v1490 = vperm.slane %v766, 1
        %v1491 = vperm.slane %v766, 5
        %v1492 = vperm.slane %v767, 1
        %v1493 = vperm.slane %v767, 5
        %v1494 = vperm.slane %v768, 1
        %v1495 = vperm.slane %v768, 5
        %v1496 = vperm.slane %v769, 1
        %v1497 = vperm.slane %v769, 5
        %v1498 = vperm.slane %v770, 1
        %v1499 = vperm.slane %v770, 5
        %v1500 = vperm.slane %v771, 1
        %v1501 = vperm.slane %v771, 5
        %v1518 = vperm.slane %v1486, 1
        %v1519 = vperm.slane %v1487, 1
        %v1520 = vperm.slane %v1488, 1
        %v1521 = vperm.slane %v1489, 1
        %v1522 = vperm.slane %v1490, 1
        %v1523 = vperm.slane %v1491, 1
        %v1524 = vperm.slane %v1492, 1
        %v1525 = vperm.slane %v1493, 1
        %v1526 = vperm.slane %v1494, 1
        %v1527 = vperm.slane %v1495, 1
        %v1528 = vperm.slane %v1496, 1
        %v1529 = vperm.slane %v1497, 1
        %v1530 = vperm.slane %v1498, 1
        %v1531 = vperm.slane %v1499, 1
        %v1532 = vperm.slane %v1500, 1
        %v1533 = vperm.slane %v1501, 1
        %v1534 = vsel %vm1470, %v1518, 0.0
        %v1535 = vsel %vm1471, %v1519, 0.0
        %v1536 = vsel %vm1472, %v1520, 0.0
        %v1537 = vsel %vm1473, %v1521, 0.0
        %v1538 = vsel %vm1474, %v1522, 0.0
        %v1539 = vsel %vm1475, %v1523, 0.0
        %v1540 = vsel %vm1476, %v1524, 0.0
        %v1541 = vsel %vm1477, %v1525, 0.0
        %v1542 = vsel %vm1478, %v1526, 0.0
        %v1543 = vsel %vm1479, %v1527, 0.0
        %v1544 = vsel %vm1480, %v1528, 0.0
        %v1545 = vsel %vm1481, %v1529, 0.0
        %v1546 = vsel %vm1482, %v1530, 0.0
        %v1547 = vsel %vm1483, %v1531, 0.0
        %v1548 = vsel %vm1484, %v1532, 0.0
        %v1549 = vsel %vm1485, %v1533, 0.0
        %v1550 = vadd.f32 %v1454, %v1534
        %v1551 = vadd.f32 %v1455, %v1535
        %v1552 = vadd.f32 %v1456, %v1536
        %v1553 = vadd.f32 %v1457, %v1537
        %v1554 = vadd.f32 %v1458, %v1538
        %v1555 = vadd.f32 %v1459, %v1539
        %v1556 = vadd.f32 %v1460, %v1540
        %v1557 = vadd.f32 %v1461, %v1541
        %v1558 = vadd.f32 %v1462, %v1542
        %v1559 = vadd.f32 %v1463, %v1543
        %v1560 = vadd.f32 %v1464, %v1544
        %v1561 = vadd.f32 %v1465, %v1545
        %v1562 = vadd.f32 %v1466, %v1546
        %v1563 = vadd.f32 %v1467, %v1547
        %v1564 = vadd.f32 %v1468, %v1548
        %v1565 = vadd.f32 %v1469, %v1549
        %vm1566 = vcmp.eq.s32.totalorder %v1278, 3
        %vm1567 = vcmp.eq.s32.totalorder %v1279, 3
        %vm1568 = vcmp.eq.s32.totalorder %v1280, 3
        %vm1569 = vcmp.eq.s32.totalorder %v1281, 3
        %vm1570 = vcmp.eq.s32.totalorder %v1282, 3
        %vm1571 = vcmp.eq.s32.totalorder %v1283, 3
        %vm1572 = vcmp.eq.s32.totalorder %v1284, 3
        %vm1573 = vcmp.eq.s32.totalorder %v1285, 3
        %vm1574 = vcmp.eq.s32.totalorder %v1286, 3
        %vm1575 = vcmp.eq.s32.totalorder %v1287, 3
        %vm1576 = vcmp.eq.s32.totalorder %v1288, 3
        %vm1577 = vcmp.eq.s32.totalorder %v1289, 3
        %vm1578 = vcmp.eq.s32.totalorder %v1290, 3
        %vm1579 = vcmp.eq.s32.totalorder %v1291, 3
        %vm1580 = vcmp.eq.s32.totalorder %v1292, 3
        %vm1581 = vcmp.eq.s32.totalorder %v1293, 3
        %v1582 = vperm.slane %v788, 1
        %v1583 = vperm.slane %v788, 5
        %v1584 = vperm.slane %v789, 1
        %v1585 = vperm.slane %v789, 5
        %v1586 = vperm.slane %v790, 1
        %v1587 = vperm.slane %v790, 5
        %v1588 = vperm.slane %v791, 1
        %v1589 = vperm.slane %v791, 5
        %v1590 = vperm.slane %v792, 1
        %v1591 = vperm.slane %v792, 5
        %v1592 = vperm.slane %v793, 1
        %v1593 = vperm.slane %v793, 5
        %v1594 = vperm.slane %v794, 1
        %v1595 = vperm.slane %v794, 5
        %v1596 = vperm.slane %v795, 1
        %v1597 = vperm.slane %v795, 5
        %v1614 = vperm.slane %v1582, 1
        %v1615 = vperm.slane %v1583, 1
        %v1616 = vperm.slane %v1584, 1
        %v1617 = vperm.slane %v1585, 1
        %v1618 = vperm.slane %v1586, 1
        %v1619 = vperm.slane %v1587, 1
        %v1620 = vperm.slane %v1588, 1
        %v1621 = vperm.slane %v1589, 1
        %v1622 = vperm.slane %v1590, 1
        %v1623 = vperm.slane %v1591, 1
        %v1624 = vperm.slane %v1592, 1
        %v1625 = vperm.slane %v1593, 1
        %v1626 = vperm.slane %v1594, 1
        %v1627 = vperm.slane %v1595, 1
        %v1628 = vperm.slane %v1596, 1
        %v1629 = vperm.slane %v1597, 1
        %v1630 = vsel %vm1566, %v1614, 0.0
        %v1631 = vsel %vm1567, %v1615, 0.0
        %v1632 = vsel %vm1568, %v1616, 0.0
        %v1633 = vsel %vm1569, %v1617, 0.0
        %v1634 = vsel %vm1570, %v1618, 0.0
        %v1635 = vsel %vm1571, %v1619, 0.0
        %v1636 = vsel %vm1572, %v1620, 0.0
        %v1637 = vsel %vm1573, %v1621, 0.0
        %v1638 = vsel %vm1574, %v1622, 0.0
        %v1639 = vsel %vm1575, %v1623, 0.0
        %v1640 = vsel %vm1576, %v1624, 0.0
        %v1641 = vsel %vm1577, %v1625, 0.0
        %v1642 = vsel %vm1578, %v1626, 0.0
        %v1643 = vsel %vm1579, %v1627, 0.0
        %v1644 = vsel %vm1580, %v1628, 0.0
        %v1645 = vsel %vm1581, %v1629, 0.0
        %v1646 = vadd.f32 %v1550, %v1630
        %v1647 = vadd.f32 %v1551, %v1631
        %v1648 = vadd.f32 %v1552, %v1632
        %v1649 = vadd.f32 %v1553, %v1633
        %v1650 = vadd.f32 %v1554, %v1634
        %v1651 = vadd.f32 %v1555, %v1635
        %v1652 = vadd.f32 %v1556, %v1636
        %v1653 = vadd.f32 %v1557, %v1637
        %v1654 = vadd.f32 %v1558, %v1638
        %v1655 = vadd.f32 %v1559, %v1639
        %v1656 = vadd.f32 %v1560, %v1640
        %v1657 = vadd.f32 %v1561, %v1641
        %v1658 = vadd.f32 %v1562, %v1642
        %v1659 = vadd.f32 %v1563, %v1643
        %v1660 = vadd.f32 %v1564, %v1644
        %v1661 = vadd.f32 %v1565, %v1645
        %v1662 = vpack.c.bf16 %v1646, %v1646
        %v1663 = vpack.c.bf16 %v1647, %v1647
        %v1664 = vpack.c.bf16 %v1648, %v1648
        %v1665 = vpack.c.bf16 %v1649, %v1649
        %v1666 = vpack.c.bf16 %v1650, %v1650
        %v1667 = vpack.c.bf16 %v1651, %v1651
        %v1668 = vpack.c.bf16 %v1652, %v1652
        %v1669 = vpack.c.bf16 %v1653, %v1653
        %v1670 = vpack.c.bf16 %v1654, %v1654
        %v1671 = vpack.c.bf16 %v1655, %v1655
        %v1672 = vpack.c.bf16 %v1656, %v1656
        %v1673 = vpack.c.bf16 %v1657, %v1657
        %v1674 = vpack.c.bf16 %v1658, %v1658
        %v1675 = vpack.c.bf16 %v1659, %v1659
        %v1676 = vpack.c.bf16 %v1660, %v1660
        %v1677 = vpack.c.bf16 %v1661, %v1661
        %v1678 = vperm.slane %v628, 2
        %v1679 = vperm.slane %v628, 6
        %v1680 = vperm.slane %v629, 2
        %v1681 = vperm.slane %v629, 6
        %v1682 = vperm.slane %v630, 2
        %v1683 = vperm.slane %v630, 6
        %v1684 = vperm.slane %v631, 2
        %v1685 = vperm.slane %v631, 6
        %v1686 = vperm.slane %v632, 2
        %v1687 = vperm.slane %v632, 6
        %v1688 = vperm.slane %v633, 2
        %v1689 = vperm.slane %v633, 6
        %v1690 = vperm.slane %v634, 2
        %v1691 = vperm.slane %v634, 6
        %v1692 = vperm.slane %v635, 2
        %v1693 = vperm.slane %v635, 6
        %v1694 = vperm.slane %v1678, 2
        %v1695 = vperm.slane %v1679, 2
        %v1696 = vperm.slane %v1680, 2
        %v1697 = vperm.slane %v1681, 2
        %v1698 = vperm.slane %v1682, 2
        %v1699 = vperm.slane %v1683, 2
        %v1700 = vperm.slane %v1684, 2
        %v1701 = vperm.slane %v1685, 2
        %v1702 = vperm.slane %v1686, 2
        %v1703 = vperm.slane %v1687, 2
        %v1704 = vperm.slane %v1688, 2
        %v1705 = vperm.slane %v1689, 2
        %v1706 = vperm.slane %v1690, 2
        %v1707 = vperm.slane %v1691, 2
        %v1708 = vperm.slane %v1692, 2
        %v1709 = vperm.slane %v1693, 2
        %v1710 = vsub.s32 %v797, %v1694
        %v1711 = vsub.s32 %v797, %v1695
        %v1712 = vsub.s32 %v797, %v1696
        %v1713 = vsub.s32 %v797, %v1697
        %v1714 = vsub.s32 %v797, %v1698
        %v1715 = vsub.s32 %v797, %v1699
        %v1716 = vsub.s32 %v797, %v1700
        %v1717 = vsub.s32 %v797, %v1701
        %v1718 = vsub.s32 %v797, %v1702
        %v1719 = vsub.s32 %v797, %v1703
        %v1720 = vsub.s32 %v797, %v1704
        %v1721 = vsub.s32 %v797, %v1705
        %v1722 = vsub.s32 %v797, %v1706
        %v1723 = vsub.s32 %v797, %v1707
        %v1724 = vsub.s32 %v797, %v1708
        %v1725 = vsub.s32 %v797, %v1709
        %vm1726 = vcmp.eq.s32.totalorder %v1710, 0
        %vm1727 = vcmp.eq.s32.totalorder %v1711, 0
        %vm1728 = vcmp.eq.s32.totalorder %v1712, 0
        %vm1729 = vcmp.eq.s32.totalorder %v1713, 0
        %vm1730 = vcmp.eq.s32.totalorder %v1714, 0
        %vm1731 = vcmp.eq.s32.totalorder %v1715, 0
        %vm1732 = vcmp.eq.s32.totalorder %v1716, 0
        %vm1733 = vcmp.eq.s32.totalorder %v1717, 0
        %vm1734 = vcmp.eq.s32.totalorder %v1718, 0
        %vm1735 = vcmp.eq.s32.totalorder %v1719, 0
        %vm1736 = vcmp.eq.s32.totalorder %v1720, 0
        %vm1737 = vcmp.eq.s32.totalorder %v1721, 0
        %vm1738 = vcmp.eq.s32.totalorder %v1722, 0
        %vm1739 = vcmp.eq.s32.totalorder %v1723, 0
        %vm1740 = vcmp.eq.s32.totalorder %v1724, 0
        %vm1741 = vcmp.eq.s32.totalorder %v1725, 0
        %v1742 = vperm.slane %v660, 2
        %v1743 = vperm.slane %v660, 6
        %v1744 = vperm.slane %v661, 2
        %v1745 = vperm.slane %v661, 6
        %v1746 = vperm.slane %v662, 2
        %v1747 = vperm.slane %v662, 6
        %v1748 = vperm.slane %v663, 2
        %v1749 = vperm.slane %v663, 6
        %v1750 = vperm.slane %v664, 2
        %v1751 = vperm.slane %v664, 6
        %v1752 = vperm.slane %v665, 2
        %v1753 = vperm.slane %v665, 6
        %v1754 = vperm.slane %v666, 2
        %v1755 = vperm.slane %v666, 6
        %v1756 = vperm.slane %v667, 2
        %v1757 = vperm.slane %v667, 6
        %v1774 = vperm.slane %v1742, 2
        %v1775 = vperm.slane %v1743, 2
        %v1776 = vperm.slane %v1744, 2
        %v1777 = vperm.slane %v1745, 2
        %v1778 = vperm.slane %v1746, 2
        %v1779 = vperm.slane %v1747, 2
        %v1780 = vperm.slane %v1748, 2
        %v1781 = vperm.slane %v1749, 2
        %v1782 = vperm.slane %v1750, 2
        %v1783 = vperm.slane %v1751, 2
        %v1784 = vperm.slane %v1752, 2
        %v1785 = vperm.slane %v1753, 2
        %v1786 = vperm.slane %v1754, 2
        %v1787 = vperm.slane %v1755, 2
        %v1788 = vperm.slane %v1756, 2
        %v1789 = vperm.slane %v1757, 2
        %v1790 = vsel %vm1726, %v1774, 0.0
        %v1791 = vsel %vm1727, %v1775, 0.0
        %v1792 = vsel %vm1728, %v1776, 0.0
        %v1793 = vsel %vm1729, %v1777, 0.0
        %v1794 = vsel %vm1730, %v1778, 0.0
        %v1795 = vsel %vm1731, %v1779, 0.0
        %v1796 = vsel %vm1732, %v1780, 0.0
        %v1797 = vsel %vm1733, %v1781, 0.0
        %v1798 = vsel %vm1734, %v1782, 0.0
        %v1799 = vsel %vm1735, %v1783, 0.0
        %v1800 = vsel %vm1736, %v1784, 0.0
        %v1801 = vsel %vm1737, %v1785, 0.0
        %v1802 = vsel %vm1738, %v1786, 0.0
        %v1803 = vsel %vm1739, %v1787, 0.0
        %v1804 = vsel %vm1740, %v1788, 0.0
        %v1805 = vsel %vm1741, %v1789, 0.0
        %vm1806 = vcmp.eq.s32.totalorder %v1710, 1
        %vm1807 = vcmp.eq.s32.totalorder %v1711, 1
        %vm1808 = vcmp.eq.s32.totalorder %v1712, 1
        %vm1809 = vcmp.eq.s32.totalorder %v1713, 1
        %vm1810 = vcmp.eq.s32.totalorder %v1714, 1
        %vm1811 = vcmp.eq.s32.totalorder %v1715, 1
        %vm1812 = vcmp.eq.s32.totalorder %v1716, 1
        %vm1813 = vcmp.eq.s32.totalorder %v1717, 1
        %vm1814 = vcmp.eq.s32.totalorder %v1718, 1
        %vm1815 = vcmp.eq.s32.totalorder %v1719, 1
        %vm1816 = vcmp.eq.s32.totalorder %v1720, 1
        %vm1817 = vcmp.eq.s32.totalorder %v1721, 1
        %vm1818 = vcmp.eq.s32.totalorder %v1722, 1
        %vm1819 = vcmp.eq.s32.totalorder %v1723, 1
        %vm1820 = vcmp.eq.s32.totalorder %v1724, 1
        %vm1821 = vcmp.eq.s32.totalorder %v1725, 1
        %v1822 = vperm.slane %v708, 2
        %v1823 = vperm.slane %v708, 6
        %v1824 = vperm.slane %v709, 2
        %v1825 = vperm.slane %v709, 6
        %v1826 = vperm.slane %v710, 2
        %v1827 = vperm.slane %v710, 6
        %v1828 = vperm.slane %v711, 2
        %v1829 = vperm.slane %v711, 6
        %v1830 = vperm.slane %v712, 2
        %v1831 = vperm.slane %v712, 6
        %v1832 = vperm.slane %v713, 2
        %v1833 = vperm.slane %v713, 6
        %v1834 = vperm.slane %v714, 2
        %v1835 = vperm.slane %v714, 6
        %v1836 = vperm.slane %v715, 2
        %v1837 = vperm.slane %v715, 6
        %v1854 = vperm.slane %v1822, 2
        %v1855 = vperm.slane %v1823, 2
        %v1856 = vperm.slane %v1824, 2
        %v1857 = vperm.slane %v1825, 2
        %v1858 = vperm.slane %v1826, 2
        %v1859 = vperm.slane %v1827, 2
        %v1860 = vperm.slane %v1828, 2
        %v1861 = vperm.slane %v1829, 2
        %v1862 = vperm.slane %v1830, 2
        %v1863 = vperm.slane %v1831, 2
        %v1864 = vperm.slane %v1832, 2
        %v1865 = vperm.slane %v1833, 2
        %v1866 = vperm.slane %v1834, 2
        %v1867 = vperm.slane %v1835, 2
        %v1868 = vperm.slane %v1836, 2
        %v1869 = vperm.slane %v1837, 2
        %v1870 = vsel %vm1806, %v1854, 0.0
        %v1871 = vsel %vm1807, %v1855, 0.0
        %v1872 = vsel %vm1808, %v1856, 0.0
        %v1873 = vsel %vm1809, %v1857, 0.0
        %v1874 = vsel %vm1810, %v1858, 0.0
        %v1875 = vsel %vm1811, %v1859, 0.0
        %v1876 = vsel %vm1812, %v1860, 0.0
        %v1877 = vsel %vm1813, %v1861, 0.0
        %v1878 = vsel %vm1814, %v1862, 0.0
        %v1879 = vsel %vm1815, %v1863, 0.0
        %v1880 = vsel %vm1816, %v1864, 0.0
        %v1881 = vsel %vm1817, %v1865, 0.0
        %v1882 = vsel %vm1818, %v1866, 0.0
        %v1883 = vsel %vm1819, %v1867, 0.0
        %v1884 = vsel %vm1820, %v1868, 0.0
        %v1885 = vsel %vm1821, %v1869, 0.0
        %v1886 = vadd.f32 %v1790, %v1870
        %v1887 = vadd.f32 %v1791, %v1871
        %v1888 = vadd.f32 %v1792, %v1872
        %v1889 = vadd.f32 %v1793, %v1873
        %v1890 = vadd.f32 %v1794, %v1874
        %v1891 = vadd.f32 %v1795, %v1875
        %v1892 = vadd.f32 %v1796, %v1876
        %v1893 = vadd.f32 %v1797, %v1877
        %v1894 = vadd.f32 %v1798, %v1878
        %v1895 = vadd.f32 %v1799, %v1879
        %v1896 = vadd.f32 %v1800, %v1880
        %v1897 = vadd.f32 %v1801, %v1881
        %v1898 = vadd.f32 %v1802, %v1882
        %v1899 = vadd.f32 %v1803, %v1883
        %v1900 = vadd.f32 %v1804, %v1884
        %v1901 = vadd.f32 %v1805, %v1885
        %vm1902 = vcmp.eq.s32.totalorder %v1710, 2
        %vm1903 = vcmp.eq.s32.totalorder %v1711, 2
        %vm1904 = vcmp.eq.s32.totalorder %v1712, 2
        %vm1905 = vcmp.eq.s32.totalorder %v1713, 2
        %vm1906 = vcmp.eq.s32.totalorder %v1714, 2
        %vm1907 = vcmp.eq.s32.totalorder %v1715, 2
        %vm1908 = vcmp.eq.s32.totalorder %v1716, 2
        %vm1909 = vcmp.eq.s32.totalorder %v1717, 2
        %vm1910 = vcmp.eq.s32.totalorder %v1718, 2
        %vm1911 = vcmp.eq.s32.totalorder %v1719, 2
        %vm1912 = vcmp.eq.s32.totalorder %v1720, 2
        %vm1913 = vcmp.eq.s32.totalorder %v1721, 2
        %vm1914 = vcmp.eq.s32.totalorder %v1722, 2
        %vm1915 = vcmp.eq.s32.totalorder %v1723, 2
        %vm1916 = vcmp.eq.s32.totalorder %v1724, 2
        %vm1917 = vcmp.eq.s32.totalorder %v1725, 2
        %v1918 = vperm.slane %v764, 2
        %v1919 = vperm.slane %v764, 6
        %v1920 = vperm.slane %v765, 2
        %v1921 = vperm.slane %v765, 6
        %v1922 = vperm.slane %v766, 2
        %v1923 = vperm.slane %v766, 6
        %v1924 = vperm.slane %v767, 2
        %v1925 = vperm.slane %v767, 6
        %v1926 = vperm.slane %v768, 2
        %v1927 = vperm.slane %v768, 6
        %v1928 = vperm.slane %v769, 2
        %v1929 = vperm.slane %v769, 6
        %v1930 = vperm.slane %v770, 2
        %v1931 = vperm.slane %v770, 6
        %v1932 = vperm.slane %v771, 2
        %v1933 = vperm.slane %v771, 6
        %v1950 = vperm.slane %v1918, 2
        %v1951 = vperm.slane %v1919, 2
        %v1952 = vperm.slane %v1920, 2
        %v1953 = vperm.slane %v1921, 2
        %v1954 = vperm.slane %v1922, 2
        %v1955 = vperm.slane %v1923, 2
        %v1956 = vperm.slane %v1924, 2
        %v1957 = vperm.slane %v1925, 2
        %v1958 = vperm.slane %v1926, 2
        %v1959 = vperm.slane %v1927, 2
        %v1960 = vperm.slane %v1928, 2
        %v1961 = vperm.slane %v1929, 2
        %v1962 = vperm.slane %v1930, 2
        %v1963 = vperm.slane %v1931, 2
        %v1964 = vperm.slane %v1932, 2
        %v1965 = vperm.slane %v1933, 2
        %v1966 = vsel %vm1902, %v1950, 0.0
        %v1967 = vsel %vm1903, %v1951, 0.0
        %v1968 = vsel %vm1904, %v1952, 0.0
        %v1969 = vsel %vm1905, %v1953, 0.0
        %v1970 = vsel %vm1906, %v1954, 0.0
        %v1971 = vsel %vm1907, %v1955, 0.0
        %v1972 = vsel %vm1908, %v1956, 0.0
        %v1973 = vsel %vm1909, %v1957, 0.0
        %v1974 = vsel %vm1910, %v1958, 0.0
        %v1975 = vsel %vm1911, %v1959, 0.0
        %v1976 = vsel %vm1912, %v1960, 0.0
        %v1977 = vsel %vm1913, %v1961, 0.0
        %v1978 = vsel %vm1914, %v1962, 0.0
        %v1979 = vsel %vm1915, %v1963, 0.0
        %v1980 = vsel %vm1916, %v1964, 0.0
        %v1981 = vsel %vm1917, %v1965, 0.0
        %v1982 = vadd.f32 %v1886, %v1966
        %v1983 = vadd.f32 %v1887, %v1967
        %v1984 = vadd.f32 %v1888, %v1968
        %v1985 = vadd.f32 %v1889, %v1969
        %v1986 = vadd.f32 %v1890, %v1970
        %v1987 = vadd.f32 %v1891, %v1971
        %v1988 = vadd.f32 %v1892, %v1972
        %v1989 = vadd.f32 %v1893, %v1973
        %v1990 = vadd.f32 %v1894, %v1974
        %v1991 = vadd.f32 %v1895, %v1975
        %v1992 = vadd.f32 %v1896, %v1976
        %v1993 = vadd.f32 %v1897, %v1977
        %v1994 = vadd.f32 %v1898, %v1978
        %v1995 = vadd.f32 %v1899, %v1979
        %v1996 = vadd.f32 %v1900, %v1980
        %v1997 = vadd.f32 %v1901, %v1981
        %vm1998 = vcmp.eq.s32.totalorder %v1710, 3
        %vm1999 = vcmp.eq.s32.totalorder %v1711, 3
        %vm2000 = vcmp.eq.s32.totalorder %v1712, 3
        %vm2001 = vcmp.eq.s32.totalorder %v1713, 3
        %vm2002 = vcmp.eq.s32.totalorder %v1714, 3
        %vm2003 = vcmp.eq.s32.totalorder %v1715, 3
        %vm2004 = vcmp.eq.s32.totalorder %v1716, 3
        %vm2005 = vcmp.eq.s32.totalorder %v1717, 3
        %vm2006 = vcmp.eq.s32.totalorder %v1718, 3
        %vm2007 = vcmp.eq.s32.totalorder %v1719, 3
        %vm2008 = vcmp.eq.s32.totalorder %v1720, 3
        %vm2009 = vcmp.eq.s32.totalorder %v1721, 3
        %vm2010 = vcmp.eq.s32.totalorder %v1722, 3
        %vm2011 = vcmp.eq.s32.totalorder %v1723, 3
        %vm2012 = vcmp.eq.s32.totalorder %v1724, 3
        %vm2013 = vcmp.eq.s32.totalorder %v1725, 3
        %v2014 = vperm.slane %v788, 2
        %v2015 = vperm.slane %v788, 6
        %v2016 = vperm.slane %v789, 2
        %v2017 = vperm.slane %v789, 6
        %v2018 = vperm.slane %v790, 2
        %v2019 = vperm.slane %v790, 6
        %v2020 = vperm.slane %v791, 2
        %v2021 = vperm.slane %v791, 6
        %v2022 = vperm.slane %v792, 2
        %v2023 = vperm.slane %v792, 6
        %v2024 = vperm.slane %v793, 2
        %v2025 = vperm.slane %v793, 6
        %v2026 = vperm.slane %v794, 2
        %v2027 = vperm.slane %v794, 6
        %v2028 = vperm.slane %v795, 2
        %v2029 = vperm.slane %v795, 6
        %v2046 = vperm.slane %v2014, 2
        %v2047 = vperm.slane %v2015, 2
        %v2048 = vperm.slane %v2016, 2
        %v2049 = vperm.slane %v2017, 2
        %v2050 = vperm.slane %v2018, 2
        %v2051 = vperm.slane %v2019, 2
        %v2052 = vperm.slane %v2020, 2
        %v2053 = vperm.slane %v2021, 2
        %v2054 = vperm.slane %v2022, 2
        %v2055 = vperm.slane %v2023, 2
        %v2056 = vperm.slane %v2024, 2
        %v2057 = vperm.slane %v2025, 2
        %v2058 = vperm.slane %v2026, 2
        %v2059 = vperm.slane %v2027, 2
        %v2060 = vperm.slane %v2028, 2
        %v2061 = vperm.slane %v2029, 2
        %v2062 = vsel %vm1998, %v2046, 0.0
        %v2063 = vsel %vm1999, %v2047, 0.0
        %v2064 = vsel %vm2000, %v2048, 0.0
        %v2065 = vsel %vm2001, %v2049, 0.0
        %v2066 = vsel %vm2002, %v2050, 0.0
        %v2067 = vsel %vm2003, %v2051, 0.0
        %v2068 = vsel %vm2004, %v2052, 0.0
        %v2069 = vsel %vm2005, %v2053, 0.0
        %v2070 = vsel %vm2006, %v2054, 0.0
        %v2071 = vsel %vm2007, %v2055, 0.0
        %v2072 = vsel %vm2008, %v2056, 0.0
        %v2073 = vsel %vm2009, %v2057, 0.0
        %v2074 = vsel %vm2010, %v2058, 0.0
        %v2075 = vsel %vm2011, %v2059, 0.0
        %v2076 = vsel %vm2012, %v2060, 0.0
        %v2077 = vsel %vm2013, %v2061, 0.0
        %v2078 = vadd.f32 %v1982, %v2062
        %v2079 = vadd.f32 %v1983, %v2063
        %v2080 = vadd.f32 %v1984, %v2064
        %v2081 = vadd.f32 %v1985, %v2065
        %v2082 = vadd.f32 %v1986, %v2066
        %v2083 = vadd.f32 %v1987, %v2067
        %v2084 = vadd.f32 %v1988, %v2068
        %v2085 = vadd.f32 %v1989, %v2069
        %v2086 = vadd.f32 %v1990, %v2070
        %v2087 = vadd.f32 %v1991, %v2071
        %v2088 = vadd.f32 %v1992, %v2072
        %v2089 = vadd.f32 %v1993, %v2073
        %v2090 = vadd.f32 %v1994, %v2074
        %v2091 = vadd.f32 %v1995, %v2075
        %v2092 = vadd.f32 %v1996, %v2076
        %v2093 = vadd.f32 %v1997, %v2077
        %v2094 = vpack.c.bf16 %v2078, %v2078
        %v2095 = vpack.c.bf16 %v2079, %v2079
        %v2096 = vpack.c.bf16 %v2080, %v2080
        %v2097 = vpack.c.bf16 %v2081, %v2081
        %v2098 = vpack.c.bf16 %v2082, %v2082
        %v2099 = vpack.c.bf16 %v2083, %v2083
        %v2100 = vpack.c.bf16 %v2084, %v2084
        %v2101 = vpack.c.bf16 %v2085, %v2085
        %v2102 = vpack.c.bf16 %v2086, %v2086
        %v2103 = vpack.c.bf16 %v2087, %v2087
        %v2104 = vpack.c.bf16 %v2088, %v2088
        %v2105 = vpack.c.bf16 %v2089, %v2089
        %v2106 = vpack.c.bf16 %v2090, %v2090
        %v2107 = vpack.c.bf16 %v2091, %v2091
        %v2108 = vpack.c.bf16 %v2092, %v2092
        %v2109 = vpack.c.bf16 %v2093, %v2093
        %v2110 = vld [vmem:[%s4] sm:$0xf]
        %v2111 = vld [vmem:[%s4 + $0x4] sm:$0xf]
        %v2112 = vld [vmem:[%s4 + $0x8] sm:$0xf]
        %v2113 = vld [vmem:[%s4 + $0xc] sm:$0xf]
        %v2114 = vld [vmem:[%s4 + $0x10] sm:$0xf]
        %v2115 = vld [vmem:[%s4 + $0x14] sm:$0xf]
        %v2116 = vld [vmem:[%s4 + $0x18] sm:$0xf]
        %v2117 = vld [vmem:[%s4 + $0x1c] sm:$0xf]
        %v2126 = vunpack.c.l.b16 %v2110
        %v2127 = vunpack.c.l.b16 %v2111
        %v2128 = vunpack.c.l.b16 %v2112
        %v2129 = vunpack.c.l.b16 %v2113
        %v2130 = vunpack.c.l.b16 %v2114
        %v2131 = vunpack.c.l.b16 %v2115
        %v2132 = vunpack.c.l.b16 %v2116
        %v2133 = vunpack.c.l.b16 %v2117
        %v2134 = vpack.c.b16 %v2127, %v2126
        %v2135 = vpack.c.b16 %v2129, %v2128
        %v2136 = vpack.c.b16 %v2131, %v2130
        %v2137 = vpack.c.b16 %v2133, %v2132
        %vm2138 = vcmask 64512
        %v2140 = vsel %vm2138, %v2134, 0
        %v2143 = vsel %vm2138, %v2135, 0
        %v2146 = vsel %vm2138, %v2136, 0
        %v2149 = vsel %vm2138, %v2137, 0
        %vm2151 = vcmask 1043456
        %v2153 = vsel %vm2151, %v1662, 0
        %v2156 = vsel %vm2151, %v1663, 0
        %v2159 = vsel %vm2151, %v1664, 0
        %v2162 = vsel %vm2151, %v1665, 0
        %v2165 = vsel %vm2151, %v1666, 0
        %v2168 = vsel %vm2151, %v1667, 0
        %v2171 = vsel %vm2151, %v1668, 0
        %v2174 = vsel %vm2151, %v1669, 0
        %v2177 = vsel %vm2151, %v1670, 0
        %v2180 = vsel %vm2151, %v1671, 0
        %v2183 = vsel %vm2151, %v1672, 0
        %v2186 = vsel %vm2151, %v1673, 0
        %v2189 = vsel %vm2151, %v1674, 0
        %v2192 = vsel %vm2151, %v1675, 0
        %v2195 = vsel %vm2151, %v1676, 0
        %v2198 = vsel %vm2151, %v1677, 0
        %2200 = vmatpush.bf16.msra.mxu0 0
        %2201 = vmatpush.bf16.msra.mxu0 0
        %2202 = vmatpush.bf16.msra.mxu0 0
        %2203 = vmatpush.bf16.msra.mxu0 0
        %2204 = vmatpush.bf16.msra.mxu0 0
        %2205 = vmatpush.bf16.msra.mxu0 0
        %2206 = vmatpush.bf16.msra.mxu0 0
        %2207 = vmatpush.bf16.msra.mxu0 %v2153
        %2208 = vmatmul.bf16.gmra.mxu0 %v2140
        %v2209 = vpop.f32.mrf.mxu0
        %v2210 = vadd.f32 0.0, %v2209
        %v2211 = vpop.f32.mrf.mxu0
        %v2212 = vadd.f32 0.0, %v2211
        %2213 = vmatmul.bf16.gmra.mxu0 %v2143
        %v2214 = vpop.f32.mrf.mxu0
        %v2215 = vadd.f32 0.0, %v2214
        %v2216 = vpop.f32.mrf.mxu0
        %v2217 = vadd.f32 0.0, %v2216
        %2218 = vmatmul.bf16.gmra.mxu0 %v2146
        %v2219 = vpop.f32.mrf.mxu0
        %v2220 = vadd.f32 0.0, %v2219
        %v2221 = vpop.f32.mrf.mxu0
        %v2222 = vadd.f32 0.0, %v2221
        %2223 = vmatmul.bf16.gmra.mxu0 %v2149
        %v2224 = vpop.f32.mrf.mxu0
        %v2225 = vadd.f32 0.0, %v2224
        %v2226 = vpop.f32.mrf.mxu0
        %v2227 = vadd.f32 0.0, %v2226
        %2228 = vdwg.mxu0
        %2229 = vmatpush.bf16.msra.mxu0 0
        %2230 = vmatpush.bf16.msra.mxu0 0
        %2231 = vmatpush.bf16.msra.mxu0 0
        %2232 = vmatpush.bf16.msra.mxu0 0
        %2233 = vmatpush.bf16.msra.mxu0 0
        %2234 = vmatpush.bf16.msra.mxu0 0
        %2235 = vmatpush.bf16.msra.mxu0 0
        %2236 = vmatpush.bf16.msra.mxu0 %v2156
        %2237 = vmatmul.bf16.gmra.mxu0 %v2140
        %v2238 = vpop.f32.mrf.mxu0
        %v2239 = vadd.f32 0.0, %v2238
        %v2240 = vpop.f32.mrf.mxu0
        %v2241 = vadd.f32 0.0, %v2240
        %2242 = vmatmul.bf16.gmra.mxu0 %v2143
        %v2243 = vpop.f32.mrf.mxu0
        %v2244 = vadd.f32 0.0, %v2243
        %v2245 = vpop.f32.mrf.mxu0
        %v2246 = vadd.f32 0.0, %v2245
        %2247 = vmatmul.bf16.gmra.mxu0 %v2146
        %v2248 = vpop.f32.mrf.mxu0
        %v2249 = vadd.f32 0.0, %v2248
        %v2250 = vpop.f32.mrf.mxu0
        %v2251 = vadd.f32 0.0, %v2250
        %2252 = vmatmul.bf16.gmra.mxu0 %v2149
        %v2253 = vpop.f32.mrf.mxu0
        %v2254 = vadd.f32 0.0, %v2253
        %v2255 = vpop.f32.mrf.mxu0
        %v2256 = vadd.f32 0.0, %v2255
        %2257 = vdwg.mxu0
        %2258 = vmatpush.bf16.msra.mxu0 0
        %2259 = vmatpush.bf16.msra.mxu0 0
        %2260 = vmatpush.bf16.msra.mxu0 0
        %2261 = vmatpush.bf16.msra.mxu0 0
        %2262 = vmatpush.bf16.msra.mxu0 0
        %2263 = vmatpush.bf16.msra.mxu0 0
        %2264 = vmatpush.bf16.msra.mxu0 0
        %2265 = vmatpush.bf16.msra.mxu0 %v2159
        %2266 = vmatmul.bf16.gmra.mxu0 %v2140
        %v2267 = vpop.f32.mrf.mxu0
        %v2268 = vadd.f32 0.0, %v2267
        %v2269 = vpop.f32.mrf.mxu0
        %v2270 = vadd.f32 0.0, %v2269
        %2271 = vmatmul.bf16.gmra.mxu0 %v2143
        %v2272 = vpop.f32.mrf.mxu0
        %v2273 = vadd.f32 0.0, %v2272
        %v2274 = vpop.f32.mrf.mxu0
        %v2275 = vadd.f32 0.0, %v2274
        %2276 = vmatmul.bf16.gmra.mxu0 %v2146
        %v2277 = vpop.f32.mrf.mxu0
        %v2278 = vadd.f32 0.0, %v2277
        %v2279 = vpop.f32.mrf.mxu0
        %v2280 = vadd.f32 0.0, %v2279
        %2281 = vmatmul.bf16.gmra.mxu0 %v2149
        %v2282 = vpop.f32.mrf.mxu0
        %v2283 = vadd.f32 0.0, %v2282
        %v2284 = vpop.f32.mrf.mxu0
        %v2285 = vadd.f32 0.0, %v2284
        %2286 = vdwg.mxu0
        %2287 = vmatpush.bf16.msra.mxu0 0
        %2288 = vmatpush.bf16.msra.mxu0 0
        %2289 = vmatpush.bf16.msra.mxu0 0
        %2290 = vmatpush.bf16.msra.mxu0 0
        %2291 = vmatpush.bf16.msra.mxu0 0
        %2292 = vmatpush.bf16.msra.mxu0 0
        %2293 = vmatpush.bf16.msra.mxu0 0
        %2294 = vmatpush.bf16.msra.mxu0 %v2162
        %2295 = vmatmul.bf16.gmra.mxu0 %v2140
        %v2296 = vpop.f32.mrf.mxu0
        %v2297 = vadd.f32 0.0, %v2296
        %v2298 = vpop.f32.mrf.mxu0
        %v2299 = vadd.f32 0.0, %v2298
        %2300 = vmatmul.bf16.gmra.mxu0 %v2143
        %v2301 = vpop.f32.mrf.mxu0
        %v2302 = vadd.f32 0.0, %v2301
        %v2303 = vpop.f32.mrf.mxu0
        %v2304 = vadd.f32 0.0, %v2303
        %2305 = vmatmul.bf16.gmra.mxu0 %v2146
        %v2306 = vpop.f32.mrf.mxu0
        %v2307 = vadd.f32 0.0, %v2306
        %v2308 = vpop.f32.mrf.mxu0
        %v2309 = vadd.f32 0.0, %v2308
        %2310 = vmatmul.bf16.gmra.mxu0 %v2149
        %v2311 = vpop.f32.mrf.mxu0
        %v2312 = vadd.f32 0.0, %v2311
        %v2313 = vpop.f32.mrf.mxu0
        %v2314 = vadd.f32 0.0, %v2313
        %2315 = vdwg.mxu0
        %2316 = vmatpush.bf16.msra.mxu0 0
        %2317 = vmatpush.bf16.msra.mxu0 0
        %2318 = vmatpush.bf16.msra.mxu0 0
        %2319 = vmatpush.bf16.msra.mxu0 0
        %2320 = vmatpush.bf16.msra.mxu0 0
        %2321 = vmatpush.bf16.msra.mxu0 0
        %2322 = vmatpush.bf16.msra.mxu0 0
        %2323 = vmatpush.bf16.msra.mxu0 %v2165
        %2324 = vmatmul.bf16.gmra.mxu0 %v2140
        %v2325 = vpop.f32.mrf.mxu0
        %v2326 = vadd.f32 0.0, %v2325
        %v2327 = vpop.f32.mrf.mxu0
        %v2328 = vadd.f32 0.0, %v2327
        %2329 = vmatmul.bf16.gmra.mxu0 %v2143
        %v2330 = vpop.f32.mrf.mxu0
        %v2331 = vadd.f32 0.0, %v2330
        %v2332 = vpop.f32.mrf.mxu0
        %v2333 = vadd.f32 0.0, %v2332
        %2334 = vmatmul.bf16.gmra.mxu0 %v2146
        %v2335 = vpop.f32.mrf.mxu0
        %v2336 = vadd.f32 0.0, %v2335
        %v2337 = vpop.f32.mrf.mxu0
        %v2338 = vadd.f32 0.0, %v2337
        %2339 = vmatmul.bf16.gmra.mxu0 %v2149
        %v2340 = vpop.f32.mrf.mxu0
        %v2341 = vadd.f32 0.0, %v2340
        %v2342 = vpop.f32.mrf.mxu0
        %v2343 = vadd.f32 0.0, %v2342
        %2344 = vdwg.mxu0
        %2345 = vmatpush.bf16.msra.mxu0 0
        %2346 = vmatpush.bf16.msra.mxu0 0
        %2347 = vmatpush.bf16.msra.mxu0 0
        %2348 = vmatpush.bf16.msra.mxu0 0
        %2349 = vmatpush.bf16.msra.mxu0 0
        %2350 = vmatpush.bf16.msra.mxu0 0
        %2351 = vmatpush.bf16.msra.mxu0 0
        %2352 = vmatpush.bf16.msra.mxu0 %v2168
        %2353 = vmatmul.bf16.gmra.mxu0 %v2140
        %v2354 = vpop.f32.mrf.mxu0
        %v2355 = vadd.f32 0.0, %v2354
        %v2356 = vpop.f32.mrf.mxu0
        %v2357 = vadd.f32 0.0, %v2356
        %2358 = vmatmul.bf16.gmra.mxu0 %v2143
        %v2359 = vpop.f32.mrf.mxu0
        %v2360 = vadd.f32 0.0, %v2359
        %v2361 = vpop.f32.mrf.mxu0
        %v2362 = vadd.f32 0.0, %v2361
        %2363 = vmatmul.bf16.gmra.mxu0 %v2146
        %v2364 = vpop.f32.mrf.mxu0
        %v2365 = vadd.f32 0.0, %v2364
        %v2366 = vpop.f32.mrf.mxu0
        %v2367 = vadd.f32 0.0, %v2366
        %2368 = vmatmul.bf16.gmra.mxu0 %v2149
        %v2369 = vpop.f32.mrf.mxu0
        %v2370 = vadd.f32 0.0, %v2369
        %v2371 = vpop.f32.mrf.mxu0
        %v2372 = vadd.f32 0.0, %v2371
        %2373 = vdwg.mxu0
        %2374 = vmatpush.bf16.msra.mxu0 0
        %2375 = vmatpush.bf16.msra.mxu0 0
        %2376 = vmatpush.bf16.msra.mxu0 0
        %2377 = vmatpush.bf16.msra.mxu0 0
        %2378 = vmatpush.bf16.msra.mxu0 0
        %2379 = vmatpush.bf16.msra.mxu0 0
        %2380 = vmatpush.bf16.msra.mxu0 0
        %2381 = vmatpush.bf16.msra.mxu0 %v2171
        %2382 = vmatmul.bf16.gmra.mxu0 %v2140
        %v2383 = vpop.f32.mrf.mxu0
        %v2384 = vadd.f32 0.0, %v2383
        %v2385 = vpop.f32.mrf.mxu0
        %v2386 = vadd.f32 0.0, %v2385
        %2387 = vmatmul.bf16.gmra.mxu0 %v2143
        %v2388 = vpop.f32.mrf.mxu0
        %v2389 = vadd.f32 0.0, %v2388
        %v2390 = vpop.f32.mrf.mxu0
        %v2391 = vadd.f32 0.0, %v2390
        %2392 = vmatmul.bf16.gmra.mxu0 %v2146
        %v2393 = vpop.f32.mrf.mxu0
        %v2394 = vadd.f32 0.0, %v2393
        %v2395 = vpop.f32.mrf.mxu0
        %v2396 = vadd.f32 0.0, %v2395
        %2397 = vmatmul.bf16.gmra.mxu0 %v2149
        %v2398 = vpop.f32.mrf.mxu0
        %v2399 = vadd.f32 0.0, %v2398
        %v2400 = vpop.f32.mrf.mxu0
        %v2401 = vadd.f32 0.0, %v2400
        %2402 = vdwg.mxu0
        %2403 = vmatpush.bf16.msra.mxu0 0
        %2404 = vmatpush.bf16.msra.mxu0 0
        %2405 = vmatpush.bf16.msra.mxu0 0
        %2406 = vmatpush.bf16.msra.mxu0 0
        %2407 = vmatpush.bf16.msra.mxu0 0
        %2408 = vmatpush.bf16.msra.mxu0 0
        %2409 = vmatpush.bf16.msra.mxu0 0
        %2410 = vmatpush.bf16.msra.mxu0 %v2174
        %2411 = vmatmul.bf16.gmra.mxu0 %v2140
        %v2412 = vpop.f32.mrf.mxu0
        %v2413 = vadd.f32 0.0, %v2412
        %v2414 = vpop.f32.mrf.mxu0
        %v2415 = vadd.f32 0.0, %v2414
        %2416 = vmatmul.bf16.gmra.mxu0 %v2143
        %v2417 = vpop.f32.mrf.mxu0
        %v2418 = vadd.f32 0.0, %v2417
        %v2419 = vpop.f32.mrf.mxu0
        %v2420 = vadd.f32 0.0, %v2419
        %2421 = vmatmul.bf16.gmra.mxu0 %v2146
        %v2422 = vpop.f32.mrf.mxu0
        %v2423 = vadd.f32 0.0, %v2422
        %v2424 = vpop.f32.mrf.mxu0
        %v2425 = vadd.f32 0.0, %v2424
        %2426 = vmatmul.bf16.gmra.mxu0 %v2149
        %v2427 = vpop.f32.mrf.mxu0
        %v2428 = vadd.f32 0.0, %v2427
        %v2429 = vpop.f32.mrf.mxu0
        %v2430 = vadd.f32 0.0, %v2429
        %2431 = vdwg.mxu0
        %2432 = vmatpush.bf16.msra.mxu0 0
        %2433 = vmatpush.bf16.msra.mxu0 0
        %2434 = vmatpush.bf16.msra.mxu0 0
        %2435 = vmatpush.bf16.msra.mxu0 0
        %2436 = vmatpush.bf16.msra.mxu0 0
        %2437 = vmatpush.bf16.msra.mxu0 0
        %2438 = vmatpush.bf16.msra.mxu0 0
        %2439 = vmatpush.bf16.msra.mxu0 %v2177
        %2440 = vmatmul.bf16.gmra.mxu0 %v2140
        %v2441 = vpop.f32.mrf.mxu0
        %v2442 = vadd.f32 0.0, %v2441
        %v2443 = vpop.f32.mrf.mxu0
        %v2444 = vadd.f32 0.0, %v2443
        %2445 = vmatmul.bf16.gmra.mxu0 %v2143
        %v2446 = vpop.f32.mrf.mxu0
        %v2447 = vadd.f32 0.0, %v2446
        %v2448 = vpop.f32.mrf.mxu0
        %v2449 = vadd.f32 0.0, %v2448
        %2450 = vmatmul.bf16.gmra.mxu0 %v2146
        %v2451 = vpop.f32.mrf.mxu0
        %v2452 = vadd.f32 0.0, %v2451
        %v2453 = vpop.f32.mrf.mxu0
        %v2454 = vadd.f32 0.0, %v2453
        %2455 = vmatmul.bf16.gmra.mxu0 %v2149
        %v2456 = vpop.f32.mrf.mxu0
        %v2457 = vadd.f32 0.0, %v2456
        %v2458 = vpop.f32.mrf.mxu0
        %v2459 = vadd.f32 0.0, %v2458
        %2460 = vdwg.mxu0
        %2461 = vmatpush.bf16.msra.mxu0 0
        %2462 = vmatpush.bf16.msra.mxu0 0
        %2463 = vmatpush.bf16.msra.mxu0 0
        %2464 = vmatpush.bf16.msra.mxu0 0
        %2465 = vmatpush.bf16.msra.mxu0 0
        %2466 = vmatpush.bf16.msra.mxu0 0
        %2467 = vmatpush.bf16.msra.mxu0 0
        %2468 = vmatpush.bf16.msra.mxu0 %v2180
        %2469 = vmatmul.bf16.gmra.mxu0 %v2140
        %v2470 = vpop.f32.mrf.mxu0
        %v2471 = vadd.f32 0.0, %v2470
        %v2472 = vpop.f32.mrf.mxu0
        %v2473 = vadd.f32 0.0, %v2472
        %2474 = vmatmul.bf16.gmra.mxu0 %v2143
        %v2475 = vpop.f32.mrf.mxu0
        %v2476 = vadd.f32 0.0, %v2475
        %v2477 = vpop.f32.mrf.mxu0
        %v2478 = vadd.f32 0.0, %v2477
        %2479 = vmatmul.bf16.gmra.mxu0 %v2146
        %v2480 = vpop.f32.mrf.mxu0
        %v2481 = vadd.f32 0.0, %v2480
        %v2482 = vpop.f32.mrf.mxu0
        %v2483 = vadd.f32 0.0, %v2482
        %2484 = vmatmul.bf16.gmra.mxu0 %v2149
        %v2485 = vpop.f32.mrf.mxu0
        %v2486 = vadd.f32 0.0, %v2485
        %v2487 = vpop.f32.mrf.mxu0
        %v2488 = vadd.f32 0.0, %v2487
        %2489 = vdwg.mxu0
        %2490 = vmatpush.bf16.msra.mxu0 0
        %2491 = vmatpush.bf16.msra.mxu0 0
        %2492 = vmatpush.bf16.msra.mxu0 0
        %2493 = vmatpush.bf16.msra.mxu0 0
        %2494 = vmatpush.bf16.msra.mxu0 0
        %2495 = vmatpush.bf16.msra.mxu0 0
        %2496 = vmatpush.bf16.msra.mxu0 0
        %2497 = vmatpush.bf16.msra.mxu0 %v2183
        %2498 = vmatmul.bf16.gmra.mxu0 %v2140
        %v2499 = vpop.f32.mrf.mxu0
        %v2500 = vadd.f32 0.0, %v2499
        %v2501 = vpop.f32.mrf.mxu0
        %v2502 = vadd.f32 0.0, %v2501
        %2503 = vmatmul.bf16.gmra.mxu0 %v2143
        %v2504 = vpop.f32.mrf.mxu0
        %v2505 = vadd.f32 0.0, %v2504
        %v2506 = vpop.f32.mrf.mxu0
        %v2507 = vadd.f32 0.0, %v2506
        %2508 = vmatmul.bf16.gmra.mxu0 %v2146
        %v2509 = vpop.f32.mrf.mxu0
        %v2510 = vadd.f32 0.0, %v2509
        %v2511 = vpop.f32.mrf.mxu0
        %v2512 = vadd.f32 0.0, %v2511
        %2513 = vmatmul.bf16.gmra.mxu0 %v2149
        %v2514 = vpop.f32.mrf.mxu0
        %v2515 = vadd.f32 0.0, %v2514
        %v2516 = vpop.f32.mrf.mxu0
        %v2517 = vadd.f32 0.0, %v2516
        %2518 = vdwg.mxu0
        %2519 = vmatpush.bf16.msra.mxu0 0
        %2520 = vmatpush.bf16.msra.mxu0 0
        %2521 = vmatpush.bf16.msra.mxu0 0
        %2522 = vmatpush.bf16.msra.mxu0 0
        %2523 = vmatpush.bf16.msra.mxu0 0
        %2524 = vmatpush.bf16.msra.mxu0 0
        %2525 = vmatpush.bf16.msra.mxu0 0
        %2526 = vmatpush.bf16.msra.mxu0 %v2186
        %2527 = vmatmul.bf16.gmra.mxu0 %v2140
        %v2528 = vpop.f32.mrf.mxu0
        %v2529 = vadd.f32 0.0, %v2528
        %v2530 = vpop.f32.mrf.mxu0
        %v2531 = vadd.f32 0.0, %v2530
        %2532 = vmatmul.bf16.gmra.mxu0 %v2143
        %v2533 = vpop.f32.mrf.mxu0
        %v2534 = vadd.f32 0.0, %v2533
        %v2535 = vpop.f32.mrf.mxu0
        %v2536 = vadd.f32 0.0, %v2535
        %2537 = vmatmul.bf16.gmra.mxu0 %v2146
        %v2538 = vpop.f32.mrf.mxu0
        %v2539 = vadd.f32 0.0, %v2538
        %v2540 = vpop.f32.mrf.mxu0
        %v2541 = vadd.f32 0.0, %v2540
        %2542 = vmatmul.bf16.gmra.mxu0 %v2149
        %v2543 = vpop.f32.mrf.mxu0
        %v2544 = vadd.f32 0.0, %v2543
        %v2545 = vpop.f32.mrf.mxu0
        %v2546 = vadd.f32 0.0, %v2545
        %2547 = vdwg.mxu0
        %2548 = vmatpush.bf16.msra.mxu0 0
        %2549 = vmatpush.bf16.msra.mxu0 0
        %2550 = vmatpush.bf16.msra.mxu0 0
        %2551 = vmatpush.bf16.msra.mxu0 0
        %2552 = vmatpush.bf16.msra.mxu0 0
        %2553 = vmatpush.bf16.msra.mxu0 0
        %2554 = vmatpush.bf16.msra.mxu0 0
        %2555 = vmatpush.bf16.msra.mxu0 %v2189
        %2556 = vmatmul.bf16.gmra.mxu0 %v2140
        %v2557 = vpop.f32.mrf.mxu0
        %v2558 = vadd.f32 0.0, %v2557
        %v2559 = vpop.f32.mrf.mxu0
        %v2560 = vadd.f32 0.0, %v2559
        %2561 = vmatmul.bf16.gmra.mxu0 %v2143
        %v2562 = vpop.f32.mrf.mxu0
        %v2563 = vadd.f32 0.0, %v2562
        %v2564 = vpop.f32.mrf.mxu0
        %v2565 = vadd.f32 0.0, %v2564
        %2566 = vmatmul.bf16.gmra.mxu0 %v2146
        %v2567 = vpop.f32.mrf.mxu0
        %v2568 = vadd.f32 0.0, %v2567
        %v2569 = vpop.f32.mrf.mxu0
        %v2570 = vadd.f32 0.0, %v2569
        %2571 = vmatmul.bf16.gmra.mxu0 %v2149
        %v2572 = vpop.f32.mrf.mxu0
        %v2573 = vadd.f32 0.0, %v2572
        %v2574 = vpop.f32.mrf.mxu0
        %v2575 = vadd.f32 0.0, %v2574
        %2576 = vdwg.mxu0
        %2577 = vmatpush.bf16.msra.mxu0 0
        %2578 = vmatpush.bf16.msra.mxu0 0
        %2579 = vmatpush.bf16.msra.mxu0 0
        %2580 = vmatpush.bf16.msra.mxu0 0
        %2581 = vmatpush.bf16.msra.mxu0 0
        %2582 = vmatpush.bf16.msra.mxu0 0
        %2583 = vmatpush.bf16.msra.mxu0 0
        %2584 = vmatpush.bf16.msra.mxu0 %v2192
        %2585 = vmatmul.bf16.gmra.mxu0 %v2140
        %v2586 = vpop.f32.mrf.mxu0
        %v2587 = vadd.f32 0.0, %v2586
        %v2588 = vpop.f32.mrf.mxu0
        %v2589 = vadd.f32 0.0, %v2588
        %2590 = vmatmul.bf16.gmra.mxu0 %v2143
        %v2591 = vpop.f32.mrf.mxu0
        %v2592 = vadd.f32 0.0, %v2591
        %v2593 = vpop.f32.mrf.mxu0
        %v2594 = vadd.f32 0.0, %v2593
        %2595 = vmatmul.bf16.gmra.mxu0 %v2146
        %v2596 = vpop.f32.mrf.mxu0
        %v2597 = vadd.f32 0.0, %v2596
        %v2598 = vpop.f32.mrf.mxu0
        %v2599 = vadd.f32 0.0, %v2598
        %2600 = vmatmul.bf16.gmra.mxu0 %v2149
        %v2601 = vpop.f32.mrf.mxu0
        %v2602 = vadd.f32 0.0, %v2601
        %v2603 = vpop.f32.mrf.mxu0
        %v2604 = vadd.f32 0.0, %v2603
        %2605 = vdwg.mxu0
        %2606 = vmatpush.bf16.msra.mxu0 0
        %2607 = vmatpush.bf16.msra.mxu0 0
        %2608 = vmatpush.bf16.msra.mxu0 0
        %2609 = vmatpush.bf16.msra.mxu0 0
        %2610 = vmatpush.bf16.msra.mxu0 0
        %2611 = vmatpush.bf16.msra.mxu0 0
        %2612 = vmatpush.bf16.msra.mxu0 0
        %2613 = vmatpush.bf16.msra.mxu0 %v2195
        %2614 = vmatmul.bf16.gmra.mxu0 %v2140
        %v2615 = vpop.f32.mrf.mxu0
        %v2616 = vadd.f32 0.0, %v2615
        %v2617 = vpop.f32.mrf.mxu0
        %v2618 = vadd.f32 0.0, %v2617
        %2619 = vmatmul.bf16.gmra.mxu0 %v2143
        %v2620 = vpop.f32.mrf.mxu0
        %v2621 = vadd.f32 0.0, %v2620
        %v2622 = vpop.f32.mrf.mxu0
        %v2623 = vadd.f32 0.0, %v2622
        %2624 = vmatmul.bf16.gmra.mxu0 %v2146
        %v2625 = vpop.f32.mrf.mxu0
        %v2626 = vadd.f32 0.0, %v2625
        %v2627 = vpop.f32.mrf.mxu0
        %v2628 = vadd.f32 0.0, %v2627
        %2629 = vmatmul.bf16.gmra.mxu0 %v2149
        %v2630 = vpop.f32.mrf.mxu0
        %v2631 = vadd.f32 0.0, %v2630
        %v2632 = vpop.f32.mrf.mxu0
        %v2633 = vadd.f32 0.0, %v2632
        %2634 = vdwg.mxu0
        %2635 = vmatpush.bf16.msra.mxu0 0
        %2636 = vmatpush.bf16.msra.mxu0 0
        %2637 = vmatpush.bf16.msra.mxu0 0
        %2638 = vmatpush.bf16.msra.mxu0 0
        %2639 = vmatpush.bf16.msra.mxu0 0
        %2640 = vmatpush.bf16.msra.mxu0 0
        %2641 = vmatpush.bf16.msra.mxu0 0
        %2642 = vmatpush.bf16.msra.mxu0 %v2198
        %2643 = vmatmul.bf16.gmra.mxu0 %v2140
        %v2644 = vpop.f32.mrf.mxu0
        %v2645 = vadd.f32 0.0, %v2644
        %v2646 = vpop.f32.mrf.mxu0
        %v2647 = vadd.f32 0.0, %v2646
        %2648 = vmatmul.bf16.gmra.mxu0 %v2143
        %v2649 = vpop.f32.mrf.mxu0
        %v2650 = vadd.f32 0.0, %v2649
        %v2651 = vpop.f32.mrf.mxu0
        %v2652 = vadd.f32 0.0, %v2651
        %2653 = vmatmul.bf16.gmra.mxu0 %v2146
        %v2654 = vpop.f32.mrf.mxu0
        %v2655 = vadd.f32 0.0, %v2654
        %v2656 = vpop.f32.mrf.mxu0
        %v2657 = vadd.f32 0.0, %v2656
        %2658 = vmatmul.bf16.gmra.mxu0 %v2149
        %v2659 = vpop.f32.mrf.mxu0
        %v2660 = vadd.f32 0.0, %v2659
        %v2661 = vpop.f32.mrf.mxu0
        %v2662 = vadd.f32 0.0, %v2661
        %2663 = vdwg.mxu0
        %v2664 = vld [vmem:[%s5] sm:$0xf]
        %v2665 = vld [vmem:[%s5 + $0x4] sm:$0xf]
        %v2666 = vld [vmem:[%s5 + $0x8] sm:$0xf]
        %v2667 = vld [vmem:[%s5 + $0xc] sm:$0xf]
        %v2668 = vld [vmem:[%s5 + $0x10] sm:$0xf]
        %v2669 = vld [vmem:[%s5 + $0x14] sm:$0xf]
        %v2670 = vld [vmem:[%s5 + $0x18] sm:$0xf]
        %v2671 = vld [vmem:[%s5 + $0x1c] sm:$0xf]
        %v2680 = vunpack.c.l.b16 %v2664
        %v2681 = vunpack.c.l.b16 %v2665
        %v2682 = vunpack.c.l.b16 %v2666
        %v2683 = vunpack.c.l.b16 %v2667
        %v2684 = vunpack.c.l.b16 %v2668
        %v2685 = vunpack.c.l.b16 %v2669
        %v2686 = vunpack.c.l.b16 %v2670
        %v2687 = vunpack.c.l.b16 %v2671
        %v2688 = vpack.c.b16 %v2681, %v2680
        %v2689 = vpack.c.b16 %v2683, %v2682
        %v2690 = vpack.c.b16 %v2685, %v2684
        %v2691 = vpack.c.b16 %v2687, %v2686
        %v2693 = vsel %vm2138, %v2688, 0
        %v2696 = vsel %vm2138, %v2689, 0
        %v2699 = vsel %vm2138, %v2690, 0
        %v2702 = vsel %vm2138, %v2691, 0
        %v2705 = vsel %vm2151, %v2094, 0
        %v2708 = vsel %vm2151, %v2095, 0
        %v2711 = vsel %vm2151, %v2096, 0
        %v2714 = vsel %vm2151, %v2097, 0
        %v2717 = vsel %vm2151, %v2098, 0
        %v2720 = vsel %vm2151, %v2099, 0
        %v2723 = vsel %vm2151, %v2100, 0
        %v2726 = vsel %vm2151, %v2101, 0
        %v2729 = vsel %vm2151, %v2102, 0
        %v2732 = vsel %vm2151, %v2103, 0
        %v2735 = vsel %vm2151, %v2104, 0
        %v2738 = vsel %vm2151, %v2105, 0
        %v2741 = vsel %vm2151, %v2106, 0
        %v2744 = vsel %vm2151, %v2107, 0
        %v2747 = vsel %vm2151, %v2108, 0
        %v2750 = vsel %vm2151, %v2109, 0
        %2752 = vmatpush.bf16.msra.mxu0 0
        %2753 = vmatpush.bf16.msra.mxu0 0
        %2754 = vmatpush.bf16.msra.mxu0 0
        %2755 = vmatpush.bf16.msra.mxu0 0
        %2756 = vmatpush.bf16.msra.mxu0 0
        %2757 = vmatpush.bf16.msra.mxu0 0
        %2758 = vmatpush.bf16.msra.mxu0 0
        %2759 = vmatpush.bf16.msra.mxu0 %v2705
        %2760 = vmatmul.bf16.gmra.mxu0 %v2693
        %v2761 = vpop.f32.mrf.mxu0
        %v2762 = vadd.f32 0.0, %v2761
        %v2763 = vpop.f32.mrf.mxu0
        %v2764 = vadd.f32 0.0, %v2763
        %2765 = vmatmul.bf16.gmra.mxu0 %v2696
        %v2766 = vpop.f32.mrf.mxu0
        %v2767 = vadd.f32 0.0, %v2766
        %v2768 = vpop.f32.mrf.mxu0
        %v2769 = vadd.f32 0.0, %v2768
        %2770 = vmatmul.bf16.gmra.mxu0 %v2699
        %v2771 = vpop.f32.mrf.mxu0
        %v2772 = vadd.f32 0.0, %v2771
        %v2773 = vpop.f32.mrf.mxu0
        %v2774 = vadd.f32 0.0, %v2773
        %2775 = vmatmul.bf16.gmra.mxu0 %v2702
        %v2776 = vpop.f32.mrf.mxu0
        %v2777 = vadd.f32 0.0, %v2776
        %v2778 = vpop.f32.mrf.mxu0
        %v2779 = vadd.f32 0.0, %v2778
        %2780 = vdwg.mxu0
        %2781 = vmatpush.bf16.msra.mxu0 0
        %2782 = vmatpush.bf16.msra.mxu0 0
        %2783 = vmatpush.bf16.msra.mxu0 0
        %2784 = vmatpush.bf16.msra.mxu0 0
        %2785 = vmatpush.bf16.msra.mxu0 0
        %2786 = vmatpush.bf16.msra.mxu0 0
        %2787 = vmatpush.bf16.msra.mxu0 0
        %2788 = vmatpush.bf16.msra.mxu0 %v2708
        %2789 = vmatmul.bf16.gmra.mxu0 %v2693
        %v2790 = vpop.f32.mrf.mxu0
        %v2791 = vadd.f32 0.0, %v2790
        %v2792 = vpop.f32.mrf.mxu0
        %v2793 = vadd.f32 0.0, %v2792
        %2794 = vmatmul.bf16.gmra.mxu0 %v2696
        %v2795 = vpop.f32.mrf.mxu0
        %v2796 = vadd.f32 0.0, %v2795
        %v2797 = vpop.f32.mrf.mxu0
        %v2798 = vadd.f32 0.0, %v2797
        %2799 = vmatmul.bf16.gmra.mxu0 %v2699
        %v2800 = vpop.f32.mrf.mxu0
        %v2801 = vadd.f32 0.0, %v2800
        %v2802 = vpop.f32.mrf.mxu0
        %v2803 = vadd.f32 0.0, %v2802
        %2804 = vmatmul.bf16.gmra.mxu0 %v2702
        %v2805 = vpop.f32.mrf.mxu0
        %v2806 = vadd.f32 0.0, %v2805
        %v2807 = vpop.f32.mrf.mxu0
        %v2808 = vadd.f32 0.0, %v2807
        %2809 = vdwg.mxu0
        %2810 = vmatpush.bf16.msra.mxu0 0
        %2811 = vmatpush.bf16.msra.mxu0 0
        %2812 = vmatpush.bf16.msra.mxu0 0
        %2813 = vmatpush.bf16.msra.mxu0 0
        %2814 = vmatpush.bf16.msra.mxu0 0
        %2815 = vmatpush.bf16.msra.mxu0 0
        %2816 = vmatpush.bf16.msra.mxu0 0
        %2817 = vmatpush.bf16.msra.mxu0 %v2711
        %2818 = vmatmul.bf16.gmra.mxu0 %v2693
        %v2819 = vpop.f32.mrf.mxu0
        %v2820 = vadd.f32 0.0, %v2819
        %v2821 = vpop.f32.mrf.mxu0
        %v2822 = vadd.f32 0.0, %v2821
        %2823 = vmatmul.bf16.gmra.mxu0 %v2696
        %v2824 = vpop.f32.mrf.mxu0
        %v2825 = vadd.f32 0.0, %v2824
        %v2826 = vpop.f32.mrf.mxu0
        %v2827 = vadd.f32 0.0, %v2826
        %2828 = vmatmul.bf16.gmra.mxu0 %v2699
        %v2829 = vpop.f32.mrf.mxu0
        %v2830 = vadd.f32 0.0, %v2829
        %v2831 = vpop.f32.mrf.mxu0
        %v2832 = vadd.f32 0.0, %v2831
        %2833 = vmatmul.bf16.gmra.mxu0 %v2702
        %v2834 = vpop.f32.mrf.mxu0
        %v2835 = vadd.f32 0.0, %v2834
        %v2836 = vpop.f32.mrf.mxu0
        %v2837 = vadd.f32 0.0, %v2836
        %2838 = vdwg.mxu0
        %2839 = vmatpush.bf16.msra.mxu0 0
        %2840 = vmatpush.bf16.msra.mxu0 0
        %2841 = vmatpush.bf16.msra.mxu0 0
        %2842 = vmatpush.bf16.msra.mxu0 0
        %2843 = vmatpush.bf16.msra.mxu0 0
        %2844 = vmatpush.bf16.msra.mxu0 0
        %2845 = vmatpush.bf16.msra.mxu0 0
        %2846 = vmatpush.bf16.msra.mxu0 %v2714
        %2847 = vmatmul.bf16.gmra.mxu0 %v2693
        %v2848 = vpop.f32.mrf.mxu0
        %v2849 = vadd.f32 0.0, %v2848
        %v2850 = vpop.f32.mrf.mxu0
        %v2851 = vadd.f32 0.0, %v2850
        %2852 = vmatmul.bf16.gmra.mxu0 %v2696
        %v2853 = vpop.f32.mrf.mxu0
        %v2854 = vadd.f32 0.0, %v2853
        %v2855 = vpop.f32.mrf.mxu0
        %v2856 = vadd.f32 0.0, %v2855
        %2857 = vmatmul.bf16.gmra.mxu0 %v2699
        %v2858 = vpop.f32.mrf.mxu0
        %v2859 = vadd.f32 0.0, %v2858
        %v2860 = vpop.f32.mrf.mxu0
        %v2861 = vadd.f32 0.0, %v2860
        %2862 = vmatmul.bf16.gmra.mxu0 %v2702
        %v2863 = vpop.f32.mrf.mxu0
        %v2864 = vadd.f32 0.0, %v2863
        %v2865 = vpop.f32.mrf.mxu0
        %v2866 = vadd.f32 0.0, %v2865
        %2867 = vdwg.mxu0
        %2868 = vmatpush.bf16.msra.mxu0 0
        %2869 = vmatpush.bf16.msra.mxu0 0
        %2870 = vmatpush.bf16.msra.mxu0 0
        %2871 = vmatpush.bf16.msra.mxu0 0
        %2872 = vmatpush.bf16.msra.mxu0 0
        %2873 = vmatpush.bf16.msra.mxu0 0
        %2874 = vmatpush.bf16.msra.mxu0 0
        %2875 = vmatpush.bf16.msra.mxu0 %v2717
        %2876 = vmatmul.bf16.gmra.mxu0 %v2693
        %v2877 = vpop.f32.mrf.mxu0
        %v2878 = vadd.f32 0.0, %v2877
        %v2879 = vpop.f32.mrf.mxu0
        %v2880 = vadd.f32 0.0, %v2879
        %2881 = vmatmul.bf16.gmra.mxu0 %v2696
        %v2882 = vpop.f32.mrf.mxu0
        %v2883 = vadd.f32 0.0, %v2882
        %v2884 = vpop.f32.mrf.mxu0
        %v2885 = vadd.f32 0.0, %v2884
        %2886 = vmatmul.bf16.gmra.mxu0 %v2699
        %v2887 = vpop.f32.mrf.mxu0
        %v2888 = vadd.f32 0.0, %v2887
        %v2889 = vpop.f32.mrf.mxu0
        %v2890 = vadd.f32 0.0, %v2889
        %2891 = vmatmul.bf16.gmra.mxu0 %v2702
        %v2892 = vpop.f32.mrf.mxu0
        %v2893 = vadd.f32 0.0, %v2892
        %v2894 = vpop.f32.mrf.mxu0
        %v2895 = vadd.f32 0.0, %v2894
        %2896 = vdwg.mxu0
        %2897 = vmatpush.bf16.msra.mxu0 0
        %2898 = vmatpush.bf16.msra.mxu0 0
        %2899 = vmatpush.bf16.msra.mxu0 0
        %2900 = vmatpush.bf16.msra.mxu0 0
        %2901 = vmatpush.bf16.msra.mxu0 0
        %2902 = vmatpush.bf16.msra.mxu0 0
        %2903 = vmatpush.bf16.msra.mxu0 0
        %2904 = vmatpush.bf16.msra.mxu0 %v2720
        %2905 = vmatmul.bf16.gmra.mxu0 %v2693
        %v2906 = vpop.f32.mrf.mxu0
        %v2907 = vadd.f32 0.0, %v2906
        %v2908 = vpop.f32.mrf.mxu0
        %v2909 = vadd.f32 0.0, %v2908
        %2910 = vmatmul.bf16.gmra.mxu0 %v2696
        %v2911 = vpop.f32.mrf.mxu0
        %v2912 = vadd.f32 0.0, %v2911
        %v2913 = vpop.f32.mrf.mxu0
        %v2914 = vadd.f32 0.0, %v2913
        %2915 = vmatmul.bf16.gmra.mxu0 %v2699
        %v2916 = vpop.f32.mrf.mxu0
        %v2917 = vadd.f32 0.0, %v2916
        %v2918 = vpop.f32.mrf.mxu0
        %v2919 = vadd.f32 0.0, %v2918
        %2920 = vmatmul.bf16.gmra.mxu0 %v2702
        %v2921 = vpop.f32.mrf.mxu0
        %v2922 = vadd.f32 0.0, %v2921
        %v2923 = vpop.f32.mrf.mxu0
        %v2924 = vadd.f32 0.0, %v2923
        %2925 = vdwg.mxu0
        %2926 = vmatpush.bf16.msra.mxu0 0
        %2927 = vmatpush.bf16.msra.mxu0 0
        %2928 = vmatpush.bf16.msra.mxu0 0
        %2929 = vmatpush.bf16.msra.mxu0 0
        %2930 = vmatpush.bf16.msra.mxu0 0
        %2931 = vmatpush.bf16.msra.mxu0 0
        %2932 = vmatpush.bf16.msra.mxu0 0
        %2933 = vmatpush.bf16.msra.mxu0 %v2723
        %2934 = vmatmul.bf16.gmra.mxu0 %v2693
        %v2935 = vpop.f32.mrf.mxu0
        %v2936 = vadd.f32 0.0, %v2935
        %v2937 = vpop.f32.mrf.mxu0
        %v2938 = vadd.f32 0.0, %v2937
        %2939 = vmatmul.bf16.gmra.mxu0 %v2696
        %v2940 = vpop.f32.mrf.mxu0
        %v2941 = vadd.f32 0.0, %v2940
        %v2942 = vpop.f32.mrf.mxu0
        %v2943 = vadd.f32 0.0, %v2942
        %2944 = vmatmul.bf16.gmra.mxu0 %v2699
        %v2945 = vpop.f32.mrf.mxu0
        %v2946 = vadd.f32 0.0, %v2945
        %v2947 = vpop.f32.mrf.mxu0
        %v2948 = vadd.f32 0.0, %v2947
        %2949 = vmatmul.bf16.gmra.mxu0 %v2702
        %v2950 = vpop.f32.mrf.mxu0
        %v2951 = vadd.f32 0.0, %v2950
        %v2952 = vpop.f32.mrf.mxu0
        %v2953 = vadd.f32 0.0, %v2952
        %2954 = vdwg.mxu0
        %2955 = vmatpush.bf16.msra.mxu0 0
        %2956 = vmatpush.bf16.msra.mxu0 0
        %2957 = vmatpush.bf16.msra.mxu0 0
        %2958 = vmatpush.bf16.msra.mxu0 0
        %2959 = vmatpush.bf16.msra.mxu0 0
        %2960 = vmatpush.bf16.msra.mxu0 0
        %2961 = vmatpush.bf16.msra.mxu0 0
        %2962 = vmatpush.bf16.msra.mxu0 %v2726
        %2963 = vmatmul.bf16.gmra.mxu0 %v2693
        %v2964 = vpop.f32.mrf.mxu0
        %v2965 = vadd.f32 0.0, %v2964
        %v2966 = vpop.f32.mrf.mxu0
        %v2967 = vadd.f32 0.0, %v2966
        %2968 = vmatmul.bf16.gmra.mxu0 %v2696
        %v2969 = vpop.f32.mrf.mxu0
        %v2970 = vadd.f32 0.0, %v2969
        %v2971 = vpop.f32.mrf.mxu0
        %v2972 = vadd.f32 0.0, %v2971
        %2973 = vmatmul.bf16.gmra.mxu0 %v2699
        %v2974 = vpop.f32.mrf.mxu0
        %v2975 = vadd.f32 0.0, %v2974
        %v2976 = vpop.f32.mrf.mxu0
        %v2977 = vadd.f32 0.0, %v2976
        %2978 = vmatmul.bf16.gmra.mxu0 %v2702
        %v2979 = vpop.f32.mrf.mxu0
        %v2980 = vadd.f32 0.0, %v2979
        %v2981 = vpop.f32.mrf.mxu0
        %v2982 = vadd.f32 0.0, %v2981
        %2983 = vdwg.mxu0
        %2984 = vmatpush.bf16.msra.mxu0 0
        %2985 = vmatpush.bf16.msra.mxu0 0
        %2986 = vmatpush.bf16.msra.mxu0 0
        %2987 = vmatpush.bf16.msra.mxu0 0
        %2988 = vmatpush.bf16.msra.mxu0 0
        %2989 = vmatpush.bf16.msra.mxu0 0
        %2990 = vmatpush.bf16.msra.mxu0 0
        %2991 = vmatpush.bf16.msra.mxu0 %v2729
        %2992 = vmatmul.bf16.gmra.mxu0 %v2693
        %v2993 = vpop.f32.mrf.mxu0
        %v2994 = vadd.f32 0.0, %v2993
        %v2995 = vpop.f32.mrf.mxu0
        %v2996 = vadd.f32 0.0, %v2995
        %2997 = vmatmul.bf16.gmra.mxu0 %v2696
        %v2998 = vpop.f32.mrf.mxu0
        %v2999 = vadd.f32 0.0, %v2998
        %v3000 = vpop.f32.mrf.mxu0
        %v3001 = vadd.f32 0.0, %v3000
        %3002 = vmatmul.bf16.gmra.mxu0 %v2699
        %v3003 = vpop.f32.mrf.mxu0
        %v3004 = vadd.f32 0.0, %v3003
        %v3005 = vpop.f32.mrf.mxu0
        %v3006 = vadd.f32 0.0, %v3005
        %3007 = vmatmul.bf16.gmra.mxu0 %v2702
        %v3008 = vpop.f32.mrf.mxu0
        %v3009 = vadd.f32 0.0, %v3008
        %v3010 = vpop.f32.mrf.mxu0
        %v3011 = vadd.f32 0.0, %v3010
        %3012 = vdwg.mxu0
        %3013 = vmatpush.bf16.msra.mxu0 0
        %3014 = vmatpush.bf16.msra.mxu0 0
        %3015 = vmatpush.bf16.msra.mxu0 0
        %3016 = vmatpush.bf16.msra.mxu0 0
        %3017 = vmatpush.bf16.msra.mxu0 0
        %3018 = vmatpush.bf16.msra.mxu0 0
        %3019 = vmatpush.bf16.msra.mxu0 0
        %3020 = vmatpush.bf16.msra.mxu0 %v2732
        %3021 = vmatmul.bf16.gmra.mxu0 %v2693
        %v3022 = vpop.f32.mrf.mxu0
        %v3023 = vadd.f32 0.0, %v3022
        %v3024 = vpop.f32.mrf.mxu0
        %v3025 = vadd.f32 0.0, %v3024
        %3026 = vmatmul.bf16.gmra.mxu0 %v2696
        %v3027 = vpop.f32.mrf.mxu0
        %v3028 = vadd.f32 0.0, %v3027
        %v3029 = vpop.f32.mrf.mxu0
        %v3030 = vadd.f32 0.0, %v3029
        %3031 = vmatmul.bf16.gmra.mxu0 %v2699
        %v3032 = vpop.f32.mrf.mxu0
        %v3033 = vadd.f32 0.0, %v3032
        %v3034 = vpop.f32.mrf.mxu0
        %v3035 = vadd.f32 0.0, %v3034
        %3036 = vmatmul.bf16.gmra.mxu0 %v2702
        %v3037 = vpop.f32.mrf.mxu0
        %v3038 = vadd.f32 0.0, %v3037
        %v3039 = vpop.f32.mrf.mxu0
        %v3040 = vadd.f32 0.0, %v3039
        %3041 = vdwg.mxu0
        %3042 = vmatpush.bf16.msra.mxu0 0
        %3043 = vmatpush.bf16.msra.mxu0 0
        %3044 = vmatpush.bf16.msra.mxu0 0
        %3045 = vmatpush.bf16.msra.mxu0 0
        %3046 = vmatpush.bf16.msra.mxu0 0
        %3047 = vmatpush.bf16.msra.mxu0 0
        %3048 = vmatpush.bf16.msra.mxu0 0
        %3049 = vmatpush.bf16.msra.mxu0 %v2735
        %3050 = vmatmul.bf16.gmra.mxu0 %v2693
        %v3051 = vpop.f32.mrf.mxu0
        %v3052 = vadd.f32 0.0, %v3051
        %v3053 = vpop.f32.mrf.mxu0
        %v3054 = vadd.f32 0.0, %v3053
        %3055 = vmatmul.bf16.gmra.mxu0 %v2696
        %v3056 = vpop.f32.mrf.mxu0
        %v3057 = vadd.f32 0.0, %v3056
        %v3058 = vpop.f32.mrf.mxu0
        %v3059 = vadd.f32 0.0, %v3058
        %3060 = vmatmul.bf16.gmra.mxu0 %v2699
        %v3061 = vpop.f32.mrf.mxu0
        %v3062 = vadd.f32 0.0, %v3061
        %v3063 = vpop.f32.mrf.mxu0
        %v3064 = vadd.f32 0.0, %v3063
        %3065 = vmatmul.bf16.gmra.mxu0 %v2702
        %v3066 = vpop.f32.mrf.mxu0
        %v3067 = vadd.f32 0.0, %v3066
        %v3068 = vpop.f32.mrf.mxu0
        %v3069 = vadd.f32 0.0, %v3068
        %3070 = vdwg.mxu0
        %3071 = vmatpush.bf16.msra.mxu0 0
        %3072 = vmatpush.bf16.msra.mxu0 0
        %3073 = vmatpush.bf16.msra.mxu0 0
        %3074 = vmatpush.bf16.msra.mxu0 0
        %3075 = vmatpush.bf16.msra.mxu0 0
        %3076 = vmatpush.bf16.msra.mxu0 0
        %3077 = vmatpush.bf16.msra.mxu0 0
        %3078 = vmatpush.bf16.msra.mxu0 %v2738
        %3079 = vmatmul.bf16.gmra.mxu0 %v2693
        %v3080 = vpop.f32.mrf.mxu0
        %v3081 = vadd.f32 0.0, %v3080
        %v3082 = vpop.f32.mrf.mxu0
        %v3083 = vadd.f32 0.0, %v3082
        %3084 = vmatmul.bf16.gmra.mxu0 %v2696
        %v3085 = vpop.f32.mrf.mxu0
        %v3086 = vadd.f32 0.0, %v3085
        %v3087 = vpop.f32.mrf.mxu0
        %v3088 = vadd.f32 0.0, %v3087
        %3089 = vmatmul.bf16.gmra.mxu0 %v2699
        %v3090 = vpop.f32.mrf.mxu0
        %v3091 = vadd.f32 0.0, %v3090
        %v3092 = vpop.f32.mrf.mxu0
        %v3093 = vadd.f32 0.0, %v3092
        %3094 = vmatmul.bf16.gmra.mxu0 %v2702
        %v3095 = vpop.f32.mrf.mxu0
        %v3096 = vadd.f32 0.0, %v3095
        %v3097 = vpop.f32.mrf.mxu0
        %v3098 = vadd.f32 0.0, %v3097
        %3099 = vdwg.mxu0
        %3100 = vmatpush.bf16.msra.mxu0 0
        %3101 = vmatpush.bf16.msra.mxu0 0
        %3102 = vmatpush.bf16.msra.mxu0 0
        %3103 = vmatpush.bf16.msra.mxu0 0
        %3104 = vmatpush.bf16.msra.mxu0 0
        %3105 = vmatpush.bf16.msra.mxu0 0
        %3106 = vmatpush.bf16.msra.mxu0 0
        %3107 = vmatpush.bf16.msra.mxu0 %v2741
        %3108 = vmatmul.bf16.gmra.mxu0 %v2693
        %v3109 = vpop.f32.mrf.mxu0
        %v3110 = vadd.f32 0.0, %v3109
        %v3111 = vpop.f32.mrf.mxu0
        %v3112 = vadd.f32 0.0, %v3111
        %3113 = vmatmul.bf16.gmra.mxu0 %v2696
        %v3114 = vpop.f32.mrf.mxu0
        %v3115 = vadd.f32 0.0, %v3114
        %v3116 = vpop.f32.mrf.mxu0
        %v3117 = vadd.f32 0.0, %v3116
        %3118 = vmatmul.bf16.gmra.mxu0 %v2699
        %v3119 = vpop.f32.mrf.mxu0
        %v3120 = vadd.f32 0.0, %v3119
        %v3121 = vpop.f32.mrf.mxu0
        %v3122 = vadd.f32 0.0, %v3121
        %3123 = vmatmul.bf16.gmra.mxu0 %v2702
        %v3124 = vpop.f32.mrf.mxu0
        %v3125 = vadd.f32 0.0, %v3124
        %v3126 = vpop.f32.mrf.mxu0
        %v3127 = vadd.f32 0.0, %v3126
        %3128 = vdwg.mxu0
        %3129 = vmatpush.bf16.msra.mxu0 0
        %3130 = vmatpush.bf16.msra.mxu0 0
        %3131 = vmatpush.bf16.msra.mxu0 0
        %3132 = vmatpush.bf16.msra.mxu0 0
        %3133 = vmatpush.bf16.msra.mxu0 0
        %3134 = vmatpush.bf16.msra.mxu0 0
        %3135 = vmatpush.bf16.msra.mxu0 0
        %3136 = vmatpush.bf16.msra.mxu0 %v2744
        %3137 = vmatmul.bf16.gmra.mxu0 %v2693
        %v3138 = vpop.f32.mrf.mxu0
        %v3139 = vadd.f32 0.0, %v3138
        %v3140 = vpop.f32.mrf.mxu0
        %v3141 = vadd.f32 0.0, %v3140
        %3142 = vmatmul.bf16.gmra.mxu0 %v2696
        %v3143 = vpop.f32.mrf.mxu0
        %v3144 = vadd.f32 0.0, %v3143
        %v3145 = vpop.f32.mrf.mxu0
        %v3146 = vadd.f32 0.0, %v3145
        %3147 = vmatmul.bf16.gmra.mxu0 %v2699
        %v3148 = vpop.f32.mrf.mxu0
        %v3149 = vadd.f32 0.0, %v3148
        %v3150 = vpop.f32.mrf.mxu0
        %v3151 = vadd.f32 0.0, %v3150
        %3152 = vmatmul.bf16.gmra.mxu0 %v2702
        %v3153 = vpop.f32.mrf.mxu0
        %v3154 = vadd.f32 0.0, %v3153
        %v3155 = vpop.f32.mrf.mxu0
        %v3156 = vadd.f32 0.0, %v3155
        %3157 = vdwg.mxu0
        %3158 = vmatpush.bf16.msra.mxu0 0
        %3159 = vmatpush.bf16.msra.mxu0 0
        %3160 = vmatpush.bf16.msra.mxu0 0
        %3161 = vmatpush.bf16.msra.mxu0 0
        %3162 = vmatpush.bf16.msra.mxu0 0
        %3163 = vmatpush.bf16.msra.mxu0 0
        %3164 = vmatpush.bf16.msra.mxu0 0
        %3165 = vmatpush.bf16.msra.mxu0 %v2747
        %3166 = vmatmul.bf16.gmra.mxu0 %v2693
        %v3167 = vpop.f32.mrf.mxu0
        %v3168 = vadd.f32 0.0, %v3167
        %v3169 = vpop.f32.mrf.mxu0
        %v3170 = vadd.f32 0.0, %v3169
        %3171 = vmatmul.bf16.gmra.mxu0 %v2696
        %v3172 = vpop.f32.mrf.mxu0
        %v3173 = vadd.f32 0.0, %v3172
        %v3174 = vpop.f32.mrf.mxu0
        %v3175 = vadd.f32 0.0, %v3174
        %3176 = vmatmul.bf16.gmra.mxu0 %v2699
        %v3177 = vpop.f32.mrf.mxu0
        %v3178 = vadd.f32 0.0, %v3177
        %v3179 = vpop.f32.mrf.mxu0
        %v3180 = vadd.f32 0.0, %v3179
        %3181 = vmatmul.bf16.gmra.mxu0 %v2702
        %v3182 = vpop.f32.mrf.mxu0
        %v3183 = vadd.f32 0.0, %v3182
        %v3184 = vpop.f32.mrf.mxu0
        %v3185 = vadd.f32 0.0, %v3184
        %3186 = vdwg.mxu0
        %3187 = vmatpush.bf16.msra.mxu0 0
        %3188 = vmatpush.bf16.msra.mxu0 0
        %3189 = vmatpush.bf16.msra.mxu0 0
        %3190 = vmatpush.bf16.msra.mxu0 0
        %3191 = vmatpush.bf16.msra.mxu0 0
        %3192 = vmatpush.bf16.msra.mxu0 0
        %3193 = vmatpush.bf16.msra.mxu0 0
        %3194 = vmatpush.bf16.msra.mxu0 %v2750
        %3195 = vmatmul.bf16.gmra.mxu0 %v2693
        %v3196 = vpop.f32.mrf.mxu0
        %v3197 = vadd.f32 0.0, %v3196
        %v3198 = vpop.f32.mrf.mxu0
        %v3199 = vadd.f32 0.0, %v3198
        %3200 = vmatmul.bf16.gmra.mxu0 %v2696
        %v3201 = vpop.f32.mrf.mxu0
        %v3202 = vadd.f32 0.0, %v3201
        %v3203 = vpop.f32.mrf.mxu0
        %v3204 = vadd.f32 0.0, %v3203
        %3205 = vmatmul.bf16.gmra.mxu0 %v2699
        %v3206 = vpop.f32.mrf.mxu0
        %v3207 = vadd.f32 0.0, %v3206
        %v3208 = vpop.f32.mrf.mxu0
        %v3209 = vadd.f32 0.0, %v3208
        %3210 = vmatmul.bf16.gmra.mxu0 %v2702
        %v3211 = vpop.f32.mrf.mxu0
        %v3212 = vadd.f32 0.0, %v3211
        %v3213 = vpop.f32.mrf.mxu0
        %v3214 = vadd.f32 0.0, %v3213
        %3215 = vdwg.mxu0
        %v3216 = vmul.f32 %v2210, %v2762
        %v3217 = vmul.f32 %v2239, %v2791
        %v3218 = vmul.f32 %v2268, %v2820
        %v3219 = vmul.f32 %v2297, %v2849
        %v3220 = vmul.f32 %v2326, %v2878
        %v3221 = vmul.f32 %v2355, %v2907
        %v3222 = vmul.f32 %v2384, %v2936
        %v3223 = vmul.f32 %v2413, %v2965
        %v3224 = vmul.f32 %v2442, %v2994
        %v3225 = vmul.f32 %v2471, %v3023
        %v3226 = vmul.f32 %v2500, %v3052
        %v3227 = vmul.f32 %v2529, %v3081
        %v3228 = vmul.f32 %v2558, %v3110
        %v3229 = vmul.f32 %v2587, %v3139
        %v3230 = vmul.f32 %v2616, %v3168
        %v3231 = vmul.f32 %v2645, %v3197
        %v3232 = vmul.f32 %v2212, %v2764
        %v3233 = vmul.f32 %v2241, %v2793
        %v3234 = vmul.f32 %v2270, %v2822
        %v3235 = vmul.f32 %v2299, %v2851
        %v3236 = vmul.f32 %v2328, %v2880
        %v3237 = vmul.f32 %v2357, %v2909
        %v3238 = vmul.f32 %v2386, %v2938
        %v3239 = vmul.f32 %v2415, %v2967
        %v3240 = vmul.f32 %v2444, %v2996
        %v3241 = vmul.f32 %v2473, %v3025
        %v3242 = vmul.f32 %v2502, %v3054
        %v3243 = vmul.f32 %v2531, %v3083
        %v3244 = vmul.f32 %v2560, %v3112
        %v3245 = vmul.f32 %v2589, %v3141
        %v3246 = vmul.f32 %v2618, %v3170
        %v3247 = vmul.f32 %v2647, %v3199
        %v3248 = vmul.f32 %v2215, %v2767
        %v3249 = vmul.f32 %v2244, %v2796
        %v3250 = vmul.f32 %v2273, %v2825
        %v3251 = vmul.f32 %v2302, %v2854
        %v3252 = vmul.f32 %v2331, %v2883
        %v3253 = vmul.f32 %v2360, %v2912
        %v3254 = vmul.f32 %v2389, %v2941
        %v3255 = vmul.f32 %v2418, %v2970
        %v3256 = vmul.f32 %v2447, %v2999
        %v3257 = vmul.f32 %v2476, %v3028
        %v3258 = vmul.f32 %v2505, %v3057
        %v3259 = vmul.f32 %v2534, %v3086
        %v3260 = vmul.f32 %v2563, %v3115
        %v3261 = vmul.f32 %v2592, %v3144
        %v3262 = vmul.f32 %v2621, %v3173
        %v3263 = vmul.f32 %v2650, %v3202
        %v3264 = vmul.f32 %v2217, %v2769
        %v3265 = vmul.f32 %v2246, %v2798
        %v3266 = vmul.f32 %v2275, %v2827
        %v3267 = vmul.f32 %v2304, %v2856
        %v3268 = vmul.f32 %v2333, %v2885
        %v3269 = vmul.f32 %v2362, %v2914
        %v3270 = vmul.f32 %v2391, %v2943
        %v3271 = vmul.f32 %v2420, %v2972
        %v3272 = vmul.f32 %v2449, %v3001
        %v3273 = vmul.f32 %v2478, %v3030
        %v3274 = vmul.f32 %v2507, %v3059
        %v3275 = vmul.f32 %v2536, %v3088
        %v3276 = vmul.f32 %v2565, %v3117
        %v3277 = vmul.f32 %v2594, %v3146
        %v3278 = vmul.f32 %v2623, %v3175
        %v3279 = vmul.f32 %v2652, %v3204
        %v3280 = vmul.f32 %v2220, %v2772
        %v3281 = vmul.f32 %v2249, %v2801
        %v3282 = vmul.f32 %v2278, %v2830
        %v3283 = vmul.f32 %v2307, %v2859
        %v3284 = vmul.f32 %v2336, %v2888
        %v3285 = vmul.f32 %v2365, %v2917
        %v3286 = vmul.f32 %v2394, %v2946
        %v3287 = vmul.f32 %v2423, %v2975
        %v3288 = vmul.f32 %v2452, %v3004
        %v3289 = vmul.f32 %v2481, %v3033
        %v3290 = vmul.f32 %v2510, %v3062
        %v3291 = vmul.f32 %v2539, %v3091
        %v3292 = vmul.f32 %v2568, %v3120
        %v3293 = vmul.f32 %v2597, %v3149
        %v3294 = vmul.f32 %v2626, %v3178
        %v3295 = vmul.f32 %v2655, %v3207
        %v3296 = vmul.f32 %v2222, %v2774
        %v3297 = vmul.f32 %v2251, %v2803
        %v3298 = vmul.f32 %v2280, %v2832
        %v3299 = vmul.f32 %v2309, %v2861
        %v3300 = vmul.f32 %v2338, %v2890
        %v3301 = vmul.f32 %v2367, %v2919
        %v3302 = vmul.f32 %v2396, %v2948
        %v3303 = vmul.f32 %v2425, %v2977
        %v3304 = vmul.f32 %v2454, %v3006
        %v3305 = vmul.f32 %v2483, %v3035
        %v3306 = vmul.f32 %v2512, %v3064
        %v3307 = vmul.f32 %v2541, %v3093
        %v3308 = vmul.f32 %v2570, %v3122
        %v3309 = vmul.f32 %v2599, %v3151
        %v3310 = vmul.f32 %v2628, %v3180
        %v3311 = vmul.f32 %v2657, %v3209
        %v3312 = vmul.f32 %v2225, %v2777
        %v3313 = vmul.f32 %v2254, %v2806
        %v3314 = vmul.f32 %v2283, %v2835
        %v3315 = vmul.f32 %v2312, %v2864
        %v3316 = vmul.f32 %v2341, %v2893
        %v3317 = vmul.f32 %v2370, %v2922
        %v3318 = vmul.f32 %v2399, %v2951
        %v3319 = vmul.f32 %v2428, %v2980
        %v3320 = vmul.f32 %v2457, %v3009
        %v3321 = vmul.f32 %v2486, %v3038
        %v3322 = vmul.f32 %v2515, %v3067
        %v3323 = vmul.f32 %v2544, %v3096
        %v3324 = vmul.f32 %v2573, %v3125
        %v3325 = vmul.f32 %v2602, %v3154
        %v3326 = vmul.f32 %v2631, %v3183
        %v3327 = vmul.f32 %v2660, %v3212
        %v3328 = vmul.f32 %v2227, %v2779
        %v3329 = vmul.f32 %v2256, %v2808
        %v3330 = vmul.f32 %v2285, %v2837
        %v3331 = vmul.f32 %v2314, %v2866
        %v3332 = vmul.f32 %v2343, %v2895
        %v3333 = vmul.f32 %v2372, %v2924
        %v3334 = vmul.f32 %v2401, %v2953
        %v3335 = vmul.f32 %v2430, %v2982
        %v3336 = vmul.f32 %v2459, %v3011
        %v3337 = vmul.f32 %v2488, %v3040
        %v3338 = vmul.f32 %v2517, %v3069
        %v3339 = vmul.f32 %v2546, %v3098
        %v3340 = vmul.f32 %v2575, %v3127
        %v3341 = vmul.f32 %v2604, %v3156
        %v3342 = vmul.f32 %v2633, %v3185
        %v3343 = vmul.f32 %v2662, %v3214
        %v3344 = vpack.c.bf16 %v3232, %v3216
        %v3345 = vpack.c.bf16 %v3233, %v3217
        %v3346 = vpack.c.bf16 %v3234, %v3218
        %v3347 = vpack.c.bf16 %v3235, %v3219
        %v3348 = vpack.c.bf16 %v3236, %v3220
        %v3349 = vpack.c.bf16 %v3237, %v3221
        %v3350 = vpack.c.bf16 %v3238, %v3222
        %v3351 = vpack.c.bf16 %v3239, %v3223
        %v3352 = vpack.c.bf16 %v3240, %v3224
        %v3353 = vpack.c.bf16 %v3241, %v3225
        %v3354 = vpack.c.bf16 %v3242, %v3226
        %v3355 = vpack.c.bf16 %v3243, %v3227
        %v3356 = vpack.c.bf16 %v3244, %v3228
        %v3357 = vpack.c.bf16 %v3245, %v3229
        %v3358 = vpack.c.bf16 %v3246, %v3230
        %v3359 = vpack.c.bf16 %v3247, %v3231
        %v3360 = vpack.c.bf16 %v3264, %v3248
        %v3361 = vpack.c.bf16 %v3265, %v3249
        %v3362 = vpack.c.bf16 %v3266, %v3250
        %v3363 = vpack.c.bf16 %v3267, %v3251
        %v3364 = vpack.c.bf16 %v3268, %v3252
        %v3365 = vpack.c.bf16 %v3269, %v3253
        %v3366 = vpack.c.bf16 %v3270, %v3254
        %v3367 = vpack.c.bf16 %v3271, %v3255
        %v3368 = vpack.c.bf16 %v3272, %v3256
        %v3369 = vpack.c.bf16 %v3273, %v3257
        %v3370 = vpack.c.bf16 %v3274, %v3258
        %v3371 = vpack.c.bf16 %v3275, %v3259
        %v3372 = vpack.c.bf16 %v3276, %v3260
        %v3373 = vpack.c.bf16 %v3277, %v3261
        %v3374 = vpack.c.bf16 %v3278, %v3262
        %v3375 = vpack.c.bf16 %v3279, %v3263
        %v3376 = vpack.c.bf16 %v3296, %v3280
        %v3377 = vpack.c.bf16 %v3297, %v3281
        %v3378 = vpack.c.bf16 %v3298, %v3282
        %v3379 = vpack.c.bf16 %v3299, %v3283
        %v3380 = vpack.c.bf16 %v3300, %v3284
        %v3381 = vpack.c.bf16 %v3301, %v3285
        %v3382 = vpack.c.bf16 %v3302, %v3286
        %v3383 = vpack.c.bf16 %v3303, %v3287
        %v3384 = vpack.c.bf16 %v3304, %v3288
        %v3385 = vpack.c.bf16 %v3305, %v3289
        %v3386 = vpack.c.bf16 %v3306, %v3290
        %v3387 = vpack.c.bf16 %v3307, %v3291
        %v3388 = vpack.c.bf16 %v3308, %v3292
        %v3389 = vpack.c.bf16 %v3309, %v3293
        %v3390 = vpack.c.bf16 %v3310, %v3294
        %v3391 = vpack.c.bf16 %v3311, %v3295
        %v3392 = vpack.c.bf16 %v3328, %v3312
        %v3393 = vpack.c.bf16 %v3329, %v3313
        %v3394 = vpack.c.bf16 %v3330, %v3314
        %v3395 = vpack.c.bf16 %v3331, %v3315
        %v3396 = vpack.c.bf16 %v3332, %v3316
        %v3397 = vpack.c.bf16 %v3333, %v3317
        %v3398 = vpack.c.bf16 %v3334, %v3318
        %v3399 = vpack.c.bf16 %v3335, %v3319
        %v3400 = vpack.c.bf16 %v3336, %v3320
        %v3401 = vpack.c.bf16 %v3337, %v3321
        %v3402 = vpack.c.bf16 %v3338, %v3322
        %v3403 = vpack.c.bf16 %v3339, %v3323
        %v3404 = vpack.c.bf16 %v3340, %v3324
        %v3405 = vpack.c.bf16 %v3341, %v3325
        %v3406 = vpack.c.bf16 %v3342, %v3326
        %v3407 = vpack.c.bf16 %v3343, %v3327
        %v3408 = vld [vmem:[%s3] sm:$0xf]
        %v3409 = vld [vmem:[%s3 + $0x4] sm:$0xf]
        %v3410 = vld [vmem:[%s3 + $0x8] sm:$0xf]
        %v3411 = vld [vmem:[%s3 + $0xc] sm:$0xf]
        %v3412 = vld [vmem:[%s3 + $0x10] sm:$0xf]
        %v3413 = vld [vmem:[%s3 + $0x14] sm:$0xf]
        %v3414 = vld [vmem:[%s3 + $0x18] sm:$0xf]
        %v3415 = vld [vmem:[%s3 + $0x1c] sm:$0xf]
        %v3416 = vld [vmem:[%s3 + $0x20] sm:$0xf]
        %v3417 = vld [vmem:[%s3 + $0x24] sm:$0xf]
        %v3418 = vld [vmem:[%s3 + $0x28] sm:$0xf]
        %v3419 = vld [vmem:[%s3 + $0x2c] sm:$0xf]
        %v3420 = vld [vmem:[%s3 + $0x30] sm:$0xf]
        %v3421 = vld [vmem:[%s3 + $0x34] sm:$0xf]
        %v3422 = vld [vmem:[%s3 + $0x38] sm:$0xf]
        %v3423 = vld [vmem:[%s3 + $0x3c] sm:$0xf]
        %v3440 = vunpack.c.l.b16 %v3408
        %v3441 = vunpack.c.l.b16 %v3409
        %v3442 = vunpack.c.l.b16 %v3410
        %v3443 = vunpack.c.l.b16 %v3411
        %v3444 = vunpack.c.l.b16 %v3412
        %v3445 = vunpack.c.l.b16 %v3413
        %v3446 = vunpack.c.l.b16 %v3414
        %v3447 = vunpack.c.l.b16 %v3415
        %v3448 = vunpack.c.l.b16 %v3416
        %v3449 = vunpack.c.l.b16 %v3417
        %v3450 = vunpack.c.l.b16 %v3418
        %v3451 = vunpack.c.l.b16 %v3419
        %v3452 = vunpack.c.l.b16 %v3420
        %v3453 = vunpack.c.l.b16 %v3421
        %v3454 = vunpack.c.l.b16 %v3422
        %v3455 = vunpack.c.l.b16 %v3423
        %v3456 = vpack.c.b16 %v3441, %v3440
        %v3457 = vpack.c.b16 %v3443, %v3442
        %v3458 = vpack.c.b16 %v3445, %v3444
        %v3459 = vpack.c.b16 %v3447, %v3446
        %v3460 = vpack.c.b16 %v3449, %v3448
        %v3461 = vpack.c.b16 %v3451, %v3450
        %v3462 = vpack.c.b16 %v3453, %v3452
        %v3463 = vpack.c.b16 %v3455, %v3454
        %vm3464 = vcmask 523264
        %v3466 = vsel %vm3464, %v3456, 0
        %v3469 = vsel %vm3464, %v3457, 0
        %v3472 = vsel %vm3464, %v3458, 0
        %v3475 = vsel %vm3464, %v3459, 0
        %v3478 = vsel %vm3464, %v3460, 0
        %v3481 = vsel %vm3464, %v3461, 0
        %v3484 = vsel %vm3464, %v3462, 0
        %v3487 = vsel %vm3464, %v3463, 0
        %3489 = vmatpush.bf16.msra.mxu0 0
        %3490 = vmatpush.bf16.msra.mxu0 0
        %3491 = vmatpush.bf16.msra.mxu0 0
        %3492 = vmatpush.bf16.msra.mxu0 0
        %3493 = vmatpush.bf16.msra.mxu0 %v3392
        %3494 = vmatpush.bf16.msra.mxu0 %v3376
        %3495 = vmatpush.bf16.msra.mxu0 %v3360
        %3496 = vmatpush.bf16.msra.mxu0 %v3344
        %3497 = vmatmul.bf16.gmra.mxu0 %v3466
        %v3498 = vpop.f32.mrf.mxu0
        %v3499 = vadd.f32 0.0, %v3498
        %v3500 = vpop.f32.mrf.mxu0
        %v3501 = vadd.f32 0.0, %v3500
        %3502 = vmatmul.bf16.gmra.mxu0 %v3469
        %v3503 = vpop.f32.mrf.mxu0
        %v3504 = vadd.f32 0.0, %v3503
        %v3505 = vpop.f32.mrf.mxu0
        %v3506 = vadd.f32 0.0, %v3505
        %3507 = vmatmul.bf16.gmra.mxu0 %v3472
        %v3508 = vpop.f32.mrf.mxu0
        %v3509 = vadd.f32 0.0, %v3508
        %v3510 = vpop.f32.mrf.mxu0
        %v3511 = vadd.f32 0.0, %v3510
        %3512 = vmatmul.bf16.gmra.mxu0 %v3475
        %v3513 = vpop.f32.mrf.mxu0
        %v3514 = vadd.f32 0.0, %v3513
        %v3515 = vpop.f32.mrf.mxu0
        %v3516 = vadd.f32 0.0, %v3515
        %3517 = vmatmul.bf16.gmra.mxu0 %v3478
        %v3518 = vpop.f32.mrf.mxu0
        %v3519 = vadd.f32 0.0, %v3518
        %v3520 = vpop.f32.mrf.mxu0
        %v3521 = vadd.f32 0.0, %v3520
        %3522 = vmatmul.bf16.gmra.mxu0 %v3481
        %v3523 = vpop.f32.mrf.mxu0
        %v3524 = vadd.f32 0.0, %v3523
        %v3525 = vpop.f32.mrf.mxu0
        %v3526 = vadd.f32 0.0, %v3525
        %3527 = vmatmul.bf16.gmra.mxu0 %v3484
        %v3528 = vpop.f32.mrf.mxu0
        %v3529 = vadd.f32 0.0, %v3528
        %v3530 = vpop.f32.mrf.mxu0
        %v3531 = vadd.f32 0.0, %v3530
        %3532 = vmatmul.bf16.gmra.mxu0 %v3487
        %v3533 = vpop.f32.mrf.mxu0
        %v3534 = vadd.f32 0.0, %v3533
        %v3535 = vpop.f32.mrf.mxu0
        %v3536 = vadd.f32 0.0, %v3535
        %3537 = vdwg.mxu0
        %3538 = vmatpush.bf16.msra.mxu0 0
        %3539 = vmatpush.bf16.msra.mxu0 0
        %3540 = vmatpush.bf16.msra.mxu0 0
        %3541 = vmatpush.bf16.msra.mxu0 0
        %3542 = vmatpush.bf16.msra.mxu0 %v3393
        %3543 = vmatpush.bf16.msra.mxu0 %v3377
        %3544 = vmatpush.bf16.msra.mxu0 %v3361
        %3545 = vmatpush.bf16.msra.mxu0 %v3345
        %3546 = vmatmul.bf16.gmra.mxu0 %v3466
        %v3547 = vpop.f32.mrf.mxu0
        %v3548 = vadd.f32 0.0, %v3547
        %v3549 = vpop.f32.mrf.mxu0
        %v3550 = vadd.f32 0.0, %v3549
        %3551 = vmatmul.bf16.gmra.mxu0 %v3469
        %v3552 = vpop.f32.mrf.mxu0
        %v3553 = vadd.f32 0.0, %v3552
        %v3554 = vpop.f32.mrf.mxu0
        %v3555 = vadd.f32 0.0, %v3554
        %3556 = vmatmul.bf16.gmra.mxu0 %v3472
        %v3557 = vpop.f32.mrf.mxu0
        %v3558 = vadd.f32 0.0, %v3557
        %v3559 = vpop.f32.mrf.mxu0
        %v3560 = vadd.f32 0.0, %v3559
        %3561 = vmatmul.bf16.gmra.mxu0 %v3475
        %v3562 = vpop.f32.mrf.mxu0
        %v3563 = vadd.f32 0.0, %v3562
        %v3564 = vpop.f32.mrf.mxu0
        %v3565 = vadd.f32 0.0, %v3564
        %3566 = vmatmul.bf16.gmra.mxu0 %v3478
        %v3567 = vpop.f32.mrf.mxu0
        %v3568 = vadd.f32 0.0, %v3567
        %v3569 = vpop.f32.mrf.mxu0
        %v3570 = vadd.f32 0.0, %v3569
        %3571 = vmatmul.bf16.gmra.mxu0 %v3481
        %v3572 = vpop.f32.mrf.mxu0
        %v3573 = vadd.f32 0.0, %v3572
        %v3574 = vpop.f32.mrf.mxu0
        %v3575 = vadd.f32 0.0, %v3574
        %3576 = vmatmul.bf16.gmra.mxu0 %v3484
        %v3577 = vpop.f32.mrf.mxu0
        %v3578 = vadd.f32 0.0, %v3577
        %v3579 = vpop.f32.mrf.mxu0
        %v3580 = vadd.f32 0.0, %v3579
        %3581 = vmatmul.bf16.gmra.mxu0 %v3487
        %v3582 = vpop.f32.mrf.mxu0
        %v3583 = vadd.f32 0.0, %v3582
        %v3584 = vpop.f32.mrf.mxu0
        %v3585 = vadd.f32 0.0, %v3584
        %3586 = vdwg.mxu0
        %3587 = vmatpush.bf16.msra.mxu0 0
        %3588 = vmatpush.bf16.msra.mxu0 0
        %3589 = vmatpush.bf16.msra.mxu0 0
        %3590 = vmatpush.bf16.msra.mxu0 0
        %3591 = vmatpush.bf16.msra.mxu0 %v3394
        %3592 = vmatpush.bf16.msra.mxu0 %v3378
        %3593 = vmatpush.bf16.msra.mxu0 %v3362
        %3594 = vmatpush.bf16.msra.mxu0 %v3346
        %3595 = vmatmul.bf16.gmra.mxu0 %v3466
        %v3596 = vpop.f32.mrf.mxu0
        %v3597 = vadd.f32 0.0, %v3596
        %v3598 = vpop.f32.mrf.mxu0
        %v3599 = vadd.f32 0.0, %v3598
        %3600 = vmatmul.bf16.gmra.mxu0 %v3469
        %v3601 = vpop.f32.mrf.mxu0
        %v3602 = vadd.f32 0.0, %v3601
        %v3603 = vpop.f32.mrf.mxu0
        %v3604 = vadd.f32 0.0, %v3603
        %3605 = vmatmul.bf16.gmra.mxu0 %v3472
        %v3606 = vpop.f32.mrf.mxu0
        %v3607 = vadd.f32 0.0, %v3606
        %v3608 = vpop.f32.mrf.mxu0
        %v3609 = vadd.f32 0.0, %v3608
        %3610 = vmatmul.bf16.gmra.mxu0 %v3475
        %v3611 = vpop.f32.mrf.mxu0
        %v3612 = vadd.f32 0.0, %v3611
        %v3613 = vpop.f32.mrf.mxu0
        %v3614 = vadd.f32 0.0, %v3613
        %3615 = vmatmul.bf16.gmra.mxu0 %v3478
        %v3616 = vpop.f32.mrf.mxu0
        %v3617 = vadd.f32 0.0, %v3616
        %v3618 = vpop.f32.mrf.mxu0
        %v3619 = vadd.f32 0.0, %v3618
        %3620 = vmatmul.bf16.gmra.mxu0 %v3481
        %v3621 = vpop.f32.mrf.mxu0
        %v3622 = vadd.f32 0.0, %v3621
        %v3623 = vpop.f32.mrf.mxu0
        %v3624 = vadd.f32 0.0, %v3623
        %3625 = vmatmul.bf16.gmra.mxu0 %v3484
        %v3626 = vpop.f32.mrf.mxu0
        %v3627 = vadd.f32 0.0, %v3626
        %v3628 = vpop.f32.mrf.mxu0
        %v3629 = vadd.f32 0.0, %v3628
        %3630 = vmatmul.bf16.gmra.mxu0 %v3487
        %v3631 = vpop.f32.mrf.mxu0
        %v3632 = vadd.f32 0.0, %v3631
        %v3633 = vpop.f32.mrf.mxu0
        %v3634 = vadd.f32 0.0, %v3633
        %3635 = vdwg.mxu0
        %3636 = vmatpush.bf16.msra.mxu0 0
        %3637 = vmatpush.bf16.msra.mxu0 0
        %3638 = vmatpush.bf16.msra.mxu0 0
        %3639 = vmatpush.bf16.msra.mxu0 0
        %3640 = vmatpush.bf16.msra.mxu0 %v3395
        %3641 = vmatpush.bf16.msra.mxu0 %v3379
        %3642 = vmatpush.bf16.msra.mxu0 %v3363
        %3643 = vmatpush.bf16.msra.mxu0 %v3347
        %3644 = vmatmul.bf16.gmra.mxu0 %v3466
        %v3645 = vpop.f32.mrf.mxu0
        %v3646 = vadd.f32 0.0, %v3645
        %v3647 = vpop.f32.mrf.mxu0
        %v3648 = vadd.f32 0.0, %v3647
        %3649 = vmatmul.bf16.gmra.mxu0 %v3469
        %v3650 = vpop.f32.mrf.mxu0
        %v3651 = vadd.f32 0.0, %v3650
        %v3652 = vpop.f32.mrf.mxu0
        %v3653 = vadd.f32 0.0, %v3652
        %3654 = vmatmul.bf16.gmra.mxu0 %v3472
        %v3655 = vpop.f32.mrf.mxu0
        %v3656 = vadd.f32 0.0, %v3655
        %v3657 = vpop.f32.mrf.mxu0
        %v3658 = vadd.f32 0.0, %v3657
        %3659 = vmatmul.bf16.gmra.mxu0 %v3475
        %v3660 = vpop.f32.mrf.mxu0
        %v3661 = vadd.f32 0.0, %v3660
        %v3662 = vpop.f32.mrf.mxu0
        %v3663 = vadd.f32 0.0, %v3662
        %3664 = vmatmul.bf16.gmra.mxu0 %v3478
        %v3665 = vpop.f32.mrf.mxu0
        %v3666 = vadd.f32 0.0, %v3665
        %v3667 = vpop.f32.mrf.mxu0
        %v3668 = vadd.f32 0.0, %v3667
        %3669 = vmatmul.bf16.gmra.mxu0 %v3481
        %v3670 = vpop.f32.mrf.mxu0
        %v3671 = vadd.f32 0.0, %v3670
        %v3672 = vpop.f32.mrf.mxu0
        %v3673 = vadd.f32 0.0, %v3672
        %3674 = vmatmul.bf16.gmra.mxu0 %v3484
        %v3675 = vpop.f32.mrf.mxu0
        %v3676 = vadd.f32 0.0, %v3675
        %v3677 = vpop.f32.mrf.mxu0
        %v3678 = vadd.f32 0.0, %v3677
        %3679 = vmatmul.bf16.gmra.mxu0 %v3487
        %v3680 = vpop.f32.mrf.mxu0
        %v3681 = vadd.f32 0.0, %v3680
        %v3682 = vpop.f32.mrf.mxu0
        %v3683 = vadd.f32 0.0, %v3682
        %3684 = vdwg.mxu0
        %3685 = vmatpush.bf16.msra.mxu0 0
        %3686 = vmatpush.bf16.msra.mxu0 0
        %3687 = vmatpush.bf16.msra.mxu0 0
        %3688 = vmatpush.bf16.msra.mxu0 0
        %3689 = vmatpush.bf16.msra.mxu0 %v3396
        %3690 = vmatpush.bf16.msra.mxu0 %v3380
        %3691 = vmatpush.bf16.msra.mxu0 %v3364
        %3692 = vmatpush.bf16.msra.mxu0 %v3348
        %3693 = vmatmul.bf16.gmra.mxu0 %v3466
        %v3694 = vpop.f32.mrf.mxu0
        %v3695 = vadd.f32 0.0, %v3694
        %v3696 = vpop.f32.mrf.mxu0
        %v3697 = vadd.f32 0.0, %v3696
        %3698 = vmatmul.bf16.gmra.mxu0 %v3469
        %v3699 = vpop.f32.mrf.mxu0
        %v3700 = vadd.f32 0.0, %v3699
        %v3701 = vpop.f32.mrf.mxu0
        %v3702 = vadd.f32 0.0, %v3701
        %3703 = vmatmul.bf16.gmra.mxu0 %v3472
        %v3704 = vpop.f32.mrf.mxu0
        %v3705 = vadd.f32 0.0, %v3704
        %v3706 = vpop.f32.mrf.mxu0
        %v3707 = vadd.f32 0.0, %v3706
        %3708 = vmatmul.bf16.gmra.mxu0 %v3475
        %v3709 = vpop.f32.mrf.mxu0
        %v3710 = vadd.f32 0.0, %v3709
        %v3711 = vpop.f32.mrf.mxu0
        %v3712 = vadd.f32 0.0, %v3711
        %3713 = vmatmul.bf16.gmra.mxu0 %v3478
        %v3714 = vpop.f32.mrf.mxu0
        %v3715 = vadd.f32 0.0, %v3714
        %v3716 = vpop.f32.mrf.mxu0
        %v3717 = vadd.f32 0.0, %v3716
        %3718 = vmatmul.bf16.gmra.mxu0 %v3481
        %v3719 = vpop.f32.mrf.mxu0
        %v3720 = vadd.f32 0.0, %v3719
        %v3721 = vpop.f32.mrf.mxu0
        %v3722 = vadd.f32 0.0, %v3721
        %3723 = vmatmul.bf16.gmra.mxu0 %v3484
        %v3724 = vpop.f32.mrf.mxu0
        %v3725 = vadd.f32 0.0, %v3724
        %v3726 = vpop.f32.mrf.mxu0
        %v3727 = vadd.f32 0.0, %v3726
        %3728 = vmatmul.bf16.gmra.mxu0 %v3487
        %v3729 = vpop.f32.mrf.mxu0
        %v3730 = vadd.f32 0.0, %v3729
        %v3731 = vpop.f32.mrf.mxu0
        %v3732 = vadd.f32 0.0, %v3731
        %3733 = vdwg.mxu0
        %3734 = vmatpush.bf16.msra.mxu0 0
        %3735 = vmatpush.bf16.msra.mxu0 0
        %3736 = vmatpush.bf16.msra.mxu0 0
        %3737 = vmatpush.bf16.msra.mxu0 0
        %3738 = vmatpush.bf16.msra.mxu0 %v3397
        %3739 = vmatpush.bf16.msra.mxu0 %v3381
        %3740 = vmatpush.bf16.msra.mxu0 %v3365
        %3741 = vmatpush.bf16.msra.mxu0 %v3349
        %3742 = vmatmul.bf16.gmra.mxu0 %v3466
        %v3743 = vpop.f32.mrf.mxu0
        %v3744 = vadd.f32 0.0, %v3743
        %v3745 = vpop.f32.mrf.mxu0
        %v3746 = vadd.f32 0.0, %v3745
        %3747 = vmatmul.bf16.gmra.mxu0 %v3469
        %v3748 = vpop.f32.mrf.mxu0
        %v3749 = vadd.f32 0.0, %v3748
        %v3750 = vpop.f32.mrf.mxu0
        %v3751 = vadd.f32 0.0, %v3750
        %3752 = vmatmul.bf16.gmra.mxu0 %v3472
        %v3753 = vpop.f32.mrf.mxu0
        %v3754 = vadd.f32 0.0, %v3753
        %v3755 = vpop.f32.mrf.mxu0
        %v3756 = vadd.f32 0.0, %v3755
        %3757 = vmatmul.bf16.gmra.mxu0 %v3475
        %v3758 = vpop.f32.mrf.mxu0
        %v3759 = vadd.f32 0.0, %v3758
        %v3760 = vpop.f32.mrf.mxu0
        %v3761 = vadd.f32 0.0, %v3760
        %3762 = vmatmul.bf16.gmra.mxu0 %v3478
        %v3763 = vpop.f32.mrf.mxu0
        %v3764 = vadd.f32 0.0, %v3763
        %v3765 = vpop.f32.mrf.mxu0
        %v3766 = vadd.f32 0.0, %v3765
        %3767 = vmatmul.bf16.gmra.mxu0 %v3481
        %v3768 = vpop.f32.mrf.mxu0
        %v3769 = vadd.f32 0.0, %v3768
        %v3770 = vpop.f32.mrf.mxu0
        %v3771 = vadd.f32 0.0, %v3770
        %3772 = vmatmul.bf16.gmra.mxu0 %v3484
        %v3773 = vpop.f32.mrf.mxu0
        %v3774 = vadd.f32 0.0, %v3773
        %v3775 = vpop.f32.mrf.mxu0
        %v3776 = vadd.f32 0.0, %v3775
        %3777 = vmatmul.bf16.gmra.mxu0 %v3487
        %v3778 = vpop.f32.mrf.mxu0
        %v3779 = vadd.f32 0.0, %v3778
        %v3780 = vpop.f32.mrf.mxu0
        %v3781 = vadd.f32 0.0, %v3780
        %3782 = vdwg.mxu0
        %3783 = vmatpush.bf16.msra.mxu0 0
        %3784 = vmatpush.bf16.msra.mxu0 0
        %3785 = vmatpush.bf16.msra.mxu0 0
        %3786 = vmatpush.bf16.msra.mxu0 0
        %3787 = vmatpush.bf16.msra.mxu0 %v3398
        %3788 = vmatpush.bf16.msra.mxu0 %v3382
        %3789 = vmatpush.bf16.msra.mxu0 %v3366
        %3790 = vmatpush.bf16.msra.mxu0 %v3350
        %3791 = vmatmul.bf16.gmra.mxu0 %v3466
        %v3792 = vpop.f32.mrf.mxu0
        %v3793 = vadd.f32 0.0, %v3792
        %v3794 = vpop.f32.mrf.mxu0
        %v3795 = vadd.f32 0.0, %v3794
        %3796 = vmatmul.bf16.gmra.mxu0 %v3469
        %v3797 = vpop.f32.mrf.mxu0
        %v3798 = vadd.f32 0.0, %v3797
        %v3799 = vpop.f32.mrf.mxu0
        %v3800 = vadd.f32 0.0, %v3799
        %3801 = vmatmul.bf16.gmra.mxu0 %v3472
        %v3802 = vpop.f32.mrf.mxu0
        %v3803 = vadd.f32 0.0, %v3802
        %v3804 = vpop.f32.mrf.mxu0
        %v3805 = vadd.f32 0.0, %v3804
        %3806 = vmatmul.bf16.gmra.mxu0 %v3475
        %v3807 = vpop.f32.mrf.mxu0
        %v3808 = vadd.f32 0.0, %v3807
        %v3809 = vpop.f32.mrf.mxu0
        %v3810 = vadd.f32 0.0, %v3809
        %3811 = vmatmul.bf16.gmra.mxu0 %v3478
        %v3812 = vpop.f32.mrf.mxu0
        %v3813 = vadd.f32 0.0, %v3812
        %v3814 = vpop.f32.mrf.mxu0
        %v3815 = vadd.f32 0.0, %v3814
        %3816 = vmatmul.bf16.gmra.mxu0 %v3481
        %v3817 = vpop.f32.mrf.mxu0
        %v3818 = vadd.f32 0.0, %v3817
        %v3819 = vpop.f32.mrf.mxu0
        %v3820 = vadd.f32 0.0, %v3819
        %3821 = vmatmul.bf16.gmra.mxu0 %v3484
        %v3822 = vpop.f32.mrf.mxu0
        %v3823 = vadd.f32 0.0, %v3822
        %v3824 = vpop.f32.mrf.mxu0
        %v3825 = vadd.f32 0.0, %v3824
        %3826 = vmatmul.bf16.gmra.mxu0 %v3487
        %v3827 = vpop.f32.mrf.mxu0
        %v3828 = vadd.f32 0.0, %v3827
        %v3829 = vpop.f32.mrf.mxu0
        %v3830 = vadd.f32 0.0, %v3829
        %3831 = vdwg.mxu0
        %3832 = vmatpush.bf16.msra.mxu0 0
        %3833 = vmatpush.bf16.msra.mxu0 0
        %3834 = vmatpush.bf16.msra.mxu0 0
        %3835 = vmatpush.bf16.msra.mxu0 0
        %3836 = vmatpush.bf16.msra.mxu0 %v3399
        %3837 = vmatpush.bf16.msra.mxu0 %v3383
        %3838 = vmatpush.bf16.msra.mxu0 %v3367
        %3839 = vmatpush.bf16.msra.mxu0 %v3351
        %3840 = vmatmul.bf16.gmra.mxu0 %v3466
        %v3841 = vpop.f32.mrf.mxu0
        %v3842 = vadd.f32 0.0, %v3841
        %v3843 = vpop.f32.mrf.mxu0
        %v3844 = vadd.f32 0.0, %v3843
        %3845 = vmatmul.bf16.gmra.mxu0 %v3469
        %v3846 = vpop.f32.mrf.mxu0
        %v3847 = vadd.f32 0.0, %v3846
        %v3848 = vpop.f32.mrf.mxu0
        %v3849 = vadd.f32 0.0, %v3848
        %3850 = vmatmul.bf16.gmra.mxu0 %v3472
        %v3851 = vpop.f32.mrf.mxu0
        %v3852 = vadd.f32 0.0, %v3851
        %v3853 = vpop.f32.mrf.mxu0
        %v3854 = vadd.f32 0.0, %v3853
        %3855 = vmatmul.bf16.gmra.mxu0 %v3475
        %v3856 = vpop.f32.mrf.mxu0
        %v3857 = vadd.f32 0.0, %v3856
        %v3858 = vpop.f32.mrf.mxu0
        %v3859 = vadd.f32 0.0, %v3858
        %3860 = vmatmul.bf16.gmra.mxu0 %v3478
        %v3861 = vpop.f32.mrf.mxu0
        %v3862 = vadd.f32 0.0, %v3861
        %v3863 = vpop.f32.mrf.mxu0
        %v3864 = vadd.f32 0.0, %v3863
        %3865 = vmatmul.bf16.gmra.mxu0 %v3481
        %v3866 = vpop.f32.mrf.mxu0
        %v3867 = vadd.f32 0.0, %v3866
        %v3868 = vpop.f32.mrf.mxu0
        %v3869 = vadd.f32 0.0, %v3868
        %3870 = vmatmul.bf16.gmra.mxu0 %v3484
        %v3871 = vpop.f32.mrf.mxu0
        %v3872 = vadd.f32 0.0, %v3871
        %v3873 = vpop.f32.mrf.mxu0
        %v3874 = vadd.f32 0.0, %v3873
        %3875 = vmatmul.bf16.gmra.mxu0 %v3487
        %v3876 = vpop.f32.mrf.mxu0
        %v3877 = vadd.f32 0.0, %v3876
        %v3878 = vpop.f32.mrf.mxu0
        %v3879 = vadd.f32 0.0, %v3878
        %3880 = vdwg.mxu0
        %3881 = vmatpush.bf16.msra.mxu0 0
        %3882 = vmatpush.bf16.msra.mxu0 0
        %3883 = vmatpush.bf16.msra.mxu0 0
        %3884 = vmatpush.bf16.msra.mxu0 0
        %3885 = vmatpush.bf16.msra.mxu0 %v3400
        %3886 = vmatpush.bf16.msra.mxu0 %v3384
        %3887 = vmatpush.bf16.msra.mxu0 %v3368
        %3888 = vmatpush.bf16.msra.mxu0 %v3352
        %3889 = vmatmul.bf16.gmra.mxu0 %v3466
        %v3890 = vpop.f32.mrf.mxu0
        %v3891 = vadd.f32 0.0, %v3890
        %v3892 = vpop.f32.mrf.mxu0
        %v3893 = vadd.f32 0.0, %v3892
        %3894 = vmatmul.bf16.gmra.mxu0 %v3469
        %v3895 = vpop.f32.mrf.mxu0
        %v3896 = vadd.f32 0.0, %v3895
        %v3897 = vpop.f32.mrf.mxu0
        %v3898 = vadd.f32 0.0, %v3897
        %3899 = vmatmul.bf16.gmra.mxu0 %v3472
        %v3900 = vpop.f32.mrf.mxu0
        %v3901 = vadd.f32 0.0, %v3900
        %v3902 = vpop.f32.mrf.mxu0
        %v3903 = vadd.f32 0.0, %v3902
        %3904 = vmatmul.bf16.gmra.mxu0 %v3475
        %v3905 = vpop.f32.mrf.mxu0
        %v3906 = vadd.f32 0.0, %v3905
        %v3907 = vpop.f32.mrf.mxu0
        %v3908 = vadd.f32 0.0, %v3907
        %3909 = vmatmul.bf16.gmra.mxu0 %v3478
        %v3910 = vpop.f32.mrf.mxu0
        %v3911 = vadd.f32 0.0, %v3910
        %v3912 = vpop.f32.mrf.mxu0
        %v3913 = vadd.f32 0.0, %v3912
        %3914 = vmatmul.bf16.gmra.mxu0 %v3481
        %v3915 = vpop.f32.mrf.mxu0
        %v3916 = vadd.f32 0.0, %v3915
        %v3917 = vpop.f32.mrf.mxu0
        %v3918 = vadd.f32 0.0, %v3917
        %3919 = vmatmul.bf16.gmra.mxu0 %v3484
        %v3920 = vpop.f32.mrf.mxu0
        %v3921 = vadd.f32 0.0, %v3920
        %v3922 = vpop.f32.mrf.mxu0
        %v3923 = vadd.f32 0.0, %v3922
        %3924 = vmatmul.bf16.gmra.mxu0 %v3487
        %v3925 = vpop.f32.mrf.mxu0
        %v3926 = vadd.f32 0.0, %v3925
        %v3927 = vpop.f32.mrf.mxu0
        %v3928 = vadd.f32 0.0, %v3927
        %3929 = vdwg.mxu0
        %3930 = vmatpush.bf16.msra.mxu0 0
        %3931 = vmatpush.bf16.msra.mxu0 0
        %3932 = vmatpush.bf16.msra.mxu0 0
        %3933 = vmatpush.bf16.msra.mxu0 0
        %3934 = vmatpush.bf16.msra.mxu0 %v3401
        %3935 = vmatpush.bf16.msra.mxu0 %v3385
        %3936 = vmatpush.bf16.msra.mxu0 %v3369
        %3937 = vmatpush.bf16.msra.mxu0 %v3353
        %3938 = vmatmul.bf16.gmra.mxu0 %v3466
        %v3939 = vpop.f32.mrf.mxu0
        %v3940 = vadd.f32 0.0, %v3939
        %v3941 = vpop.f32.mrf.mxu0
        %v3942 = vadd.f32 0.0, %v3941
        %3943 = vmatmul.bf16.gmra.mxu0 %v3469
        %v3944 = vpop.f32.mrf.mxu0
        %v3945 = vadd.f32 0.0, %v3944
        %v3946 = vpop.f32.mrf.mxu0
        %v3947 = vadd.f32 0.0, %v3946
        %3948 = vmatmul.bf16.gmra.mxu0 %v3472
        %v3949 = vpop.f32.mrf.mxu0
        %v3950 = vadd.f32 0.0, %v3949
        %v3951 = vpop.f32.mrf.mxu0
        %v3952 = vadd.f32 0.0, %v3951
        %3953 = vmatmul.bf16.gmra.mxu0 %v3475
        %v3954 = vpop.f32.mrf.mxu0
        %v3955 = vadd.f32 0.0, %v3954
        %v3956 = vpop.f32.mrf.mxu0
        %v3957 = vadd.f32 0.0, %v3956
        %3958 = vmatmul.bf16.gmra.mxu0 %v3478
        %v3959 = vpop.f32.mrf.mxu0
        %v3960 = vadd.f32 0.0, %v3959
        %v3961 = vpop.f32.mrf.mxu0
        %v3962 = vadd.f32 0.0, %v3961
        %3963 = vmatmul.bf16.gmra.mxu0 %v3481
        %v3964 = vpop.f32.mrf.mxu0
        %v3965 = vadd.f32 0.0, %v3964
        %v3966 = vpop.f32.mrf.mxu0
        %v3967 = vadd.f32 0.0, %v3966
        %3968 = vmatmul.bf16.gmra.mxu0 %v3484
        %v3969 = vpop.f32.mrf.mxu0
        %v3970 = vadd.f32 0.0, %v3969
        %v3971 = vpop.f32.mrf.mxu0
        %v3972 = vadd.f32 0.0, %v3971
        %3973 = vmatmul.bf16.gmra.mxu0 %v3487
        %v3974 = vpop.f32.mrf.mxu0
        %v3975 = vadd.f32 0.0, %v3974
        %v3976 = vpop.f32.mrf.mxu0
        %v3977 = vadd.f32 0.0, %v3976
        %3978 = vdwg.mxu0
        %3979 = vmatpush.bf16.msra.mxu0 0
        %3980 = vmatpush.bf16.msra.mxu0 0
        %3981 = vmatpush.bf16.msra.mxu0 0
        %3982 = vmatpush.bf16.msra.mxu0 0
        %3983 = vmatpush.bf16.msra.mxu0 %v3402
        %3984 = vmatpush.bf16.msra.mxu0 %v3386
        %3985 = vmatpush.bf16.msra.mxu0 %v3370
        %3986 = vmatpush.bf16.msra.mxu0 %v3354
        %3987 = vmatmul.bf16.gmra.mxu0 %v3466
        %v3988 = vpop.f32.mrf.mxu0
        %v3989 = vadd.f32 0.0, %v3988
        %v3990 = vpop.f32.mrf.mxu0
        %v3991 = vadd.f32 0.0, %v3990
        %3992 = vmatmul.bf16.gmra.mxu0 %v3469
        %v3993 = vpop.f32.mrf.mxu0
        %v3994 = vadd.f32 0.0, %v3993
        %v3995 = vpop.f32.mrf.mxu0
        %v3996 = vadd.f32 0.0, %v3995
        %3997 = vmatmul.bf16.gmra.mxu0 %v3472
        %v3998 = vpop.f32.mrf.mxu0
        %v3999 = vadd.f32 0.0, %v3998
        %v4000 = vpop.f32.mrf.mxu0
        %v4001 = vadd.f32 0.0, %v4000
        %4002 = vmatmul.bf16.gmra.mxu0 %v3475
        %v4003 = vpop.f32.mrf.mxu0
        %v4004 = vadd.f32 0.0, %v4003
        %v4005 = vpop.f32.mrf.mxu0
        %v4006 = vadd.f32 0.0, %v4005
        %4007 = vmatmul.bf16.gmra.mxu0 %v3478
        %v4008 = vpop.f32.mrf.mxu0
        %v4009 = vadd.f32 0.0, %v4008
        %v4010 = vpop.f32.mrf.mxu0
        %v4011 = vadd.f32 0.0, %v4010
        %4012 = vmatmul.bf16.gmra.mxu0 %v3481
        %v4013 = vpop.f32.mrf.mxu0
        %v4014 = vadd.f32 0.0, %v4013
        %v4015 = vpop.f32.mrf.mxu0
        %v4016 = vadd.f32 0.0, %v4015
        %4017 = vmatmul.bf16.gmra.mxu0 %v3484
        %v4018 = vpop.f32.mrf.mxu0
        %v4019 = vadd.f32 0.0, %v4018
        %v4020 = vpop.f32.mrf.mxu0
        %v4021 = vadd.f32 0.0, %v4020
        %4022 = vmatmul.bf16.gmra.mxu0 %v3487
        %v4023 = vpop.f32.mrf.mxu0
        %v4024 = vadd.f32 0.0, %v4023
        %v4025 = vpop.f32.mrf.mxu0
        %v4026 = vadd.f32 0.0, %v4025
        %4027 = vdwg.mxu0
        %4028 = vmatpush.bf16.msra.mxu0 0
        %4029 = vmatpush.bf16.msra.mxu0 0
        %4030 = vmatpush.bf16.msra.mxu0 0
        %4031 = vmatpush.bf16.msra.mxu0 0
        %4032 = vmatpush.bf16.msra.mxu0 %v3403
        %4033 = vmatpush.bf16.msra.mxu0 %v3387
        %4034 = vmatpush.bf16.msra.mxu0 %v3371
        %4035 = vmatpush.bf16.msra.mxu0 %v3355
        %4036 = vmatmul.bf16.gmra.mxu0 %v3466
        %v4037 = vpop.f32.mrf.mxu0
        %v4038 = vadd.f32 0.0, %v4037
        %v4039 = vpop.f32.mrf.mxu0
        %v4040 = vadd.f32 0.0, %v4039
        %4041 = vmatmul.bf16.gmra.mxu0 %v3469
        %v4042 = vpop.f32.mrf.mxu0
        %v4043 = vadd.f32 0.0, %v4042
        %v4044 = vpop.f32.mrf.mxu0
        %v4045 = vadd.f32 0.0, %v4044
        %4046 = vmatmul.bf16.gmra.mxu0 %v3472
        %v4047 = vpop.f32.mrf.mxu0
        %v4048 = vadd.f32 0.0, %v4047
        %v4049 = vpop.f32.mrf.mxu0
        %v4050 = vadd.f32 0.0, %v4049
        %4051 = vmatmul.bf16.gmra.mxu0 %v3475
        %v4052 = vpop.f32.mrf.mxu0
        %v4053 = vadd.f32 0.0, %v4052
        %v4054 = vpop.f32.mrf.mxu0
        %v4055 = vadd.f32 0.0, %v4054
        %4056 = vmatmul.bf16.gmra.mxu0 %v3478
        %v4057 = vpop.f32.mrf.mxu0
        %v4058 = vadd.f32 0.0, %v4057
        %v4059 = vpop.f32.mrf.mxu0
        %v4060 = vadd.f32 0.0, %v4059
        %4061 = vmatmul.bf16.gmra.mxu0 %v3481
        %v4062 = vpop.f32.mrf.mxu0
        %v4063 = vadd.f32 0.0, %v4062
        %v4064 = vpop.f32.mrf.mxu0
        %v4065 = vadd.f32 0.0, %v4064
        %4066 = vmatmul.bf16.gmra.mxu0 %v3484
        %v4067 = vpop.f32.mrf.mxu0
        %v4068 = vadd.f32 0.0, %v4067
        %v4069 = vpop.f32.mrf.mxu0
        %v4070 = vadd.f32 0.0, %v4069
        %4071 = vmatmul.bf16.gmra.mxu0 %v3487
        %v4072 = vpop.f32.mrf.mxu0
        %v4073 = vadd.f32 0.0, %v4072
        %v4074 = vpop.f32.mrf.mxu0
        %v4075 = vadd.f32 0.0, %v4074
        %4076 = vdwg.mxu0
        %4077 = vmatpush.bf16.msra.mxu0 0
        %4078 = vmatpush.bf16.msra.mxu0 0
        %4079 = vmatpush.bf16.msra.mxu0 0
        %4080 = vmatpush.bf16.msra.mxu0 0
        %4081 = vmatpush.bf16.msra.mxu0 %v3404
        %4082 = vmatpush.bf16.msra.mxu0 %v3388
        %4083 = vmatpush.bf16.msra.mxu0 %v3372
        %4084 = vmatpush.bf16.msra.mxu0 %v3356
        %4085 = vmatmul.bf16.gmra.mxu0 %v3466
        %v4086 = vpop.f32.mrf.mxu0
        %v4087 = vadd.f32 0.0, %v4086
        %v4088 = vpop.f32.mrf.mxu0
        %v4089 = vadd.f32 0.0, %v4088
        %4090 = vmatmul.bf16.gmra.mxu0 %v3469
        %v4091 = vpop.f32.mrf.mxu0
        %v4092 = vadd.f32 0.0, %v4091
        %v4093 = vpop.f32.mrf.mxu0
        %v4094 = vadd.f32 0.0, %v4093
        %4095 = vmatmul.bf16.gmra.mxu0 %v3472
        %v4096 = vpop.f32.mrf.mxu0
        %v4097 = vadd.f32 0.0, %v4096
        %v4098 = vpop.f32.mrf.mxu0
        %v4099 = vadd.f32 0.0, %v4098
        %4100 = vmatmul.bf16.gmra.mxu0 %v3475
        %v4101 = vpop.f32.mrf.mxu0
        %v4102 = vadd.f32 0.0, %v4101
        %v4103 = vpop.f32.mrf.mxu0
        %v4104 = vadd.f32 0.0, %v4103
        %4105 = vmatmul.bf16.gmra.mxu0 %v3478
        %v4106 = vpop.f32.mrf.mxu0
        %v4107 = vadd.f32 0.0, %v4106
        %v4108 = vpop.f32.mrf.mxu0
        %v4109 = vadd.f32 0.0, %v4108
        %4110 = vmatmul.bf16.gmra.mxu0 %v3481
        %v4111 = vpop.f32.mrf.mxu0
        %v4112 = vadd.f32 0.0, %v4111
        %v4113 = vpop.f32.mrf.mxu0
        %v4114 = vadd.f32 0.0, %v4113
        %4115 = vmatmul.bf16.gmra.mxu0 %v3484
        %v4116 = vpop.f32.mrf.mxu0
        %v4117 = vadd.f32 0.0, %v4116
        %v4118 = vpop.f32.mrf.mxu0
        %v4119 = vadd.f32 0.0, %v4118
        %4120 = vmatmul.bf16.gmra.mxu0 %v3487
        %v4121 = vpop.f32.mrf.mxu0
        %v4122 = vadd.f32 0.0, %v4121
        %v4123 = vpop.f32.mrf.mxu0
        %v4124 = vadd.f32 0.0, %v4123
        %4125 = vdwg.mxu0
        %4126 = vmatpush.bf16.msra.mxu0 0
        %4127 = vmatpush.bf16.msra.mxu0 0
        %4128 = vmatpush.bf16.msra.mxu0 0
        %4129 = vmatpush.bf16.msra.mxu0 0
        %4130 = vmatpush.bf16.msra.mxu0 %v3405
        %4131 = vmatpush.bf16.msra.mxu0 %v3389
        %4132 = vmatpush.bf16.msra.mxu0 %v3373
        %4133 = vmatpush.bf16.msra.mxu0 %v3357
        %4134 = vmatmul.bf16.gmra.mxu0 %v3466
        %v4135 = vpop.f32.mrf.mxu0
        %v4136 = vadd.f32 0.0, %v4135
        %v4137 = vpop.f32.mrf.mxu0
        %v4138 = vadd.f32 0.0, %v4137
        %4139 = vmatmul.bf16.gmra.mxu0 %v3469
        %v4140 = vpop.f32.mrf.mxu0
        %v4141 = vadd.f32 0.0, %v4140
        %v4142 = vpop.f32.mrf.mxu0
        %v4143 = vadd.f32 0.0, %v4142
        %4144 = vmatmul.bf16.gmra.mxu0 %v3472
        %v4145 = vpop.f32.mrf.mxu0
        %v4146 = vadd.f32 0.0, %v4145
        %v4147 = vpop.f32.mrf.mxu0
        %v4148 = vadd.f32 0.0, %v4147
        %4149 = vmatmul.bf16.gmra.mxu0 %v3475
        %v4150 = vpop.f32.mrf.mxu0
        %v4151 = vadd.f32 0.0, %v4150
        %v4152 = vpop.f32.mrf.mxu0
        %v4153 = vadd.f32 0.0, %v4152
        %4154 = vmatmul.bf16.gmra.mxu0 %v3478
        %v4155 = vpop.f32.mrf.mxu0
        %v4156 = vadd.f32 0.0, %v4155
        %v4157 = vpop.f32.mrf.mxu0
        %v4158 = vadd.f32 0.0, %v4157
        %4159 = vmatmul.bf16.gmra.mxu0 %v3481
        %v4160 = vpop.f32.mrf.mxu0
        %v4161 = vadd.f32 0.0, %v4160
        %v4162 = vpop.f32.mrf.mxu0
        %v4163 = vadd.f32 0.0, %v4162
        %4164 = vmatmul.bf16.gmra.mxu0 %v3484
        %v4165 = vpop.f32.mrf.mxu0
        %v4166 = vadd.f32 0.0, %v4165
        %v4167 = vpop.f32.mrf.mxu0
        %v4168 = vadd.f32 0.0, %v4167
        %4169 = vmatmul.bf16.gmra.mxu0 %v3487
        %v4170 = vpop.f32.mrf.mxu0
        %v4171 = vadd.f32 0.0, %v4170
        %v4172 = vpop.f32.mrf.mxu0
        %v4173 = vadd.f32 0.0, %v4172
        %4174 = vdwg.mxu0
        %4175 = vmatpush.bf16.msra.mxu0 0
        %4176 = vmatpush.bf16.msra.mxu0 0
        %4177 = vmatpush.bf16.msra.mxu0 0
        %4178 = vmatpush.bf16.msra.mxu0 0
        %4179 = vmatpush.bf16.msra.mxu0 %v3406
        %4180 = vmatpush.bf16.msra.mxu0 %v3390
        %4181 = vmatpush.bf16.msra.mxu0 %v3374
        %4182 = vmatpush.bf16.msra.mxu0 %v3358
        %4183 = vmatmul.bf16.gmra.mxu0 %v3466
        %v4184 = vpop.f32.mrf.mxu0
        %v4185 = vadd.f32 0.0, %v4184
        %v4186 = vpop.f32.mrf.mxu0
        %v4187 = vadd.f32 0.0, %v4186
        %4188 = vmatmul.bf16.gmra.mxu0 %v3469
        %v4189 = vpop.f32.mrf.mxu0
        %v4190 = vadd.f32 0.0, %v4189
        %v4191 = vpop.f32.mrf.mxu0
        %v4192 = vadd.f32 0.0, %v4191
        %4193 = vmatmul.bf16.gmra.mxu0 %v3472
        %v4194 = vpop.f32.mrf.mxu0
        %v4195 = vadd.f32 0.0, %v4194
        %v4196 = vpop.f32.mrf.mxu0
        %v4197 = vadd.f32 0.0, %v4196
        %4198 = vmatmul.bf16.gmra.mxu0 %v3475
        %v4199 = vpop.f32.mrf.mxu0
        %v4200 = vadd.f32 0.0, %v4199
        %v4201 = vpop.f32.mrf.mxu0
        %v4202 = vadd.f32 0.0, %v4201
        %4203 = vmatmul.bf16.gmra.mxu0 %v3478
        %v4204 = vpop.f32.mrf.mxu0
        %v4205 = vadd.f32 0.0, %v4204
        %v4206 = vpop.f32.mrf.mxu0
        %v4207 = vadd.f32 0.0, %v4206
        %4208 = vmatmul.bf16.gmra.mxu0 %v3481
        %v4209 = vpop.f32.mrf.mxu0
        %v4210 = vadd.f32 0.0, %v4209
        %v4211 = vpop.f32.mrf.mxu0
        %v4212 = vadd.f32 0.0, %v4211
        %4213 = vmatmul.bf16.gmra.mxu0 %v3484
        %v4214 = vpop.f32.mrf.mxu0
        %v4215 = vadd.f32 0.0, %v4214
        %v4216 = vpop.f32.mrf.mxu0
        %v4217 = vadd.f32 0.0, %v4216
        %4218 = vmatmul.bf16.gmra.mxu0 %v3487
        %v4219 = vpop.f32.mrf.mxu0
        %v4220 = vadd.f32 0.0, %v4219
        %v4221 = vpop.f32.mrf.mxu0
        %v4222 = vadd.f32 0.0, %v4221
        %4223 = vdwg.mxu0
        %4224 = vmatpush.bf16.msra.mxu0 0
        %4225 = vmatpush.bf16.msra.mxu0 0
        %4226 = vmatpush.bf16.msra.mxu0 0
        %4227 = vmatpush.bf16.msra.mxu0 0
        %4228 = vmatpush.bf16.msra.mxu0 %v3407
        %4229 = vmatpush.bf16.msra.mxu0 %v3391
        %4230 = vmatpush.bf16.msra.mxu0 %v3375
        %4231 = vmatpush.bf16.msra.mxu0 %v3359
        %4232 = vmatmul.bf16.gmra.mxu0 %v3466
        %v4233 = vpop.f32.mrf.mxu0
        %v4234 = vadd.f32 0.0, %v4233
        %v4235 = vpop.f32.mrf.mxu0
        %v4236 = vadd.f32 0.0, %v4235
        %4237 = vmatmul.bf16.gmra.mxu0 %v3469
        %v4238 = vpop.f32.mrf.mxu0
        %v4239 = vadd.f32 0.0, %v4238
        %v4240 = vpop.f32.mrf.mxu0
        %v4241 = vadd.f32 0.0, %v4240
        %4242 = vmatmul.bf16.gmra.mxu0 %v3472
        %v4243 = vpop.f32.mrf.mxu0
        %v4244 = vadd.f32 0.0, %v4243
        %v4245 = vpop.f32.mrf.mxu0
        %v4246 = vadd.f32 0.0, %v4245
        %4247 = vmatmul.bf16.gmra.mxu0 %v3475
        %v4248 = vpop.f32.mrf.mxu0
        %v4249 = vadd.f32 0.0, %v4248
        %v4250 = vpop.f32.mrf.mxu0
        %v4251 = vadd.f32 0.0, %v4250
        %4252 = vmatmul.bf16.gmra.mxu0 %v3478
        %v4253 = vpop.f32.mrf.mxu0
        %v4254 = vadd.f32 0.0, %v4253
        %v4255 = vpop.f32.mrf.mxu0
        %v4256 = vadd.f32 0.0, %v4255
        %4257 = vmatmul.bf16.gmra.mxu0 %v3481
        %v4258 = vpop.f32.mrf.mxu0
        %v4259 = vadd.f32 0.0, %v4258
        %v4260 = vpop.f32.mrf.mxu0
        %v4261 = vadd.f32 0.0, %v4260
        %4262 = vmatmul.bf16.gmra.mxu0 %v3484
        %v4263 = vpop.f32.mrf.mxu0
        %v4264 = vadd.f32 0.0, %v4263
        %v4265 = vpop.f32.mrf.mxu0
        %v4266 = vadd.f32 0.0, %v4265
        %4267 = vmatmul.bf16.gmra.mxu0 %v3487
        %v4268 = vpop.f32.mrf.mxu0
        %v4269 = vadd.f32 0.0, %v4268
        %v4270 = vpop.f32.mrf.mxu0
        %v4271 = vadd.f32 0.0, %v4270
        %4272 = vdwg.mxu0
        %v4273 = vperm.slane %v1230, 0
        %v4274 = vperm.slane %v1231, 0
        %v4275 = vperm.slane %v1232, 0
        %v4276 = vperm.slane %v1233, 0
        %v4277 = vperm.slane %v1234, 0
        %v4278 = vperm.slane %v1235, 0
        %v4279 = vperm.slane %v1236, 0
        %v4280 = vperm.slane %v1237, 0
        %v4281 = vperm.slane %v1238, 0
        %v4282 = vperm.slane %v1239, 0
        %v4283 = vperm.slane %v1240, 0
        %v4284 = vperm.slane %v1241, 0
        %v4285 = vperm.slane %v1242, 0
        %v4286 = vperm.slane %v1243, 0
        %v4287 = vperm.slane %v1244, 0
        %v4288 = vperm.slane %v1245, 0
        %v4289 = vmul.f32 %v4273, %v3499
        %v4290 = vmul.f32 %v4274, %v3548
        %v4291 = vmul.f32 %v4275, %v3597
        %v4292 = vmul.f32 %v4276, %v3646
        %v4293 = vmul.f32 %v4277, %v3695
        %v4294 = vmul.f32 %v4278, %v3744
        %v4295 = vmul.f32 %v4279, %v3793
        %v4296 = vmul.f32 %v4280, %v3842
        %v4297 = vmul.f32 %v4281, %v3891
        %v4298 = vmul.f32 %v4282, %v3940
        %v4299 = vmul.f32 %v4283, %v3989
        %v4300 = vmul.f32 %v4284, %v4038
        %v4301 = vmul.f32 %v4285, %v4087
        %v4302 = vmul.f32 %v4286, %v4136
        %v4303 = vmul.f32 %v4287, %v4185
        %v4304 = vmul.f32 %v4288, %v4234
        %v4305 = vmul.f32 %v4273, %v3501
        %v4306 = vmul.f32 %v4274, %v3550
        %v4307 = vmul.f32 %v4275, %v3599
        %v4308 = vmul.f32 %v4276, %v3648
        %v4309 = vmul.f32 %v4277, %v3697
        %v4310 = vmul.f32 %v4278, %v3746
        %v4311 = vmul.f32 %v4279, %v3795
        %v4312 = vmul.f32 %v4280, %v3844
        %v4313 = vmul.f32 %v4281, %v3893
        %v4314 = vmul.f32 %v4282, %v3942
        %v4315 = vmul.f32 %v4283, %v3991
        %v4316 = vmul.f32 %v4284, %v4040
        %v4317 = vmul.f32 %v4285, %v4089
        %v4318 = vmul.f32 %v4286, %v4138
        %v4319 = vmul.f32 %v4287, %v4187
        %v4320 = vmul.f32 %v4288, %v4236
        %v4321 = vperm.slane %v1230, 1
        %v4322 = vperm.slane %v1231, 1
        %v4323 = vperm.slane %v1232, 1
        %v4324 = vperm.slane %v1233, 1
        %v4325 = vperm.slane %v1234, 1
        %v4326 = vperm.slane %v1235, 1
        %v4327 = vperm.slane %v1236, 1
        %v4328 = vperm.slane %v1237, 1
        %v4329 = vperm.slane %v1238, 1
        %v4330 = vperm.slane %v1239, 1
        %v4331 = vperm.slane %v1240, 1
        %v4332 = vperm.slane %v1241, 1
        %v4333 = vperm.slane %v1242, 1
        %v4334 = vperm.slane %v1243, 1
        %v4335 = vperm.slane %v1244, 1
        %v4336 = vperm.slane %v1245, 1
        %v4337 = vmul.f32 %v4321, %v3504
        %v4338 = vmul.f32 %v4322, %v3553
        %v4339 = vmul.f32 %v4323, %v3602
        %v4340 = vmul.f32 %v4324, %v3651
        %v4341 = vmul.f32 %v4325, %v3700
        %v4342 = vmul.f32 %v4326, %v3749
        %v4343 = vmul.f32 %v4327, %v3798
        %v4344 = vmul.f32 %v4328, %v3847
        %v4345 = vmul.f32 %v4329, %v3896
        %v4346 = vmul.f32 %v4330, %v3945
        %v4347 = vmul.f32 %v4331, %v3994
        %v4348 = vmul.f32 %v4332, %v4043
        %v4349 = vmul.f32 %v4333, %v4092
        %v4350 = vmul.f32 %v4334, %v4141
        %v4351 = vmul.f32 %v4335, %v4190
        %v4352 = vmul.f32 %v4336, %v4239
        %v4353 = vmul.f32 %v4321, %v3506
        %v4354 = vmul.f32 %v4322, %v3555
        %v4355 = vmul.f32 %v4323, %v3604
        %v4356 = vmul.f32 %v4324, %v3653
        %v4357 = vmul.f32 %v4325, %v3702
        %v4358 = vmul.f32 %v4326, %v3751
        %v4359 = vmul.f32 %v4327, %v3800
        %v4360 = vmul.f32 %v4328, %v3849
        %v4361 = vmul.f32 %v4329, %v3898
        %v4362 = vmul.f32 %v4330, %v3947
        %v4363 = vmul.f32 %v4331, %v3996
        %v4364 = vmul.f32 %v4332, %v4045
        %v4365 = vmul.f32 %v4333, %v4094
        %v4366 = vmul.f32 %v4334, %v4143
        %v4367 = vmul.f32 %v4335, %v4192
        %v4368 = vmul.f32 %v4336, %v4241
        %v4369 = vadd.f32 %v4289, %v4337
        %v4370 = vadd.f32 %v4290, %v4338
        %v4371 = vadd.f32 %v4291, %v4339
        %v4372 = vadd.f32 %v4292, %v4340
        %v4373 = vadd.f32 %v4293, %v4341
        %v4374 = vadd.f32 %v4294, %v4342
        %v4375 = vadd.f32 %v4295, %v4343
        %v4376 = vadd.f32 %v4296, %v4344
        %v4377 = vadd.f32 %v4297, %v4345
        %v4378 = vadd.f32 %v4298, %v4346
        %v4379 = vadd.f32 %v4299, %v4347
        %v4380 = vadd.f32 %v4300, %v4348
        %v4381 = vadd.f32 %v4301, %v4349
        %v4382 = vadd.f32 %v4302, %v4350
        %v4383 = vadd.f32 %v4303, %v4351
        %v4384 = vadd.f32 %v4304, %v4352
        %v4385 = vadd.f32 %v4305, %v4353
        %v4386 = vadd.f32 %v4306, %v4354
        %v4387 = vadd.f32 %v4307, %v4355
        %v4388 = vadd.f32 %v4308, %v4356
        %v4389 = vadd.f32 %v4309, %v4357
        %v4390 = vadd.f32 %v4310, %v4358
        %v4391 = vadd.f32 %v4311, %v4359
        %v4392 = vadd.f32 %v4312, %v4360
        %v4393 = vadd.f32 %v4313, %v4361
        %v4394 = vadd.f32 %v4314, %v4362
        %v4395 = vadd.f32 %v4315, %v4363
        %v4396 = vadd.f32 %v4316, %v4364
        %v4397 = vadd.f32 %v4317, %v4365
        %v4398 = vadd.f32 %v4318, %v4366
        %v4399 = vadd.f32 %v4319, %v4367
        %v4400 = vadd.f32 %v4320, %v4368
        %v4401 = vperm.slane %v1230, 2
        %v4402 = vperm.slane %v1231, 2
        %v4403 = vperm.slane %v1232, 2
        %v4404 = vperm.slane %v1233, 2
        %v4405 = vperm.slane %v1234, 2
        %v4406 = vperm.slane %v1235, 2
        %v4407 = vperm.slane %v1236, 2
        %v4408 = vperm.slane %v1237, 2
        %v4409 = vperm.slane %v1238, 2
        %v4410 = vperm.slane %v1239, 2
        %v4411 = vperm.slane %v1240, 2
        %v4412 = vperm.slane %v1241, 2
        %v4413 = vperm.slane %v1242, 2
        %v4414 = vperm.slane %v1243, 2
        %v4415 = vperm.slane %v1244, 2
        %v4416 = vperm.slane %v1245, 2
        %v4417 = vmul.f32 %v4401, %v3509
        %v4418 = vmul.f32 %v4402, %v3558
        %v4419 = vmul.f32 %v4403, %v3607
        %v4420 = vmul.f32 %v4404, %v3656
        %v4421 = vmul.f32 %v4405, %v3705
        %v4422 = vmul.f32 %v4406, %v3754
        %v4423 = vmul.f32 %v4407, %v3803
        %v4424 = vmul.f32 %v4408, %v3852
        %v4425 = vmul.f32 %v4409, %v3901
        %v4426 = vmul.f32 %v4410, %v3950
        %v4427 = vmul.f32 %v4411, %v3999
        %v4428 = vmul.f32 %v4412, %v4048
        %v4429 = vmul.f32 %v4413, %v4097
        %v4430 = vmul.f32 %v4414, %v4146
        %v4431 = vmul.f32 %v4415, %v4195
        %v4432 = vmul.f32 %v4416, %v4244
        %v4433 = vmul.f32 %v4401, %v3511
        %v4434 = vmul.f32 %v4402, %v3560
        %v4435 = vmul.f32 %v4403, %v3609
        %v4436 = vmul.f32 %v4404, %v3658
        %v4437 = vmul.f32 %v4405, %v3707
        %v4438 = vmul.f32 %v4406, %v3756
        %v4439 = vmul.f32 %v4407, %v3805
        %v4440 = vmul.f32 %v4408, %v3854
        %v4441 = vmul.f32 %v4409, %v3903
        %v4442 = vmul.f32 %v4410, %v3952
        %v4443 = vmul.f32 %v4411, %v4001
        %v4444 = vmul.f32 %v4412, %v4050
        %v4445 = vmul.f32 %v4413, %v4099
        %v4446 = vmul.f32 %v4414, %v4148
        %v4447 = vmul.f32 %v4415, %v4197
        %v4448 = vmul.f32 %v4416, %v4246
        %v4449 = vadd.f32 %v4369, %v4417
        %v4450 = vadd.f32 %v4370, %v4418
        %v4451 = vadd.f32 %v4371, %v4419
        %v4452 = vadd.f32 %v4372, %v4420
        %v4453 = vadd.f32 %v4373, %v4421
        %v4454 = vadd.f32 %v4374, %v4422
        %v4455 = vadd.f32 %v4375, %v4423
        %v4456 = vadd.f32 %v4376, %v4424
        %v4457 = vadd.f32 %v4377, %v4425
        %v4458 = vadd.f32 %v4378, %v4426
        %v4459 = vadd.f32 %v4379, %v4427
        %v4460 = vadd.f32 %v4380, %v4428
        %v4461 = vadd.f32 %v4381, %v4429
        %v4462 = vadd.f32 %v4382, %v4430
        %v4463 = vadd.f32 %v4383, %v4431
        %v4464 = vadd.f32 %v4384, %v4432
        %v4465 = vadd.f32 %v4385, %v4433
        %v4466 = vadd.f32 %v4386, %v4434
        %v4467 = vadd.f32 %v4387, %v4435
        %v4468 = vadd.f32 %v4388, %v4436
        %v4469 = vadd.f32 %v4389, %v4437
        %v4470 = vadd.f32 %v4390, %v4438
        %v4471 = vadd.f32 %v4391, %v4439
        %v4472 = vadd.f32 %v4392, %v4440
        %v4473 = vadd.f32 %v4393, %v4441
        %v4474 = vadd.f32 %v4394, %v4442
        %v4475 = vadd.f32 %v4395, %v4443
        %v4476 = vadd.f32 %v4396, %v4444
        %v4477 = vadd.f32 %v4397, %v4445
        %v4478 = vadd.f32 %v4398, %v4446
        %v4479 = vadd.f32 %v4399, %v4447
        %v4480 = vadd.f32 %v4400, %v4448
        %v4481 = vperm.slane %v1230, 3
        %v4482 = vperm.slane %v1231, 3
        %v4483 = vperm.slane %v1232, 3
        %v4484 = vperm.slane %v1233, 3
        %v4485 = vperm.slane %v1234, 3
        %v4486 = vperm.slane %v1235, 3
        %v4487 = vperm.slane %v1236, 3
        %v4488 = vperm.slane %v1237, 3
        %v4489 = vperm.slane %v1238, 3
        %v4490 = vperm.slane %v1239, 3
        %v4491 = vperm.slane %v1240, 3
        %v4492 = vperm.slane %v1241, 3
        %v4493 = vperm.slane %v1242, 3
        %v4494 = vperm.slane %v1243, 3
        %v4495 = vperm.slane %v1244, 3
        %v4496 = vperm.slane %v1245, 3
        %v4497 = vmul.f32 %v4481, %v3514
        %v4498 = vmul.f32 %v4482, %v3563
        %v4499 = vmul.f32 %v4483, %v3612
        %v4500 = vmul.f32 %v4484, %v3661
        %v4501 = vmul.f32 %v4485, %v3710
        %v4502 = vmul.f32 %v4486, %v3759
        %v4503 = vmul.f32 %v4487, %v3808
        %v4504 = vmul.f32 %v4488, %v3857
        %v4505 = vmul.f32 %v4489, %v3906
        %v4506 = vmul.f32 %v4490, %v3955
        %v4507 = vmul.f32 %v4491, %v4004
        %v4508 = vmul.f32 %v4492, %v4053
        %v4509 = vmul.f32 %v4493, %v4102
        %v4510 = vmul.f32 %v4494, %v4151
        %v4511 = vmul.f32 %v4495, %v4200
        %v4512 = vmul.f32 %v4496, %v4249
        %v4513 = vmul.f32 %v4481, %v3516
        %v4514 = vmul.f32 %v4482, %v3565
        %v4515 = vmul.f32 %v4483, %v3614
        %v4516 = vmul.f32 %v4484, %v3663
        %v4517 = vmul.f32 %v4485, %v3712
        %v4518 = vmul.f32 %v4486, %v3761
        %v4519 = vmul.f32 %v4487, %v3810
        %v4520 = vmul.f32 %v4488, %v3859
        %v4521 = vmul.f32 %v4489, %v3908
        %v4522 = vmul.f32 %v4490, %v3957
        %v4523 = vmul.f32 %v4491, %v4006
        %v4524 = vmul.f32 %v4492, %v4055
        %v4525 = vmul.f32 %v4493, %v4104
        %v4526 = vmul.f32 %v4494, %v4153
        %v4527 = vmul.f32 %v4495, %v4202
        %v4528 = vmul.f32 %v4496, %v4251
        %v4529 = vadd.f32 %v4449, %v4497
        %v4530 = vadd.f32 %v4450, %v4498
        %v4531 = vadd.f32 %v4451, %v4499
        %v4532 = vadd.f32 %v4452, %v4500
        %v4533 = vadd.f32 %v4453, %v4501
        %v4534 = vadd.f32 %v4454, %v4502
        %v4535 = vadd.f32 %v4455, %v4503
        %v4536 = vadd.f32 %v4456, %v4504
        %v4537 = vadd.f32 %v4457, %v4505
        %v4538 = vadd.f32 %v4458, %v4506
        %v4539 = vadd.f32 %v4459, %v4507
        %v4540 = vadd.f32 %v4460, %v4508
        %v4541 = vadd.f32 %v4461, %v4509
        %v4542 = vadd.f32 %v4462, %v4510
        %v4543 = vadd.f32 %v4463, %v4511
        %v4544 = vadd.f32 %v4464, %v4512
        %v4545 = vadd.f32 %v4465, %v4513
        %v4546 = vadd.f32 %v4466, %v4514
        %v4547 = vadd.f32 %v4467, %v4515
        %v4548 = vadd.f32 %v4468, %v4516
        %v4549 = vadd.f32 %v4469, %v4517
        %v4550 = vadd.f32 %v4470, %v4518
        %v4551 = vadd.f32 %v4471, %v4519
        %v4552 = vadd.f32 %v4472, %v4520
        %v4553 = vadd.f32 %v4473, %v4521
        %v4554 = vadd.f32 %v4474, %v4522
        %v4555 = vadd.f32 %v4475, %v4523
        %v4556 = vadd.f32 %v4476, %v4524
        %v4557 = vadd.f32 %v4477, %v4525
        %v4558 = vadd.f32 %v4478, %v4526
        %v4559 = vadd.f32 %v4479, %v4527
        %v4560 = vadd.f32 %v4480, %v4528
        %v4561 = vperm.slane %v1230, 4
        %v4562 = vperm.slane %v1231, 4
        %v4563 = vperm.slane %v1232, 4
        %v4564 = vperm.slane %v1233, 4
        %v4565 = vperm.slane %v1234, 4
        %v4566 = vperm.slane %v1235, 4
        %v4567 = vperm.slane %v1236, 4
        %v4568 = vperm.slane %v1237, 4
        %v4569 = vperm.slane %v1238, 4
        %v4570 = vperm.slane %v1239, 4
        %v4571 = vperm.slane %v1240, 4
        %v4572 = vperm.slane %v1241, 4
        %v4573 = vperm.slane %v1242, 4
        %v4574 = vperm.slane %v1243, 4
        %v4575 = vperm.slane %v1244, 4
        %v4576 = vperm.slane %v1245, 4
        %v4577 = vmul.f32 %v4561, %v3519
        %v4578 = vmul.f32 %v4562, %v3568
        %v4579 = vmul.f32 %v4563, %v3617
        %v4580 = vmul.f32 %v4564, %v3666
        %v4581 = vmul.f32 %v4565, %v3715
        %v4582 = vmul.f32 %v4566, %v3764
        %v4583 = vmul.f32 %v4567, %v3813
        %v4584 = vmul.f32 %v4568, %v3862
        %v4585 = vmul.f32 %v4569, %v3911
        %v4586 = vmul.f32 %v4570, %v3960
        %v4587 = vmul.f32 %v4571, %v4009
        %v4588 = vmul.f32 %v4572, %v4058
        %v4589 = vmul.f32 %v4573, %v4107
        %v4590 = vmul.f32 %v4574, %v4156
        %v4591 = vmul.f32 %v4575, %v4205
        %v4592 = vmul.f32 %v4576, %v4254
        %v4593 = vmul.f32 %v4561, %v3521
        %v4594 = vmul.f32 %v4562, %v3570
        %v4595 = vmul.f32 %v4563, %v3619
        %v4596 = vmul.f32 %v4564, %v3668
        %v4597 = vmul.f32 %v4565, %v3717
        %v4598 = vmul.f32 %v4566, %v3766
        %v4599 = vmul.f32 %v4567, %v3815
        %v4600 = vmul.f32 %v4568, %v3864
        %v4601 = vmul.f32 %v4569, %v3913
        %v4602 = vmul.f32 %v4570, %v3962
        %v4603 = vmul.f32 %v4571, %v4011
        %v4604 = vmul.f32 %v4572, %v4060
        %v4605 = vmul.f32 %v4573, %v4109
        %v4606 = vmul.f32 %v4574, %v4158
        %v4607 = vmul.f32 %v4575, %v4207
        %v4608 = vmul.f32 %v4576, %v4256
        %v4609 = vadd.f32 %v4529, %v4577
        %v4610 = vadd.f32 %v4530, %v4578
        %v4611 = vadd.f32 %v4531, %v4579
        %v4612 = vadd.f32 %v4532, %v4580
        %v4613 = vadd.f32 %v4533, %v4581
        %v4614 = vadd.f32 %v4534, %v4582
        %v4615 = vadd.f32 %v4535, %v4583
        %v4616 = vadd.f32 %v4536, %v4584
        %v4617 = vadd.f32 %v4537, %v4585
        %v4618 = vadd.f32 %v4538, %v4586
        %v4619 = vadd.f32 %v4539, %v4587
        %v4620 = vadd.f32 %v4540, %v4588
        %v4621 = vadd.f32 %v4541, %v4589
        %v4622 = vadd.f32 %v4542, %v4590
        %v4623 = vadd.f32 %v4543, %v4591
        %v4624 = vadd.f32 %v4544, %v4592
        %v4625 = vadd.f32 %v4545, %v4593
        %v4626 = vadd.f32 %v4546, %v4594
        %v4627 = vadd.f32 %v4547, %v4595
        %v4628 = vadd.f32 %v4548, %v4596
        %v4629 = vadd.f32 %v4549, %v4597
        %v4630 = vadd.f32 %v4550, %v4598
        %v4631 = vadd.f32 %v4551, %v4599
        %v4632 = vadd.f32 %v4552, %v4600
        %v4633 = vadd.f32 %v4553, %v4601
        %v4634 = vadd.f32 %v4554, %v4602
        %v4635 = vadd.f32 %v4555, %v4603
        %v4636 = vadd.f32 %v4556, %v4604
        %v4637 = vadd.f32 %v4557, %v4605
        %v4638 = vadd.f32 %v4558, %v4606
        %v4639 = vadd.f32 %v4559, %v4607
        %v4640 = vadd.f32 %v4560, %v4608
        %v4641 = vperm.slane %v1230, 5
        %v4642 = vperm.slane %v1231, 5
        %v4643 = vperm.slane %v1232, 5
        %v4644 = vperm.slane %v1233, 5
        %v4645 = vperm.slane %v1234, 5
        %v4646 = vperm.slane %v1235, 5
        %v4647 = vperm.slane %v1236, 5
        %v4648 = vperm.slane %v1237, 5
        %v4649 = vperm.slane %v1238, 5
        %v4650 = vperm.slane %v1239, 5
        %v4651 = vperm.slane %v1240, 5
        %v4652 = vperm.slane %v1241, 5
        %v4653 = vperm.slane %v1242, 5
        %v4654 = vperm.slane %v1243, 5
        %v4655 = vperm.slane %v1244, 5
        %v4656 = vperm.slane %v1245, 5
        %v4657 = vmul.f32 %v4641, %v3524
        %v4658 = vmul.f32 %v4642, %v3573
        %v4659 = vmul.f32 %v4643, %v3622
        %v4660 = vmul.f32 %v4644, %v3671
        %v4661 = vmul.f32 %v4645, %v3720
        %v4662 = vmul.f32 %v4646, %v3769
        %v4663 = vmul.f32 %v4647, %v3818
        %v4664 = vmul.f32 %v4648, %v3867
        %v4665 = vmul.f32 %v4649, %v3916
        %v4666 = vmul.f32 %v4650, %v3965
        %v4667 = vmul.f32 %v4651, %v4014
        %v4668 = vmul.f32 %v4652, %v4063
        %v4669 = vmul.f32 %v4653, %v4112
        %v4670 = vmul.f32 %v4654, %v4161
        %v4671 = vmul.f32 %v4655, %v4210
        %v4672 = vmul.f32 %v4656, %v4259
        %v4673 = vmul.f32 %v4641, %v3526
        %v4674 = vmul.f32 %v4642, %v3575
        %v4675 = vmul.f32 %v4643, %v3624
        %v4676 = vmul.f32 %v4644, %v3673
        %v4677 = vmul.f32 %v4645, %v3722
        %v4678 = vmul.f32 %v4646, %v3771
        %v4679 = vmul.f32 %v4647, %v3820
        %v4680 = vmul.f32 %v4648, %v3869
        %v4681 = vmul.f32 %v4649, %v3918
        %v4682 = vmul.f32 %v4650, %v3967
        %v4683 = vmul.f32 %v4651, %v4016
        %v4684 = vmul.f32 %v4652, %v4065
        %v4685 = vmul.f32 %v4653, %v4114
        %v4686 = vmul.f32 %v4654, %v4163
        %v4687 = vmul.f32 %v4655, %v4212
        %v4688 = vmul.f32 %v4656, %v4261
        %v4689 = vadd.f32 %v4609, %v4657
        %v4690 = vadd.f32 %v4610, %v4658
        %v4691 = vadd.f32 %v4611, %v4659
        %v4692 = vadd.f32 %v4612, %v4660
        %v4693 = vadd.f32 %v4613, %v4661
        %v4694 = vadd.f32 %v4614, %v4662
        %v4695 = vadd.f32 %v4615, %v4663
        %v4696 = vadd.f32 %v4616, %v4664
        %v4697 = vadd.f32 %v4617, %v4665
        %v4698 = vadd.f32 %v4618, %v4666
        %v4699 = vadd.f32 %v4619, %v4667
        %v4700 = vadd.f32 %v4620, %v4668
        %v4701 = vadd.f32 %v4621, %v4669
        %v4702 = vadd.f32 %v4622, %v4670
        %v4703 = vadd.f32 %v4623, %v4671
        %v4704 = vadd.f32 %v4624, %v4672
        %v4705 = vadd.f32 %v4625, %v4673
        %v4706 = vadd.f32 %v4626, %v4674
        %v4707 = vadd.f32 %v4627, %v4675
        %v4708 = vadd.f32 %v4628, %v4676
        %v4709 = vadd.f32 %v4629, %v4677
        %v4710 = vadd.f32 %v4630, %v4678
        %v4711 = vadd.f32 %v4631, %v4679
        %v4712 = vadd.f32 %v4632, %v4680
        %v4713 = vadd.f32 %v4633, %v4681
        %v4714 = vadd.f32 %v4634, %v4682
        %v4715 = vadd.f32 %v4635, %v4683
        %v4716 = vadd.f32 %v4636, %v4684
        %v4717 = vadd.f32 %v4637, %v4685
        %v4718 = vadd.f32 %v4638, %v4686
        %v4719 = vadd.f32 %v4639, %v4687
        %v4720 = vadd.f32 %v4640, %v4688
        %v4721 = vperm.slane %v1230, 6
        %v4722 = vperm.slane %v1231, 6
        %v4723 = vperm.slane %v1232, 6
        %v4724 = vperm.slane %v1233, 6
        %v4725 = vperm.slane %v1234, 6
        %v4726 = vperm.slane %v1235, 6
        %v4727 = vperm.slane %v1236, 6
        %v4728 = vperm.slane %v1237, 6
        %v4729 = vperm.slane %v1238, 6
        %v4730 = vperm.slane %v1239, 6
        %v4731 = vperm.slane %v1240, 6
        %v4732 = vperm.slane %v1241, 6
        %v4733 = vperm.slane %v1242, 6
        %v4734 = vperm.slane %v1243, 6
        %v4735 = vperm.slane %v1244, 6
        %v4736 = vperm.slane %v1245, 6
        %v4737 = vmul.f32 %v4721, %v3529
        %v4738 = vmul.f32 %v4722, %v3578
        %v4739 = vmul.f32 %v4723, %v3627
        %v4740 = vmul.f32 %v4724, %v3676
        %v4741 = vmul.f32 %v4725, %v3725
        %v4742 = vmul.f32 %v4726, %v3774
        %v4743 = vmul.f32 %v4727, %v3823
        %v4744 = vmul.f32 %v4728, %v3872
        %v4745 = vmul.f32 %v4729, %v3921
        %v4746 = vmul.f32 %v4730, %v3970
        %v4747 = vmul.f32 %v4731, %v4019
        %v4748 = vmul.f32 %v4732, %v4068
        %v4749 = vmul.f32 %v4733, %v4117
        %v4750 = vmul.f32 %v4734, %v4166
        %v4751 = vmul.f32 %v4735, %v4215
        %v4752 = vmul.f32 %v4736, %v4264
        %v4753 = vmul.f32 %v4721, %v3531
        %v4754 = vmul.f32 %v4722, %v3580
        %v4755 = vmul.f32 %v4723, %v3629
        %v4756 = vmul.f32 %v4724, %v3678
        %v4757 = vmul.f32 %v4725, %v3727
        %v4758 = vmul.f32 %v4726, %v3776
        %v4759 = vmul.f32 %v4727, %v3825
        %v4760 = vmul.f32 %v4728, %v3874
        %v4761 = vmul.f32 %v4729, %v3923
        %v4762 = vmul.f32 %v4730, %v3972
        %v4763 = vmul.f32 %v4731, %v4021
        %v4764 = vmul.f32 %v4732, %v4070
        %v4765 = vmul.f32 %v4733, %v4119
        %v4766 = vmul.f32 %v4734, %v4168
        %v4767 = vmul.f32 %v4735, %v4217
        %v4768 = vmul.f32 %v4736, %v4266
        %v4769 = vadd.f32 %v4689, %v4737
        %v4770 = vadd.f32 %v4690, %v4738
        %v4771 = vadd.f32 %v4691, %v4739
        %v4772 = vadd.f32 %v4692, %v4740
        %v4773 = vadd.f32 %v4693, %v4741
        %v4774 = vadd.f32 %v4694, %v4742
        %v4775 = vadd.f32 %v4695, %v4743
        %v4776 = vadd.f32 %v4696, %v4744
        %v4777 = vadd.f32 %v4697, %v4745
        %v4778 = vadd.f32 %v4698, %v4746
        %v4779 = vadd.f32 %v4699, %v4747
        %v4780 = vadd.f32 %v4700, %v4748
        %v4781 = vadd.f32 %v4701, %v4749
        %v4782 = vadd.f32 %v4702, %v4750
        %v4783 = vadd.f32 %v4703, %v4751
        %v4784 = vadd.f32 %v4704, %v4752
        %v4785 = vadd.f32 %v4705, %v4753
        %v4786 = vadd.f32 %v4706, %v4754
        %v4787 = vadd.f32 %v4707, %v4755
        %v4788 = vadd.f32 %v4708, %v4756
        %v4789 = vadd.f32 %v4709, %v4757
        %v4790 = vadd.f32 %v4710, %v4758
        %v4791 = vadd.f32 %v4711, %v4759
        %v4792 = vadd.f32 %v4712, %v4760
        %v4793 = vadd.f32 %v4713, %v4761
        %v4794 = vadd.f32 %v4714, %v4762
        %v4795 = vadd.f32 %v4715, %v4763
        %v4796 = vadd.f32 %v4716, %v4764
        %v4797 = vadd.f32 %v4717, %v4765
        %v4798 = vadd.f32 %v4718, %v4766
        %v4799 = vadd.f32 %v4719, %v4767
        %v4800 = vadd.f32 %v4720, %v4768
        %v4801 = vperm.slane %v1230, 7
        %v4802 = vperm.slane %v1231, 7
        %v4803 = vperm.slane %v1232, 7
        %v4804 = vperm.slane %v1233, 7
        %v4805 = vperm.slane %v1234, 7
        %v4806 = vperm.slane %v1235, 7
        %v4807 = vperm.slane %v1236, 7
        %v4808 = vperm.slane %v1237, 7
        %v4809 = vperm.slane %v1238, 7
        %v4810 = vperm.slane %v1239, 7
        %v4811 = vperm.slane %v1240, 7
        %v4812 = vperm.slane %v1241, 7
        %v4813 = vperm.slane %v1242, 7
        %v4814 = vperm.slane %v1243, 7
        %v4815 = vperm.slane %v1244, 7
        %v4816 = vperm.slane %v1245, 7
        %v4817 = vmul.f32 %v4801, %v3534
        %v4818 = vmul.f32 %v4802, %v3583
        %v4819 = vmul.f32 %v4803, %v3632
        %v4820 = vmul.f32 %v4804, %v3681
        %v4821 = vmul.f32 %v4805, %v3730
        %v4822 = vmul.f32 %v4806, %v3779
        %v4823 = vmul.f32 %v4807, %v3828
        %v4824 = vmul.f32 %v4808, %v3877
        %v4825 = vmul.f32 %v4809, %v3926
        %v4826 = vmul.f32 %v4810, %v3975
        %v4827 = vmul.f32 %v4811, %v4024
        %v4828 = vmul.f32 %v4812, %v4073
        %v4829 = vmul.f32 %v4813, %v4122
        %v4830 = vmul.f32 %v4814, %v4171
        %v4831 = vmul.f32 %v4815, %v4220
        %v4832 = vmul.f32 %v4816, %v4269
        %v4833 = vmul.f32 %v4801, %v3536
        %v4834 = vmul.f32 %v4802, %v3585
        %v4835 = vmul.f32 %v4803, %v3634
        %v4836 = vmul.f32 %v4804, %v3683
        %v4837 = vmul.f32 %v4805, %v3732
        %v4838 = vmul.f32 %v4806, %v3781
        %v4839 = vmul.f32 %v4807, %v3830
        %v4840 = vmul.f32 %v4808, %v3879
        %v4841 = vmul.f32 %v4809, %v3928
        %v4842 = vmul.f32 %v4810, %v3977
        %v4843 = vmul.f32 %v4811, %v4026
        %v4844 = vmul.f32 %v4812, %v4075
        %v4845 = vmul.f32 %v4813, %v4124
        %v4846 = vmul.f32 %v4814, %v4173
        %v4847 = vmul.f32 %v4815, %v4222
        %v4848 = vmul.f32 %v4816, %v4271
        %v4849 = vadd.f32 %v4769, %v4817
        %v4850 = vadd.f32 %v4770, %v4818
        %v4851 = vadd.f32 %v4771, %v4819
        %v4852 = vadd.f32 %v4772, %v4820
        %v4853 = vadd.f32 %v4773, %v4821
        %v4854 = vadd.f32 %v4774, %v4822
        %v4855 = vadd.f32 %v4775, %v4823
        %v4856 = vadd.f32 %v4776, %v4824
        %v4857 = vadd.f32 %v4777, %v4825
        %v4858 = vadd.f32 %v4778, %v4826
        %v4859 = vadd.f32 %v4779, %v4827
        %v4860 = vadd.f32 %v4780, %v4828
        %v4861 = vadd.f32 %v4781, %v4829
        %v4862 = vadd.f32 %v4782, %v4830
        %v4863 = vadd.f32 %v4783, %v4831
        %v4864 = vadd.f32 %v4784, %v4832
        %v4865 = vadd.f32 %v4785, %v4833
        %v4866 = vadd.f32 %v4786, %v4834
        %v4867 = vadd.f32 %v4787, %v4835
        %v4868 = vadd.f32 %v4788, %v4836
        %v4869 = vadd.f32 %v4789, %v4837
        %v4870 = vadd.f32 %v4790, %v4838
        %v4871 = vadd.f32 %v4791, %v4839
        %v4872 = vadd.f32 %v4792, %v4840
        %v4873 = vadd.f32 %v4793, %v4841
        %v4874 = vadd.f32 %v4794, %v4842
        %v4875 = vadd.f32 %v4795, %v4843
        %v4876 = vadd.f32 %v4796, %v4844
        %v4877 = vadd.f32 %v4797, %v4845
        %v4878 = vadd.f32 %v4798, %v4846
        %v4879 = vadd.f32 %v4799, %v4847
        %v4880 = vadd.f32 %v4800, %v4848
        %v4881 = vmul.f32 %v580, 3.0
        %v4882 = vmul.f32 %v581, 3.0
        %v4883 = vmul.f32 %v582, 3.0
        %v4884 = vmul.f32 %v583, 3.0
        %v4885 = vmul.f32 %v584, 3.0
        %v4886 = vmul.f32 %v585, 3.0
        %v4887 = vmul.f32 %v586, 3.0
        %v4888 = vmul.f32 %v587, 3.0
        %v4889 = vfloor.f32 %v4881
        %v4890 = vfloor.f32 %v4882
        %v4891 = vfloor.f32 %v4883
        %v4892 = vfloor.f32 %v4884
        %v4893 = vfloor.f32 %v4885
        %v4894 = vfloor.f32 %v4886
        %v4895 = vfloor.f32 %v4887
        %v4896 = vfloor.f32 %v4888
        %v4897 = vmax.f32 %v4889, 0.0
        %v4898 = vmax.f32 %v4890, 0.0
        %v4899 = vmax.f32 %v4891, 0.0
        %v4900 = vmax.f32 %v4892, 0.0
        %v4901 = vmax.f32 %v4893, 0.0
        %v4902 = vmax.f32 %v4894, 0.0
        %v4903 = vmax.f32 %v4895, 0.0
        %v4904 = vmax.f32 %v4896, 0.0
        %v4905 = vmin.f32 %v4897, 2.0
        %v4906 = vmin.f32 %v4898, 2.0
        %v4907 = vmin.f32 %v4899, 2.0
        %v4908 = vmin.f32 %v4900, 2.0
        %v4909 = vmin.f32 %v4901, 2.0
        %v4910 = vmin.f32 %v4902, 2.0
        %v4911 = vmin.f32 %v4903, 2.0
        %v4912 = vmin.f32 %v4904, 2.0
        %v4913 = vsub.f32 %v4881, %v4905
        %v4914 = vsub.f32 %v4882, %v4906
        %v4915 = vsub.f32 %v4883, %v4907
        %v4916 = vsub.f32 %v4884, %v4908
        %v4917 = vsub.f32 %v4885, %v4909
        %v4918 = vsub.f32 %v4886, %v4910
        %v4919 = vsub.f32 %v4887, %v4911
        %v4920 = vsub.f32 %v4888, %v4912
        %v4921 = vcvt.f32.s32.to.zero.pseudo %v4905
        %v4922 = vcvt.f32.s32.to.zero.pseudo %v4906
        %v4923 = vcvt.f32.s32.to.zero.pseudo %v4907
        %v4924 = vcvt.f32.s32.to.zero.pseudo %v4908
        %v4925 = vcvt.f32.s32.to.zero.pseudo %v4909
        %v4926 = vcvt.f32.s32.to.zero.pseudo %v4910
        %v4927 = vcvt.f32.s32.to.zero.pseudo %v4911
        %v4928 = vcvt.f32.s32.to.zero.pseudo %v4912
        %v4929 = vsub.f32 1.0, %v4913
        %v4930 = vsub.f32 1.0, %v4914
        %v4931 = vsub.f32 1.0, %v4915
        %v4932 = vsub.f32 1.0, %v4916
        %v4933 = vsub.f32 1.0, %v4917
        %v4934 = vsub.f32 1.0, %v4918
        %v4935 = vsub.f32 1.0, %v4919
        %v4936 = vsub.f32 1.0, %v4920
        %v4937 = vmul.f32 %v4929, %v4929
        %v4938 = vmul.f32 %v4930, %v4930
        %v4939 = vmul.f32 %v4931, %v4931
        %v4940 = vmul.f32 %v4932, %v4932
        %v4941 = vmul.f32 %v4933, %v4933
        %v4942 = vmul.f32 %v4934, %v4934
        %v4943 = vmul.f32 %v4935, %v4935
        %v4944 = vmul.f32 %v4936, %v4936
        %v4945 = vmul.f32 %v4937, %v4929
        %v4946 = vmul.f32 %v4938, %v4930
        %v4947 = vmul.f32 %v4939, %v4931
        %v4948 = vmul.f32 %v4940, %v4932
        %v4949 = vmul.f32 %v4941, %v4933
        %v4950 = vmul.f32 %v4942, %v4934
        %v4951 = vmul.f32 %v4943, %v4935
        %v4952 = vmul.f32 %v4944, %v4936
        %v4953 = vmul.f32 %v4945, 0.16666667
        %v4954 = vmul.f32 %v4946, 0.16666667
        %v4955 = vmul.f32 %v4947, 0.16666667
        %v4956 = vmul.f32 %v4948, 0.16666667
        %v4957 = vmul.f32 %v4949, 0.16666667
        %v4958 = vmul.f32 %v4950, 0.16666667
        %v4959 = vmul.f32 %v4951, 0.16666667
        %v4960 = vmul.f32 %v4952, 0.16666667
        %v4961 = vmul.f32 %v4913, 3.0
        %v4962 = vmul.f32 %v4914, 3.0
        %v4963 = vmul.f32 %v4915, 3.0
        %v4964 = vmul.f32 %v4916, 3.0
        %v4965 = vmul.f32 %v4917, 3.0
        %v4966 = vmul.f32 %v4918, 3.0
        %v4967 = vmul.f32 %v4919, 3.0
        %v4968 = vmul.f32 %v4920, 3.0
        %v4969 = vsub.f32 %v4961, 6.0
        %v4970 = vsub.f32 %v4962, 6.0
        %v4971 = vsub.f32 %v4963, 6.0
        %v4972 = vsub.f32 %v4964, 6.0
        %v4973 = vsub.f32 %v4965, 6.0
        %v4974 = vsub.f32 %v4966, 6.0
        %v4975 = vsub.f32 %v4967, 6.0
        %v4976 = vsub.f32 %v4968, 6.0
        %v4977 = vmul.f32 %v4969, %v4913
        %v4978 = vmul.f32 %v4970, %v4914
        %v4979 = vmul.f32 %v4971, %v4915
        %v4980 = vmul.f32 %v4972, %v4916
        %v4981 = vmul.f32 %v4973, %v4917
        %v4982 = vmul.f32 %v4974, %v4918
        %v4983 = vmul.f32 %v4975, %v4919
        %v4984 = vmul.f32 %v4976, %v4920
        %v4985 = vmul.f32 %v4977, %v4913
        %v4986 = vmul.f32 %v4978, %v4914
        %v4987 = vmul.f32 %v4979, %v4915
        %v4988 = vmul.f32 %v4980, %v4916
        %v4989 = vmul.f32 %v4981, %v4917
        %v4990 = vmul.f32 %v4982, %v4918
        %v4991 = vmul.f32 %v4983, %v4919
        %v4992 = vmul.f32 %v4984, %v4920
        %v4993 = vadd.f32 %v4985, 4.0
        %v4994 = vadd.f32 %v4986, 4.0
        %v4995 = vadd.f32 %v4987, 4.0
        %v4996 = vadd.f32 %v4988, 4.0
        %v4997 = vadd.f32 %v4989, 4.0
        %v4998 = vadd.f32 %v4990, 4.0
        %v4999 = vadd.f32 %v4991, 4.0
        %v5000 = vadd.f32 %v4992, 4.0
        %v5001 = vmul.f32 %v4993, 0.16666667
        %v5002 = vmul.f32 %v4994, 0.16666667
        %v5003 = vmul.f32 %v4995, 0.16666667
        %v5004 = vmul.f32 %v4996, 0.16666667
        %v5005 = vmul.f32 %v4997, 0.16666667
        %v5006 = vmul.f32 %v4998, 0.16666667
        %v5007 = vmul.f32 %v4999, 0.16666667
        %v5008 = vmul.f32 %v5000, 0.16666667
        %v5009 = vmul.f32 %v4913, -3.0
        %v5010 = vmul.f32 %v4914, -3.0
        %v5011 = vmul.f32 %v4915, -3.0
        %v5012 = vmul.f32 %v4916, -3.0
        %v5013 = vmul.f32 %v4917, -3.0
        %v5014 = vmul.f32 %v4918, -3.0
        %v5015 = vmul.f32 %v4919, -3.0
        %v5016 = vmul.f32 %v4920, -3.0
        %v5017 = vadd.f32 %v5009, 3.0
        %v5018 = vadd.f32 %v5010, 3.0
        %v5019 = vadd.f32 %v5011, 3.0
        %v5020 = vadd.f32 %v5012, 3.0
        %v5021 = vadd.f32 %v5013, 3.0
        %v5022 = vadd.f32 %v5014, 3.0
        %v5023 = vadd.f32 %v5015, 3.0
        %v5024 = vadd.f32 %v5016, 3.0
        %v5025 = vmul.f32 %v5017, %v4913
        %v5026 = vmul.f32 %v5018, %v4914
        %v5027 = vmul.f32 %v5019, %v4915
        %v5028 = vmul.f32 %v5020, %v4916
        %v5029 = vmul.f32 %v5021, %v4917
        %v5030 = vmul.f32 %v5022, %v4918
        %v5031 = vmul.f32 %v5023, %v4919
        %v5032 = vmul.f32 %v5024, %v4920
        %v5033 = vadd.f32 %v5025, 3.0
        %v5034 = vadd.f32 %v5026, 3.0
        %v5035 = vadd.f32 %v5027, 3.0
        %v5036 = vadd.f32 %v5028, 3.0
        %v5037 = vadd.f32 %v5029, 3.0
        %v5038 = vadd.f32 %v5030, 3.0
        %v5039 = vadd.f32 %v5031, 3.0
        %v5040 = vadd.f32 %v5032, 3.0
        %v5041 = vmul.f32 %v5033, %v4913
        %v5042 = vmul.f32 %v5034, %v4914
        %v5043 = vmul.f32 %v5035, %v4915
        %v5044 = vmul.f32 %v5036, %v4916
        %v5045 = vmul.f32 %v5037, %v4917
        %v5046 = vmul.f32 %v5038, %v4918
        %v5047 = vmul.f32 %v5039, %v4919
        %v5048 = vmul.f32 %v5040, %v4920
        %v5049 = vadd.f32 %v5041, 1.0
        %v5050 = vadd.f32 %v5042, 1.0
        %v5051 = vadd.f32 %v5043, 1.0
        %v5052 = vadd.f32 %v5044, 1.0
        %v5053 = vadd.f32 %v5045, 1.0
        %v5054 = vadd.f32 %v5046, 1.0
        %v5055 = vadd.f32 %v5047, 1.0
        %v5056 = vadd.f32 %v5048, 1.0
        %v5057 = vmul.f32 %v5049, 0.16666667
        %v5058 = vmul.f32 %v5050, 0.16666667
        %v5059 = vmul.f32 %v5051, 0.16666667
        %v5060 = vmul.f32 %v5052, 0.16666667
        %v5061 = vmul.f32 %v5053, 0.16666667
        %v5062 = vmul.f32 %v5054, 0.16666667
        %v5063 = vmul.f32 %v5055, 0.16666667
        %v5064 = vmul.f32 %v5056, 0.16666667
        %v5065 = vmul.f32 %v4913, %v4913
        %v5066 = vmul.f32 %v4914, %v4914
        %v5067 = vmul.f32 %v4915, %v4915
        %v5068 = vmul.f32 %v4916, %v4916
        %v5069 = vmul.f32 %v4917, %v4917
        %v5070 = vmul.f32 %v4918, %v4918
        %v5071 = vmul.f32 %v4919, %v4919
        %v5072 = vmul.f32 %v4920, %v4920
        %v5073 = vmul.f32 %v5065, %v4913
        %v5074 = vmul.f32 %v5066, %v4914
        %v5075 = vmul.f32 %v5067, %v4915
        %v5076 = vmul.f32 %v5068, %v4916
        %v5077 = vmul.f32 %v5069, %v4917
        %v5078 = vmul.f32 %v5070, %v4918
        %v5079 = vmul.f32 %v5071, %v4919
        %v5080 = vmul.f32 %v5072, %v4920
        %v5081 = vmul.f32 %v5073, 0.16666667
        %v5082 = vmul.f32 %v5074, 0.16666667
        %v5083 = vmul.f32 %v5075, 0.16666667
        %v5084 = vmul.f32 %v5076, 0.16666667
        %v5085 = vmul.f32 %v5077, 0.16666667
        %v5086 = vmul.f32 %v5078, 0.16666667
        %v5087 = vmul.f32 %v5079, 0.16666667
        %v5088 = vmul.f32 %v5080, 0.16666667
        %v5089 = vperm.slane %v4921, 0
        %v5090 = vperm.slane %v4921, 4
        %v5091 = vperm.slane %v4922, 0
        %v5092 = vperm.slane %v4922, 4
        %v5093 = vperm.slane %v4923, 0
        %v5094 = vperm.slane %v4923, 4
        %v5095 = vperm.slane %v4924, 0
        %v5096 = vperm.slane %v4924, 4
        %v5097 = vperm.slane %v4925, 0
        %v5098 = vperm.slane %v4925, 4
        %v5099 = vperm.slane %v4926, 0
        %v5100 = vperm.slane %v4926, 4
        %v5101 = vperm.slane %v4927, 0
        %v5102 = vperm.slane %v4927, 4
        %v5103 = vperm.slane %v4928, 0
        %v5104 = vperm.slane %v4928, 4
        %v5105 = vperm.slane %v5089, 0
        %v5106 = vperm.slane %v5090, 0
        %v5107 = vperm.slane %v5091, 0
        %v5108 = vperm.slane %v5092, 0
        %v5109 = vperm.slane %v5093, 0
        %v5110 = vperm.slane %v5094, 0
        %v5111 = vperm.slane %v5095, 0
        %v5112 = vperm.slane %v5096, 0
        %v5113 = vperm.slane %v5097, 0
        %v5114 = vperm.slane %v5098, 0
        %v5115 = vperm.slane %v5099, 0
        %v5116 = vperm.slane %v5100, 0
        %v5117 = vperm.slane %v5101, 0
        %v5118 = vperm.slane %v5102, 0
        %v5119 = vperm.slane %v5103, 0
        %v5120 = vperm.slane %v5104, 0
        %v5121 = vsub.s32 %v797, %v5105
        %v5122 = vsub.s32 %v797, %v5106
        %v5123 = vsub.s32 %v797, %v5107
        %v5124 = vsub.s32 %v797, %v5108
        %v5125 = vsub.s32 %v797, %v5109
        %v5126 = vsub.s32 %v797, %v5110
        %v5127 = vsub.s32 %v797, %v5111
        %v5128 = vsub.s32 %v797, %v5112
        %v5129 = vsub.s32 %v797, %v5113
        %v5130 = vsub.s32 %v797, %v5114
        %v5131 = vsub.s32 %v797, %v5115
        %v5132 = vsub.s32 %v797, %v5116
        %v5133 = vsub.s32 %v797, %v5117
        %v5134 = vsub.s32 %v797, %v5118
        %v5135 = vsub.s32 %v797, %v5119
        %v5136 = vsub.s32 %v797, %v5120
        %vm5137 = vcmp.eq.s32.totalorder %v5121, 0
        %vm5138 = vcmp.eq.s32.totalorder %v5122, 0
        %vm5139 = vcmp.eq.s32.totalorder %v5123, 0
        %vm5140 = vcmp.eq.s32.totalorder %v5124, 0
        %vm5141 = vcmp.eq.s32.totalorder %v5125, 0
        %vm5142 = vcmp.eq.s32.totalorder %v5126, 0
        %vm5143 = vcmp.eq.s32.totalorder %v5127, 0
        %vm5144 = vcmp.eq.s32.totalorder %v5128, 0
        %vm5145 = vcmp.eq.s32.totalorder %v5129, 0
        %vm5146 = vcmp.eq.s32.totalorder %v5130, 0
        %vm5147 = vcmp.eq.s32.totalorder %v5131, 0
        %vm5148 = vcmp.eq.s32.totalorder %v5132, 0
        %vm5149 = vcmp.eq.s32.totalorder %v5133, 0
        %vm5150 = vcmp.eq.s32.totalorder %v5134, 0
        %vm5151 = vcmp.eq.s32.totalorder %v5135, 0
        %vm5152 = vcmp.eq.s32.totalorder %v5136, 0
        %v5161 = vperm.slane %v4953, 0
        %v5162 = vperm.slane %v4953, 4
        %v5163 = vperm.slane %v4954, 0
        %v5164 = vperm.slane %v4954, 4
        %v5165 = vperm.slane %v4955, 0
        %v5166 = vperm.slane %v4955, 4
        %v5167 = vperm.slane %v4956, 0
        %v5168 = vperm.slane %v4956, 4
        %v5169 = vperm.slane %v4957, 0
        %v5170 = vperm.slane %v4957, 4
        %v5171 = vperm.slane %v4958, 0
        %v5172 = vperm.slane %v4958, 4
        %v5173 = vperm.slane %v4959, 0
        %v5174 = vperm.slane %v4959, 4
        %v5175 = vperm.slane %v4960, 0
        %v5176 = vperm.slane %v4960, 4
        %v5193 = vperm.slane %v5161, 0
        %v5194 = vperm.slane %v5162, 0
        %v5195 = vperm.slane %v5163, 0
        %v5196 = vperm.slane %v5164, 0
        %v5197 = vperm.slane %v5165, 0
        %v5198 = vperm.slane %v5166, 0
        %v5199 = vperm.slane %v5167, 0
        %v5200 = vperm.slane %v5168, 0
        %v5201 = vperm.slane %v5169, 0
        %v5202 = vperm.slane %v5170, 0
        %v5203 = vperm.slane %v5171, 0
        %v5204 = vperm.slane %v5172, 0
        %v5205 = vperm.slane %v5173, 0
        %v5206 = vperm.slane %v5174, 0
        %v5207 = vperm.slane %v5175, 0
        %v5208 = vperm.slane %v5176, 0
        %v5209 = vsel %vm5137, %v5193, 0.0
        %v5210 = vsel %vm5138, %v5194, 0.0
        %v5211 = vsel %vm5139, %v5195, 0.0
        %v5212 = vsel %vm5140, %v5196, 0.0
        %v5213 = vsel %vm5141, %v5197, 0.0
        %v5214 = vsel %vm5142, %v5198, 0.0
        %v5215 = vsel %vm5143, %v5199, 0.0
        %v5216 = vsel %vm5144, %v5200, 0.0
        %v5217 = vsel %vm5145, %v5201, 0.0
        %v5218 = vsel %vm5146, %v5202, 0.0
        %v5219 = vsel %vm5147, %v5203, 0.0
        %v5220 = vsel %vm5148, %v5204, 0.0
        %v5221 = vsel %vm5149, %v5205, 0.0
        %v5222 = vsel %vm5150, %v5206, 0.0
        %v5223 = vsel %vm5151, %v5207, 0.0
        %v5224 = vsel %vm5152, %v5208, 0.0
        %vm5225 = vcmp.eq.s32.totalorder %v5121, 1
        %vm5226 = vcmp.eq.s32.totalorder %v5122, 1
        %vm5227 = vcmp.eq.s32.totalorder %v5123, 1
        %vm5228 = vcmp.eq.s32.totalorder %v5124, 1
        %vm5229 = vcmp.eq.s32.totalorder %v5125, 1
        %vm5230 = vcmp.eq.s32.totalorder %v5126, 1
        %vm5231 = vcmp.eq.s32.totalorder %v5127, 1
        %vm5232 = vcmp.eq.s32.totalorder %v5128, 1
        %vm5233 = vcmp.eq.s32.totalorder %v5129, 1
        %vm5234 = vcmp.eq.s32.totalorder %v5130, 1
        %vm5235 = vcmp.eq.s32.totalorder %v5131, 1
        %vm5236 = vcmp.eq.s32.totalorder %v5132, 1
        %vm5237 = vcmp.eq.s32.totalorder %v5133, 1
        %vm5238 = vcmp.eq.s32.totalorder %v5134, 1
        %vm5239 = vcmp.eq.s32.totalorder %v5135, 1
        %vm5240 = vcmp.eq.s32.totalorder %v5136, 1
        %v5249 = vperm.slane %v5001, 0
        %v5250 = vperm.slane %v5001, 4
        %v5251 = vperm.slane %v5002, 0
        %v5252 = vperm.slane %v5002, 4
        %v5253 = vperm.slane %v5003, 0
        %v5254 = vperm.slane %v5003, 4
        %v5255 = vperm.slane %v5004, 0
        %v5256 = vperm.slane %v5004, 4
        %v5257 = vperm.slane %v5005, 0
        %v5258 = vperm.slane %v5005, 4
        %v5259 = vperm.slane %v5006, 0
        %v5260 = vperm.slane %v5006, 4
        %v5261 = vperm.slane %v5007, 0
        %v5262 = vperm.slane %v5007, 4
        %v5263 = vperm.slane %v5008, 0
        %v5264 = vperm.slane %v5008, 4
        %v5281 = vperm.slane %v5249, 0
        %v5282 = vperm.slane %v5250, 0
        %v5283 = vperm.slane %v5251, 0
        %v5284 = vperm.slane %v5252, 0
        %v5285 = vperm.slane %v5253, 0
        %v5286 = vperm.slane %v5254, 0
        %v5287 = vperm.slane %v5255, 0
        %v5288 = vperm.slane %v5256, 0
        %v5289 = vperm.slane %v5257, 0
        %v5290 = vperm.slane %v5258, 0
        %v5291 = vperm.slane %v5259, 0
        %v5292 = vperm.slane %v5260, 0
        %v5293 = vperm.slane %v5261, 0
        %v5294 = vperm.slane %v5262, 0
        %v5295 = vperm.slane %v5263, 0
        %v5296 = vperm.slane %v5264, 0
        %v5297 = vsel %vm5225, %v5281, 0.0
        %v5298 = vsel %vm5226, %v5282, 0.0
        %v5299 = vsel %vm5227, %v5283, 0.0
        %v5300 = vsel %vm5228, %v5284, 0.0
        %v5301 = vsel %vm5229, %v5285, 0.0
        %v5302 = vsel %vm5230, %v5286, 0.0
        %v5303 = vsel %vm5231, %v5287, 0.0
        %v5304 = vsel %vm5232, %v5288, 0.0
        %v5305 = vsel %vm5233, %v5289, 0.0
        %v5306 = vsel %vm5234, %v5290, 0.0
        %v5307 = vsel %vm5235, %v5291, 0.0
        %v5308 = vsel %vm5236, %v5292, 0.0
        %v5309 = vsel %vm5237, %v5293, 0.0
        %v5310 = vsel %vm5238, %v5294, 0.0
        %v5311 = vsel %vm5239, %v5295, 0.0
        %v5312 = vsel %vm5240, %v5296, 0.0
        %v5313 = vadd.f32 %v5209, %v5297
        %v5314 = vadd.f32 %v5210, %v5298
        %v5315 = vadd.f32 %v5211, %v5299
        %v5316 = vadd.f32 %v5212, %v5300
        %v5317 = vadd.f32 %v5213, %v5301
        %v5318 = vadd.f32 %v5214, %v5302
        %v5319 = vadd.f32 %v5215, %v5303
        %v5320 = vadd.f32 %v5216, %v5304
        %v5321 = vadd.f32 %v5217, %v5305
        %v5322 = vadd.f32 %v5218, %v5306
        %v5323 = vadd.f32 %v5219, %v5307
        %v5324 = vadd.f32 %v5220, %v5308
        %v5325 = vadd.f32 %v5221, %v5309
        %v5326 = vadd.f32 %v5222, %v5310
        %v5327 = vadd.f32 %v5223, %v5311
        %v5328 = vadd.f32 %v5224, %v5312
        %vm5329 = vcmp.eq.s32.totalorder %v5121, 2
        %vm5330 = vcmp.eq.s32.totalorder %v5122, 2
        %vm5331 = vcmp.eq.s32.totalorder %v5123, 2
        %vm5332 = vcmp.eq.s32.totalorder %v5124, 2
        %vm5333 = vcmp.eq.s32.totalorder %v5125, 2
        %vm5334 = vcmp.eq.s32.totalorder %v5126, 2
        %vm5335 = vcmp.eq.s32.totalorder %v5127, 2
        %vm5336 = vcmp.eq.s32.totalorder %v5128, 2
        %vm5337 = vcmp.eq.s32.totalorder %v5129, 2
        %vm5338 = vcmp.eq.s32.totalorder %v5130, 2
        %vm5339 = vcmp.eq.s32.totalorder %v5131, 2
        %vm5340 = vcmp.eq.s32.totalorder %v5132, 2
        %vm5341 = vcmp.eq.s32.totalorder %v5133, 2
        %vm5342 = vcmp.eq.s32.totalorder %v5134, 2
        %vm5343 = vcmp.eq.s32.totalorder %v5135, 2
        %vm5344 = vcmp.eq.s32.totalorder %v5136, 2
        %v5353 = vperm.slane %v5057, 0
        %v5354 = vperm.slane %v5057, 4
        %v5355 = vperm.slane %v5058, 0
        %v5356 = vperm.slane %v5058, 4
        %v5357 = vperm.slane %v5059, 0
        %v5358 = vperm.slane %v5059, 4
        %v5359 = vperm.slane %v5060, 0
        %v5360 = vperm.slane %v5060, 4
        %v5361 = vperm.slane %v5061, 0
        %v5362 = vperm.slane %v5061, 4
        %v5363 = vperm.slane %v5062, 0
        %v5364 = vperm.slane %v5062, 4
        %v5365 = vperm.slane %v5063, 0
        %v5366 = vperm.slane %v5063, 4
        %v5367 = vperm.slane %v5064, 0
        %v5368 = vperm.slane %v5064, 4
        %v5385 = vperm.slane %v5353, 0
        %v5386 = vperm.slane %v5354, 0
        %v5387 = vperm.slane %v5355, 0
        %v5388 = vperm.slane %v5356, 0
        %v5389 = vperm.slane %v5357, 0
        %v5390 = vperm.slane %v5358, 0
        %v5391 = vperm.slane %v5359, 0
        %v5392 = vperm.slane %v5360, 0
        %v5393 = vperm.slane %v5361, 0
        %v5394 = vperm.slane %v5362, 0
        %v5395 = vperm.slane %v5363, 0
        %v5396 = vperm.slane %v5364, 0
        %v5397 = vperm.slane %v5365, 0
        %v5398 = vperm.slane %v5366, 0
        %v5399 = vperm.slane %v5367, 0
        %v5400 = vperm.slane %v5368, 0
        %v5401 = vsel %vm5329, %v5385, 0.0
        %v5402 = vsel %vm5330, %v5386, 0.0
        %v5403 = vsel %vm5331, %v5387, 0.0
        %v5404 = vsel %vm5332, %v5388, 0.0
        %v5405 = vsel %vm5333, %v5389, 0.0
        %v5406 = vsel %vm5334, %v5390, 0.0
        %v5407 = vsel %vm5335, %v5391, 0.0
        %v5408 = vsel %vm5336, %v5392, 0.0
        %v5409 = vsel %vm5337, %v5393, 0.0
        %v5410 = vsel %vm5338, %v5394, 0.0
        %v5411 = vsel %vm5339, %v5395, 0.0
        %v5412 = vsel %vm5340, %v5396, 0.0
        %v5413 = vsel %vm5341, %v5397, 0.0
        %v5414 = vsel %vm5342, %v5398, 0.0
        %v5415 = vsel %vm5343, %v5399, 0.0
        %v5416 = vsel %vm5344, %v5400, 0.0
        %v5417 = vadd.f32 %v5313, %v5401
        %v5418 = vadd.f32 %v5314, %v5402
        %v5419 = vadd.f32 %v5315, %v5403
        %v5420 = vadd.f32 %v5316, %v5404
        %v5421 = vadd.f32 %v5317, %v5405
        %v5422 = vadd.f32 %v5318, %v5406
        %v5423 = vadd.f32 %v5319, %v5407
        %v5424 = vadd.f32 %v5320, %v5408
        %v5425 = vadd.f32 %v5321, %v5409
        %v5426 = vadd.f32 %v5322, %v5410
        %v5427 = vadd.f32 %v5323, %v5411
        %v5428 = vadd.f32 %v5324, %v5412
        %v5429 = vadd.f32 %v5325, %v5413
        %v5430 = vadd.f32 %v5326, %v5414
        %v5431 = vadd.f32 %v5327, %v5415
        %v5432 = vadd.f32 %v5328, %v5416
        %vm5433 = vcmp.eq.s32.totalorder %v5121, 3
        %vm5434 = vcmp.eq.s32.totalorder %v5122, 3
        %vm5435 = vcmp.eq.s32.totalorder %v5123, 3
        %vm5436 = vcmp.eq.s32.totalorder %v5124, 3
        %vm5437 = vcmp.eq.s32.totalorder %v5125, 3
        %vm5438 = vcmp.eq.s32.totalorder %v5126, 3
        %vm5439 = vcmp.eq.s32.totalorder %v5127, 3
        %vm5440 = vcmp.eq.s32.totalorder %v5128, 3
        %vm5441 = vcmp.eq.s32.totalorder %v5129, 3
        %vm5442 = vcmp.eq.s32.totalorder %v5130, 3
        %vm5443 = vcmp.eq.s32.totalorder %v5131, 3
        %vm5444 = vcmp.eq.s32.totalorder %v5132, 3
        %vm5445 = vcmp.eq.s32.totalorder %v5133, 3
        %vm5446 = vcmp.eq.s32.totalorder %v5134, 3
        %vm5447 = vcmp.eq.s32.totalorder %v5135, 3
        %vm5448 = vcmp.eq.s32.totalorder %v5136, 3
        %v5457 = vperm.slane %v5081, 0
        %v5458 = vperm.slane %v5081, 4
        %v5459 = vperm.slane %v5082, 0
        %v5460 = vperm.slane %v5082, 4
        %v5461 = vperm.slane %v5083, 0
        %v5462 = vperm.slane %v5083, 4
        %v5463 = vperm.slane %v5084, 0
        %v5464 = vperm.slane %v5084, 4
        %v5465 = vperm.slane %v5085, 0
        %v5466 = vperm.slane %v5085, 4
        %v5467 = vperm.slane %v5086, 0
        %v5468 = vperm.slane %v5086, 4
        %v5469 = vperm.slane %v5087, 0
        %v5470 = vperm.slane %v5087, 4
        %v5471 = vperm.slane %v5088, 0
        %v5472 = vperm.slane %v5088, 4
        %v5489 = vperm.slane %v5457, 0
        %v5490 = vperm.slane %v5458, 0
        %v5491 = vperm.slane %v5459, 0
        %v5492 = vperm.slane %v5460, 0
        %v5493 = vperm.slane %v5461, 0
        %v5494 = vperm.slane %v5462, 0
        %v5495 = vperm.slane %v5463, 0
        %v5496 = vperm.slane %v5464, 0
        %v5497 = vperm.slane %v5465, 0
        %v5498 = vperm.slane %v5466, 0
        %v5499 = vperm.slane %v5467, 0
        %v5500 = vperm.slane %v5468, 0
        %v5501 = vperm.slane %v5469, 0
        %v5502 = vperm.slane %v5470, 0
        %v5503 = vperm.slane %v5471, 0
        %v5504 = vperm.slane %v5472, 0
        %v5505 = vsel %vm5433, %v5489, 0.0
        %v5506 = vsel %vm5434, %v5490, 0.0
        %v5507 = vsel %vm5435, %v5491, 0.0
        %v5508 = vsel %vm5436, %v5492, 0.0
        %v5509 = vsel %vm5437, %v5493, 0.0
        %v5510 = vsel %vm5438, %v5494, 0.0
        %v5511 = vsel %vm5439, %v5495, 0.0
        %v5512 = vsel %vm5440, %v5496, 0.0
        %v5513 = vsel %vm5441, %v5497, 0.0
        %v5514 = vsel %vm5442, %v5498, 0.0
        %v5515 = vsel %vm5443, %v5499, 0.0
        %v5516 = vsel %vm5444, %v5500, 0.0
        %v5517 = vsel %vm5445, %v5501, 0.0
        %v5518 = vsel %vm5446, %v5502, 0.0
        %v5519 = vsel %vm5447, %v5503, 0.0
        %v5520 = vsel %vm5448, %v5504, 0.0
        %v5521 = vadd.f32 %v5417, %v5505
        %v5522 = vadd.f32 %v5418, %v5506
        %v5523 = vadd.f32 %v5419, %v5507
        %v5524 = vadd.f32 %v5420, %v5508
        %v5525 = vadd.f32 %v5421, %v5509
        %v5526 = vadd.f32 %v5422, %v5510
        %v5527 = vadd.f32 %v5423, %v5511
        %v5528 = vadd.f32 %v5424, %v5512
        %v5529 = vadd.f32 %v5425, %v5513
        %v5530 = vadd.f32 %v5426, %v5514
        %v5531 = vadd.f32 %v5427, %v5515
        %v5532 = vadd.f32 %v5428, %v5516
        %v5533 = vadd.f32 %v5429, %v5517
        %v5534 = vadd.f32 %v5430, %v5518
        %v5535 = vadd.f32 %v5431, %v5519
        %v5536 = vadd.f32 %v5432, %v5520
        %v5537 = vperm.slane %v4921, 1
        %v5538 = vperm.slane %v4921, 5
        %v5539 = vperm.slane %v4922, 1
        %v5540 = vperm.slane %v4922, 5
        %v5541 = vperm.slane %v4923, 1
        %v5542 = vperm.slane %v4923, 5
        %v5543 = vperm.slane %v4924, 1
        %v5544 = vperm.slane %v4924, 5
        %v5545 = vperm.slane %v4925, 1
        %v5546 = vperm.slane %v4925, 5
        %v5547 = vperm.slane %v4926, 1
        %v5548 = vperm.slane %v4926, 5
        %v5549 = vperm.slane %v4927, 1
        %v5550 = vperm.slane %v4927, 5
        %v5551 = vperm.slane %v4928, 1
        %v5552 = vperm.slane %v4928, 5
        %v5553 = vperm.slane %v5537, 1
        %v5554 = vperm.slane %v5538, 1
        %v5555 = vperm.slane %v5539, 1
        %v5556 = vperm.slane %v5540, 1
        %v5557 = vperm.slane %v5541, 1
        %v5558 = vperm.slane %v5542, 1
        %v5559 = vperm.slane %v5543, 1
        %v5560 = vperm.slane %v5544, 1
        %v5561 = vperm.slane %v5545, 1
        %v5562 = vperm.slane %v5546, 1
        %v5563 = vperm.slane %v5547, 1
        %v5564 = vperm.slane %v5548, 1
        %v5565 = vperm.slane %v5549, 1
        %v5566 = vperm.slane %v5550, 1
        %v5567 = vperm.slane %v5551, 1
        %v5568 = vperm.slane %v5552, 1
        %v5569 = vsub.s32 %v797, %v5553
        %v5570 = vsub.s32 %v797, %v5554
        %v5571 = vsub.s32 %v797, %v5555
        %v5572 = vsub.s32 %v797, %v5556
        %v5573 = vsub.s32 %v797, %v5557
        %v5574 = vsub.s32 %v797, %v5558
        %v5575 = vsub.s32 %v797, %v5559
        %v5576 = vsub.s32 %v797, %v5560
        %v5577 = vsub.s32 %v797, %v5561
        %v5578 = vsub.s32 %v797, %v5562
        %v5579 = vsub.s32 %v797, %v5563
        %v5580 = vsub.s32 %v797, %v5564
        %v5581 = vsub.s32 %v797, %v5565
        %v5582 = vsub.s32 %v797, %v5566
        %v5583 = vsub.s32 %v797, %v5567
        %v5584 = vsub.s32 %v797, %v5568
        %vm5585 = vcmp.eq.s32.totalorder %v5569, 0
        %vm5586 = vcmp.eq.s32.totalorder %v5570, 0
        %vm5587 = vcmp.eq.s32.totalorder %v5571, 0
        %vm5588 = vcmp.eq.s32.totalorder %v5572, 0
        %vm5589 = vcmp.eq.s32.totalorder %v5573, 0
        %vm5590 = vcmp.eq.s32.totalorder %v5574, 0
        %vm5591 = vcmp.eq.s32.totalorder %v5575, 0
        %vm5592 = vcmp.eq.s32.totalorder %v5576, 0
        %vm5593 = vcmp.eq.s32.totalorder %v5577, 0
        %vm5594 = vcmp.eq.s32.totalorder %v5578, 0
        %vm5595 = vcmp.eq.s32.totalorder %v5579, 0
        %vm5596 = vcmp.eq.s32.totalorder %v5580, 0
        %vm5597 = vcmp.eq.s32.totalorder %v5581, 0
        %vm5598 = vcmp.eq.s32.totalorder %v5582, 0
        %vm5599 = vcmp.eq.s32.totalorder %v5583, 0
        %vm5600 = vcmp.eq.s32.totalorder %v5584, 0
        %v5601 = vperm.slane %v4953, 1
        %v5602 = vperm.slane %v4953, 5
        %v5603 = vperm.slane %v4954, 1
        %v5604 = vperm.slane %v4954, 5
        %v5605 = vperm.slane %v4955, 1
        %v5606 = vperm.slane %v4955, 5
        %v5607 = vperm.slane %v4956, 1
        %v5608 = vperm.slane %v4956, 5
        %v5609 = vperm.slane %v4957, 1
        %v5610 = vperm.slane %v4957, 5
        %v5611 = vperm.slane %v4958, 1
        %v5612 = vperm.slane %v4958, 5
        %v5613 = vperm.slane %v4959, 1
        %v5614 = vperm.slane %v4959, 5
        %v5615 = vperm.slane %v4960, 1
        %v5616 = vperm.slane %v4960, 5
        %v5633 = vperm.slane %v5601, 1
        %v5634 = vperm.slane %v5602, 1
        %v5635 = vperm.slane %v5603, 1
        %v5636 = vperm.slane %v5604, 1
        %v5637 = vperm.slane %v5605, 1
        %v5638 = vperm.slane %v5606, 1
        %v5639 = vperm.slane %v5607, 1
        %v5640 = vperm.slane %v5608, 1
        %v5641 = vperm.slane %v5609, 1
        %v5642 = vperm.slane %v5610, 1
        %v5643 = vperm.slane %v5611, 1
        %v5644 = vperm.slane %v5612, 1
        %v5645 = vperm.slane %v5613, 1
        %v5646 = vperm.slane %v5614, 1
        %v5647 = vperm.slane %v5615, 1
        %v5648 = vperm.slane %v5616, 1
        %v5649 = vsel %vm5585, %v5633, 0.0
        %v5650 = vsel %vm5586, %v5634, 0.0
        %v5651 = vsel %vm5587, %v5635, 0.0
        %v5652 = vsel %vm5588, %v5636, 0.0
        %v5653 = vsel %vm5589, %v5637, 0.0
        %v5654 = vsel %vm5590, %v5638, 0.0
        %v5655 = vsel %vm5591, %v5639, 0.0
        %v5656 = vsel %vm5592, %v5640, 0.0
        %v5657 = vsel %vm5593, %v5641, 0.0
        %v5658 = vsel %vm5594, %v5642, 0.0
        %v5659 = vsel %vm5595, %v5643, 0.0
        %v5660 = vsel %vm5596, %v5644, 0.0
        %v5661 = vsel %vm5597, %v5645, 0.0
        %v5662 = vsel %vm5598, %v5646, 0.0
        %v5663 = vsel %vm5599, %v5647, 0.0
        %v5664 = vsel %vm5600, %v5648, 0.0
        %vm5665 = vcmp.eq.s32.totalorder %v5569, 1
        %vm5666 = vcmp.eq.s32.totalorder %v5570, 1
        %vm5667 = vcmp.eq.s32.totalorder %v5571, 1
        %vm5668 = vcmp.eq.s32.totalorder %v5572, 1
        %vm5669 = vcmp.eq.s32.totalorder %v5573, 1
        %vm5670 = vcmp.eq.s32.totalorder %v5574, 1
        %vm5671 = vcmp.eq.s32.totalorder %v5575, 1
        %vm5672 = vcmp.eq.s32.totalorder %v5576, 1
        %vm5673 = vcmp.eq.s32.totalorder %v5577, 1
        %vm5674 = vcmp.eq.s32.totalorder %v5578, 1
        %vm5675 = vcmp.eq.s32.totalorder %v5579, 1
        %vm5676 = vcmp.eq.s32.totalorder %v5580, 1
        %vm5677 = vcmp.eq.s32.totalorder %v5581, 1
        %vm5678 = vcmp.eq.s32.totalorder %v5582, 1
        %vm5679 = vcmp.eq.s32.totalorder %v5583, 1
        %vm5680 = vcmp.eq.s32.totalorder %v5584, 1
        %v5681 = vperm.slane %v5001, 1
        %v5682 = vperm.slane %v5001, 5
        %v5683 = vperm.slane %v5002, 1
        %v5684 = vperm.slane %v5002, 5
        %v5685 = vperm.slane %v5003, 1
        %v5686 = vperm.slane %v5003, 5
        %v5687 = vperm.slane %v5004, 1
        %v5688 = vperm.slane %v5004, 5
        %v5689 = vperm.slane %v5005, 1
        %v5690 = vperm.slane %v5005, 5
        %v5691 = vperm.slane %v5006, 1
        %v5692 = vperm.slane %v5006, 5
        %v5693 = vperm.slane %v5007, 1
        %v5694 = vperm.slane %v5007, 5
        %v5695 = vperm.slane %v5008, 1
        %v5696 = vperm.slane %v5008, 5
        %v5713 = vperm.slane %v5681, 1
        %v5714 = vperm.slane %v5682, 1
        %v5715 = vperm.slane %v5683, 1
        %v5716 = vperm.slane %v5684, 1
        %v5717 = vperm.slane %v5685, 1
        %v5718 = vperm.slane %v5686, 1
        %v5719 = vperm.slane %v5687, 1
        %v5720 = vperm.slane %v5688, 1
        %v5721 = vperm.slane %v5689, 1
        %v5722 = vperm.slane %v5690, 1
        %v5723 = vperm.slane %v5691, 1
        %v5724 = vperm.slane %v5692, 1
        %v5725 = vperm.slane %v5693, 1
        %v5726 = vperm.slane %v5694, 1
        %v5727 = vperm.slane %v5695, 1
        %v5728 = vperm.slane %v5696, 1
        %v5729 = vsel %vm5665, %v5713, 0.0
        %v5730 = vsel %vm5666, %v5714, 0.0
        %v5731 = vsel %vm5667, %v5715, 0.0
        %v5732 = vsel %vm5668, %v5716, 0.0
        %v5733 = vsel %vm5669, %v5717, 0.0
        %v5734 = vsel %vm5670, %v5718, 0.0
        %v5735 = vsel %vm5671, %v5719, 0.0
        %v5736 = vsel %vm5672, %v5720, 0.0
        %v5737 = vsel %vm5673, %v5721, 0.0
        %v5738 = vsel %vm5674, %v5722, 0.0
        %v5739 = vsel %vm5675, %v5723, 0.0
        %v5740 = vsel %vm5676, %v5724, 0.0
        %v5741 = vsel %vm5677, %v5725, 0.0
        %v5742 = vsel %vm5678, %v5726, 0.0
        %v5743 = vsel %vm5679, %v5727, 0.0
        %v5744 = vsel %vm5680, %v5728, 0.0
        %v5745 = vadd.f32 %v5649, %v5729
        %v5746 = vadd.f32 %v5650, %v5730
        %v5747 = vadd.f32 %v5651, %v5731
        %v5748 = vadd.f32 %v5652, %v5732
        %v5749 = vadd.f32 %v5653, %v5733
        %v5750 = vadd.f32 %v5654, %v5734
        %v5751 = vadd.f32 %v5655, %v5735
        %v5752 = vadd.f32 %v5656, %v5736
        %v5753 = vadd.f32 %v5657, %v5737
        %v5754 = vadd.f32 %v5658, %v5738
        %v5755 = vadd.f32 %v5659, %v5739
        %v5756 = vadd.f32 %v5660, %v5740
        %v5757 = vadd.f32 %v5661, %v5741
        %v5758 = vadd.f32 %v5662, %v5742
        %v5759 = vadd.f32 %v5663, %v5743
        %v5760 = vadd.f32 %v5664, %v5744
        %vm5761 = vcmp.eq.s32.totalorder %v5569, 2
        %vm5762 = vcmp.eq.s32.totalorder %v5570, 2
        %vm5763 = vcmp.eq.s32.totalorder %v5571, 2
        %vm5764 = vcmp.eq.s32.totalorder %v5572, 2
        %vm5765 = vcmp.eq.s32.totalorder %v5573, 2
        %vm5766 = vcmp.eq.s32.totalorder %v5574, 2
        %vm5767 = vcmp.eq.s32.totalorder %v5575, 2
        %vm5768 = vcmp.eq.s32.totalorder %v5576, 2
        %vm5769 = vcmp.eq.s32.totalorder %v5577, 2
        %vm5770 = vcmp.eq.s32.totalorder %v5578, 2
        %vm5771 = vcmp.eq.s32.totalorder %v5579, 2
        %vm5772 = vcmp.eq.s32.totalorder %v5580, 2
        %vm5773 = vcmp.eq.s32.totalorder %v5581, 2
        %vm5774 = vcmp.eq.s32.totalorder %v5582, 2
        %vm5775 = vcmp.eq.s32.totalorder %v5583, 2
        %vm5776 = vcmp.eq.s32.totalorder %v5584, 2
        %v5777 = vperm.slane %v5057, 1
        %v5778 = vperm.slane %v5057, 5
        %v5779 = vperm.slane %v5058, 1
        %v5780 = vperm.slane %v5058, 5
        %v5781 = vperm.slane %v5059, 1
        %v5782 = vperm.slane %v5059, 5
        %v5783 = vperm.slane %v5060, 1
        %v5784 = vperm.slane %v5060, 5
        %v5785 = vperm.slane %v5061, 1
        %v5786 = vperm.slane %v5061, 5
        %v5787 = vperm.slane %v5062, 1
        %v5788 = vperm.slane %v5062, 5
        %v5789 = vperm.slane %v5063, 1
        %v5790 = vperm.slane %v5063, 5
        %v5791 = vperm.slane %v5064, 1
        %v5792 = vperm.slane %v5064, 5
        %v5809 = vperm.slane %v5777, 1
        %v5810 = vperm.slane %v5778, 1
        %v5811 = vperm.slane %v5779, 1
        %v5812 = vperm.slane %v5780, 1
        %v5813 = vperm.slane %v5781, 1
        %v5814 = vperm.slane %v5782, 1
        %v5815 = vperm.slane %v5783, 1
        %v5816 = vperm.slane %v5784, 1
        %v5817 = vperm.slane %v5785, 1
        %v5818 = vperm.slane %v5786, 1
        %v5819 = vperm.slane %v5787, 1
        %v5820 = vperm.slane %v5788, 1
        %v5821 = vperm.slane %v5789, 1
        %v5822 = vperm.slane %v5790, 1
        %v5823 = vperm.slane %v5791, 1
        %v5824 = vperm.slane %v5792, 1
        %v5825 = vsel %vm5761, %v5809, 0.0
        %v5826 = vsel %vm5762, %v5810, 0.0
        %v5827 = vsel %vm5763, %v5811, 0.0
        %v5828 = vsel %vm5764, %v5812, 0.0
        %v5829 = vsel %vm5765, %v5813, 0.0
        %v5830 = vsel %vm5766, %v5814, 0.0
        %v5831 = vsel %vm5767, %v5815, 0.0
        %v5832 = vsel %vm5768, %v5816, 0.0
        %v5833 = vsel %vm5769, %v5817, 0.0
        %v5834 = vsel %vm5770, %v5818, 0.0
        %v5835 = vsel %vm5771, %v5819, 0.0
        %v5836 = vsel %vm5772, %v5820, 0.0
        %v5837 = vsel %vm5773, %v5821, 0.0
        %v5838 = vsel %vm5774, %v5822, 0.0
        %v5839 = vsel %vm5775, %v5823, 0.0
        %v5840 = vsel %vm5776, %v5824, 0.0
        %v5841 = vadd.f32 %v5745, %v5825
        %v5842 = vadd.f32 %v5746, %v5826
        %v5843 = vadd.f32 %v5747, %v5827
        %v5844 = vadd.f32 %v5748, %v5828
        %v5845 = vadd.f32 %v5749, %v5829
        %v5846 = vadd.f32 %v5750, %v5830
        %v5847 = vadd.f32 %v5751, %v5831
        %v5848 = vadd.f32 %v5752, %v5832
        %v5849 = vadd.f32 %v5753, %v5833
        %v5850 = vadd.f32 %v5754, %v5834
        %v5851 = vadd.f32 %v5755, %v5835
        %v5852 = vadd.f32 %v5756, %v5836
        %v5853 = vadd.f32 %v5757, %v5837
        %v5854 = vadd.f32 %v5758, %v5838
        %v5855 = vadd.f32 %v5759, %v5839
        %v5856 = vadd.f32 %v5760, %v5840
        %vm5857 = vcmp.eq.s32.totalorder %v5569, 3
        %vm5858 = vcmp.eq.s32.totalorder %v5570, 3
        %vm5859 = vcmp.eq.s32.totalorder %v5571, 3
        %vm5860 = vcmp.eq.s32.totalorder %v5572, 3
        %vm5861 = vcmp.eq.s32.totalorder %v5573, 3
        %vm5862 = vcmp.eq.s32.totalorder %v5574, 3
        %vm5863 = vcmp.eq.s32.totalorder %v5575, 3
        %vm5864 = vcmp.eq.s32.totalorder %v5576, 3
        %vm5865 = vcmp.eq.s32.totalorder %v5577, 3
        %vm5866 = vcmp.eq.s32.totalorder %v5578, 3
        %vm5867 = vcmp.eq.s32.totalorder %v5579, 3
        %vm5868 = vcmp.eq.s32.totalorder %v5580, 3
        %vm5869 = vcmp.eq.s32.totalorder %v5581, 3
        %vm5870 = vcmp.eq.s32.totalorder %v5582, 3
        %vm5871 = vcmp.eq.s32.totalorder %v5583, 3
        %vm5872 = vcmp.eq.s32.totalorder %v5584, 3
        %v5873 = vperm.slane %v5081, 1
        %v5874 = vperm.slane %v5081, 5
        %v5875 = vperm.slane %v5082, 1
        %v5876 = vperm.slane %v5082, 5
        %v5877 = vperm.slane %v5083, 1
        %v5878 = vperm.slane %v5083, 5
        %v5879 = vperm.slane %v5084, 1
        %v5880 = vperm.slane %v5084, 5
        %v5881 = vperm.slane %v5085, 1
        %v5882 = vperm.slane %v5085, 5
        %v5883 = vperm.slane %v5086, 1
        %v5884 = vperm.slane %v5086, 5
        %v5885 = vperm.slane %v5087, 1
        %v5886 = vperm.slane %v5087, 5
        %v5887 = vperm.slane %v5088, 1
        %v5888 = vperm.slane %v5088, 5
        %v5905 = vperm.slane %v5873, 1
        %v5906 = vperm.slane %v5874, 1
        %v5907 = vperm.slane %v5875, 1
        %v5908 = vperm.slane %v5876, 1
        %v5909 = vperm.slane %v5877, 1
        %v5910 = vperm.slane %v5878, 1
        %v5911 = vperm.slane %v5879, 1
        %v5912 = vperm.slane %v5880, 1
        %v5913 = vperm.slane %v5881, 1
        %v5914 = vperm.slane %v5882, 1
        %v5915 = vperm.slane %v5883, 1
        %v5916 = vperm.slane %v5884, 1
        %v5917 = vperm.slane %v5885, 1
        %v5918 = vperm.slane %v5886, 1
        %v5919 = vperm.slane %v5887, 1
        %v5920 = vperm.slane %v5888, 1
        %v5921 = vsel %vm5857, %v5905, 0.0
        %v5922 = vsel %vm5858, %v5906, 0.0
        %v5923 = vsel %vm5859, %v5907, 0.0
        %v5924 = vsel %vm5860, %v5908, 0.0
        %v5925 = vsel %vm5861, %v5909, 0.0
        %v5926 = vsel %vm5862, %v5910, 0.0
        %v5927 = vsel %vm5863, %v5911, 0.0
        %v5928 = vsel %vm5864, %v5912, 0.0
        %v5929 = vsel %vm5865, %v5913, 0.0
        %v5930 = vsel %vm5866, %v5914, 0.0
        %v5931 = vsel %vm5867, %v5915, 0.0
        %v5932 = vsel %vm5868, %v5916, 0.0
        %v5933 = vsel %vm5869, %v5917, 0.0
        %v5934 = vsel %vm5870, %v5918, 0.0
        %v5935 = vsel %vm5871, %v5919, 0.0
        %v5936 = vsel %vm5872, %v5920, 0.0
        %v5937 = vadd.f32 %v5841, %v5921
        %v5938 = vadd.f32 %v5842, %v5922
        %v5939 = vadd.f32 %v5843, %v5923
        %v5940 = vadd.f32 %v5844, %v5924
        %v5941 = vadd.f32 %v5845, %v5925
        %v5942 = vadd.f32 %v5846, %v5926
        %v5943 = vadd.f32 %v5847, %v5927
        %v5944 = vadd.f32 %v5848, %v5928
        %v5945 = vadd.f32 %v5849, %v5929
        %v5946 = vadd.f32 %v5850, %v5930
        %v5947 = vadd.f32 %v5851, %v5931
        %v5948 = vadd.f32 %v5852, %v5932
        %v5949 = vadd.f32 %v5853, %v5933
        %v5950 = vadd.f32 %v5854, %v5934
        %v5951 = vadd.f32 %v5855, %v5935
        %v5952 = vadd.f32 %v5856, %v5936
        %v5953 = vpack.c.bf16 %v5937, %v5937
        %v5954 = vpack.c.bf16 %v5938, %v5938
        %v5955 = vpack.c.bf16 %v5939, %v5939
        %v5956 = vpack.c.bf16 %v5940, %v5940
        %v5957 = vpack.c.bf16 %v5941, %v5941
        %v5958 = vpack.c.bf16 %v5942, %v5942
        %v5959 = vpack.c.bf16 %v5943, %v5943
        %v5960 = vpack.c.bf16 %v5944, %v5944
        %v5961 = vpack.c.bf16 %v5945, %v5945
        %v5962 = vpack.c.bf16 %v5946, %v5946
        %v5963 = vpack.c.bf16 %v5947, %v5947
        %v5964 = vpack.c.bf16 %v5948, %v5948
        %v5965 = vpack.c.bf16 %v5949, %v5949
        %v5966 = vpack.c.bf16 %v5950, %v5950
        %v5967 = vpack.c.bf16 %v5951, %v5951
        %v5968 = vpack.c.bf16 %v5952, %v5952
        %v5969 = vperm.slane %v4921, 2
        %v5970 = vperm.slane %v4921, 6
        %v5971 = vperm.slane %v4922, 2
        %v5972 = vperm.slane %v4922, 6
        %v5973 = vperm.slane %v4923, 2
        %v5974 = vperm.slane %v4923, 6
        %v5975 = vperm.slane %v4924, 2
        %v5976 = vperm.slane %v4924, 6
        %v5977 = vperm.slane %v4925, 2
        %v5978 = vperm.slane %v4925, 6
        %v5979 = vperm.slane %v4926, 2
        %v5980 = vperm.slane %v4926, 6
        %v5981 = vperm.slane %v4927, 2
        %v5982 = vperm.slane %v4927, 6
        %v5983 = vperm.slane %v4928, 2
        %v5984 = vperm.slane %v4928, 6
        %v5985 = vperm.slane %v5969, 2
        %v5986 = vperm.slane %v5970, 2
        %v5987 = vperm.slane %v5971, 2
        %v5988 = vperm.slane %v5972, 2
        %v5989 = vperm.slane %v5973, 2
        %v5990 = vperm.slane %v5974, 2
        %v5991 = vperm.slane %v5975, 2
        %v5992 = vperm.slane %v5976, 2
        %v5993 = vperm.slane %v5977, 2
        %v5994 = vperm.slane %v5978, 2
        %v5995 = vperm.slane %v5979, 2
        %v5996 = vperm.slane %v5980, 2
        %v5997 = vperm.slane %v5981, 2
        %v5998 = vperm.slane %v5982, 2
        %v5999 = vperm.slane %v5983, 2
        %v6000 = vperm.slane %v5984, 2
        %v6001 = vsub.s32 %v797, %v5985
        %v6002 = vsub.s32 %v797, %v5986
        %v6003 = vsub.s32 %v797, %v5987
        %v6004 = vsub.s32 %v797, %v5988
        %v6005 = vsub.s32 %v797, %v5989
        %v6006 = vsub.s32 %v797, %v5990
        %v6007 = vsub.s32 %v797, %v5991
        %v6008 = vsub.s32 %v797, %v5992
        %v6009 = vsub.s32 %v797, %v5993
        %v6010 = vsub.s32 %v797, %v5994
        %v6011 = vsub.s32 %v797, %v5995
        %v6012 = vsub.s32 %v797, %v5996
        %v6013 = vsub.s32 %v797, %v5997
        %v6014 = vsub.s32 %v797, %v5998
        %v6015 = vsub.s32 %v797, %v5999
        %v6016 = vsub.s32 %v797, %v6000
        %vm6017 = vcmp.eq.s32.totalorder %v6001, 0
        %vm6018 = vcmp.eq.s32.totalorder %v6002, 0
        %vm6019 = vcmp.eq.s32.totalorder %v6003, 0
        %vm6020 = vcmp.eq.s32.totalorder %v6004, 0
        %vm6021 = vcmp.eq.s32.totalorder %v6005, 0
        %vm6022 = vcmp.eq.s32.totalorder %v6006, 0
        %vm6023 = vcmp.eq.s32.totalorder %v6007, 0
        %vm6024 = vcmp.eq.s32.totalorder %v6008, 0
        %vm6025 = vcmp.eq.s32.totalorder %v6009, 0
        %vm6026 = vcmp.eq.s32.totalorder %v6010, 0
        %vm6027 = vcmp.eq.s32.totalorder %v6011, 0
        %vm6028 = vcmp.eq.s32.totalorder %v6012, 0
        %vm6029 = vcmp.eq.s32.totalorder %v6013, 0
        %vm6030 = vcmp.eq.s32.totalorder %v6014, 0
        %vm6031 = vcmp.eq.s32.totalorder %v6015, 0
        %vm6032 = vcmp.eq.s32.totalorder %v6016, 0
        %v6033 = vperm.slane %v4953, 2
        %v6034 = vperm.slane %v4953, 6
        %v6035 = vperm.slane %v4954, 2
        %v6036 = vperm.slane %v4954, 6
        %v6037 = vperm.slane %v4955, 2
        %v6038 = vperm.slane %v4955, 6
        %v6039 = vperm.slane %v4956, 2
        %v6040 = vperm.slane %v4956, 6
        %v6041 = vperm.slane %v4957, 2
        %v6042 = vperm.slane %v4957, 6
        %v6043 = vperm.slane %v4958, 2
        %v6044 = vperm.slane %v4958, 6
        %v6045 = vperm.slane %v4959, 2
        %v6046 = vperm.slane %v4959, 6
        %v6047 = vperm.slane %v4960, 2
        %v6048 = vperm.slane %v4960, 6
        %v6065 = vperm.slane %v6033, 2
        %v6066 = vperm.slane %v6034, 2
        %v6067 = vperm.slane %v6035, 2
        %v6068 = vperm.slane %v6036, 2
        %v6069 = vperm.slane %v6037, 2
        %v6070 = vperm.slane %v6038, 2
        %v6071 = vperm.slane %v6039, 2
        %v6072 = vperm.slane %v6040, 2
        %v6073 = vperm.slane %v6041, 2
        %v6074 = vperm.slane %v6042, 2
        %v6075 = vperm.slane %v6043, 2
        %v6076 = vperm.slane %v6044, 2
        %v6077 = vperm.slane %v6045, 2
        %v6078 = vperm.slane %v6046, 2
        %v6079 = vperm.slane %v6047, 2
        %v6080 = vperm.slane %v6048, 2
        %v6081 = vsel %vm6017, %v6065, 0.0
        %v6082 = vsel %vm6018, %v6066, 0.0
        %v6083 = vsel %vm6019, %v6067, 0.0
        %v6084 = vsel %vm6020, %v6068, 0.0
        %v6085 = vsel %vm6021, %v6069, 0.0
        %v6086 = vsel %vm6022, %v6070, 0.0
        %v6087 = vsel %vm6023, %v6071, 0.0
        %v6088 = vsel %vm6024, %v6072, 0.0
        %v6089 = vsel %vm6025, %v6073, 0.0
        %v6090 = vsel %vm6026, %v6074, 0.0
        %v6091 = vsel %vm6027, %v6075, 0.0
        %v6092 = vsel %vm6028, %v6076, 0.0
        %v6093 = vsel %vm6029, %v6077, 0.0
        %v6094 = vsel %vm6030, %v6078, 0.0
        %v6095 = vsel %vm6031, %v6079, 0.0
        %v6096 = vsel %vm6032, %v6080, 0.0
        %vm6097 = vcmp.eq.s32.totalorder %v6001, 1
        %vm6098 = vcmp.eq.s32.totalorder %v6002, 1
        %vm6099 = vcmp.eq.s32.totalorder %v6003, 1
        %vm6100 = vcmp.eq.s32.totalorder %v6004, 1
        %vm6101 = vcmp.eq.s32.totalorder %v6005, 1
        %vm6102 = vcmp.eq.s32.totalorder %v6006, 1
        %vm6103 = vcmp.eq.s32.totalorder %v6007, 1
        %vm6104 = vcmp.eq.s32.totalorder %v6008, 1
        %vm6105 = vcmp.eq.s32.totalorder %v6009, 1
        %vm6106 = vcmp.eq.s32.totalorder %v6010, 1
        %vm6107 = vcmp.eq.s32.totalorder %v6011, 1
        %vm6108 = vcmp.eq.s32.totalorder %v6012, 1
        %vm6109 = vcmp.eq.s32.totalorder %v6013, 1
        %vm6110 = vcmp.eq.s32.totalorder %v6014, 1
        %vm6111 = vcmp.eq.s32.totalorder %v6015, 1
        %vm6112 = vcmp.eq.s32.totalorder %v6016, 1
        %v6113 = vperm.slane %v5001, 2
        %v6114 = vperm.slane %v5001, 6
        %v6115 = vperm.slane %v5002, 2
        %v6116 = vperm.slane %v5002, 6
        %v6117 = vperm.slane %v5003, 2
        %v6118 = vperm.slane %v5003, 6
        %v6119 = vperm.slane %v5004, 2
        %v6120 = vperm.slane %v5004, 6
        %v6121 = vperm.slane %v5005, 2
        %v6122 = vperm.slane %v5005, 6
        %v6123 = vperm.slane %v5006, 2
        %v6124 = vperm.slane %v5006, 6
        %v6125 = vperm.slane %v5007, 2
        %v6126 = vperm.slane %v5007, 6
        %v6127 = vperm.slane %v5008, 2
        %v6128 = vperm.slane %v5008, 6
        %v6145 = vperm.slane %v6113, 2
        %v6146 = vperm.slane %v6114, 2
        %v6147 = vperm.slane %v6115, 2
        %v6148 = vperm.slane %v6116, 2
        %v6149 = vperm.slane %v6117, 2
        %v6150 = vperm.slane %v6118, 2
        %v6151 = vperm.slane %v6119, 2
        %v6152 = vperm.slane %v6120, 2
        %v6153 = vperm.slane %v6121, 2
        %v6154 = vperm.slane %v6122, 2
        %v6155 = vperm.slane %v6123, 2
        %v6156 = vperm.slane %v6124, 2
        %v6157 = vperm.slane %v6125, 2
        %v6158 = vperm.slane %v6126, 2
        %v6159 = vperm.slane %v6127, 2
        %v6160 = vperm.slane %v6128, 2
        %v6161 = vsel %vm6097, %v6145, 0.0
        %v6162 = vsel %vm6098, %v6146, 0.0
        %v6163 = vsel %vm6099, %v6147, 0.0
        %v6164 = vsel %vm6100, %v6148, 0.0
        %v6165 = vsel %vm6101, %v6149, 0.0
        %v6166 = vsel %vm6102, %v6150, 0.0
        %v6167 = vsel %vm6103, %v6151, 0.0
        %v6168 = vsel %vm6104, %v6152, 0.0
        %v6169 = vsel %vm6105, %v6153, 0.0
        %v6170 = vsel %vm6106, %v6154, 0.0
        %v6171 = vsel %vm6107, %v6155, 0.0
        %v6172 = vsel %vm6108, %v6156, 0.0
        %v6173 = vsel %vm6109, %v6157, 0.0
        %v6174 = vsel %vm6110, %v6158, 0.0
        %v6175 = vsel %vm6111, %v6159, 0.0
        %v6176 = vsel %vm6112, %v6160, 0.0
        %v6177 = vadd.f32 %v6081, %v6161
        %v6178 = vadd.f32 %v6082, %v6162
        %v6179 = vadd.f32 %v6083, %v6163
        %v6180 = vadd.f32 %v6084, %v6164
        %v6181 = vadd.f32 %v6085, %v6165
        %v6182 = vadd.f32 %v6086, %v6166
        %v6183 = vadd.f32 %v6087, %v6167
        %v6184 = vadd.f32 %v6088, %v6168
        %v6185 = vadd.f32 %v6089, %v6169
        %v6186 = vadd.f32 %v6090, %v6170
        %v6187 = vadd.f32 %v6091, %v6171
        %v6188 = vadd.f32 %v6092, %v6172
        %v6189 = vadd.f32 %v6093, %v6173
        %v6190 = vadd.f32 %v6094, %v6174
        %v6191 = vadd.f32 %v6095, %v6175
        %v6192 = vadd.f32 %v6096, %v6176
        %vm6193 = vcmp.eq.s32.totalorder %v6001, 2
        %vm6194 = vcmp.eq.s32.totalorder %v6002, 2
        %vm6195 = vcmp.eq.s32.totalorder %v6003, 2
        %vm6196 = vcmp.eq.s32.totalorder %v6004, 2
        %vm6197 = vcmp.eq.s32.totalorder %v6005, 2
        %vm6198 = vcmp.eq.s32.totalorder %v6006, 2
        %vm6199 = vcmp.eq.s32.totalorder %v6007, 2
        %vm6200 = vcmp.eq.s32.totalorder %v6008, 2
        %vm6201 = vcmp.eq.s32.totalorder %v6009, 2
        %vm6202 = vcmp.eq.s32.totalorder %v6010, 2
        %vm6203 = vcmp.eq.s32.totalorder %v6011, 2
        %vm6204 = vcmp.eq.s32.totalorder %v6012, 2
        %vm6205 = vcmp.eq.s32.totalorder %v6013, 2
        %vm6206 = vcmp.eq.s32.totalorder %v6014, 2
        %vm6207 = vcmp.eq.s32.totalorder %v6015, 2
        %vm6208 = vcmp.eq.s32.totalorder %v6016, 2
        %v6209 = vperm.slane %v5057, 2
        %v6210 = vperm.slane %v5057, 6
        %v6211 = vperm.slane %v5058, 2
        %v6212 = vperm.slane %v5058, 6
        %v6213 = vperm.slane %v5059, 2
        %v6214 = vperm.slane %v5059, 6
        %v6215 = vperm.slane %v5060, 2
        %v6216 = vperm.slane %v5060, 6
        %v6217 = vperm.slane %v5061, 2
        %v6218 = vperm.slane %v5061, 6
        %v6219 = vperm.slane %v5062, 2
        %v6220 = vperm.slane %v5062, 6
        %v6221 = vperm.slane %v5063, 2
        %v6222 = vperm.slane %v5063, 6
        %v6223 = vperm.slane %v5064, 2
        %v6224 = vperm.slane %v5064, 6
        %v6241 = vperm.slane %v6209, 2
        %v6242 = vperm.slane %v6210, 2
        %v6243 = vperm.slane %v6211, 2
        %v6244 = vperm.slane %v6212, 2
        %v6245 = vperm.slane %v6213, 2
        %v6246 = vperm.slane %v6214, 2
        %v6247 = vperm.slane %v6215, 2
        %v6248 = vperm.slane %v6216, 2
        %v6249 = vperm.slane %v6217, 2
        %v6250 = vperm.slane %v6218, 2
        %v6251 = vperm.slane %v6219, 2
        %v6252 = vperm.slane %v6220, 2
        %v6253 = vperm.slane %v6221, 2
        %v6254 = vperm.slane %v6222, 2
        %v6255 = vperm.slane %v6223, 2
        %v6256 = vperm.slane %v6224, 2
        %v6257 = vsel %vm6193, %v6241, 0.0
        %v6258 = vsel %vm6194, %v6242, 0.0
        %v6259 = vsel %vm6195, %v6243, 0.0
        %v6260 = vsel %vm6196, %v6244, 0.0
        %v6261 = vsel %vm6197, %v6245, 0.0
        %v6262 = vsel %vm6198, %v6246, 0.0
        %v6263 = vsel %vm6199, %v6247, 0.0
        %v6264 = vsel %vm6200, %v6248, 0.0
        %v6265 = vsel %vm6201, %v6249, 0.0
        %v6266 = vsel %vm6202, %v6250, 0.0
        %v6267 = vsel %vm6203, %v6251, 0.0
        %v6268 = vsel %vm6204, %v6252, 0.0
        %v6269 = vsel %vm6205, %v6253, 0.0
        %v6270 = vsel %vm6206, %v6254, 0.0
        %v6271 = vsel %vm6207, %v6255, 0.0
        %v6272 = vsel %vm6208, %v6256, 0.0
        %v6273 = vadd.f32 %v6177, %v6257
        %v6274 = vadd.f32 %v6178, %v6258
        %v6275 = vadd.f32 %v6179, %v6259
        %v6276 = vadd.f32 %v6180, %v6260
        %v6277 = vadd.f32 %v6181, %v6261
        %v6278 = vadd.f32 %v6182, %v6262
        %v6279 = vadd.f32 %v6183, %v6263
        %v6280 = vadd.f32 %v6184, %v6264
        %v6281 = vadd.f32 %v6185, %v6265
        %v6282 = vadd.f32 %v6186, %v6266
        %v6283 = vadd.f32 %v6187, %v6267
        %v6284 = vadd.f32 %v6188, %v6268
        %v6285 = vadd.f32 %v6189, %v6269
        %v6286 = vadd.f32 %v6190, %v6270
        %v6287 = vadd.f32 %v6191, %v6271
        %v6288 = vadd.f32 %v6192, %v6272
        %vm6289 = vcmp.eq.s32.totalorder %v6001, 3
        %vm6290 = vcmp.eq.s32.totalorder %v6002, 3
        %vm6291 = vcmp.eq.s32.totalorder %v6003, 3
        %vm6292 = vcmp.eq.s32.totalorder %v6004, 3
        %vm6293 = vcmp.eq.s32.totalorder %v6005, 3
        %vm6294 = vcmp.eq.s32.totalorder %v6006, 3
        %vm6295 = vcmp.eq.s32.totalorder %v6007, 3
        %vm6296 = vcmp.eq.s32.totalorder %v6008, 3
        %vm6297 = vcmp.eq.s32.totalorder %v6009, 3
        %vm6298 = vcmp.eq.s32.totalorder %v6010, 3
        %vm6299 = vcmp.eq.s32.totalorder %v6011, 3
        %vm6300 = vcmp.eq.s32.totalorder %v6012, 3
        %vm6301 = vcmp.eq.s32.totalorder %v6013, 3
        %vm6302 = vcmp.eq.s32.totalorder %v6014, 3
        %vm6303 = vcmp.eq.s32.totalorder %v6015, 3
        %vm6304 = vcmp.eq.s32.totalorder %v6016, 3
        %v6305 = vperm.slane %v5081, 2
        %v6306 = vperm.slane %v5081, 6
        %v6307 = vperm.slane %v5082, 2
        %v6308 = vperm.slane %v5082, 6
        %v6309 = vperm.slane %v5083, 2
        %v6310 = vperm.slane %v5083, 6
        %v6311 = vperm.slane %v5084, 2
        %v6312 = vperm.slane %v5084, 6
        %v6313 = vperm.slane %v5085, 2
        %v6314 = vperm.slane %v5085, 6
        %v6315 = vperm.slane %v5086, 2
        %v6316 = vperm.slane %v5086, 6
        %v6317 = vperm.slane %v5087, 2
        %v6318 = vperm.slane %v5087, 6
        %v6319 = vperm.slane %v5088, 2
        %v6320 = vperm.slane %v5088, 6
        %v6337 = vperm.slane %v6305, 2
        %v6338 = vperm.slane %v6306, 2
        %v6339 = vperm.slane %v6307, 2
        %v6340 = vperm.slane %v6308, 2
        %v6341 = vperm.slane %v6309, 2
        %v6342 = vperm.slane %v6310, 2
        %v6343 = vperm.slane %v6311, 2
        %v6344 = vperm.slane %v6312, 2
        %v6345 = vperm.slane %v6313, 2
        %v6346 = vperm.slane %v6314, 2
        %v6347 = vperm.slane %v6315, 2
        %v6348 = vperm.slane %v6316, 2
        %v6349 = vperm.slane %v6317, 2
        %v6350 = vperm.slane %v6318, 2
        %v6351 = vperm.slane %v6319, 2
        %v6352 = vperm.slane %v6320, 2
        %v6353 = vsel %vm6289, %v6337, 0.0
        %v6354 = vsel %vm6290, %v6338, 0.0
        %v6355 = vsel %vm6291, %v6339, 0.0
        %v6356 = vsel %vm6292, %v6340, 0.0
        %v6357 = vsel %vm6293, %v6341, 0.0
        %v6358 = vsel %vm6294, %v6342, 0.0
        %v6359 = vsel %vm6295, %v6343, 0.0
        %v6360 = vsel %vm6296, %v6344, 0.0
        %v6361 = vsel %vm6297, %v6345, 0.0
        %v6362 = vsel %vm6298, %v6346, 0.0
        %v6363 = vsel %vm6299, %v6347, 0.0
        %v6364 = vsel %vm6300, %v6348, 0.0
        %v6365 = vsel %vm6301, %v6349, 0.0
        %v6366 = vsel %vm6302, %v6350, 0.0
        %v6367 = vsel %vm6303, %v6351, 0.0
        %v6368 = vsel %vm6304, %v6352, 0.0
        %v6369 = vadd.f32 %v6273, %v6353
        %v6370 = vadd.f32 %v6274, %v6354
        %v6371 = vadd.f32 %v6275, %v6355
        %v6372 = vadd.f32 %v6276, %v6356
        %v6373 = vadd.f32 %v6277, %v6357
        %v6374 = vadd.f32 %v6278, %v6358
        %v6375 = vadd.f32 %v6279, %v6359
        %v6376 = vadd.f32 %v6280, %v6360
        %v6377 = vadd.f32 %v6281, %v6361
        %v6378 = vadd.f32 %v6282, %v6362
        %v6379 = vadd.f32 %v6283, %v6363
        %v6380 = vadd.f32 %v6284, %v6364
        %v6381 = vadd.f32 %v6285, %v6365
        %v6382 = vadd.f32 %v6286, %v6366
        %v6383 = vadd.f32 %v6287, %v6367
        %v6384 = vadd.f32 %v6288, %v6368
        %v6385 = vpack.c.bf16 %v6369, %v6369
        %v6386 = vpack.c.bf16 %v6370, %v6370
        %v6387 = vpack.c.bf16 %v6371, %v6371
        %v6388 = vpack.c.bf16 %v6372, %v6372
        %v6389 = vpack.c.bf16 %v6373, %v6373
        %v6390 = vpack.c.bf16 %v6374, %v6374
        %v6391 = vpack.c.bf16 %v6375, %v6375
        %v6392 = vpack.c.bf16 %v6376, %v6376
        %v6393 = vpack.c.bf16 %v6377, %v6377
        %v6394 = vpack.c.bf16 %v6378, %v6378
        %v6395 = vpack.c.bf16 %v6379, %v6379
        %v6396 = vpack.c.bf16 %v6380, %v6380
        %v6397 = vpack.c.bf16 %v6381, %v6381
        %v6398 = vpack.c.bf16 %v6382, %v6382
        %v6399 = vpack.c.bf16 %v6383, %v6383
        %v6400 = vpack.c.bf16 %v6384, %v6384
        %v6401 = vld [vmem:[%s7] sm:$0xf]
        %v6402 = vld [vmem:[%s7 + $0x4] sm:$0xf]
        %v6403 = vld [vmem:[%s7 + $0x8] sm:$0xf]
        %v6404 = vld [vmem:[%s7 + $0xc] sm:$0xf]
        %v6405 = vld [vmem:[%s7 + $0x10] sm:$0xf]
        %v6411 = vunpack.c.l.b16 %v6401
        %v6412 = vunpack.c.l.b16 %v6402
        %v6413 = vunpack.c.l.b16 %v6403
        %v6414 = vunpack.c.l.b16 %v6404
        %v6415 = vunpack.c.l.b16 %v6405
        %v6416 = vpack.c.b16 %v6412, %v6411
        %v6417 = vpack.c.b16 %v6414, %v6413
        %v6418 = vpack.c.b16 %v6415, %v6415
        %v6420 = vsel %vm2138, %v6416, 0
        %v6423 = vsel %vm2138, %v6417, 0
        %v6426 = vsel %vm2138, %v6418, 0
        %v6429 = vsel %vm2151, %v5953, 0
        %v6432 = vsel %vm2151, %v5954, 0
        %v6435 = vsel %vm2151, %v5955, 0
        %v6438 = vsel %vm2151, %v5956, 0
        %v6441 = vsel %vm2151, %v5957, 0
        %v6444 = vsel %vm2151, %v5958, 0
        %v6447 = vsel %vm2151, %v5959, 0
        %v6450 = vsel %vm2151, %v5960, 0
        %v6453 = vsel %vm2151, %v5961, 0
        %v6456 = vsel %vm2151, %v5962, 0
        %v6459 = vsel %vm2151, %v5963, 0
        %v6462 = vsel %vm2151, %v5964, 0
        %v6465 = vsel %vm2151, %v5965, 0
        %v6468 = vsel %vm2151, %v5966, 0
        %v6471 = vsel %vm2151, %v5967, 0
        %v6474 = vsel %vm2151, %v5968, 0
        %6476 = vmatpush.bf16.msra.mxu0 0
        %6477 = vmatpush.bf16.msra.mxu0 0
        %6478 = vmatpush.bf16.msra.mxu0 0
        %6479 = vmatpush.bf16.msra.mxu0 0
        %6480 = vmatpush.bf16.msra.mxu0 0
        %6481 = vmatpush.bf16.msra.mxu0 0
        %6482 = vmatpush.bf16.msra.mxu0 0
        %6483 = vmatpush.bf16.msra.mxu0 %v6429
        %6484 = vmatmul.bf16.gmra.mxu0 %v6420
        %v6485 = vpop.f32.mrf.mxu0
        %v6486 = vadd.f32 0.0, %v6485
        %v6487 = vpop.f32.mrf.mxu0
        %v6488 = vadd.f32 0.0, %v6487
        %6489 = vmatmul.bf16.gmra.mxu0 %v6423
        %v6490 = vpop.f32.mrf.mxu0
        %v6491 = vadd.f32 0.0, %v6490
        %v6492 = vpop.f32.mrf.mxu0
        %v6493 = vadd.f32 0.0, %v6492
        %6494 = vmatmul.bf16.gmra.mxu0 %v6426
        %v6495 = vpop.f32.mrf.mxu0
        %v6496 = vadd.f32 0.0, %v6495
        %v6497 = vpop.f32.mrf.mxu0
        %6498 = vdwg.mxu0
        %6499 = vmatpush.bf16.msra.mxu0 0
        %6500 = vmatpush.bf16.msra.mxu0 0
        %6501 = vmatpush.bf16.msra.mxu0 0
        %6502 = vmatpush.bf16.msra.mxu0 0
        %6503 = vmatpush.bf16.msra.mxu0 0
        %6504 = vmatpush.bf16.msra.mxu0 0
        %6505 = vmatpush.bf16.msra.mxu0 0
        %6506 = vmatpush.bf16.msra.mxu0 %v6432
        %6507 = vmatmul.bf16.gmra.mxu0 %v6420
        %v6508 = vpop.f32.mrf.mxu0
        %v6509 = vadd.f32 0.0, %v6508
        %v6510 = vpop.f32.mrf.mxu0
        %v6511 = vadd.f32 0.0, %v6510
        %6512 = vmatmul.bf16.gmra.mxu0 %v6423
        %v6513 = vpop.f32.mrf.mxu0
        %v6514 = vadd.f32 0.0, %v6513
        %v6515 = vpop.f32.mrf.mxu0
        %v6516 = vadd.f32 0.0, %v6515
        %6517 = vmatmul.bf16.gmra.mxu0 %v6426
        %v6518 = vpop.f32.mrf.mxu0
        %v6519 = vadd.f32 0.0, %v6518
        %v6520 = vpop.f32.mrf.mxu0
        %6521 = vdwg.mxu0
        %6522 = vmatpush.bf16.msra.mxu0 0
        %6523 = vmatpush.bf16.msra.mxu0 0
        %6524 = vmatpush.bf16.msra.mxu0 0
        %6525 = vmatpush.bf16.msra.mxu0 0
        %6526 = vmatpush.bf16.msra.mxu0 0
        %6527 = vmatpush.bf16.msra.mxu0 0
        %6528 = vmatpush.bf16.msra.mxu0 0
        %6529 = vmatpush.bf16.msra.mxu0 %v6435
        %6530 = vmatmul.bf16.gmra.mxu0 %v6420
        %v6531 = vpop.f32.mrf.mxu0
        %v6532 = vadd.f32 0.0, %v6531
        %v6533 = vpop.f32.mrf.mxu0
        %v6534 = vadd.f32 0.0, %v6533
        %6535 = vmatmul.bf16.gmra.mxu0 %v6423
        %v6536 = vpop.f32.mrf.mxu0
        %v6537 = vadd.f32 0.0, %v6536
        %v6538 = vpop.f32.mrf.mxu0
        %v6539 = vadd.f32 0.0, %v6538
        %6540 = vmatmul.bf16.gmra.mxu0 %v6426
        %v6541 = vpop.f32.mrf.mxu0
        %v6542 = vadd.f32 0.0, %v6541
        %v6543 = vpop.f32.mrf.mxu0
        %6544 = vdwg.mxu0
        %6545 = vmatpush.bf16.msra.mxu0 0
        %6546 = vmatpush.bf16.msra.mxu0 0
        %6547 = vmatpush.bf16.msra.mxu0 0
        %6548 = vmatpush.bf16.msra.mxu0 0
        %6549 = vmatpush.bf16.msra.mxu0 0
        %6550 = vmatpush.bf16.msra.mxu0 0
        %6551 = vmatpush.bf16.msra.mxu0 0
        %6552 = vmatpush.bf16.msra.mxu0 %v6438
        %6553 = vmatmul.bf16.gmra.mxu0 %v6420
        %v6554 = vpop.f32.mrf.mxu0
        %v6555 = vadd.f32 0.0, %v6554
        %v6556 = vpop.f32.mrf.mxu0
        %v6557 = vadd.f32 0.0, %v6556
        %6558 = vmatmul.bf16.gmra.mxu0 %v6423
        %v6559 = vpop.f32.mrf.mxu0
        %v6560 = vadd.f32 0.0, %v6559
        %v6561 = vpop.f32.mrf.mxu0
        %v6562 = vadd.f32 0.0, %v6561
        %6563 = vmatmul.bf16.gmra.mxu0 %v6426
        %v6564 = vpop.f32.mrf.mxu0
        %v6565 = vadd.f32 0.0, %v6564
        %v6566 = vpop.f32.mrf.mxu0
        %6567 = vdwg.mxu0
        %6568 = vmatpush.bf16.msra.mxu0 0
        %6569 = vmatpush.bf16.msra.mxu0 0
        %6570 = vmatpush.bf16.msra.mxu0 0
        %6571 = vmatpush.bf16.msra.mxu0 0
        %6572 = vmatpush.bf16.msra.mxu0 0
        %6573 = vmatpush.bf16.msra.mxu0 0
        %6574 = vmatpush.bf16.msra.mxu0 0
        %6575 = vmatpush.bf16.msra.mxu0 %v6441
        %6576 = vmatmul.bf16.gmra.mxu0 %v6420
        %v6577 = vpop.f32.mrf.mxu0
        %v6578 = vadd.f32 0.0, %v6577
        %v6579 = vpop.f32.mrf.mxu0
        %v6580 = vadd.f32 0.0, %v6579
        %6581 = vmatmul.bf16.gmra.mxu0 %v6423
        %v6582 = vpop.f32.mrf.mxu0
        %v6583 = vadd.f32 0.0, %v6582
        %v6584 = vpop.f32.mrf.mxu0
        %v6585 = vadd.f32 0.0, %v6584
        %6586 = vmatmul.bf16.gmra.mxu0 %v6426
        %v6587 = vpop.f32.mrf.mxu0
        %v6588 = vadd.f32 0.0, %v6587
        %v6589 = vpop.f32.mrf.mxu0
        %6590 = vdwg.mxu0
        %6591 = vmatpush.bf16.msra.mxu0 0
        %6592 = vmatpush.bf16.msra.mxu0 0
        %6593 = vmatpush.bf16.msra.mxu0 0
        %6594 = vmatpush.bf16.msra.mxu0 0
        %6595 = vmatpush.bf16.msra.mxu0 0
        %6596 = vmatpush.bf16.msra.mxu0 0
        %6597 = vmatpush.bf16.msra.mxu0 0
        %6598 = vmatpush.bf16.msra.mxu0 %v6444
        %6599 = vmatmul.bf16.gmra.mxu0 %v6420
        %v6600 = vpop.f32.mrf.mxu0
        %v6601 = vadd.f32 0.0, %v6600
        %v6602 = vpop.f32.mrf.mxu0
        %v6603 = vadd.f32 0.0, %v6602
        %6604 = vmatmul.bf16.gmra.mxu0 %v6423
        %v6605 = vpop.f32.mrf.mxu0
        %v6606 = vadd.f32 0.0, %v6605
        %v6607 = vpop.f32.mrf.mxu0
        %v6608 = vadd.f32 0.0, %v6607
        %6609 = vmatmul.bf16.gmra.mxu0 %v6426
        %v6610 = vpop.f32.mrf.mxu0
        %v6611 = vadd.f32 0.0, %v6610
        %v6612 = vpop.f32.mrf.mxu0
        %6613 = vdwg.mxu0
        %6614 = vmatpush.bf16.msra.mxu0 0
        %6615 = vmatpush.bf16.msra.mxu0 0
        %6616 = vmatpush.bf16.msra.mxu0 0
        %6617 = vmatpush.bf16.msra.mxu0 0
        %6618 = vmatpush.bf16.msra.mxu0 0
        %6619 = vmatpush.bf16.msra.mxu0 0
        %6620 = vmatpush.bf16.msra.mxu0 0
        %6621 = vmatpush.bf16.msra.mxu0 %v6447
        %6622 = vmatmul.bf16.gmra.mxu0 %v6420
        %v6623 = vpop.f32.mrf.mxu0
        %v6624 = vadd.f32 0.0, %v6623
        %v6625 = vpop.f32.mrf.mxu0
        %v6626 = vadd.f32 0.0, %v6625
        %6627 = vmatmul.bf16.gmra.mxu0 %v6423
        %v6628 = vpop.f32.mrf.mxu0
        %v6629 = vadd.f32 0.0, %v6628
        %v6630 = vpop.f32.mrf.mxu0
        %v6631 = vadd.f32 0.0, %v6630
        %6632 = vmatmul.bf16.gmra.mxu0 %v6426
        %v6633 = vpop.f32.mrf.mxu0
        %v6634 = vadd.f32 0.0, %v6633
        %v6635 = vpop.f32.mrf.mxu0
        %6636 = vdwg.mxu0
        %6637 = vmatpush.bf16.msra.mxu0 0
        %6638 = vmatpush.bf16.msra.mxu0 0
        %6639 = vmatpush.bf16.msra.mxu0 0
        %6640 = vmatpush.bf16.msra.mxu0 0
        %6641 = vmatpush.bf16.msra.mxu0 0
        %6642 = vmatpush.bf16.msra.mxu0 0
        %6643 = vmatpush.bf16.msra.mxu0 0
        %6644 = vmatpush.bf16.msra.mxu0 %v6450
        %6645 = vmatmul.bf16.gmra.mxu0 %v6420
        %v6646 = vpop.f32.mrf.mxu0
        %v6647 = vadd.f32 0.0, %v6646
        %v6648 = vpop.f32.mrf.mxu0
        %v6649 = vadd.f32 0.0, %v6648
        %6650 = vmatmul.bf16.gmra.mxu0 %v6423
        %v6651 = vpop.f32.mrf.mxu0
        %v6652 = vadd.f32 0.0, %v6651
        %v6653 = vpop.f32.mrf.mxu0
        %v6654 = vadd.f32 0.0, %v6653
        %6655 = vmatmul.bf16.gmra.mxu0 %v6426
        %v6656 = vpop.f32.mrf.mxu0
        %v6657 = vadd.f32 0.0, %v6656
        %v6658 = vpop.f32.mrf.mxu0
        %6659 = vdwg.mxu0
        %6660 = vmatpush.bf16.msra.mxu0 0
        %6661 = vmatpush.bf16.msra.mxu0 0
        %6662 = vmatpush.bf16.msra.mxu0 0
        %6663 = vmatpush.bf16.msra.mxu0 0
        %6664 = vmatpush.bf16.msra.mxu0 0
        %6665 = vmatpush.bf16.msra.mxu0 0
        %6666 = vmatpush.bf16.msra.mxu0 0
        %6667 = vmatpush.bf16.msra.mxu0 %v6453
        %6668 = vmatmul.bf16.gmra.mxu0 %v6420
        %v6669 = vpop.f32.mrf.mxu0
        %v6670 = vadd.f32 0.0, %v6669
        %v6671 = vpop.f32.mrf.mxu0
        %v6672 = vadd.f32 0.0, %v6671
        %6673 = vmatmul.bf16.gmra.mxu0 %v6423
        %v6674 = vpop.f32.mrf.mxu0
        %v6675 = vadd.f32 0.0, %v6674
        %v6676 = vpop.f32.mrf.mxu0
        %v6677 = vadd.f32 0.0, %v6676
        %6678 = vmatmul.bf16.gmra.mxu0 %v6426
        %v6679 = vpop.f32.mrf.mxu0
        %v6680 = vadd.f32 0.0, %v6679
        %v6681 = vpop.f32.mrf.mxu0
        %6682 = vdwg.mxu0
        %6683 = vmatpush.bf16.msra.mxu0 0
        %6684 = vmatpush.bf16.msra.mxu0 0
        %6685 = vmatpush.bf16.msra.mxu0 0
        %6686 = vmatpush.bf16.msra.mxu0 0
        %6687 = vmatpush.bf16.msra.mxu0 0
        %6688 = vmatpush.bf16.msra.mxu0 0
        %6689 = vmatpush.bf16.msra.mxu0 0
        %6690 = vmatpush.bf16.msra.mxu0 %v6456
        %6691 = vmatmul.bf16.gmra.mxu0 %v6420
        %v6692 = vpop.f32.mrf.mxu0
        %v6693 = vadd.f32 0.0, %v6692
        %v6694 = vpop.f32.mrf.mxu0
        %v6695 = vadd.f32 0.0, %v6694
        %6696 = vmatmul.bf16.gmra.mxu0 %v6423
        %v6697 = vpop.f32.mrf.mxu0
        %v6698 = vadd.f32 0.0, %v6697
        %v6699 = vpop.f32.mrf.mxu0
        %v6700 = vadd.f32 0.0, %v6699
        %6701 = vmatmul.bf16.gmra.mxu0 %v6426
        %v6702 = vpop.f32.mrf.mxu0
        %v6703 = vadd.f32 0.0, %v6702
        %v6704 = vpop.f32.mrf.mxu0
        %6705 = vdwg.mxu0
        %6706 = vmatpush.bf16.msra.mxu0 0
        %6707 = vmatpush.bf16.msra.mxu0 0
        %6708 = vmatpush.bf16.msra.mxu0 0
        %6709 = vmatpush.bf16.msra.mxu0 0
        %6710 = vmatpush.bf16.msra.mxu0 0
        %6711 = vmatpush.bf16.msra.mxu0 0
        %6712 = vmatpush.bf16.msra.mxu0 0
        %6713 = vmatpush.bf16.msra.mxu0 %v6459
        %6714 = vmatmul.bf16.gmra.mxu0 %v6420
        %v6715 = vpop.f32.mrf.mxu0
        %v6716 = vadd.f32 0.0, %v6715
        %v6717 = vpop.f32.mrf.mxu0
        %v6718 = vadd.f32 0.0, %v6717
        %6719 = vmatmul.bf16.gmra.mxu0 %v6423
        %v6720 = vpop.f32.mrf.mxu0
        %v6721 = vadd.f32 0.0, %v6720
        %v6722 = vpop.f32.mrf.mxu0
        %v6723 = vadd.f32 0.0, %v6722
        %6724 = vmatmul.bf16.gmra.mxu0 %v6426
        %v6725 = vpop.f32.mrf.mxu0
        %v6726 = vadd.f32 0.0, %v6725
        %v6727 = vpop.f32.mrf.mxu0
        %6728 = vdwg.mxu0
        %6729 = vmatpush.bf16.msra.mxu0 0
        %6730 = vmatpush.bf16.msra.mxu0 0
        %6731 = vmatpush.bf16.msra.mxu0 0
        %6732 = vmatpush.bf16.msra.mxu0 0
        %6733 = vmatpush.bf16.msra.mxu0 0
        %6734 = vmatpush.bf16.msra.mxu0 0
        %6735 = vmatpush.bf16.msra.mxu0 0
        %6736 = vmatpush.bf16.msra.mxu0 %v6462
        %6737 = vmatmul.bf16.gmra.mxu0 %v6420
        %v6738 = vpop.f32.mrf.mxu0
        %v6739 = vadd.f32 0.0, %v6738
        %v6740 = vpop.f32.mrf.mxu0
        %v6741 = vadd.f32 0.0, %v6740
        %6742 = vmatmul.bf16.gmra.mxu0 %v6423
        %v6743 = vpop.f32.mrf.mxu0
        %v6744 = vadd.f32 0.0, %v6743
        %v6745 = vpop.f32.mrf.mxu0
        %v6746 = vadd.f32 0.0, %v6745
        %6747 = vmatmul.bf16.gmra.mxu0 %v6426
        %v6748 = vpop.f32.mrf.mxu0
        %v6749 = vadd.f32 0.0, %v6748
        %v6750 = vpop.f32.mrf.mxu0
        %6751 = vdwg.mxu0
        %6752 = vmatpush.bf16.msra.mxu0 0
        %6753 = vmatpush.bf16.msra.mxu0 0
        %6754 = vmatpush.bf16.msra.mxu0 0
        %6755 = vmatpush.bf16.msra.mxu0 0
        %6756 = vmatpush.bf16.msra.mxu0 0
        %6757 = vmatpush.bf16.msra.mxu0 0
        %6758 = vmatpush.bf16.msra.mxu0 0
        %6759 = vmatpush.bf16.msra.mxu0 %v6465
        %6760 = vmatmul.bf16.gmra.mxu0 %v6420
        %v6761 = vpop.f32.mrf.mxu0
        %v6762 = vadd.f32 0.0, %v6761
        %v6763 = vpop.f32.mrf.mxu0
        %v6764 = vadd.f32 0.0, %v6763
        %6765 = vmatmul.bf16.gmra.mxu0 %v6423
        %v6766 = vpop.f32.mrf.mxu0
        %v6767 = vadd.f32 0.0, %v6766
        %v6768 = vpop.f32.mrf.mxu0
        %v6769 = vadd.f32 0.0, %v6768
        %6770 = vmatmul.bf16.gmra.mxu0 %v6426
        %v6771 = vpop.f32.mrf.mxu0
        %v6772 = vadd.f32 0.0, %v6771
        %v6773 = vpop.f32.mrf.mxu0
        %6774 = vdwg.mxu0
        %6775 = vmatpush.bf16.msra.mxu0 0
        %6776 = vmatpush.bf16.msra.mxu0 0
        %6777 = vmatpush.bf16.msra.mxu0 0
        %6778 = vmatpush.bf16.msra.mxu0 0
        %6779 = vmatpush.bf16.msra.mxu0 0
        %6780 = vmatpush.bf16.msra.mxu0 0
        %6781 = vmatpush.bf16.msra.mxu0 0
        %6782 = vmatpush.bf16.msra.mxu0 %v6468
        %6783 = vmatmul.bf16.gmra.mxu0 %v6420
        %v6784 = vpop.f32.mrf.mxu0
        %v6785 = vadd.f32 0.0, %v6784
        %v6786 = vpop.f32.mrf.mxu0
        %v6787 = vadd.f32 0.0, %v6786
        %6788 = vmatmul.bf16.gmra.mxu0 %v6423
        %v6789 = vpop.f32.mrf.mxu0
        %v6790 = vadd.f32 0.0, %v6789
        %v6791 = vpop.f32.mrf.mxu0
        %v6792 = vadd.f32 0.0, %v6791
        %6793 = vmatmul.bf16.gmra.mxu0 %v6426
        %v6794 = vpop.f32.mrf.mxu0
        %v6795 = vadd.f32 0.0, %v6794
        %v6796 = vpop.f32.mrf.mxu0
        %6797 = vdwg.mxu0
        %6798 = vmatpush.bf16.msra.mxu0 0
        %6799 = vmatpush.bf16.msra.mxu0 0
        %6800 = vmatpush.bf16.msra.mxu0 0
        %6801 = vmatpush.bf16.msra.mxu0 0
        %6802 = vmatpush.bf16.msra.mxu0 0
        %6803 = vmatpush.bf16.msra.mxu0 0
        %6804 = vmatpush.bf16.msra.mxu0 0
        %6805 = vmatpush.bf16.msra.mxu0 %v6471
        %6806 = vmatmul.bf16.gmra.mxu0 %v6420
        %v6807 = vpop.f32.mrf.mxu0
        %v6808 = vadd.f32 0.0, %v6807
        %v6809 = vpop.f32.mrf.mxu0
        %v6810 = vadd.f32 0.0, %v6809
        %6811 = vmatmul.bf16.gmra.mxu0 %v6423
        %v6812 = vpop.f32.mrf.mxu0
        %v6813 = vadd.f32 0.0, %v6812
        %v6814 = vpop.f32.mrf.mxu0
        %v6815 = vadd.f32 0.0, %v6814
        %6816 = vmatmul.bf16.gmra.mxu0 %v6426
        %v6817 = vpop.f32.mrf.mxu0
        %v6818 = vadd.f32 0.0, %v6817
        %v6819 = vpop.f32.mrf.mxu0
        %6820 = vdwg.mxu0
        %6821 = vmatpush.bf16.msra.mxu0 0
        %6822 = vmatpush.bf16.msra.mxu0 0
        %6823 = vmatpush.bf16.msra.mxu0 0
        %6824 = vmatpush.bf16.msra.mxu0 0
        %6825 = vmatpush.bf16.msra.mxu0 0
        %6826 = vmatpush.bf16.msra.mxu0 0
        %6827 = vmatpush.bf16.msra.mxu0 0
        %6828 = vmatpush.bf16.msra.mxu0 %v6474
        %6829 = vmatmul.bf16.gmra.mxu0 %v6420
        %v6830 = vpop.f32.mrf.mxu0
        %v6831 = vadd.f32 0.0, %v6830
        %v6832 = vpop.f32.mrf.mxu0
        %v6833 = vadd.f32 0.0, %v6832
        %6834 = vmatmul.bf16.gmra.mxu0 %v6423
        %v6835 = vpop.f32.mrf.mxu0
        %v6836 = vadd.f32 0.0, %v6835
        %v6837 = vpop.f32.mrf.mxu0
        %v6838 = vadd.f32 0.0, %v6837
        %6839 = vmatmul.bf16.gmra.mxu0 %v6426
        %v6840 = vpop.f32.mrf.mxu0
        %v6841 = vadd.f32 0.0, %v6840
        %v6842 = vpop.f32.mrf.mxu0
        %6843 = vdwg.mxu0
        %v6844 = vld [vmem:[%s8] sm:$0xf]
        %v6845 = vld [vmem:[%s8 + $0x4] sm:$0xf]
        %v6846 = vld [vmem:[%s8 + $0x8] sm:$0xf]
        %v6847 = vld [vmem:[%s8 + $0xc] sm:$0xf]
        %v6848 = vld [vmem:[%s8 + $0x10] sm:$0xf]
        %v6854 = vunpack.c.l.b16 %v6844
        %v6855 = vunpack.c.l.b16 %v6845
        %v6856 = vunpack.c.l.b16 %v6846
        %v6857 = vunpack.c.l.b16 %v6847
        %v6858 = vunpack.c.l.b16 %v6848
        %v6859 = vpack.c.b16 %v6855, %v6854
        %v6860 = vpack.c.b16 %v6857, %v6856
        %v6861 = vpack.c.b16 %v6858, %v6858
        %v6863 = vsel %vm2138, %v6859, 0
        %v6866 = vsel %vm2138, %v6860, 0
        %v6869 = vsel %vm2138, %v6861, 0
        %v6872 = vsel %vm2151, %v6385, 0
        %v6875 = vsel %vm2151, %v6386, 0
        %v6878 = vsel %vm2151, %v6387, 0
        %v6881 = vsel %vm2151, %v6388, 0
        %v6884 = vsel %vm2151, %v6389, 0
        %v6887 = vsel %vm2151, %v6390, 0
        %v6890 = vsel %vm2151, %v6391, 0
        %v6893 = vsel %vm2151, %v6392, 0
        %v6896 = vsel %vm2151, %v6393, 0
        %v6899 = vsel %vm2151, %v6394, 0
        %v6902 = vsel %vm2151, %v6395, 0
        %v6905 = vsel %vm2151, %v6396, 0
        %v6908 = vsel %vm2151, %v6397, 0
        %v6911 = vsel %vm2151, %v6398, 0
        %v6914 = vsel %vm2151, %v6399, 0
        %v6917 = vsel %vm2151, %v6400, 0
        %6919 = vmatpush.bf16.msra.mxu0 0
        %6920 = vmatpush.bf16.msra.mxu0 0
        %6921 = vmatpush.bf16.msra.mxu0 0
        %6922 = vmatpush.bf16.msra.mxu0 0
        %6923 = vmatpush.bf16.msra.mxu0 0
        %6924 = vmatpush.bf16.msra.mxu0 0
        %6925 = vmatpush.bf16.msra.mxu0 0
        %6926 = vmatpush.bf16.msra.mxu0 %v6872
        %6927 = vmatmul.bf16.gmra.mxu0 %v6863
        %v6928 = vpop.f32.mrf.mxu0
        %v6929 = vadd.f32 0.0, %v6928
        %v6930 = vpop.f32.mrf.mxu0
        %v6931 = vadd.f32 0.0, %v6930
        %6932 = vmatmul.bf16.gmra.mxu0 %v6866
        %v6933 = vpop.f32.mrf.mxu0
        %v6934 = vadd.f32 0.0, %v6933
        %v6935 = vpop.f32.mrf.mxu0
        %v6936 = vadd.f32 0.0, %v6935
        %6937 = vmatmul.bf16.gmra.mxu0 %v6869
        %v6938 = vpop.f32.mrf.mxu0
        %v6939 = vadd.f32 0.0, %v6938
        %v6940 = vpop.f32.mrf.mxu0
        %6941 = vdwg.mxu0
        %6942 = vmatpush.bf16.msra.mxu0 0
        %6943 = vmatpush.bf16.msra.mxu0 0
        %6944 = vmatpush.bf16.msra.mxu0 0
        %6945 = vmatpush.bf16.msra.mxu0 0
        %6946 = vmatpush.bf16.msra.mxu0 0
        %6947 = vmatpush.bf16.msra.mxu0 0
        %6948 = vmatpush.bf16.msra.mxu0 0
        %6949 = vmatpush.bf16.msra.mxu0 %v6875
        %6950 = vmatmul.bf16.gmra.mxu0 %v6863
        %v6951 = vpop.f32.mrf.mxu0
        %v6952 = vadd.f32 0.0, %v6951
        %v6953 = vpop.f32.mrf.mxu0
        %v6954 = vadd.f32 0.0, %v6953
        %6955 = vmatmul.bf16.gmra.mxu0 %v6866
        %v6956 = vpop.f32.mrf.mxu0
        %v6957 = vadd.f32 0.0, %v6956
        %v6958 = vpop.f32.mrf.mxu0
        %v6959 = vadd.f32 0.0, %v6958
        %6960 = vmatmul.bf16.gmra.mxu0 %v6869
        %v6961 = vpop.f32.mrf.mxu0
        %v6962 = vadd.f32 0.0, %v6961
        %v6963 = vpop.f32.mrf.mxu0
        %6964 = vdwg.mxu0
        %6965 = vmatpush.bf16.msra.mxu0 0
        %6966 = vmatpush.bf16.msra.mxu0 0
        %6967 = vmatpush.bf16.msra.mxu0 0
        %6968 = vmatpush.bf16.msra.mxu0 0
        %6969 = vmatpush.bf16.msra.mxu0 0
        %6970 = vmatpush.bf16.msra.mxu0 0
        %6971 = vmatpush.bf16.msra.mxu0 0
        %6972 = vmatpush.bf16.msra.mxu0 %v6878
        %6973 = vmatmul.bf16.gmra.mxu0 %v6863
        %v6974 = vpop.f32.mrf.mxu0
        %v6975 = vadd.f32 0.0, %v6974
        %v6976 = vpop.f32.mrf.mxu0
        %v6977 = vadd.f32 0.0, %v6976
        %6978 = vmatmul.bf16.gmra.mxu0 %v6866
        %v6979 = vpop.f32.mrf.mxu0
        %v6980 = vadd.f32 0.0, %v6979
        %v6981 = vpop.f32.mrf.mxu0
        %v6982 = vadd.f32 0.0, %v6981
        %6983 = vmatmul.bf16.gmra.mxu0 %v6869
        %v6984 = vpop.f32.mrf.mxu0
        %v6985 = vadd.f32 0.0, %v6984
        %v6986 = vpop.f32.mrf.mxu0
        %6987 = vdwg.mxu0
        %6988 = vmatpush.bf16.msra.mxu0 0
        %6989 = vmatpush.bf16.msra.mxu0 0
        %6990 = vmatpush.bf16.msra.mxu0 0
        %6991 = vmatpush.bf16.msra.mxu0 0
        %6992 = vmatpush.bf16.msra.mxu0 0
        %6993 = vmatpush.bf16.msra.mxu0 0
        %6994 = vmatpush.bf16.msra.mxu0 0
        %6995 = vmatpush.bf16.msra.mxu0 %v6881
        %6996 = vmatmul.bf16.gmra.mxu0 %v6863
        %v6997 = vpop.f32.mrf.mxu0
        %v6998 = vadd.f32 0.0, %v6997
        %v6999 = vpop.f32.mrf.mxu0
        %v7000 = vadd.f32 0.0, %v6999
        %7001 = vmatmul.bf16.gmra.mxu0 %v6866
        %v7002 = vpop.f32.mrf.mxu0
        %v7003 = vadd.f32 0.0, %v7002
        %v7004 = vpop.f32.mrf.mxu0
        %v7005 = vadd.f32 0.0, %v7004
        %7006 = vmatmul.bf16.gmra.mxu0 %v6869
        %v7007 = vpop.f32.mrf.mxu0
        %v7008 = vadd.f32 0.0, %v7007
        %v7009 = vpop.f32.mrf.mxu0
        %7010 = vdwg.mxu0
        %7011 = vmatpush.bf16.msra.mxu0 0
        %7012 = vmatpush.bf16.msra.mxu0 0
        %7013 = vmatpush.bf16.msra.mxu0 0
        %7014 = vmatpush.bf16.msra.mxu0 0
        %7015 = vmatpush.bf16.msra.mxu0 0
        %7016 = vmatpush.bf16.msra.mxu0 0
        %7017 = vmatpush.bf16.msra.mxu0 0
        %7018 = vmatpush.bf16.msra.mxu0 %v6884
        %7019 = vmatmul.bf16.gmra.mxu0 %v6863
        %v7020 = vpop.f32.mrf.mxu0
        %v7021 = vadd.f32 0.0, %v7020
        %v7022 = vpop.f32.mrf.mxu0
        %v7023 = vadd.f32 0.0, %v7022
        %7024 = vmatmul.bf16.gmra.mxu0 %v6866
        %v7025 = vpop.f32.mrf.mxu0
        %v7026 = vadd.f32 0.0, %v7025
        %v7027 = vpop.f32.mrf.mxu0
        %v7028 = vadd.f32 0.0, %v7027
        %7029 = vmatmul.bf16.gmra.mxu0 %v6869
        %v7030 = vpop.f32.mrf.mxu0
        %v7031 = vadd.f32 0.0, %v7030
        %v7032 = vpop.f32.mrf.mxu0
        %7033 = vdwg.mxu0
        %7034 = vmatpush.bf16.msra.mxu0 0
        %7035 = vmatpush.bf16.msra.mxu0 0
        %7036 = vmatpush.bf16.msra.mxu0 0
        %7037 = vmatpush.bf16.msra.mxu0 0
        %7038 = vmatpush.bf16.msra.mxu0 0
        %7039 = vmatpush.bf16.msra.mxu0 0
        %7040 = vmatpush.bf16.msra.mxu0 0
        %7041 = vmatpush.bf16.msra.mxu0 %v6887
        %7042 = vmatmul.bf16.gmra.mxu0 %v6863
        %v7043 = vpop.f32.mrf.mxu0
        %v7044 = vadd.f32 0.0, %v7043
        %v7045 = vpop.f32.mrf.mxu0
        %v7046 = vadd.f32 0.0, %v7045
        %7047 = vmatmul.bf16.gmra.mxu0 %v6866
        %v7048 = vpop.f32.mrf.mxu0
        %v7049 = vadd.f32 0.0, %v7048
        %v7050 = vpop.f32.mrf.mxu0
        %v7051 = vadd.f32 0.0, %v7050
        %7052 = vmatmul.bf16.gmra.mxu0 %v6869
        %v7053 = vpop.f32.mrf.mxu0
        %v7054 = vadd.f32 0.0, %v7053
        %v7055 = vpop.f32.mrf.mxu0
        %7056 = vdwg.mxu0
        %7057 = vmatpush.bf16.msra.mxu0 0
        %7058 = vmatpush.bf16.msra.mxu0 0
        %7059 = vmatpush.bf16.msra.mxu0 0
        %7060 = vmatpush.bf16.msra.mxu0 0
        %7061 = vmatpush.bf16.msra.mxu0 0
        %7062 = vmatpush.bf16.msra.mxu0 0
        %7063 = vmatpush.bf16.msra.mxu0 0
        %7064 = vmatpush.bf16.msra.mxu0 %v6890
        %7065 = vmatmul.bf16.gmra.mxu0 %v6863
        %v7066 = vpop.f32.mrf.mxu0
        %v7067 = vadd.f32 0.0, %v7066
        %v7068 = vpop.f32.mrf.mxu0
        %v7069 = vadd.f32 0.0, %v7068
        %7070 = vmatmul.bf16.gmra.mxu0 %v6866
        %v7071 = vpop.f32.mrf.mxu0
        %v7072 = vadd.f32 0.0, %v7071
        %v7073 = vpop.f32.mrf.mxu0
        %v7074 = vadd.f32 0.0, %v7073
        %7075 = vmatmul.bf16.gmra.mxu0 %v6869
        %v7076 = vpop.f32.mrf.mxu0
        %v7077 = vadd.f32 0.0, %v7076
        %v7078 = vpop.f32.mrf.mxu0
        %7079 = vdwg.mxu0
        %7080 = vmatpush.bf16.msra.mxu0 0
        %7081 = vmatpush.bf16.msra.mxu0 0
        %7082 = vmatpush.bf16.msra.mxu0 0
        %7083 = vmatpush.bf16.msra.mxu0 0
        %7084 = vmatpush.bf16.msra.mxu0 0
        %7085 = vmatpush.bf16.msra.mxu0 0
        %7086 = vmatpush.bf16.msra.mxu0 0
        %7087 = vmatpush.bf16.msra.mxu0 %v6893
        %7088 = vmatmul.bf16.gmra.mxu0 %v6863
        %v7089 = vpop.f32.mrf.mxu0
        %v7090 = vadd.f32 0.0, %v7089
        %v7091 = vpop.f32.mrf.mxu0
        %v7092 = vadd.f32 0.0, %v7091
        %7093 = vmatmul.bf16.gmra.mxu0 %v6866
        %v7094 = vpop.f32.mrf.mxu0
        %v7095 = vadd.f32 0.0, %v7094
        %v7096 = vpop.f32.mrf.mxu0
        %v7097 = vadd.f32 0.0, %v7096
        %7098 = vmatmul.bf16.gmra.mxu0 %v6869
        %v7099 = vpop.f32.mrf.mxu0
        %v7100 = vadd.f32 0.0, %v7099
        %v7101 = vpop.f32.mrf.mxu0
        %7102 = vdwg.mxu0
        %7103 = vmatpush.bf16.msra.mxu0 0
        %7104 = vmatpush.bf16.msra.mxu0 0
        %7105 = vmatpush.bf16.msra.mxu0 0
        %7106 = vmatpush.bf16.msra.mxu0 0
        %7107 = vmatpush.bf16.msra.mxu0 0
        %7108 = vmatpush.bf16.msra.mxu0 0
        %7109 = vmatpush.bf16.msra.mxu0 0
        %7110 = vmatpush.bf16.msra.mxu0 %v6896
        %7111 = vmatmul.bf16.gmra.mxu0 %v6863
        %v7112 = vpop.f32.mrf.mxu0
        %v7113 = vadd.f32 0.0, %v7112
        %v7114 = vpop.f32.mrf.mxu0
        %v7115 = vadd.f32 0.0, %v7114
        %7116 = vmatmul.bf16.gmra.mxu0 %v6866
        %v7117 = vpop.f32.mrf.mxu0
        %v7118 = vadd.f32 0.0, %v7117
        %v7119 = vpop.f32.mrf.mxu0
        %v7120 = vadd.f32 0.0, %v7119
        %7121 = vmatmul.bf16.gmra.mxu0 %v6869
        %v7122 = vpop.f32.mrf.mxu0
        %v7123 = vadd.f32 0.0, %v7122
        %v7124 = vpop.f32.mrf.mxu0
        %7125 = vdwg.mxu0
        %7126 = vmatpush.bf16.msra.mxu0 0
        %7127 = vmatpush.bf16.msra.mxu0 0
        %7128 = vmatpush.bf16.msra.mxu0 0
        %7129 = vmatpush.bf16.msra.mxu0 0
        %7130 = vmatpush.bf16.msra.mxu0 0
        %7131 = vmatpush.bf16.msra.mxu0 0
        %7132 = vmatpush.bf16.msra.mxu0 0
        %7133 = vmatpush.bf16.msra.mxu0 %v6899
        %7134 = vmatmul.bf16.gmra.mxu0 %v6863
        %v7135 = vpop.f32.mrf.mxu0
        %v7136 = vadd.f32 0.0, %v7135
        %v7137 = vpop.f32.mrf.mxu0
        %v7138 = vadd.f32 0.0, %v7137
        %7139 = vmatmul.bf16.gmra.mxu0 %v6866
        %v7140 = vpop.f32.mrf.mxu0
        %v7141 = vadd.f32 0.0, %v7140
        %v7142 = vpop.f32.mrf.mxu0
        %v7143 = vadd.f32 0.0, %v7142
        %7144 = vmatmul.bf16.gmra.mxu0 %v6869
        %v7145 = vpop.f32.mrf.mxu0
        %v7146 = vadd.f32 0.0, %v7145
        %v7147 = vpop.f32.mrf.mxu0
        %7148 = vdwg.mxu0
        %7149 = vmatpush.bf16.msra.mxu0 0
        %7150 = vmatpush.bf16.msra.mxu0 0
        %7151 = vmatpush.bf16.msra.mxu0 0
        %7152 = vmatpush.bf16.msra.mxu0 0
        %7153 = vmatpush.bf16.msra.mxu0 0
        %7154 = vmatpush.bf16.msra.mxu0 0
        %7155 = vmatpush.bf16.msra.mxu0 0
        %7156 = vmatpush.bf16.msra.mxu0 %v6902
        %7157 = vmatmul.bf16.gmra.mxu0 %v6863
        %v7158 = vpop.f32.mrf.mxu0
        %v7159 = vadd.f32 0.0, %v7158
        %v7160 = vpop.f32.mrf.mxu0
        %v7161 = vadd.f32 0.0, %v7160
        %7162 = vmatmul.bf16.gmra.mxu0 %v6866
        %v7163 = vpop.f32.mrf.mxu0
        %v7164 = vadd.f32 0.0, %v7163
        %v7165 = vpop.f32.mrf.mxu0
        %v7166 = vadd.f32 0.0, %v7165
        %7167 = vmatmul.bf16.gmra.mxu0 %v6869
        %v7168 = vpop.f32.mrf.mxu0
        %v7169 = vadd.f32 0.0, %v7168
        %v7170 = vpop.f32.mrf.mxu0
        %7171 = vdwg.mxu0
        %7172 = vmatpush.bf16.msra.mxu0 0
        %7173 = vmatpush.bf16.msra.mxu0 0
        %7174 = vmatpush.bf16.msra.mxu0 0
        %7175 = vmatpush.bf16.msra.mxu0 0
        %7176 = vmatpush.bf16.msra.mxu0 0
        %7177 = vmatpush.bf16.msra.mxu0 0
        %7178 = vmatpush.bf16.msra.mxu0 0
        %7179 = vmatpush.bf16.msra.mxu0 %v6905
        %7180 = vmatmul.bf16.gmra.mxu0 %v6863
        %v7181 = vpop.f32.mrf.mxu0
        %v7182 = vadd.f32 0.0, %v7181
        %v7183 = vpop.f32.mrf.mxu0
        %v7184 = vadd.f32 0.0, %v7183
        %7185 = vmatmul.bf16.gmra.mxu0 %v6866
        %v7186 = vpop.f32.mrf.mxu0
        %v7187 = vadd.f32 0.0, %v7186
        %v7188 = vpop.f32.mrf.mxu0
        %v7189 = vadd.f32 0.0, %v7188
        %7190 = vmatmul.bf16.gmra.mxu0 %v6869
        %v7191 = vpop.f32.mrf.mxu0
        %v7192 = vadd.f32 0.0, %v7191
        %v7193 = vpop.f32.mrf.mxu0
        %7194 = vdwg.mxu0
        %7195 = vmatpush.bf16.msra.mxu0 0
        %7196 = vmatpush.bf16.msra.mxu0 0
        %7197 = vmatpush.bf16.msra.mxu0 0
        %7198 = vmatpush.bf16.msra.mxu0 0
        %7199 = vmatpush.bf16.msra.mxu0 0
        %7200 = vmatpush.bf16.msra.mxu0 0
        %7201 = vmatpush.bf16.msra.mxu0 0
        %7202 = vmatpush.bf16.msra.mxu0 %v6908
        %7203 = vmatmul.bf16.gmra.mxu0 %v6863
        %v7204 = vpop.f32.mrf.mxu0
        %v7205 = vadd.f32 0.0, %v7204
        %v7206 = vpop.f32.mrf.mxu0
        %v7207 = vadd.f32 0.0, %v7206
        %7208 = vmatmul.bf16.gmra.mxu0 %v6866
        %v7209 = vpop.f32.mrf.mxu0
        %v7210 = vadd.f32 0.0, %v7209
        %v7211 = vpop.f32.mrf.mxu0
        %v7212 = vadd.f32 0.0, %v7211
        %7213 = vmatmul.bf16.gmra.mxu0 %v6869
        %v7214 = vpop.f32.mrf.mxu0
        %v7215 = vadd.f32 0.0, %v7214
        %v7216 = vpop.f32.mrf.mxu0
        %7217 = vdwg.mxu0
        %7218 = vmatpush.bf16.msra.mxu0 0
        %7219 = vmatpush.bf16.msra.mxu0 0
        %7220 = vmatpush.bf16.msra.mxu0 0
        %7221 = vmatpush.bf16.msra.mxu0 0
        %7222 = vmatpush.bf16.msra.mxu0 0
        %7223 = vmatpush.bf16.msra.mxu0 0
        %7224 = vmatpush.bf16.msra.mxu0 0
        %7225 = vmatpush.bf16.msra.mxu0 %v6911
        %7226 = vmatmul.bf16.gmra.mxu0 %v6863
        %v7227 = vpop.f32.mrf.mxu0
        %v7228 = vadd.f32 0.0, %v7227
        %v7229 = vpop.f32.mrf.mxu0
        %v7230 = vadd.f32 0.0, %v7229
        %7231 = vmatmul.bf16.gmra.mxu0 %v6866
        %v7232 = vpop.f32.mrf.mxu0
        %v7233 = vadd.f32 0.0, %v7232
        %v7234 = vpop.f32.mrf.mxu0
        %v7235 = vadd.f32 0.0, %v7234
        %7236 = vmatmul.bf16.gmra.mxu0 %v6869
        %v7237 = vpop.f32.mrf.mxu0
        %v7238 = vadd.f32 0.0, %v7237
        %v7239 = vpop.f32.mrf.mxu0
        %7240 = vdwg.mxu0
        %7241 = vmatpush.bf16.msra.mxu0 0
        %7242 = vmatpush.bf16.msra.mxu0 0
        %7243 = vmatpush.bf16.msra.mxu0 0
        %7244 = vmatpush.bf16.msra.mxu0 0
        %7245 = vmatpush.bf16.msra.mxu0 0
        %7246 = vmatpush.bf16.msra.mxu0 0
        %7247 = vmatpush.bf16.msra.mxu0 0
        %7248 = vmatpush.bf16.msra.mxu0 %v6914
        %7249 = vmatmul.bf16.gmra.mxu0 %v6863
        %v7250 = vpop.f32.mrf.mxu0
        %v7251 = vadd.f32 0.0, %v7250
        %v7252 = vpop.f32.mrf.mxu0
        %v7253 = vadd.f32 0.0, %v7252
        %7254 = vmatmul.bf16.gmra.mxu0 %v6866
        %v7255 = vpop.f32.mrf.mxu0
        %v7256 = vadd.f32 0.0, %v7255
        %v7257 = vpop.f32.mrf.mxu0
        %v7258 = vadd.f32 0.0, %v7257
        %7259 = vmatmul.bf16.gmra.mxu0 %v6869
        %v7260 = vpop.f32.mrf.mxu0
        %v7261 = vadd.f32 0.0, %v7260
        %v7262 = vpop.f32.mrf.mxu0
        %7263 = vdwg.mxu0
        %7264 = vmatpush.bf16.msra.mxu0 0
        %7265 = vmatpush.bf16.msra.mxu0 0
        %7266 = vmatpush.bf16.msra.mxu0 0
        %7267 = vmatpush.bf16.msra.mxu0 0
        %7268 = vmatpush.bf16.msra.mxu0 0
        %7269 = vmatpush.bf16.msra.mxu0 0
        %7270 = vmatpush.bf16.msra.mxu0 0
        %7271 = vmatpush.bf16.msra.mxu0 %v6917
        %7272 = vmatmul.bf16.gmra.mxu0 %v6863
        %v7273 = vpop.f32.mrf.mxu0
        %v7274 = vadd.f32 0.0, %v7273
        %v7275 = vpop.f32.mrf.mxu0
        %v7276 = vadd.f32 0.0, %v7275
        %7277 = vmatmul.bf16.gmra.mxu0 %v6866
        %v7278 = vpop.f32.mrf.mxu0
        %v7279 = vadd.f32 0.0, %v7278
        %v7280 = vpop.f32.mrf.mxu0
        %v7281 = vadd.f32 0.0, %v7280
        %7282 = vmatmul.bf16.gmra.mxu0 %v6869
        %v7283 = vpop.f32.mrf.mxu0
        %v7284 = vadd.f32 0.0, %v7283
        %v7285 = vpop.f32.mrf.mxu0
        %7286 = vdwg.mxu0
        %v7287 = vmul.f32 %v6486, %v6929
        %v7288 = vmul.f32 %v6509, %v6952
        %v7289 = vmul.f32 %v6532, %v6975
        %v7290 = vmul.f32 %v6555, %v6998
        %v7291 = vmul.f32 %v6578, %v7021
        %v7292 = vmul.f32 %v6601, %v7044
        %v7293 = vmul.f32 %v6624, %v7067
        %v7294 = vmul.f32 %v6647, %v7090
        %v7295 = vmul.f32 %v6670, %v7113
        %v7296 = vmul.f32 %v6693, %v7136
        %v7297 = vmul.f32 %v6716, %v7159
        %v7298 = vmul.f32 %v6739, %v7182
        %v7299 = vmul.f32 %v6762, %v7205
        %v7300 = vmul.f32 %v6785, %v7228
        %v7301 = vmul.f32 %v6808, %v7251
        %v7302 = vmul.f32 %v6831, %v7274
        %v7303 = vmul.f32 %v6488, %v6931
        %v7304 = vmul.f32 %v6511, %v6954
        %v7305 = vmul.f32 %v6534, %v6977
        %v7306 = vmul.f32 %v6557, %v7000
        %v7307 = vmul.f32 %v6580, %v7023
        %v7308 = vmul.f32 %v6603, %v7046
        %v7309 = vmul.f32 %v6626, %v7069
        %v7310 = vmul.f32 %v6649, %v7092
        %v7311 = vmul.f32 %v6672, %v7115
        %v7312 = vmul.f32 %v6695, %v7138
        %v7313 = vmul.f32 %v6718, %v7161
        %v7314 = vmul.f32 %v6741, %v7184
        %v7315 = vmul.f32 %v6764, %v7207
        %v7316 = vmul.f32 %v6787, %v7230
        %v7317 = vmul.f32 %v6810, %v7253
        %v7318 = vmul.f32 %v6833, %v7276
        %v7319 = vmul.f32 %v6491, %v6934
        %v7320 = vmul.f32 %v6514, %v6957
        %v7321 = vmul.f32 %v6537, %v6980
        %v7322 = vmul.f32 %v6560, %v7003
        %v7323 = vmul.f32 %v6583, %v7026
        %v7324 = vmul.f32 %v6606, %v7049
        %v7325 = vmul.f32 %v6629, %v7072
        %v7326 = vmul.f32 %v6652, %v7095
        %v7327 = vmul.f32 %v6675, %v7118
        %v7328 = vmul.f32 %v6698, %v7141
        %v7329 = vmul.f32 %v6721, %v7164
        %v7330 = vmul.f32 %v6744, %v7187
        %v7331 = vmul.f32 %v6767, %v7210
        %v7332 = vmul.f32 %v6790, %v7233
        %v7333 = vmul.f32 %v6813, %v7256
        %v7334 = vmul.f32 %v6836, %v7279
        %v7335 = vmul.f32 %v6493, %v6936
        %v7336 = vmul.f32 %v6516, %v6959
        %v7337 = vmul.f32 %v6539, %v6982
        %v7338 = vmul.f32 %v6562, %v7005
        %v7339 = vmul.f32 %v6585, %v7028
        %v7340 = vmul.f32 %v6608, %v7051
        %v7341 = vmul.f32 %v6631, %v7074
        %v7342 = vmul.f32 %v6654, %v7097
        %v7343 = vmul.f32 %v6677, %v7120
        %v7344 = vmul.f32 %v6700, %v7143
        %v7345 = vmul.f32 %v6723, %v7166
        %v7346 = vmul.f32 %v6746, %v7189
        %v7347 = vmul.f32 %v6769, %v7212
        %v7348 = vmul.f32 %v6792, %v7235
        %v7349 = vmul.f32 %v6815, %v7258
        %v7350 = vmul.f32 %v6838, %v7281
        %v7351 = vmul.f32 %v6496, %v6939
        %v7352 = vmul.f32 %v6519, %v6962
        %v7353 = vmul.f32 %v6542, %v6985
        %v7354 = vmul.f32 %v6565, %v7008
        %v7355 = vmul.f32 %v6588, %v7031
        %v7356 = vmul.f32 %v6611, %v7054
        %v7357 = vmul.f32 %v6634, %v7077
        %v7358 = vmul.f32 %v6657, %v7100
        %v7359 = vmul.f32 %v6680, %v7123
        %v7360 = vmul.f32 %v6703, %v7146
        %v7361 = vmul.f32 %v6726, %v7169
        %v7362 = vmul.f32 %v6749, %v7192
        %v7363 = vmul.f32 %v6772, %v7215
        %v7364 = vmul.f32 %v6795, %v7238
        %v7365 = vmul.f32 %v6818, %v7261
        %v7366 = vmul.f32 %v6841, %v7284
        %v7367 = vpack.c.bf16 %v7303, %v7287
        %v7368 = vpack.c.bf16 %v7304, %v7288
        %v7369 = vpack.c.bf16 %v7305, %v7289
        %v7370 = vpack.c.bf16 %v7306, %v7290
        %v7371 = vpack.c.bf16 %v7307, %v7291
        %v7372 = vpack.c.bf16 %v7308, %v7292
        %v7373 = vpack.c.bf16 %v7309, %v7293
        %v7374 = vpack.c.bf16 %v7310, %v7294
        %v7375 = vpack.c.bf16 %v7311, %v7295
        %v7376 = vpack.c.bf16 %v7312, %v7296
        %v7377 = vpack.c.bf16 %v7313, %v7297
        %v7378 = vpack.c.bf16 %v7314, %v7298
        %v7379 = vpack.c.bf16 %v7315, %v7299
        %v7380 = vpack.c.bf16 %v7316, %v7300
        %v7381 = vpack.c.bf16 %v7317, %v7301
        %v7382 = vpack.c.bf16 %v7318, %v7302
        %v7383 = vpack.c.bf16 %v7335, %v7319
        %v7384 = vpack.c.bf16 %v7336, %v7320
        %v7385 = vpack.c.bf16 %v7337, %v7321
        %v7386 = vpack.c.bf16 %v7338, %v7322
        %v7387 = vpack.c.bf16 %v7339, %v7323
        %v7388 = vpack.c.bf16 %v7340, %v7324
        %v7389 = vpack.c.bf16 %v7341, %v7325
        %v7390 = vpack.c.bf16 %v7342, %v7326
        %v7391 = vpack.c.bf16 %v7343, %v7327
        %v7392 = vpack.c.bf16 %v7344, %v7328
        %v7393 = vpack.c.bf16 %v7345, %v7329
        %v7394 = vpack.c.bf16 %v7346, %v7330
        %v7395 = vpack.c.bf16 %v7347, %v7331
        %v7396 = vpack.c.bf16 %v7348, %v7332
        %v7397 = vpack.c.bf16 %v7349, %v7333
        %v7398 = vpack.c.bf16 %v7350, %v7334
        %v7399 = vpack.c.bf16 %v7351, %v7351
        %v7400 = vpack.c.bf16 %v7352, %v7352
        %v7401 = vpack.c.bf16 %v7353, %v7353
        %v7402 = vpack.c.bf16 %v7354, %v7354
        %v7403 = vpack.c.bf16 %v7355, %v7355
        %v7404 = vpack.c.bf16 %v7356, %v7356
        %v7405 = vpack.c.bf16 %v7357, %v7357
        %v7406 = vpack.c.bf16 %v7358, %v7358
        %v7407 = vpack.c.bf16 %v7359, %v7359
        %v7408 = vpack.c.bf16 %v7360, %v7360
        %v7409 = vpack.c.bf16 %v7361, %v7361
        %v7410 = vpack.c.bf16 %v7362, %v7362
        %v7411 = vpack.c.bf16 %v7363, %v7363
        %v7412 = vpack.c.bf16 %v7364, %v7364
        %v7413 = vpack.c.bf16 %v7365, %v7365
        %v7414 = vpack.c.bf16 %v7366, %v7366
        %v7415 = vld [vmem:[%s6] sm:$0xf]
        %v7416 = vld [vmem:[%s6 + $0x4] sm:$0xf]
        %v7417 = vld [vmem:[%s6 + $0x8] sm:$0xf]
        %v7418 = vld [vmem:[%s6 + $0xc] sm:$0xf]
        %v7419 = vld [vmem:[%s6 + $0x10] sm:$0xf]
        %v7420 = vld [vmem:[%s6 + $0x14] sm:$0xf]
        %v7421 = vld [vmem:[%s6 + $0x18] sm:$0xf]
        %v7422 = vld [vmem:[%s6 + $0x1c] sm:$0xf]
        %v7423 = vld [vmem:[%s6 + $0x20] sm:$0xf]
        %v7424 = vld [vmem:[%s6 + $0x24] sm:$0xf]
        %v7425 = vld [vmem:[%s6 + $0x28] sm:$0xf]
        %v7426 = vld [vmem:[%s6 + $0x2c] sm:$0xf]
        %v7439 = vunpack.c.l.b16 %v7415
        %v7440 = vunpack.c.l.b16 %v7416
        %v7441 = vunpack.c.l.b16 %v7417
        %v7442 = vunpack.c.l.b16 %v7418
        %v7443 = vunpack.c.l.b16 %v7419
        %v7444 = vunpack.c.l.b16 %v7420
        %v7445 = vunpack.c.l.b16 %v7421
        %v7446 = vunpack.c.l.b16 %v7422
        %v7447 = vunpack.c.l.b16 %v7423
        %v7448 = vunpack.c.l.b16 %v7424
        %v7449 = vunpack.c.l.b16 %v7425
        %v7450 = vunpack.c.l.b16 %v7426
        %v7451 = vpack.c.b16 %v7440, %v7439
        %v7452 = vpack.c.b16 %v7442, %v7441
        %v7453 = vpack.c.b16 %v7444, %v7443
        %v7454 = vpack.c.b16 %v7446, %v7445
        %v7455 = vpack.c.b16 %v7448, %v7447
        %v7456 = vpack.c.b16 %v7450, %v7449
        %vm7457 = vcmask 326656
        %v7459 = vsel %vm7457, %v7451, 0
        %v7462 = vsel %vm7457, %v7452, 0
        %v7465 = vsel %vm7457, %v7453, 0
        %v7468 = vsel %vm7457, %v7454, 0
        %v7471 = vsel %vm7457, %v7455, 0
        %v7474 = vsel %vm7457, %v7456, 0
        %v7477 = vsel %vm2151, %v7399, 0
        %v7480 = vsel %vm2151, %v7400, 0
        %v7483 = vsel %vm2151, %v7401, 0
        %v7486 = vsel %vm2151, %v7402, 0
        %v7489 = vsel %vm2151, %v7403, 0
        %v7492 = vsel %vm2151, %v7404, 0
        %v7495 = vsel %vm2151, %v7405, 0
        %v7498 = vsel %vm2151, %v7406, 0
        %v7501 = vsel %vm2151, %v7407, 0
        %v7504 = vsel %vm2151, %v7408, 0
        %v7507 = vsel %vm2151, %v7409, 0
        %v7510 = vsel %vm2151, %v7410, 0
        %v7513 = vsel %vm2151, %v7411, 0
        %v7516 = vsel %vm2151, %v7412, 0
        %v7519 = vsel %vm2151, %v7413, 0
        %v7522 = vsel %vm2151, %v7414, 0
        %7524 = vmatpush.bf16.msra.mxu0 0
        %7525 = vmatpush.bf16.msra.mxu0 0
        %7526 = vmatpush.bf16.msra.mxu0 0
        %7527 = vmatpush.bf16.msra.mxu0 0
        %7528 = vmatpush.bf16.msra.mxu0 0
        %7529 = vmatpush.bf16.msra.mxu0 %v7477
        %7530 = vmatpush.bf16.msra.mxu0 %v7383
        %7531 = vmatpush.bf16.msra.mxu0 %v7367
        %7532 = vmatmul.bf16.gmra.mxu0 %v7459
        %v7533 = vpop.f32.mrf.mxu0
        %v7534 = vadd.f32 0.0, %v7533
        %v7535 = vpop.f32.mrf.mxu0
        %v7536 = vadd.f32 0.0, %v7535
        %7537 = vmatmul.bf16.gmra.mxu0 %v7462
        %v7538 = vpop.f32.mrf.mxu0
        %v7539 = vadd.f32 0.0, %v7538
        %v7540 = vpop.f32.mrf.mxu0
        %v7541 = vadd.f32 0.0, %v7540
        %7542 = vmatmul.bf16.gmra.mxu0 %v7465
        %v7543 = vpop.f32.mrf.mxu0
        %v7544 = vadd.f32 0.0, %v7543
        %v7545 = vpop.f32.mrf.mxu0
        %v7546 = vadd.f32 0.0, %v7545
        %7547 = vmatmul.bf16.gmra.mxu0 %v7468
        %v7548 = vpop.f32.mrf.mxu0
        %v7549 = vadd.f32 0.0, %v7548
        %v7550 = vpop.f32.mrf.mxu0
        %v7551 = vadd.f32 0.0, %v7550
        %7552 = vmatmul.bf16.gmra.mxu0 %v7471
        %v7553 = vpop.f32.mrf.mxu0
        %v7554 = vadd.f32 0.0, %v7553
        %v7555 = vpop.f32.mrf.mxu0
        %v7556 = vadd.f32 0.0, %v7555
        %7557 = vmatmul.bf16.gmra.mxu0 %v7474
        %v7558 = vpop.f32.mrf.mxu0
        %v7559 = vadd.f32 0.0, %v7558
        %v7560 = vpop.f32.mrf.mxu0
        %v7561 = vadd.f32 0.0, %v7560
        %7562 = vdwg.mxu0
        %7563 = vmatpush.bf16.msra.mxu0 0
        %7564 = vmatpush.bf16.msra.mxu0 0
        %7565 = vmatpush.bf16.msra.mxu0 0
        %7566 = vmatpush.bf16.msra.mxu0 0
        %7567 = vmatpush.bf16.msra.mxu0 0
        %7568 = vmatpush.bf16.msra.mxu0 %v7480
        %7569 = vmatpush.bf16.msra.mxu0 %v7384
        %7570 = vmatpush.bf16.msra.mxu0 %v7368
        %7571 = vmatmul.bf16.gmra.mxu0 %v7459
        %v7572 = vpop.f32.mrf.mxu0
        %v7573 = vadd.f32 0.0, %v7572
        %v7574 = vpop.f32.mrf.mxu0
        %v7575 = vadd.f32 0.0, %v7574
        %7576 = vmatmul.bf16.gmra.mxu0 %v7462
        %v7577 = vpop.f32.mrf.mxu0
        %v7578 = vadd.f32 0.0, %v7577
        %v7579 = vpop.f32.mrf.mxu0
        %v7580 = vadd.f32 0.0, %v7579
        %7581 = vmatmul.bf16.gmra.mxu0 %v7465
        %v7582 = vpop.f32.mrf.mxu0
        %v7583 = vadd.f32 0.0, %v7582
        %v7584 = vpop.f32.mrf.mxu0
        %v7585 = vadd.f32 0.0, %v7584
        %7586 = vmatmul.bf16.gmra.mxu0 %v7468
        %v7587 = vpop.f32.mrf.mxu0
        %v7588 = vadd.f32 0.0, %v7587
        %v7589 = vpop.f32.mrf.mxu0
        %v7590 = vadd.f32 0.0, %v7589
        %7591 = vmatmul.bf16.gmra.mxu0 %v7471
        %v7592 = vpop.f32.mrf.mxu0
        %v7593 = vadd.f32 0.0, %v7592
        %v7594 = vpop.f32.mrf.mxu0
        %v7595 = vadd.f32 0.0, %v7594
        %7596 = vmatmul.bf16.gmra.mxu0 %v7474
        %v7597 = vpop.f32.mrf.mxu0
        %v7598 = vadd.f32 0.0, %v7597
        %v7599 = vpop.f32.mrf.mxu0
        %v7600 = vadd.f32 0.0, %v7599
        %7601 = vdwg.mxu0
        %7602 = vmatpush.bf16.msra.mxu0 0
        %7603 = vmatpush.bf16.msra.mxu0 0
        %7604 = vmatpush.bf16.msra.mxu0 0
        %7605 = vmatpush.bf16.msra.mxu0 0
        %7606 = vmatpush.bf16.msra.mxu0 0
        %7607 = vmatpush.bf16.msra.mxu0 %v7483
        %7608 = vmatpush.bf16.msra.mxu0 %v7385
        %7609 = vmatpush.bf16.msra.mxu0 %v7369
        %7610 = vmatmul.bf16.gmra.mxu0 %v7459
        %v7611 = vpop.f32.mrf.mxu0
        %v7612 = vadd.f32 0.0, %v7611
        %v7613 = vpop.f32.mrf.mxu0
        %v7614 = vadd.f32 0.0, %v7613
        %7615 = vmatmul.bf16.gmra.mxu0 %v7462
        %v7616 = vpop.f32.mrf.mxu0
        %v7617 = vadd.f32 0.0, %v7616
        %v7618 = vpop.f32.mrf.mxu0
        %v7619 = vadd.f32 0.0, %v7618
        %7620 = vmatmul.bf16.gmra.mxu0 %v7465
        %v7621 = vpop.f32.mrf.mxu0
        %v7622 = vadd.f32 0.0, %v7621
        %v7623 = vpop.f32.mrf.mxu0
        %v7624 = vadd.f32 0.0, %v7623
        %7625 = vmatmul.bf16.gmra.mxu0 %v7468
        %v7626 = vpop.f32.mrf.mxu0
        %v7627 = vadd.f32 0.0, %v7626
        %v7628 = vpop.f32.mrf.mxu0
        %v7629 = vadd.f32 0.0, %v7628
        %7630 = vmatmul.bf16.gmra.mxu0 %v7471
        %v7631 = vpop.f32.mrf.mxu0
        %v7632 = vadd.f32 0.0, %v7631
        %v7633 = vpop.f32.mrf.mxu0
        %v7634 = vadd.f32 0.0, %v7633
        %7635 = vmatmul.bf16.gmra.mxu0 %v7474
        %v7636 = vpop.f32.mrf.mxu0
        %v7637 = vadd.f32 0.0, %v7636
        %v7638 = vpop.f32.mrf.mxu0
        %v7639 = vadd.f32 0.0, %v7638
        %7640 = vdwg.mxu0
        %7641 = vmatpush.bf16.msra.mxu0 0
        %7642 = vmatpush.bf16.msra.mxu0 0
        %7643 = vmatpush.bf16.msra.mxu0 0
        %7644 = vmatpush.bf16.msra.mxu0 0
        %7645 = vmatpush.bf16.msra.mxu0 0
        %7646 = vmatpush.bf16.msra.mxu0 %v7486
        %7647 = vmatpush.bf16.msra.mxu0 %v7386
        %7648 = vmatpush.bf16.msra.mxu0 %v7370
        %7649 = vmatmul.bf16.gmra.mxu0 %v7459
        %v7650 = vpop.f32.mrf.mxu0
        %v7651 = vadd.f32 0.0, %v7650
        %v7652 = vpop.f32.mrf.mxu0
        %v7653 = vadd.f32 0.0, %v7652
        %7654 = vmatmul.bf16.gmra.mxu0 %v7462
        %v7655 = vpop.f32.mrf.mxu0
        %v7656 = vadd.f32 0.0, %v7655
        %v7657 = vpop.f32.mrf.mxu0
        %v7658 = vadd.f32 0.0, %v7657
        %7659 = vmatmul.bf16.gmra.mxu0 %v7465
        %v7660 = vpop.f32.mrf.mxu0
        %v7661 = vadd.f32 0.0, %v7660
        %v7662 = vpop.f32.mrf.mxu0
        %v7663 = vadd.f32 0.0, %v7662
        %7664 = vmatmul.bf16.gmra.mxu0 %v7468
        %v7665 = vpop.f32.mrf.mxu0
        %v7666 = vadd.f32 0.0, %v7665
        %v7667 = vpop.f32.mrf.mxu0
        %v7668 = vadd.f32 0.0, %v7667
        %7669 = vmatmul.bf16.gmra.mxu0 %v7471
        %v7670 = vpop.f32.mrf.mxu0
        %v7671 = vadd.f32 0.0, %v7670
        %v7672 = vpop.f32.mrf.mxu0
        %v7673 = vadd.f32 0.0, %v7672
        %7674 = vmatmul.bf16.gmra.mxu0 %v7474
        %v7675 = vpop.f32.mrf.mxu0
        %v7676 = vadd.f32 0.0, %v7675
        %v7677 = vpop.f32.mrf.mxu0
        %v7678 = vadd.f32 0.0, %v7677
        %7679 = vdwg.mxu0
        %7680 = vmatpush.bf16.msra.mxu0 0
        %7681 = vmatpush.bf16.msra.mxu0 0
        %7682 = vmatpush.bf16.msra.mxu0 0
        %7683 = vmatpush.bf16.msra.mxu0 0
        %7684 = vmatpush.bf16.msra.mxu0 0
        %7685 = vmatpush.bf16.msra.mxu0 %v7489
        %7686 = vmatpush.bf16.msra.mxu0 %v7387
        %7687 = vmatpush.bf16.msra.mxu0 %v7371
        %7688 = vmatmul.bf16.gmra.mxu0 %v7459
        %v7689 = vpop.f32.mrf.mxu0
        %v7690 = vadd.f32 0.0, %v7689
        %v7691 = vpop.f32.mrf.mxu0
        %v7692 = vadd.f32 0.0, %v7691
        %7693 = vmatmul.bf16.gmra.mxu0 %v7462
        %v7694 = vpop.f32.mrf.mxu0
        %v7695 = vadd.f32 0.0, %v7694
        %v7696 = vpop.f32.mrf.mxu0
        %v7697 = vadd.f32 0.0, %v7696
        %7698 = vmatmul.bf16.gmra.mxu0 %v7465
        %v7699 = vpop.f32.mrf.mxu0
        %v7700 = vadd.f32 0.0, %v7699
        %v7701 = vpop.f32.mrf.mxu0
        %v7702 = vadd.f32 0.0, %v7701
        %7703 = vmatmul.bf16.gmra.mxu0 %v7468
        %v7704 = vpop.f32.mrf.mxu0
        %v7705 = vadd.f32 0.0, %v7704
        %v7706 = vpop.f32.mrf.mxu0
        %v7707 = vadd.f32 0.0, %v7706
        %7708 = vmatmul.bf16.gmra.mxu0 %v7471
        %v7709 = vpop.f32.mrf.mxu0
        %v7710 = vadd.f32 0.0, %v7709
        %v7711 = vpop.f32.mrf.mxu0
        %v7712 = vadd.f32 0.0, %v7711
        %7713 = vmatmul.bf16.gmra.mxu0 %v7474
        %v7714 = vpop.f32.mrf.mxu0
        %v7715 = vadd.f32 0.0, %v7714
        %v7716 = vpop.f32.mrf.mxu0
        %v7717 = vadd.f32 0.0, %v7716
        %7718 = vdwg.mxu0
        %7719 = vmatpush.bf16.msra.mxu0 0
        %7720 = vmatpush.bf16.msra.mxu0 0
        %7721 = vmatpush.bf16.msra.mxu0 0
        %7722 = vmatpush.bf16.msra.mxu0 0
        %7723 = vmatpush.bf16.msra.mxu0 0
        %7724 = vmatpush.bf16.msra.mxu0 %v7492
        %7725 = vmatpush.bf16.msra.mxu0 %v7388
        %7726 = vmatpush.bf16.msra.mxu0 %v7372
        %7727 = vmatmul.bf16.gmra.mxu0 %v7459
        %v7728 = vpop.f32.mrf.mxu0
        %v7729 = vadd.f32 0.0, %v7728
        %v7730 = vpop.f32.mrf.mxu0
        %v7731 = vadd.f32 0.0, %v7730
        %7732 = vmatmul.bf16.gmra.mxu0 %v7462
        %v7733 = vpop.f32.mrf.mxu0
        %v7734 = vadd.f32 0.0, %v7733
        %v7735 = vpop.f32.mrf.mxu0
        %v7736 = vadd.f32 0.0, %v7735
        %7737 = vmatmul.bf16.gmra.mxu0 %v7465
        %v7738 = vpop.f32.mrf.mxu0
        %v7739 = vadd.f32 0.0, %v7738
        %v7740 = vpop.f32.mrf.mxu0
        %v7741 = vadd.f32 0.0, %v7740
        %7742 = vmatmul.bf16.gmra.mxu0 %v7468
        %v7743 = vpop.f32.mrf.mxu0
        %v7744 = vadd.f32 0.0, %v7743
        %v7745 = vpop.f32.mrf.mxu0
        %v7746 = vadd.f32 0.0, %v7745
        %7747 = vmatmul.bf16.gmra.mxu0 %v7471
        %v7748 = vpop.f32.mrf.mxu0
        %v7749 = vadd.f32 0.0, %v7748
        %v7750 = vpop.f32.mrf.mxu0
        %v7751 = vadd.f32 0.0, %v7750
        %7752 = vmatmul.bf16.gmra.mxu0 %v7474
        %v7753 = vpop.f32.mrf.mxu0
        %v7754 = vadd.f32 0.0, %v7753
        %v7755 = vpop.f32.mrf.mxu0
        %v7756 = vadd.f32 0.0, %v7755
        %7757 = vdwg.mxu0
        %7758 = vmatpush.bf16.msra.mxu0 0
        %7759 = vmatpush.bf16.msra.mxu0 0
        %7760 = vmatpush.bf16.msra.mxu0 0
        %7761 = vmatpush.bf16.msra.mxu0 0
        %7762 = vmatpush.bf16.msra.mxu0 0
        %7763 = vmatpush.bf16.msra.mxu0 %v7495
        %7764 = vmatpush.bf16.msra.mxu0 %v7389
        %7765 = vmatpush.bf16.msra.mxu0 %v7373
        %7766 = vmatmul.bf16.gmra.mxu0 %v7459
        %v7767 = vpop.f32.mrf.mxu0
        %v7768 = vadd.f32 0.0, %v7767
        %v7769 = vpop.f32.mrf.mxu0
        %v7770 = vadd.f32 0.0, %v7769
        %7771 = vmatmul.bf16.gmra.mxu0 %v7462
        %v7772 = vpop.f32.mrf.mxu0
        %v7773 = vadd.f32 0.0, %v7772
        %v7774 = vpop.f32.mrf.mxu0
        %v7775 = vadd.f32 0.0, %v7774
        %7776 = vmatmul.bf16.gmra.mxu0 %v7465
        %v7777 = vpop.f32.mrf.mxu0
        %v7778 = vadd.f32 0.0, %v7777
        %v7779 = vpop.f32.mrf.mxu0
        %v7780 = vadd.f32 0.0, %v7779
        %7781 = vmatmul.bf16.gmra.mxu0 %v7468
        %v7782 = vpop.f32.mrf.mxu0
        %v7783 = vadd.f32 0.0, %v7782
        %v7784 = vpop.f32.mrf.mxu0
        %v7785 = vadd.f32 0.0, %v7784
        %7786 = vmatmul.bf16.gmra.mxu0 %v7471
        %v7787 = vpop.f32.mrf.mxu0
        %v7788 = vadd.f32 0.0, %v7787
        %v7789 = vpop.f32.mrf.mxu0
        %v7790 = vadd.f32 0.0, %v7789
        %7791 = vmatmul.bf16.gmra.mxu0 %v7474
        %v7792 = vpop.f32.mrf.mxu0
        %v7793 = vadd.f32 0.0, %v7792
        %v7794 = vpop.f32.mrf.mxu0
        %v7795 = vadd.f32 0.0, %v7794
        %7796 = vdwg.mxu0
        %7797 = vmatpush.bf16.msra.mxu0 0
        %7798 = vmatpush.bf16.msra.mxu0 0
        %7799 = vmatpush.bf16.msra.mxu0 0
        %7800 = vmatpush.bf16.msra.mxu0 0
        %7801 = vmatpush.bf16.msra.mxu0 0
        %7802 = vmatpush.bf16.msra.mxu0 %v7498
        %7803 = vmatpush.bf16.msra.mxu0 %v7390
        %7804 = vmatpush.bf16.msra.mxu0 %v7374
        %7805 = vmatmul.bf16.gmra.mxu0 %v7459
        %v7806 = vpop.f32.mrf.mxu0
        %v7807 = vadd.f32 0.0, %v7806
        %v7808 = vpop.f32.mrf.mxu0
        %v7809 = vadd.f32 0.0, %v7808
        %7810 = vmatmul.bf16.gmra.mxu0 %v7462
        %v7811 = vpop.f32.mrf.mxu0
        %v7812 = vadd.f32 0.0, %v7811
        %v7813 = vpop.f32.mrf.mxu0
        %v7814 = vadd.f32 0.0, %v7813
        %7815 = vmatmul.bf16.gmra.mxu0 %v7465
        %v7816 = vpop.f32.mrf.mxu0
        %v7817 = vadd.f32 0.0, %v7816
        %v7818 = vpop.f32.mrf.mxu0
        %v7819 = vadd.f32 0.0, %v7818
        %7820 = vmatmul.bf16.gmra.mxu0 %v7468
        %v7821 = vpop.f32.mrf.mxu0
        %v7822 = vadd.f32 0.0, %v7821
        %v7823 = vpop.f32.mrf.mxu0
        %v7824 = vadd.f32 0.0, %v7823
        %7825 = vmatmul.bf16.gmra.mxu0 %v7471
        %v7826 = vpop.f32.mrf.mxu0
        %v7827 = vadd.f32 0.0, %v7826
        %v7828 = vpop.f32.mrf.mxu0
        %v7829 = vadd.f32 0.0, %v7828
        %7830 = vmatmul.bf16.gmra.mxu0 %v7474
        %v7831 = vpop.f32.mrf.mxu0
        %v7832 = vadd.f32 0.0, %v7831
        %v7833 = vpop.f32.mrf.mxu0
        %v7834 = vadd.f32 0.0, %v7833
        %7835 = vdwg.mxu0
        %7836 = vmatpush.bf16.msra.mxu0 0
        %7837 = vmatpush.bf16.msra.mxu0 0
        %7838 = vmatpush.bf16.msra.mxu0 0
        %7839 = vmatpush.bf16.msra.mxu0 0
        %7840 = vmatpush.bf16.msra.mxu0 0
        %7841 = vmatpush.bf16.msra.mxu0 %v7501
        %7842 = vmatpush.bf16.msra.mxu0 %v7391
        %7843 = vmatpush.bf16.msra.mxu0 %v7375
        %7844 = vmatmul.bf16.gmra.mxu0 %v7459
        %v7845 = vpop.f32.mrf.mxu0
        %v7846 = vadd.f32 0.0, %v7845
        %v7847 = vpop.f32.mrf.mxu0
        %v7848 = vadd.f32 0.0, %v7847
        %7849 = vmatmul.bf16.gmra.mxu0 %v7462
        %v7850 = vpop.f32.mrf.mxu0
        %v7851 = vadd.f32 0.0, %v7850
        %v7852 = vpop.f32.mrf.mxu0
        %v7853 = vadd.f32 0.0, %v7852
        %7854 = vmatmul.bf16.gmra.mxu0 %v7465
        %v7855 = vpop.f32.mrf.mxu0
        %v7856 = vadd.f32 0.0, %v7855
        %v7857 = vpop.f32.mrf.mxu0
        %v7858 = vadd.f32 0.0, %v7857
        %7859 = vmatmul.bf16.gmra.mxu0 %v7468
        %v7860 = vpop.f32.mrf.mxu0
        %v7861 = vadd.f32 0.0, %v7860
        %v7862 = vpop.f32.mrf.mxu0
        %v7863 = vadd.f32 0.0, %v7862
        %7864 = vmatmul.bf16.gmra.mxu0 %v7471
        %v7865 = vpop.f32.mrf.mxu0
        %v7866 = vadd.f32 0.0, %v7865
        %v7867 = vpop.f32.mrf.mxu0
        %v7868 = vadd.f32 0.0, %v7867
        %7869 = vmatmul.bf16.gmra.mxu0 %v7474
        %v7870 = vpop.f32.mrf.mxu0
        %v7871 = vadd.f32 0.0, %v7870
        %v7872 = vpop.f32.mrf.mxu0
        %v7873 = vadd.f32 0.0, %v7872
        %7874 = vdwg.mxu0
        %7875 = vmatpush.bf16.msra.mxu0 0
        %7876 = vmatpush.bf16.msra.mxu0 0
        %7877 = vmatpush.bf16.msra.mxu0 0
        %7878 = vmatpush.bf16.msra.mxu0 0
        %7879 = vmatpush.bf16.msra.mxu0 0
        %7880 = vmatpush.bf16.msra.mxu0 %v7504
        %7881 = vmatpush.bf16.msra.mxu0 %v7392
        %7882 = vmatpush.bf16.msra.mxu0 %v7376
        %7883 = vmatmul.bf16.gmra.mxu0 %v7459
        %v7884 = vpop.f32.mrf.mxu0
        %v7885 = vadd.f32 0.0, %v7884
        %v7886 = vpop.f32.mrf.mxu0
        %v7887 = vadd.f32 0.0, %v7886
        %7888 = vmatmul.bf16.gmra.mxu0 %v7462
        %v7889 = vpop.f32.mrf.mxu0
        %v7890 = vadd.f32 0.0, %v7889
        %v7891 = vpop.f32.mrf.mxu0
        %v7892 = vadd.f32 0.0, %v7891
        %7893 = vmatmul.bf16.gmra.mxu0 %v7465
        %v7894 = vpop.f32.mrf.mxu0
        %v7895 = vadd.f32 0.0, %v7894
        %v7896 = vpop.f32.mrf.mxu0
        %v7897 = vadd.f32 0.0, %v7896
        %7898 = vmatmul.bf16.gmra.mxu0 %v7468
        %v7899 = vpop.f32.mrf.mxu0
        %v7900 = vadd.f32 0.0, %v7899
        %v7901 = vpop.f32.mrf.mxu0
        %v7902 = vadd.f32 0.0, %v7901
        %7903 = vmatmul.bf16.gmra.mxu0 %v7471
        %v7904 = vpop.f32.mrf.mxu0
        %v7905 = vadd.f32 0.0, %v7904
        %v7906 = vpop.f32.mrf.mxu0
        %v7907 = vadd.f32 0.0, %v7906
        %7908 = vmatmul.bf16.gmra.mxu0 %v7474
        %v7909 = vpop.f32.mrf.mxu0
        %v7910 = vadd.f32 0.0, %v7909
        %v7911 = vpop.f32.mrf.mxu0
        %v7912 = vadd.f32 0.0, %v7911
        %7913 = vdwg.mxu0
        %7914 = vmatpush.bf16.msra.mxu0 0
        %7915 = vmatpush.bf16.msra.mxu0 0
        %7916 = vmatpush.bf16.msra.mxu0 0
        %7917 = vmatpush.bf16.msra.mxu0 0
        %7918 = vmatpush.bf16.msra.mxu0 0
        %7919 = vmatpush.bf16.msra.mxu0 %v7507
        %7920 = vmatpush.bf16.msra.mxu0 %v7393
        %7921 = vmatpush.bf16.msra.mxu0 %v7377
        %7922 = vmatmul.bf16.gmra.mxu0 %v7459
        %v7923 = vpop.f32.mrf.mxu0
        %v7924 = vadd.f32 0.0, %v7923
        %v7925 = vpop.f32.mrf.mxu0
        %v7926 = vadd.f32 0.0, %v7925
        %7927 = vmatmul.bf16.gmra.mxu0 %v7462
        %v7928 = vpop.f32.mrf.mxu0
        %v7929 = vadd.f32 0.0, %v7928
        %v7930 = vpop.f32.mrf.mxu0
        %v7931 = vadd.f32 0.0, %v7930
        %7932 = vmatmul.bf16.gmra.mxu0 %v7465
        %v7933 = vpop.f32.mrf.mxu0
        %v7934 = vadd.f32 0.0, %v7933
        %v7935 = vpop.f32.mrf.mxu0
        %v7936 = vadd.f32 0.0, %v7935
        %7937 = vmatmul.bf16.gmra.mxu0 %v7468
        %v7938 = vpop.f32.mrf.mxu0
        %v7939 = vadd.f32 0.0, %v7938
        %v7940 = vpop.f32.mrf.mxu0
        %v7941 = vadd.f32 0.0, %v7940
        %7942 = vmatmul.bf16.gmra.mxu0 %v7471
        %v7943 = vpop.f32.mrf.mxu0
        %v7944 = vadd.f32 0.0, %v7943
        %v7945 = vpop.f32.mrf.mxu0
        %v7946 = vadd.f32 0.0, %v7945
        %7947 = vmatmul.bf16.gmra.mxu0 %v7474
        %v7948 = vpop.f32.mrf.mxu0
        %v7949 = vadd.f32 0.0, %v7948
        %v7950 = vpop.f32.mrf.mxu0
        %v7951 = vadd.f32 0.0, %v7950
        %7952 = vdwg.mxu0
        %7953 = vmatpush.bf16.msra.mxu0 0
        %7954 = vmatpush.bf16.msra.mxu0 0
        %7955 = vmatpush.bf16.msra.mxu0 0
        %7956 = vmatpush.bf16.msra.mxu0 0
        %7957 = vmatpush.bf16.msra.mxu0 0
        %7958 = vmatpush.bf16.msra.mxu0 %v7510
        %7959 = vmatpush.bf16.msra.mxu0 %v7394
        %7960 = vmatpush.bf16.msra.mxu0 %v7378
        %7961 = vmatmul.bf16.gmra.mxu0 %v7459
        %v7962 = vpop.f32.mrf.mxu0
        %v7963 = vadd.f32 0.0, %v7962
        %v7964 = vpop.f32.mrf.mxu0
        %v7965 = vadd.f32 0.0, %v7964
        %7966 = vmatmul.bf16.gmra.mxu0 %v7462
        %v7967 = vpop.f32.mrf.mxu0
        %v7968 = vadd.f32 0.0, %v7967
        %v7969 = vpop.f32.mrf.mxu0
        %v7970 = vadd.f32 0.0, %v7969
        %7971 = vmatmul.bf16.gmra.mxu0 %v7465
        %v7972 = vpop.f32.mrf.mxu0
        %v7973 = vadd.f32 0.0, %v7972
        %v7974 = vpop.f32.mrf.mxu0
        %v7975 = vadd.f32 0.0, %v7974
        %7976 = vmatmul.bf16.gmra.mxu0 %v7468
        %v7977 = vpop.f32.mrf.mxu0
        %v7978 = vadd.f32 0.0, %v7977
        %v7979 = vpop.f32.mrf.mxu0
        %v7980 = vadd.f32 0.0, %v7979
        %7981 = vmatmul.bf16.gmra.mxu0 %v7471
        %v7982 = vpop.f32.mrf.mxu0
        %v7983 = vadd.f32 0.0, %v7982
        %v7984 = vpop.f32.mrf.mxu0
        %v7985 = vadd.f32 0.0, %v7984
        %7986 = vmatmul.bf16.gmra.mxu0 %v7474
        %v7987 = vpop.f32.mrf.mxu0
        %v7988 = vadd.f32 0.0, %v7987
        %v7989 = vpop.f32.mrf.mxu0
        %v7990 = vadd.f32 0.0, %v7989
        %7991 = vdwg.mxu0
        %7992 = vmatpush.bf16.msra.mxu0 0
        %7993 = vmatpush.bf16.msra.mxu0 0
        %7994 = vmatpush.bf16.msra.mxu0 0
        %7995 = vmatpush.bf16.msra.mxu0 0
        %7996 = vmatpush.bf16.msra.mxu0 0
        %7997 = vmatpush.bf16.msra.mxu0 %v7513
        %7998 = vmatpush.bf16.msra.mxu0 %v7395
        %7999 = vmatpush.bf16.msra.mxu0 %v7379
        %8000 = vmatmul.bf16.gmra.mxu0 %v7459
        %v8001 = vpop.f32.mrf.mxu0
        %v8002 = vadd.f32 0.0, %v8001
        %v8003 = vpop.f32.mrf.mxu0
        %v8004 = vadd.f32 0.0, %v8003
        %8005 = vmatmul.bf16.gmra.mxu0 %v7462
        %v8006 = vpop.f32.mrf.mxu0
        %v8007 = vadd.f32 0.0, %v8006
        %v8008 = vpop.f32.mrf.mxu0
        %v8009 = vadd.f32 0.0, %v8008
        %8010 = vmatmul.bf16.gmra.mxu0 %v7465
        %v8011 = vpop.f32.mrf.mxu0
        %v8012 = vadd.f32 0.0, %v8011
        %v8013 = vpop.f32.mrf.mxu0
        %v8014 = vadd.f32 0.0, %v8013
        %8015 = vmatmul.bf16.gmra.mxu0 %v7468
        %v8016 = vpop.f32.mrf.mxu0
        %v8017 = vadd.f32 0.0, %v8016
        %v8018 = vpop.f32.mrf.mxu0
        %v8019 = vadd.f32 0.0, %v8018
        %8020 = vmatmul.bf16.gmra.mxu0 %v7471
        %v8021 = vpop.f32.mrf.mxu0
        %v8022 = vadd.f32 0.0, %v8021
        %v8023 = vpop.f32.mrf.mxu0
        %v8024 = vadd.f32 0.0, %v8023
        %8025 = vmatmul.bf16.gmra.mxu0 %v7474
        %v8026 = vpop.f32.mrf.mxu0
        %v8027 = vadd.f32 0.0, %v8026
        %v8028 = vpop.f32.mrf.mxu0
        %v8029 = vadd.f32 0.0, %v8028
        %8030 = vdwg.mxu0
        %8031 = vmatpush.bf16.msra.mxu0 0
        %8032 = vmatpush.bf16.msra.mxu0 0
        %8033 = vmatpush.bf16.msra.mxu0 0
        %8034 = vmatpush.bf16.msra.mxu0 0
        %8035 = vmatpush.bf16.msra.mxu0 0
        %8036 = vmatpush.bf16.msra.mxu0 %v7516
        %8037 = vmatpush.bf16.msra.mxu0 %v7396
        %8038 = vmatpush.bf16.msra.mxu0 %v7380
        %8039 = vmatmul.bf16.gmra.mxu0 %v7459
        %v8040 = vpop.f32.mrf.mxu0
        %v8041 = vadd.f32 0.0, %v8040
        %v8042 = vpop.f32.mrf.mxu0
        %v8043 = vadd.f32 0.0, %v8042
        %8044 = vmatmul.bf16.gmra.mxu0 %v7462
        %v8045 = vpop.f32.mrf.mxu0
        %v8046 = vadd.f32 0.0, %v8045
        %v8047 = vpop.f32.mrf.mxu0
        %v8048 = vadd.f32 0.0, %v8047
        %8049 = vmatmul.bf16.gmra.mxu0 %v7465
        %v8050 = vpop.f32.mrf.mxu0
        %v8051 = vadd.f32 0.0, %v8050
        %v8052 = vpop.f32.mrf.mxu0
        %v8053 = vadd.f32 0.0, %v8052
        %8054 = vmatmul.bf16.gmra.mxu0 %v7468
        %v8055 = vpop.f32.mrf.mxu0
        %v8056 = vadd.f32 0.0, %v8055
        %v8057 = vpop.f32.mrf.mxu0
        %v8058 = vadd.f32 0.0, %v8057
        %8059 = vmatmul.bf16.gmra.mxu0 %v7471
        %v8060 = vpop.f32.mrf.mxu0
        %v8061 = vadd.f32 0.0, %v8060
        %v8062 = vpop.f32.mrf.mxu0
        %v8063 = vadd.f32 0.0, %v8062
        %8064 = vmatmul.bf16.gmra.mxu0 %v7474
        %v8065 = vpop.f32.mrf.mxu0
        %v8066 = vadd.f32 0.0, %v8065
        %v8067 = vpop.f32.mrf.mxu0
        %v8068 = vadd.f32 0.0, %v8067
        %8069 = vdwg.mxu0
        %8070 = vmatpush.bf16.msra.mxu0 0
        %8071 = vmatpush.bf16.msra.mxu0 0
        %8072 = vmatpush.bf16.msra.mxu0 0
        %8073 = vmatpush.bf16.msra.mxu0 0
        %8074 = vmatpush.bf16.msra.mxu0 0
        %8075 = vmatpush.bf16.msra.mxu0 %v7519
        %8076 = vmatpush.bf16.msra.mxu0 %v7397
        %8077 = vmatpush.bf16.msra.mxu0 %v7381
        %8078 = vmatmul.bf16.gmra.mxu0 %v7459
        %v8079 = vpop.f32.mrf.mxu0
        %v8080 = vadd.f32 0.0, %v8079
        %v8081 = vpop.f32.mrf.mxu0
        %v8082 = vadd.f32 0.0, %v8081
        %8083 = vmatmul.bf16.gmra.mxu0 %v7462
        %v8084 = vpop.f32.mrf.mxu0
        %v8085 = vadd.f32 0.0, %v8084
        %v8086 = vpop.f32.mrf.mxu0
        %v8087 = vadd.f32 0.0, %v8086
        %8088 = vmatmul.bf16.gmra.mxu0 %v7465
        %v8089 = vpop.f32.mrf.mxu0
        %v8090 = vadd.f32 0.0, %v8089
        %v8091 = vpop.f32.mrf.mxu0
        %v8092 = vadd.f32 0.0, %v8091
        %8093 = vmatmul.bf16.gmra.mxu0 %v7468
        %v8094 = vpop.f32.mrf.mxu0
        %v8095 = vadd.f32 0.0, %v8094
        %v8096 = vpop.f32.mrf.mxu0
        %v8097 = vadd.f32 0.0, %v8096
        %8098 = vmatmul.bf16.gmra.mxu0 %v7471
        %v8099 = vpop.f32.mrf.mxu0
        %v8100 = vadd.f32 0.0, %v8099
        %v8101 = vpop.f32.mrf.mxu0
        %v8102 = vadd.f32 0.0, %v8101
        %8103 = vmatmul.bf16.gmra.mxu0 %v7474
        %v8104 = vpop.f32.mrf.mxu0
        %v8105 = vadd.f32 0.0, %v8104
        %v8106 = vpop.f32.mrf.mxu0
        %v8107 = vadd.f32 0.0, %v8106
        %8108 = vdwg.mxu0
        %8109 = vmatpush.bf16.msra.mxu0 0
        %8110 = vmatpush.bf16.msra.mxu0 0
        %8111 = vmatpush.bf16.msra.mxu0 0
        %8112 = vmatpush.bf16.msra.mxu0 0
        %8113 = vmatpush.bf16.msra.mxu0 0
        %8114 = vmatpush.bf16.msra.mxu0 %v7522
        %8115 = vmatpush.bf16.msra.mxu0 %v7398
        %8116 = vmatpush.bf16.msra.mxu0 %v7382
        %8117 = vmatmul.bf16.gmra.mxu0 %v7459
        %v8118 = vpop.f32.mrf.mxu0
        %v8119 = vadd.f32 0.0, %v8118
        %v8120 = vpop.f32.mrf.mxu0
        %v8121 = vadd.f32 0.0, %v8120
        %8122 = vmatmul.bf16.gmra.mxu0 %v7462
        %v8123 = vpop.f32.mrf.mxu0
        %v8124 = vadd.f32 0.0, %v8123
        %v8125 = vpop.f32.mrf.mxu0
        %v8126 = vadd.f32 0.0, %v8125
        %8127 = vmatmul.bf16.gmra.mxu0 %v7465
        %v8128 = vpop.f32.mrf.mxu0
        %v8129 = vadd.f32 0.0, %v8128
        %v8130 = vpop.f32.mrf.mxu0
        %v8131 = vadd.f32 0.0, %v8130
        %8132 = vmatmul.bf16.gmra.mxu0 %v7468
        %v8133 = vpop.f32.mrf.mxu0
        %v8134 = vadd.f32 0.0, %v8133
        %v8135 = vpop.f32.mrf.mxu0
        %v8136 = vadd.f32 0.0, %v8135
        %8137 = vmatmul.bf16.gmra.mxu0 %v7471
        %v8138 = vpop.f32.mrf.mxu0
        %v8139 = vadd.f32 0.0, %v8138
        %v8140 = vpop.f32.mrf.mxu0
        %v8141 = vadd.f32 0.0, %v8140
        %8142 = vmatmul.bf16.gmra.mxu0 %v7474
        %v8143 = vpop.f32.mrf.mxu0
        %v8144 = vadd.f32 0.0, %v8143
        %v8145 = vpop.f32.mrf.mxu0
        %v8146 = vadd.f32 0.0, %v8145
        %8147 = vdwg.mxu0
        %v8148 = vperm.slane %v5521, 0
        %v8149 = vperm.slane %v5522, 0
        %v8150 = vperm.slane %v5523, 0
        %v8151 = vperm.slane %v5524, 0
        %v8152 = vperm.slane %v5525, 0
        %v8153 = vperm.slane %v5526, 0
        %v8154 = vperm.slane %v5527, 0
        %v8155 = vperm.slane %v5528, 0
        %v8156 = vperm.slane %v5529, 0
        %v8157 = vperm.slane %v5530, 0
        %v8158 = vperm.slane %v5531, 0
        %v8159 = vperm.slane %v5532, 0
        %v8160 = vperm.slane %v5533, 0
        %v8161 = vperm.slane %v5534, 0
        %v8162 = vperm.slane %v5535, 0
        %v8163 = vperm.slane %v5536, 0
        %v8164 = vmul.f32 %v8148, %v7534
        %v8165 = vmul.f32 %v8149, %v7573
        %v8166 = vmul.f32 %v8150, %v7612
        %v8167 = vmul.f32 %v8151, %v7651
        %v8168 = vmul.f32 %v8152, %v7690
        %v8169 = vmul.f32 %v8153, %v7729
        %v8170 = vmul.f32 %v8154, %v7768
        %v8171 = vmul.f32 %v8155, %v7807
        %v8172 = vmul.f32 %v8156, %v7846
        %v8173 = vmul.f32 %v8157, %v7885
        %v8174 = vmul.f32 %v8158, %v7924
        %v8175 = vmul.f32 %v8159, %v7963
        %v8176 = vmul.f32 %v8160, %v8002
        %v8177 = vmul.f32 %v8161, %v8041
        %v8178 = vmul.f32 %v8162, %v8080
        %v8179 = vmul.f32 %v8163, %v8119
        %v8180 = vmul.f32 %v8148, %v7536
        %v8181 = vmul.f32 %v8149, %v7575
        %v8182 = vmul.f32 %v8150, %v7614
        %v8183 = vmul.f32 %v8151, %v7653
        %v8184 = vmul.f32 %v8152, %v7692
        %v8185 = vmul.f32 %v8153, %v7731
        %v8186 = vmul.f32 %v8154, %v7770
        %v8187 = vmul.f32 %v8155, %v7809
        %v8188 = vmul.f32 %v8156, %v7848
        %v8189 = vmul.f32 %v8157, %v7887
        %v8190 = vmul.f32 %v8158, %v7926
        %v8191 = vmul.f32 %v8159, %v7965
        %v8192 = vmul.f32 %v8160, %v8004
        %v8193 = vmul.f32 %v8161, %v8043
        %v8194 = vmul.f32 %v8162, %v8082
        %v8195 = vmul.f32 %v8163, %v8121
        %v8196 = vperm.slane %v5521, 1
        %v8197 = vperm.slane %v5522, 1
        %v8198 = vperm.slane %v5523, 1
        %v8199 = vperm.slane %v5524, 1
        %v8200 = vperm.slane %v5525, 1
        %v8201 = vperm.slane %v5526, 1
        %v8202 = vperm.slane %v5527, 1
        %v8203 = vperm.slane %v5528, 1
        %v8204 = vperm.slane %v5529, 1
        %v8205 = vperm.slane %v5530, 1
        %v8206 = vperm.slane %v5531, 1
        %v8207 = vperm.slane %v5532, 1
        %v8208 = vperm.slane %v5533, 1
        %v8209 = vperm.slane %v5534, 1
        %v8210 = vperm.slane %v5535, 1
        %v8211 = vperm.slane %v5536, 1
        %v8212 = vmul.f32 %v8196, %v7539
        %v8213 = vmul.f32 %v8197, %v7578
        %v8214 = vmul.f32 %v8198, %v7617
        %v8215 = vmul.f32 %v8199, %v7656
        %v8216 = vmul.f32 %v8200, %v7695
        %v8217 = vmul.f32 %v8201, %v7734
        %v8218 = vmul.f32 %v8202, %v7773
        %v8219 = vmul.f32 %v8203, %v7812
        %v8220 = vmul.f32 %v8204, %v7851
        %v8221 = vmul.f32 %v8205, %v7890
        %v8222 = vmul.f32 %v8206, %v7929
        %v8223 = vmul.f32 %v8207, %v7968
        %v8224 = vmul.f32 %v8208, %v8007
        %v8225 = vmul.f32 %v8209, %v8046
        %v8226 = vmul.f32 %v8210, %v8085
        %v8227 = vmul.f32 %v8211, %v8124
        %v8228 = vmul.f32 %v8196, %v7541
        %v8229 = vmul.f32 %v8197, %v7580
        %v8230 = vmul.f32 %v8198, %v7619
        %v8231 = vmul.f32 %v8199, %v7658
        %v8232 = vmul.f32 %v8200, %v7697
        %v8233 = vmul.f32 %v8201, %v7736
        %v8234 = vmul.f32 %v8202, %v7775
        %v8235 = vmul.f32 %v8203, %v7814
        %v8236 = vmul.f32 %v8204, %v7853
        %v8237 = vmul.f32 %v8205, %v7892
        %v8238 = vmul.f32 %v8206, %v7931
        %v8239 = vmul.f32 %v8207, %v7970
        %v8240 = vmul.f32 %v8208, %v8009
        %v8241 = vmul.f32 %v8209, %v8048
        %v8242 = vmul.f32 %v8210, %v8087
        %v8243 = vmul.f32 %v8211, %v8126
        %v8244 = vadd.f32 %v8164, %v8212
        %v8245 = vadd.f32 %v8165, %v8213
        %v8246 = vadd.f32 %v8166, %v8214
        %v8247 = vadd.f32 %v8167, %v8215
        %v8248 = vadd.f32 %v8168, %v8216
        %v8249 = vadd.f32 %v8169, %v8217
        %v8250 = vadd.f32 %v8170, %v8218
        %v8251 = vadd.f32 %v8171, %v8219
        %v8252 = vadd.f32 %v8172, %v8220
        %v8253 = vadd.f32 %v8173, %v8221
        %v8254 = vadd.f32 %v8174, %v8222
        %v8255 = vadd.f32 %v8175, %v8223
        %v8256 = vadd.f32 %v8176, %v8224
        %v8257 = vadd.f32 %v8177, %v8225
        %v8258 = vadd.f32 %v8178, %v8226
        %v8259 = vadd.f32 %v8179, %v8227
        %v8260 = vadd.f32 %v8180, %v8228
        %v8261 = vadd.f32 %v8181, %v8229
        %v8262 = vadd.f32 %v8182, %v8230
        %v8263 = vadd.f32 %v8183, %v8231
        %v8264 = vadd.f32 %v8184, %v8232
        %v8265 = vadd.f32 %v8185, %v8233
        %v8266 = vadd.f32 %v8186, %v8234
        %v8267 = vadd.f32 %v8187, %v8235
        %v8268 = vadd.f32 %v8188, %v8236
        %v8269 = vadd.f32 %v8189, %v8237
        %v8270 = vadd.f32 %v8190, %v8238
        %v8271 = vadd.f32 %v8191, %v8239
        %v8272 = vadd.f32 %v8192, %v8240
        %v8273 = vadd.f32 %v8193, %v8241
        %v8274 = vadd.f32 %v8194, %v8242
        %v8275 = vadd.f32 %v8195, %v8243
        %v8276 = vperm.slane %v5521, 2
        %v8277 = vperm.slane %v5522, 2
        %v8278 = vperm.slane %v5523, 2
        %v8279 = vperm.slane %v5524, 2
        %v8280 = vperm.slane %v5525, 2
        %v8281 = vperm.slane %v5526, 2
        %v8282 = vperm.slane %v5527, 2
        %v8283 = vperm.slane %v5528, 2
        %v8284 = vperm.slane %v5529, 2
        %v8285 = vperm.slane %v5530, 2
        %v8286 = vperm.slane %v5531, 2
        %v8287 = vperm.slane %v5532, 2
        %v8288 = vperm.slane %v5533, 2
        %v8289 = vperm.slane %v5534, 2
        %v8290 = vperm.slane %v5535, 2
        %v8291 = vperm.slane %v5536, 2
        %v8292 = vmul.f32 %v8276, %v7544
        %v8293 = vmul.f32 %v8277, %v7583
        %v8294 = vmul.f32 %v8278, %v7622
        %v8295 = vmul.f32 %v8279, %v7661
        %v8296 = vmul.f32 %v8280, %v7700
        %v8297 = vmul.f32 %v8281, %v7739
        %v8298 = vmul.f32 %v8282, %v7778
        %v8299 = vmul.f32 %v8283, %v7817
        %v8300 = vmul.f32 %v8284, %v7856
        %v8301 = vmul.f32 %v8285, %v7895
        %v8302 = vmul.f32 %v8286, %v7934
        %v8303 = vmul.f32 %v8287, %v7973
        %v8304 = vmul.f32 %v8288, %v8012
        %v8305 = vmul.f32 %v8289, %v8051
        %v8306 = vmul.f32 %v8290, %v8090
        %v8307 = vmul.f32 %v8291, %v8129
        %v8308 = vmul.f32 %v8276, %v7546
        %v8309 = vmul.f32 %v8277, %v7585
        %v8310 = vmul.f32 %v8278, %v7624
        %v8311 = vmul.f32 %v8279, %v7663
        %v8312 = vmul.f32 %v8280, %v7702
        %v8313 = vmul.f32 %v8281, %v7741
        %v8314 = vmul.f32 %v8282, %v7780
        %v8315 = vmul.f32 %v8283, %v7819
        %v8316 = vmul.f32 %v8284, %v7858
        %v8317 = vmul.f32 %v8285, %v7897
        %v8318 = vmul.f32 %v8286, %v7936
        %v8319 = vmul.f32 %v8287, %v7975
        %v8320 = vmul.f32 %v8288, %v8014
        %v8321 = vmul.f32 %v8289, %v8053
        %v8322 = vmul.f32 %v8290, %v8092
        %v8323 = vmul.f32 %v8291, %v8131
        %v8324 = vadd.f32 %v8244, %v8292
        %v8325 = vadd.f32 %v8245, %v8293
        %v8326 = vadd.f32 %v8246, %v8294
        %v8327 = vadd.f32 %v8247, %v8295
        %v8328 = vadd.f32 %v8248, %v8296
        %v8329 = vadd.f32 %v8249, %v8297
        %v8330 = vadd.f32 %v8250, %v8298
        %v8331 = vadd.f32 %v8251, %v8299
        %v8332 = vadd.f32 %v8252, %v8300
        %v8333 = vadd.f32 %v8253, %v8301
        %v8334 = vadd.f32 %v8254, %v8302
        %v8335 = vadd.f32 %v8255, %v8303
        %v8336 = vadd.f32 %v8256, %v8304
        %v8337 = vadd.f32 %v8257, %v8305
        %v8338 = vadd.f32 %v8258, %v8306
        %v8339 = vadd.f32 %v8259, %v8307
        %v8340 = vadd.f32 %v8260, %v8308
        %v8341 = vadd.f32 %v8261, %v8309
        %v8342 = vadd.f32 %v8262, %v8310
        %v8343 = vadd.f32 %v8263, %v8311
        %v8344 = vadd.f32 %v8264, %v8312
        %v8345 = vadd.f32 %v8265, %v8313
        %v8346 = vadd.f32 %v8266, %v8314
        %v8347 = vadd.f32 %v8267, %v8315
        %v8348 = vadd.f32 %v8268, %v8316
        %v8349 = vadd.f32 %v8269, %v8317
        %v8350 = vadd.f32 %v8270, %v8318
        %v8351 = vadd.f32 %v8271, %v8319
        %v8352 = vadd.f32 %v8272, %v8320
        %v8353 = vadd.f32 %v8273, %v8321
        %v8354 = vadd.f32 %v8274, %v8322
        %v8355 = vadd.f32 %v8275, %v8323
        %v8356 = vperm.slane %v5521, 3
        %v8357 = vperm.slane %v5522, 3
        %v8358 = vperm.slane %v5523, 3
        %v8359 = vperm.slane %v5524, 3
        %v8360 = vperm.slane %v5525, 3
        %v8361 = vperm.slane %v5526, 3
        %v8362 = vperm.slane %v5527, 3
        %v8363 = vperm.slane %v5528, 3
        %v8364 = vperm.slane %v5529, 3
        %v8365 = vperm.slane %v5530, 3
        %v8366 = vperm.slane %v5531, 3
        %v8367 = vperm.slane %v5532, 3
        %v8368 = vperm.slane %v5533, 3
        %v8369 = vperm.slane %v5534, 3
        %v8370 = vperm.slane %v5535, 3
        %v8371 = vperm.slane %v5536, 3
        %v8372 = vmul.f32 %v8356, %v7549
        %v8373 = vmul.f32 %v8357, %v7588
        %v8374 = vmul.f32 %v8358, %v7627
        %v8375 = vmul.f32 %v8359, %v7666
        %v8376 = vmul.f32 %v8360, %v7705
        %v8377 = vmul.f32 %v8361, %v7744
        %v8378 = vmul.f32 %v8362, %v7783
        %v8379 = vmul.f32 %v8363, %v7822
        %v8380 = vmul.f32 %v8364, %v7861
        %v8381 = vmul.f32 %v8365, %v7900
        %v8382 = vmul.f32 %v8366, %v7939
        %v8383 = vmul.f32 %v8367, %v7978
        %v8384 = vmul.f32 %v8368, %v8017
        %v8385 = vmul.f32 %v8369, %v8056
        %v8386 = vmul.f32 %v8370, %v8095
        %v8387 = vmul.f32 %v8371, %v8134
        %v8388 = vmul.f32 %v8356, %v7551
        %v8389 = vmul.f32 %v8357, %v7590
        %v8390 = vmul.f32 %v8358, %v7629
        %v8391 = vmul.f32 %v8359, %v7668
        %v8392 = vmul.f32 %v8360, %v7707
        %v8393 = vmul.f32 %v8361, %v7746
        %v8394 = vmul.f32 %v8362, %v7785
        %v8395 = vmul.f32 %v8363, %v7824
        %v8396 = vmul.f32 %v8364, %v7863
        %v8397 = vmul.f32 %v8365, %v7902
        %v8398 = vmul.f32 %v8366, %v7941
        %v8399 = vmul.f32 %v8367, %v7980
        %v8400 = vmul.f32 %v8368, %v8019
        %v8401 = vmul.f32 %v8369, %v8058
        %v8402 = vmul.f32 %v8370, %v8097
        %v8403 = vmul.f32 %v8371, %v8136
        %v8404 = vadd.f32 %v8324, %v8372
        %v8405 = vadd.f32 %v8325, %v8373
        %v8406 = vadd.f32 %v8326, %v8374
        %v8407 = vadd.f32 %v8327, %v8375
        %v8408 = vadd.f32 %v8328, %v8376
        %v8409 = vadd.f32 %v8329, %v8377
        %v8410 = vadd.f32 %v8330, %v8378
        %v8411 = vadd.f32 %v8331, %v8379
        %v8412 = vadd.f32 %v8332, %v8380
        %v8413 = vadd.f32 %v8333, %v8381
        %v8414 = vadd.f32 %v8334, %v8382
        %v8415 = vadd.f32 %v8335, %v8383
        %v8416 = vadd.f32 %v8336, %v8384
        %v8417 = vadd.f32 %v8337, %v8385
        %v8418 = vadd.f32 %v8338, %v8386
        %v8419 = vadd.f32 %v8339, %v8387
        %v8420 = vadd.f32 %v8340, %v8388
        %v8421 = vadd.f32 %v8341, %v8389
        %v8422 = vadd.f32 %v8342, %v8390
        %v8423 = vadd.f32 %v8343, %v8391
        %v8424 = vadd.f32 %v8344, %v8392
        %v8425 = vadd.f32 %v8345, %v8393
        %v8426 = vadd.f32 %v8346, %v8394
        %v8427 = vadd.f32 %v8347, %v8395
        %v8428 = vadd.f32 %v8348, %v8396
        %v8429 = vadd.f32 %v8349, %v8397
        %v8430 = vadd.f32 %v8350, %v8398
        %v8431 = vadd.f32 %v8351, %v8399
        %v8432 = vadd.f32 %v8352, %v8400
        %v8433 = vadd.f32 %v8353, %v8401
        %v8434 = vadd.f32 %v8354, %v8402
        %v8435 = vadd.f32 %v8355, %v8403
        %v8436 = vperm.slane %v5521, 4
        %v8437 = vperm.slane %v5522, 4
        %v8438 = vperm.slane %v5523, 4
        %v8439 = vperm.slane %v5524, 4
        %v8440 = vperm.slane %v5525, 4
        %v8441 = vperm.slane %v5526, 4
        %v8442 = vperm.slane %v5527, 4
        %v8443 = vperm.slane %v5528, 4
        %v8444 = vperm.slane %v5529, 4
        %v8445 = vperm.slane %v5530, 4
        %v8446 = vperm.slane %v5531, 4
        %v8447 = vperm.slane %v5532, 4
        %v8448 = vperm.slane %v5533, 4
        %v8449 = vperm.slane %v5534, 4
        %v8450 = vperm.slane %v5535, 4
        %v8451 = vperm.slane %v5536, 4
        %v8452 = vmul.f32 %v8436, %v7554
        %v8453 = vmul.f32 %v8437, %v7593
        %v8454 = vmul.f32 %v8438, %v7632
        %v8455 = vmul.f32 %v8439, %v7671
        %v8456 = vmul.f32 %v8440, %v7710
        %v8457 = vmul.f32 %v8441, %v7749
        %v8458 = vmul.f32 %v8442, %v7788
        %v8459 = vmul.f32 %v8443, %v7827
        %v8460 = vmul.f32 %v8444, %v7866
        %v8461 = vmul.f32 %v8445, %v7905
        %v8462 = vmul.f32 %v8446, %v7944
        %v8463 = vmul.f32 %v8447, %v7983
        %v8464 = vmul.f32 %v8448, %v8022
        %v8465 = vmul.f32 %v8449, %v8061
        %v8466 = vmul.f32 %v8450, %v8100
        %v8467 = vmul.f32 %v8451, %v8139
        %v8468 = vmul.f32 %v8436, %v7556
        %v8469 = vmul.f32 %v8437, %v7595
        %v8470 = vmul.f32 %v8438, %v7634
        %v8471 = vmul.f32 %v8439, %v7673
        %v8472 = vmul.f32 %v8440, %v7712
        %v8473 = vmul.f32 %v8441, %v7751
        %v8474 = vmul.f32 %v8442, %v7790
        %v8475 = vmul.f32 %v8443, %v7829
        %v8476 = vmul.f32 %v8444, %v7868
        %v8477 = vmul.f32 %v8445, %v7907
        %v8478 = vmul.f32 %v8446, %v7946
        %v8479 = vmul.f32 %v8447, %v7985
        %v8480 = vmul.f32 %v8448, %v8024
        %v8481 = vmul.f32 %v8449, %v8063
        %v8482 = vmul.f32 %v8450, %v8102
        %v8483 = vmul.f32 %v8451, %v8141
        %v8484 = vadd.f32 %v8404, %v8452
        %v8485 = vadd.f32 %v8405, %v8453
        %v8486 = vadd.f32 %v8406, %v8454
        %v8487 = vadd.f32 %v8407, %v8455
        %v8488 = vadd.f32 %v8408, %v8456
        %v8489 = vadd.f32 %v8409, %v8457
        %v8490 = vadd.f32 %v8410, %v8458
        %v8491 = vadd.f32 %v8411, %v8459
        %v8492 = vadd.f32 %v8412, %v8460
        %v8493 = vadd.f32 %v8413, %v8461
        %v8494 = vadd.f32 %v8414, %v8462
        %v8495 = vadd.f32 %v8415, %v8463
        %v8496 = vadd.f32 %v8416, %v8464
        %v8497 = vadd.f32 %v8417, %v8465
        %v8498 = vadd.f32 %v8418, %v8466
        %v8499 = vadd.f32 %v8419, %v8467
        %v8500 = vadd.f32 %v8420, %v8468
        %v8501 = vadd.f32 %v8421, %v8469
        %v8502 = vadd.f32 %v8422, %v8470
        %v8503 = vadd.f32 %v8423, %v8471
        %v8504 = vadd.f32 %v8424, %v8472
        %v8505 = vadd.f32 %v8425, %v8473
        %v8506 = vadd.f32 %v8426, %v8474
        %v8507 = vadd.f32 %v8427, %v8475
        %v8508 = vadd.f32 %v8428, %v8476
        %v8509 = vadd.f32 %v8429, %v8477
        %v8510 = vadd.f32 %v8430, %v8478
        %v8511 = vadd.f32 %v8431, %v8479
        %v8512 = vadd.f32 %v8432, %v8480
        %v8513 = vadd.f32 %v8433, %v8481
        %v8514 = vadd.f32 %v8434, %v8482
        %v8515 = vadd.f32 %v8435, %v8483
        %v8516 = vperm.slane %v5521, 5
        %v8517 = vperm.slane %v5522, 5
        %v8518 = vperm.slane %v5523, 5
        %v8519 = vperm.slane %v5524, 5
        %v8520 = vperm.slane %v5525, 5
        %v8521 = vperm.slane %v5526, 5
        %v8522 = vperm.slane %v5527, 5
        %v8523 = vperm.slane %v5528, 5
        %v8524 = vperm.slane %v5529, 5
        %v8525 = vperm.slane %v5530, 5
        %v8526 = vperm.slane %v5531, 5
        %v8527 = vperm.slane %v5532, 5
        %v8528 = vperm.slane %v5533, 5
        %v8529 = vperm.slane %v5534, 5
        %v8530 = vperm.slane %v5535, 5
        %v8531 = vperm.slane %v5536, 5
        %v8532 = vmul.f32 %v8516, %v7559
        %v8533 = vmul.f32 %v8517, %v7598
        %v8534 = vmul.f32 %v8518, %v7637
        %v8535 = vmul.f32 %v8519, %v7676
        %v8536 = vmul.f32 %v8520, %v7715
        %v8537 = vmul.f32 %v8521, %v7754
        %v8538 = vmul.f32 %v8522, %v7793
        %v8539 = vmul.f32 %v8523, %v7832
        %v8540 = vmul.f32 %v8524, %v7871
        %v8541 = vmul.f32 %v8525, %v7910
        %v8542 = vmul.f32 %v8526, %v7949
        %v8543 = vmul.f32 %v8527, %v7988
        %v8544 = vmul.f32 %v8528, %v8027
        %v8545 = vmul.f32 %v8529, %v8066
        %v8546 = vmul.f32 %v8530, %v8105
        %v8547 = vmul.f32 %v8531, %v8144
        %v8548 = vmul.f32 %v8516, %v7561
        %v8549 = vmul.f32 %v8517, %v7600
        %v8550 = vmul.f32 %v8518, %v7639
        %v8551 = vmul.f32 %v8519, %v7678
        %v8552 = vmul.f32 %v8520, %v7717
        %v8553 = vmul.f32 %v8521, %v7756
        %v8554 = vmul.f32 %v8522, %v7795
        %v8555 = vmul.f32 %v8523, %v7834
        %v8556 = vmul.f32 %v8524, %v7873
        %v8557 = vmul.f32 %v8525, %v7912
        %v8558 = vmul.f32 %v8526, %v7951
        %v8559 = vmul.f32 %v8527, %v7990
        %v8560 = vmul.f32 %v8528, %v8029
        %v8561 = vmul.f32 %v8529, %v8068
        %v8562 = vmul.f32 %v8530, %v8107
        %v8563 = vmul.f32 %v8531, %v8146
        %v8564 = vadd.f32 %v8484, %v8532
        %v8565 = vadd.f32 %v8485, %v8533
        %v8566 = vadd.f32 %v8486, %v8534
        %v8567 = vadd.f32 %v8487, %v8535
        %v8568 = vadd.f32 %v8488, %v8536
        %v8569 = vadd.f32 %v8489, %v8537
        %v8570 = vadd.f32 %v8490, %v8538
        %v8571 = vadd.f32 %v8491, %v8539
        %v8572 = vadd.f32 %v8492, %v8540
        %v8573 = vadd.f32 %v8493, %v8541
        %v8574 = vadd.f32 %v8494, %v8542
        %v8575 = vadd.f32 %v8495, %v8543
        %v8576 = vadd.f32 %v8496, %v8544
        %v8577 = vadd.f32 %v8497, %v8545
        %v8578 = vadd.f32 %v8498, %v8546
        %v8579 = vadd.f32 %v8499, %v8547
        %v8580 = vadd.f32 %v8500, %v8548
        %v8581 = vadd.f32 %v8501, %v8549
        %v8582 = vadd.f32 %v8502, %v8550
        %v8583 = vadd.f32 %v8503, %v8551
        %v8584 = vadd.f32 %v8504, %v8552
        %v8585 = vadd.f32 %v8505, %v8553
        %v8586 = vadd.f32 %v8506, %v8554
        %v8587 = vadd.f32 %v8507, %v8555
        %v8588 = vadd.f32 %v8508, %v8556
        %v8589 = vadd.f32 %v8509, %v8557
        %v8590 = vadd.f32 %v8510, %v8558
        %v8591 = vadd.f32 %v8511, %v8559
        %v8592 = vadd.f32 %v8512, %v8560
        %v8593 = vadd.f32 %v8513, %v8561
        %v8594 = vadd.f32 %v8514, %v8562
        %v8595 = vadd.f32 %v8515, %v8563
        %v8596 = vadd.f32 %v4849, %v8564
        %v8597 = vadd.f32 %v4850, %v8565
        %v8598 = vadd.f32 %v4851, %v8566
        %v8599 = vadd.f32 %v4852, %v8567
        %v8600 = vadd.f32 %v4853, %v8568
        %v8601 = vadd.f32 %v4854, %v8569
        %v8602 = vadd.f32 %v4855, %v8570
        %v8603 = vadd.f32 %v4856, %v8571
        %v8604 = vadd.f32 %v4857, %v8572
        %v8605 = vadd.f32 %v4858, %v8573
        %v8606 = vadd.f32 %v4859, %v8574
        %v8607 = vadd.f32 %v4860, %v8575
        %v8608 = vadd.f32 %v4861, %v8576
        %v8609 = vadd.f32 %v4862, %v8577
        %v8610 = vadd.f32 %v4863, %v8578
        %v8611 = vadd.f32 %v4864, %v8579
        %v8612 = vadd.f32 %v4865, %v8580
        %v8613 = vadd.f32 %v4866, %v8581
        %v8614 = vadd.f32 %v4867, %v8582
        %v8615 = vadd.f32 %v4868, %v8583
        %v8616 = vadd.f32 %v4869, %v8584
        %v8617 = vadd.f32 %v4870, %v8585
        %v8618 = vadd.f32 %v4871, %v8586
        %v8619 = vadd.f32 %v4872, %v8587
        %v8620 = vadd.f32 %v4873, %v8588
        %v8621 = vadd.f32 %v4874, %v8589
        %v8622 = vadd.f32 %v4875, %v8590
        %v8623 = vadd.f32 %v4876, %v8591
        %v8624 = vadd.f32 %v4877, %v8592
        %v8625 = vadd.f32 %v4878, %v8593
        %v8626 = vadd.f32 %v4879, %v8594
        %v8627 = vadd.f32 %v4880, %v8595
        %v8628 = vld [vmem:[%s9] sm:$0xff]
        %v8629 = vld [vmem:[%s9 + $0x8] sm:$0xff]
        %v8630 = vld [vmem:[%s9 + $0x10] sm:$0xff]
        %v8631 = vld [vmem:[%s9 + $0x18] sm:$0xff]
        %v8632 = vld [vmem:[%s9 + $0x20] sm:$0xff]
        %v8633 = vld [vmem:[%s9 + $0x28] sm:$0xff]
        %v8634 = vld [vmem:[%s475] sm:$0xff]
        %v8635 = vld [vmem:[%s475 + $0x8] sm:$0xff]
        %v8636 = vld [vmem:[%s475 + $0x10] sm:$0xff]
        %v8637 = vld [vmem:[%s475 + $0x18] sm:$0xff]
        %v8638 = vld [vmem:[%s475 + $0x20] sm:$0xff]
        %v8639 = vld [vmem:[%s475 + $0x28] sm:$0xff]
        %v8640 = vld [vmem:[%s475 + $0x30] sm:$0xff]
        %v8641 = vld [vmem:[%s475 + $0x38] sm:$0xff]
        %v8642 = vld [vmem:[%s475 + $0x40] sm:$0xff]
        %v8643 = vld [vmem:[%s475 + $0x48] sm:$0xff]
        %v8644 = vld [vmem:[%s475 + $0x50] sm:$0xff]
        %v8645 = vld [vmem:[%s475 + $0x58] sm:$0xff]
        %v8646 = vld [vmem:[%s475 + $0x60] sm:$0xff]
        %v8647 = vld [vmem:[%s475 + $0x68] sm:$0xff]
        %v8648 = vld [vmem:[%s475 + $0x70] sm:$0xff]
        %v8649 = vld [vmem:[%s475 + $0x78] sm:$0xff]
        %v8650 = vld [vmem:[%s10] sm:$0xff]
        %v8651 = vld [vmem:[%s10 + $0x8] sm:$0xff]
        %v8652 = vld [vmem:[%s10 + $0x10] sm:$0xff]
        %v8653 = vld [vmem:[%s10 + $0x18] sm:$0xff]
        %v8654 = vld [vmem:[%s10 + $0x20] sm:$0xff]
        %v8655 = vld [vmem:[%s10 + $0x28] sm:$0xff]
        %8657 = vset.pattern.permute.xlu0 0
        %8658 = vperm.xlu0 %8657, %v8650
        %v8659 = vpop.permute.xlu0 %8658
        %8662 = vset.pattern.permute.xlu0 0
        %8663 = vperm.xlu0 %8662, %v8651
        %v8664 = vpop.permute.xlu0 %8663
        %8667 = vset.pattern.permute.xlu0 0
        %8668 = vperm.xlu0 %8667, %v8652
        %v8669 = vpop.permute.xlu0 %8668
        %8672 = vset.pattern.permute.xlu0 0
        %8673 = vperm.xlu0 %8672, %v8653
        %v8674 = vpop.permute.xlu0 %8673
        %8677 = vset.pattern.permute.xlu0 0
        %8678 = vperm.xlu0 %8677, %v8654
        %v8679 = vpop.permute.xlu0 %8678
        %8682 = vset.pattern.permute.xlu0 0
        %8683 = vperm.xlu0 %8682, %v8655
        %v8684 = vpop.permute.xlu0 %8683
        %v8687 = vsel %vm2138, %v8628, 0
        %v8690 = vsel %vm2138, %v8629, 0
        %v8693 = vsel %vm2138, %v8630, 0
        %v8696 = vsel %vm2138, %v8631, 0
        %v8699 = vsel %vm2138, %v8632, 0
        %v8702 = vsel %vm2138, %v8633, 0
        %8704 = vmatpush.msra.mxu0 0.0
        %8705 = vmatpush.msra.mxu0 0.0
        %8706 = vmatpush.msra.mxu0 0.0
        %8707 = vmatpush.msra.mxu0 0.0
        %8708 = vmatpush.msra.mxu0 0.0
        %8709 = vmatpush.msra.mxu0 0.0
        %8710 = vmatpush.msra.mxu0 0.0
        %8711 = vmatpush.msra.mxu0 0.0
        %8712 = vmatpush.msra.mxu0 0.0
        %8713 = vmatpush.msra.mxu0 0.0
        %8714 = vmatpush.msra.mxu0 0.0
        %8715 = vmatpush.msra.mxu0 0.0
        %8716 = vmatpush.msra.mxu0 0.0
        %8717 = vmatpush.msra.mxu0 0.0
        %8718 = vmatpush.msra.mxu0 0.0
        %8719 = vmatpush.msra.mxu0 %v8634
        %8720 = vmatmul.f32.gmra.mxu0 %v8687
        %v8721 = vpop.f32.mrf.mxu0
        %v8722 = vadd.f32 %v8659, %v8721
        %8723 = vmatmul.f32.gmra.mxu0 %v8690
        %v8724 = vpop.f32.mrf.mxu0
        %v8725 = vadd.f32 %v8664, %v8724
        %8726 = vmatmul.f32.gmra.mxu0 %v8693
        %v8727 = vpop.f32.mrf.mxu0
        %v8728 = vadd.f32 %v8669, %v8727
        %8729 = vmatmul.f32.gmra.mxu0 %v8696
        %v8730 = vpop.f32.mrf.mxu0
        %v8731 = vadd.f32 %v8674, %v8730
        %8732 = vmatmul.f32.gmra.mxu0 %v8699
        %v8733 = vpop.f32.mrf.mxu0
        %v8734 = vadd.f32 %v8679, %v8733
        %8735 = vmatmul.f32.gmra.mxu0 %v8702
        %v8736 = vpop.f32.mrf.mxu0
        %v8737 = vadd.f32 %v8684, %v8736
        %8738 = vdwg.mxu0
        %8739 = vmatpush.msra.mxu0 0.0
        %8740 = vmatpush.msra.mxu0 0.0
        %8741 = vmatpush.msra.mxu0 0.0
        %8742 = vmatpush.msra.mxu0 0.0
        %8743 = vmatpush.msra.mxu0 0.0
        %8744 = vmatpush.msra.mxu0 0.0
        %8745 = vmatpush.msra.mxu0 0.0
        %8746 = vmatpush.msra.mxu0 0.0
        %8747 = vmatpush.msra.mxu0 0.0
        %8748 = vmatpush.msra.mxu0 0.0
        %8749 = vmatpush.msra.mxu0 0.0
        %8750 = vmatpush.msra.mxu0 0.0
        %8751 = vmatpush.msra.mxu0 0.0
        %8752 = vmatpush.msra.mxu0 0.0
        %8753 = vmatpush.msra.mxu0 0.0
        %8754 = vmatpush.msra.mxu0 %v8635
        %8755 = vmatmul.f32.gmra.mxu0 %v8687
        %v8756 = vpop.f32.mrf.mxu0
        %v8757 = vadd.f32 %v8659, %v8756
        %8758 = vmatmul.f32.gmra.mxu0 %v8690
        %v8759 = vpop.f32.mrf.mxu0
        %v8760 = vadd.f32 %v8664, %v8759
        %8761 = vmatmul.f32.gmra.mxu0 %v8693
        %v8762 = vpop.f32.mrf.mxu0
        %v8763 = vadd.f32 %v8669, %v8762
        %8764 = vmatmul.f32.gmra.mxu0 %v8696
        %v8765 = vpop.f32.mrf.mxu0
        %v8766 = vadd.f32 %v8674, %v8765
        %8767 = vmatmul.f32.gmra.mxu0 %v8699
        %v8768 = vpop.f32.mrf.mxu0
        %v8769 = vadd.f32 %v8679, %v8768
        %8770 = vmatmul.f32.gmra.mxu0 %v8702
        %v8771 = vpop.f32.mrf.mxu0
        %v8772 = vadd.f32 %v8684, %v8771
        %8773 = vdwg.mxu0
        %8774 = vmatpush.msra.mxu0 0.0
        %8775 = vmatpush.msra.mxu0 0.0
        %8776 = vmatpush.msra.mxu0 0.0
        %8777 = vmatpush.msra.mxu0 0.0
        %8778 = vmatpush.msra.mxu0 0.0
        %8779 = vmatpush.msra.mxu0 0.0
        %8780 = vmatpush.msra.mxu0 0.0
        %8781 = vmatpush.msra.mxu0 0.0
        %8782 = vmatpush.msra.mxu0 0.0
        %8783 = vmatpush.msra.mxu0 0.0
        %8784 = vmatpush.msra.mxu0 0.0
        %8785 = vmatpush.msra.mxu0 0.0
        %8786 = vmatpush.msra.mxu0 0.0
        %8787 = vmatpush.msra.mxu0 0.0
        %8788 = vmatpush.msra.mxu0 0.0
        %8789 = vmatpush.msra.mxu0 %v8636
        %8790 = vmatmul.f32.gmra.mxu0 %v8687
        %v8791 = vpop.f32.mrf.mxu0
        %v8792 = vadd.f32 %v8659, %v8791
        %8793 = vmatmul.f32.gmra.mxu0 %v8690
        %v8794 = vpop.f32.mrf.mxu0
        %v8795 = vadd.f32 %v8664, %v8794
        %8796 = vmatmul.f32.gmra.mxu0 %v8693
        %v8797 = vpop.f32.mrf.mxu0
        %v8798 = vadd.f32 %v8669, %v8797
        %8799 = vmatmul.f32.gmra.mxu0 %v8696
        %v8800 = vpop.f32.mrf.mxu0
        %v8801 = vadd.f32 %v8674, %v8800
        %8802 = vmatmul.f32.gmra.mxu0 %v8699
        %v8803 = vpop.f32.mrf.mxu0
        %v8804 = vadd.f32 %v8679, %v8803
        %8805 = vmatmul.f32.gmra.mxu0 %v8702
        %v8806 = vpop.f32.mrf.mxu0
        %v8807 = vadd.f32 %v8684, %v8806
        %8808 = vdwg.mxu0
        %8809 = vmatpush.msra.mxu0 0.0
        %8810 = vmatpush.msra.mxu0 0.0
        %8811 = vmatpush.msra.mxu0 0.0
        %8812 = vmatpush.msra.mxu0 0.0
        %8813 = vmatpush.msra.mxu0 0.0
        %8814 = vmatpush.msra.mxu0 0.0
        %8815 = vmatpush.msra.mxu0 0.0
        %8816 = vmatpush.msra.mxu0 0.0
        %8817 = vmatpush.msra.mxu0 0.0
        %8818 = vmatpush.msra.mxu0 0.0
        %8819 = vmatpush.msra.mxu0 0.0
        %8820 = vmatpush.msra.mxu0 0.0
        %8821 = vmatpush.msra.mxu0 0.0
        %8822 = vmatpush.msra.mxu0 0.0
        %8823 = vmatpush.msra.mxu0 0.0
        %8824 = vmatpush.msra.mxu0 %v8637
        %8825 = vmatmul.f32.gmra.mxu0 %v8687
        %v8826 = vpop.f32.mrf.mxu0
        %v8827 = vadd.f32 %v8659, %v8826
        %8828 = vmatmul.f32.gmra.mxu0 %v8690
        %v8829 = vpop.f32.mrf.mxu0
        %v8830 = vadd.f32 %v8664, %v8829
        %8831 = vmatmul.f32.gmra.mxu0 %v8693
        %v8832 = vpop.f32.mrf.mxu0
        %v8833 = vadd.f32 %v8669, %v8832
        %8834 = vmatmul.f32.gmra.mxu0 %v8696
        %v8835 = vpop.f32.mrf.mxu0
        %v8836 = vadd.f32 %v8674, %v8835
        %8837 = vmatmul.f32.gmra.mxu0 %v8699
        %v8838 = vpop.f32.mrf.mxu0
        %v8839 = vadd.f32 %v8679, %v8838
        %8840 = vmatmul.f32.gmra.mxu0 %v8702
        %v8841 = vpop.f32.mrf.mxu0
        %v8842 = vadd.f32 %v8684, %v8841
        %8843 = vdwg.mxu0
        %8844 = vmatpush.msra.mxu0 0.0
        %8845 = vmatpush.msra.mxu0 0.0
        %8846 = vmatpush.msra.mxu0 0.0
        %8847 = vmatpush.msra.mxu0 0.0
        %8848 = vmatpush.msra.mxu0 0.0
        %8849 = vmatpush.msra.mxu0 0.0
        %8850 = vmatpush.msra.mxu0 0.0
        %8851 = vmatpush.msra.mxu0 0.0
        %8852 = vmatpush.msra.mxu0 0.0
        %8853 = vmatpush.msra.mxu0 0.0
        %8854 = vmatpush.msra.mxu0 0.0
        %8855 = vmatpush.msra.mxu0 0.0
        %8856 = vmatpush.msra.mxu0 0.0
        %8857 = vmatpush.msra.mxu0 0.0
        %8858 = vmatpush.msra.mxu0 0.0
        %8859 = vmatpush.msra.mxu0 %v8638
        %8860 = vmatmul.f32.gmra.mxu0 %v8687
        %v8861 = vpop.f32.mrf.mxu0
        %v8862 = vadd.f32 %v8659, %v8861
        %8863 = vmatmul.f32.gmra.mxu0 %v8690
        %v8864 = vpop.f32.mrf.mxu0
        %v8865 = vadd.f32 %v8664, %v8864
        %8866 = vmatmul.f32.gmra.mxu0 %v8693
        %v8867 = vpop.f32.mrf.mxu0
        %v8868 = vadd.f32 %v8669, %v8867
        %8869 = vmatmul.f32.gmra.mxu0 %v8696
        %v8870 = vpop.f32.mrf.mxu0
        %v8871 = vadd.f32 %v8674, %v8870
        %8872 = vmatmul.f32.gmra.mxu0 %v8699
        %v8873 = vpop.f32.mrf.mxu0
        %v8874 = vadd.f32 %v8679, %v8873
        %8875 = vmatmul.f32.gmra.mxu0 %v8702
        %v8876 = vpop.f32.mrf.mxu0
        %v8877 = vadd.f32 %v8684, %v8876
        %8878 = vdwg.mxu0
        %8879 = vmatpush.msra.mxu0 0.0
        %8880 = vmatpush.msra.mxu0 0.0
        %8881 = vmatpush.msra.mxu0 0.0
        %8882 = vmatpush.msra.mxu0 0.0
        %8883 = vmatpush.msra.mxu0 0.0
        %8884 = vmatpush.msra.mxu0 0.0
        %8885 = vmatpush.msra.mxu0 0.0
        %8886 = vmatpush.msra.mxu0 0.0
        %8887 = vmatpush.msra.mxu0 0.0
        %8888 = vmatpush.msra.mxu0 0.0
        %8889 = vmatpush.msra.mxu0 0.0
        %8890 = vmatpush.msra.mxu0 0.0
        %8891 = vmatpush.msra.mxu0 0.0
        %8892 = vmatpush.msra.mxu0 0.0
        %8893 = vmatpush.msra.mxu0 0.0
        %8894 = vmatpush.msra.mxu0 %v8639
        %8895 = vmatmul.f32.gmra.mxu0 %v8687
        %v8896 = vpop.f32.mrf.mxu0
        %v8897 = vadd.f32 %v8659, %v8896
        %8898 = vmatmul.f32.gmra.mxu0 %v8690
        %v8899 = vpop.f32.mrf.mxu0
        %v8900 = vadd.f32 %v8664, %v8899
        %8901 = vmatmul.f32.gmra.mxu0 %v8693
        %v8902 = vpop.f32.mrf.mxu0
        %v8903 = vadd.f32 %v8669, %v8902
        %8904 = vmatmul.f32.gmra.mxu0 %v8696
        %v8905 = vpop.f32.mrf.mxu0
        %v8906 = vadd.f32 %v8674, %v8905
        %8907 = vmatmul.f32.gmra.mxu0 %v8699
        %v8908 = vpop.f32.mrf.mxu0
        %v8909 = vadd.f32 %v8679, %v8908
        %8910 = vmatmul.f32.gmra.mxu0 %v8702
        %v8911 = vpop.f32.mrf.mxu0
        %v8912 = vadd.f32 %v8684, %v8911
        %8913 = vdwg.mxu0
        %8914 = vmatpush.msra.mxu0 0.0
        %8915 = vmatpush.msra.mxu0 0.0
        %8916 = vmatpush.msra.mxu0 0.0
        %8917 = vmatpush.msra.mxu0 0.0
        %8918 = vmatpush.msra.mxu0 0.0
        %8919 = vmatpush.msra.mxu0 0.0
        %8920 = vmatpush.msra.mxu0 0.0
        %8921 = vmatpush.msra.mxu0 0.0
        %8922 = vmatpush.msra.mxu0 0.0
        %8923 = vmatpush.msra.mxu0 0.0
        %8924 = vmatpush.msra.mxu0 0.0
        %8925 = vmatpush.msra.mxu0 0.0
        %8926 = vmatpush.msra.mxu0 0.0
        %8927 = vmatpush.msra.mxu0 0.0
        %8928 = vmatpush.msra.mxu0 0.0
        %8929 = vmatpush.msra.mxu0 %v8640
        %8930 = vmatmul.f32.gmra.mxu0 %v8687
        %v8931 = vpop.f32.mrf.mxu0
        %v8932 = vadd.f32 %v8659, %v8931
        %8933 = vmatmul.f32.gmra.mxu0 %v8690
        %v8934 = vpop.f32.mrf.mxu0
        %v8935 = vadd.f32 %v8664, %v8934
        %8936 = vmatmul.f32.gmra.mxu0 %v8693
        %v8937 = vpop.f32.mrf.mxu0
        %v8938 = vadd.f32 %v8669, %v8937
        %8939 = vmatmul.f32.gmra.mxu0 %v8696
        %v8940 = vpop.f32.mrf.mxu0
        %v8941 = vadd.f32 %v8674, %v8940
        %8942 = vmatmul.f32.gmra.mxu0 %v8699
        %v8943 = vpop.f32.mrf.mxu0
        %v8944 = vadd.f32 %v8679, %v8943
        %8945 = vmatmul.f32.gmra.mxu0 %v8702
        %v8946 = vpop.f32.mrf.mxu0
        %v8947 = vadd.f32 %v8684, %v8946
        %8948 = vdwg.mxu0
        %8949 = vmatpush.msra.mxu0 0.0
        %8950 = vmatpush.msra.mxu0 0.0
        %8951 = vmatpush.msra.mxu0 0.0
        %8952 = vmatpush.msra.mxu0 0.0
        %8953 = vmatpush.msra.mxu0 0.0
        %8954 = vmatpush.msra.mxu0 0.0
        %8955 = vmatpush.msra.mxu0 0.0
        %8956 = vmatpush.msra.mxu0 0.0
        %8957 = vmatpush.msra.mxu0 0.0
        %8958 = vmatpush.msra.mxu0 0.0
        %8959 = vmatpush.msra.mxu0 0.0
        %8960 = vmatpush.msra.mxu0 0.0
        %8961 = vmatpush.msra.mxu0 0.0
        %8962 = vmatpush.msra.mxu0 0.0
        %8963 = vmatpush.msra.mxu0 0.0
        %8964 = vmatpush.msra.mxu0 %v8641
        %8965 = vmatmul.f32.gmra.mxu0 %v8687
        %v8966 = vpop.f32.mrf.mxu0
        %v8967 = vadd.f32 %v8659, %v8966
        %8968 = vmatmul.f32.gmra.mxu0 %v8690
        %v8969 = vpop.f32.mrf.mxu0
        %v8970 = vadd.f32 %v8664, %v8969
        %8971 = vmatmul.f32.gmra.mxu0 %v8693
        %v8972 = vpop.f32.mrf.mxu0
        %v8973 = vadd.f32 %v8669, %v8972
        %8974 = vmatmul.f32.gmra.mxu0 %v8696
        %v8975 = vpop.f32.mrf.mxu0
        %v8976 = vadd.f32 %v8674, %v8975
        %8977 = vmatmul.f32.gmra.mxu0 %v8699
        %v8978 = vpop.f32.mrf.mxu0
        %v8979 = vadd.f32 %v8679, %v8978
        %8980 = vmatmul.f32.gmra.mxu0 %v8702
        %v8981 = vpop.f32.mrf.mxu0
        %v8982 = vadd.f32 %v8684, %v8981
        %8983 = vdwg.mxu0
        %8984 = vmatpush.msra.mxu0 0.0
        %8985 = vmatpush.msra.mxu0 0.0
        %8986 = vmatpush.msra.mxu0 0.0
        %8987 = vmatpush.msra.mxu0 0.0
        %8988 = vmatpush.msra.mxu0 0.0
        %8989 = vmatpush.msra.mxu0 0.0
        %8990 = vmatpush.msra.mxu0 0.0
        %8991 = vmatpush.msra.mxu0 0.0
        %8992 = vmatpush.msra.mxu0 0.0
        %8993 = vmatpush.msra.mxu0 0.0
        %8994 = vmatpush.msra.mxu0 0.0
        %8995 = vmatpush.msra.mxu0 0.0
        %8996 = vmatpush.msra.mxu0 0.0
        %8997 = vmatpush.msra.mxu0 0.0
        %8998 = vmatpush.msra.mxu0 0.0
        %8999 = vmatpush.msra.mxu0 %v8642
        %9000 = vmatmul.f32.gmra.mxu0 %v8687
        %v9001 = vpop.f32.mrf.mxu0
        %v9002 = vadd.f32 %v8659, %v9001
        %9003 = vmatmul.f32.gmra.mxu0 %v8690
        %v9004 = vpop.f32.mrf.mxu0
        %v9005 = vadd.f32 %v8664, %v9004
        %9006 = vmatmul.f32.gmra.mxu0 %v8693
        %v9007 = vpop.f32.mrf.mxu0
        %v9008 = vadd.f32 %v8669, %v9007
        %9009 = vmatmul.f32.gmra.mxu0 %v8696
        %v9010 = vpop.f32.mrf.mxu0
        %v9011 = vadd.f32 %v8674, %v9010
        %9012 = vmatmul.f32.gmra.mxu0 %v8699
        %v9013 = vpop.f32.mrf.mxu0
        %v9014 = vadd.f32 %v8679, %v9013
        %9015 = vmatmul.f32.gmra.mxu0 %v8702
        %v9016 = vpop.f32.mrf.mxu0
        %v9017 = vadd.f32 %v8684, %v9016
        %9018 = vdwg.mxu0
        %9019 = vmatpush.msra.mxu0 0.0
        %9020 = vmatpush.msra.mxu0 0.0
        %9021 = vmatpush.msra.mxu0 0.0
        %9022 = vmatpush.msra.mxu0 0.0
        %9023 = vmatpush.msra.mxu0 0.0
        %9024 = vmatpush.msra.mxu0 0.0
        %9025 = vmatpush.msra.mxu0 0.0
        %9026 = vmatpush.msra.mxu0 0.0
        %9027 = vmatpush.msra.mxu0 0.0
        %9028 = vmatpush.msra.mxu0 0.0
        %9029 = vmatpush.msra.mxu0 0.0
        %9030 = vmatpush.msra.mxu0 0.0
        %9031 = vmatpush.msra.mxu0 0.0
        %9032 = vmatpush.msra.mxu0 0.0
        %9033 = vmatpush.msra.mxu0 0.0
        %9034 = vmatpush.msra.mxu0 %v8643
        %9035 = vmatmul.f32.gmra.mxu0 %v8687
        %v9036 = vpop.f32.mrf.mxu0
        %v9037 = vadd.f32 %v8659, %v9036
        %9038 = vmatmul.f32.gmra.mxu0 %v8690
        %v9039 = vpop.f32.mrf.mxu0
        %v9040 = vadd.f32 %v8664, %v9039
        %9041 = vmatmul.f32.gmra.mxu0 %v8693
        %v9042 = vpop.f32.mrf.mxu0
        %v9043 = vadd.f32 %v8669, %v9042
        %9044 = vmatmul.f32.gmra.mxu0 %v8696
        %v9045 = vpop.f32.mrf.mxu0
        %v9046 = vadd.f32 %v8674, %v9045
        %9047 = vmatmul.f32.gmra.mxu0 %v8699
        %v9048 = vpop.f32.mrf.mxu0
        %v9049 = vadd.f32 %v8679, %v9048
        %9050 = vmatmul.f32.gmra.mxu0 %v8702
        %v9051 = vpop.f32.mrf.mxu0
        %v9052 = vadd.f32 %v8684, %v9051
        %9053 = vdwg.mxu0
        %9054 = vmatpush.msra.mxu0 0.0
        %9055 = vmatpush.msra.mxu0 0.0
        %9056 = vmatpush.msra.mxu0 0.0
        %9057 = vmatpush.msra.mxu0 0.0
        %9058 = vmatpush.msra.mxu0 0.0
        %9059 = vmatpush.msra.mxu0 0.0
        %9060 = vmatpush.msra.mxu0 0.0
        %9061 = vmatpush.msra.mxu0 0.0
        %9062 = vmatpush.msra.mxu0 0.0
        %9063 = vmatpush.msra.mxu0 0.0
        %9064 = vmatpush.msra.mxu0 0.0
        %9065 = vmatpush.msra.mxu0 0.0
        %9066 = vmatpush.msra.mxu0 0.0
        %9067 = vmatpush.msra.mxu0 0.0
        %9068 = vmatpush.msra.mxu0 0.0
        %9069 = vmatpush.msra.mxu0 %v8644
        %9070 = vmatmul.f32.gmra.mxu0 %v8687
        %v9071 = vpop.f32.mrf.mxu0
        %v9072 = vadd.f32 %v8659, %v9071
        %9073 = vmatmul.f32.gmra.mxu0 %v8690
        %v9074 = vpop.f32.mrf.mxu0
        %v9075 = vadd.f32 %v8664, %v9074
        %9076 = vmatmul.f32.gmra.mxu0 %v8693
        %v9077 = vpop.f32.mrf.mxu0
        %v9078 = vadd.f32 %v8669, %v9077
        %9079 = vmatmul.f32.gmra.mxu0 %v8696
        %v9080 = vpop.f32.mrf.mxu0
        %v9081 = vadd.f32 %v8674, %v9080
        %9082 = vmatmul.f32.gmra.mxu0 %v8699
        %v9083 = vpop.f32.mrf.mxu0
        %v9084 = vadd.f32 %v8679, %v9083
        %9085 = vmatmul.f32.gmra.mxu0 %v8702
        %v9086 = vpop.f32.mrf.mxu0
        %v9087 = vadd.f32 %v8684, %v9086
        %9088 = vdwg.mxu0
        %9089 = vmatpush.msra.mxu0 0.0
        %9090 = vmatpush.msra.mxu0 0.0
        %9091 = vmatpush.msra.mxu0 0.0
        %9092 = vmatpush.msra.mxu0 0.0
        %9093 = vmatpush.msra.mxu0 0.0
        %9094 = vmatpush.msra.mxu0 0.0
        %9095 = vmatpush.msra.mxu0 0.0
        %9096 = vmatpush.msra.mxu0 0.0
        %9097 = vmatpush.msra.mxu0 0.0
        %9098 = vmatpush.msra.mxu0 0.0
        %9099 = vmatpush.msra.mxu0 0.0
        %9100 = vmatpush.msra.mxu0 0.0
        %9101 = vmatpush.msra.mxu0 0.0
        %9102 = vmatpush.msra.mxu0 0.0
        %9103 = vmatpush.msra.mxu0 0.0
        %9104 = vmatpush.msra.mxu0 %v8645
        %9105 = vmatmul.f32.gmra.mxu0 %v8687
        %v9106 = vpop.f32.mrf.mxu0
        %v9107 = vadd.f32 %v8659, %v9106
        %9108 = vmatmul.f32.gmra.mxu0 %v8690
        %v9109 = vpop.f32.mrf.mxu0
        %v9110 = vadd.f32 %v8664, %v9109
        %9111 = vmatmul.f32.gmra.mxu0 %v8693
        %v9112 = vpop.f32.mrf.mxu0
        %v9113 = vadd.f32 %v8669, %v9112
        %9114 = vmatmul.f32.gmra.mxu0 %v8696
        %v9115 = vpop.f32.mrf.mxu0
        %v9116 = vadd.f32 %v8674, %v9115
        %9117 = vmatmul.f32.gmra.mxu0 %v8699
        %v9118 = vpop.f32.mrf.mxu0
        %v9119 = vadd.f32 %v8679, %v9118
        %9120 = vmatmul.f32.gmra.mxu0 %v8702
        %v9121 = vpop.f32.mrf.mxu0
        %v9122 = vadd.f32 %v8684, %v9121
        %9123 = vdwg.mxu0
        %9124 = vmatpush.msra.mxu0 0.0
        %9125 = vmatpush.msra.mxu0 0.0
        %9126 = vmatpush.msra.mxu0 0.0
        %9127 = vmatpush.msra.mxu0 0.0
        %9128 = vmatpush.msra.mxu0 0.0
        %9129 = vmatpush.msra.mxu0 0.0
        %9130 = vmatpush.msra.mxu0 0.0
        %9131 = vmatpush.msra.mxu0 0.0
        %9132 = vmatpush.msra.mxu0 0.0
        %9133 = vmatpush.msra.mxu0 0.0
        %9134 = vmatpush.msra.mxu0 0.0
        %9135 = vmatpush.msra.mxu0 0.0
        %9136 = vmatpush.msra.mxu0 0.0
        %9137 = vmatpush.msra.mxu0 0.0
        %9138 = vmatpush.msra.mxu0 0.0
        %9139 = vmatpush.msra.mxu0 %v8646
        %9140 = vmatmul.f32.gmra.mxu0 %v8687
        %v9141 = vpop.f32.mrf.mxu0
        %v9142 = vadd.f32 %v8659, %v9141
        %9143 = vmatmul.f32.gmra.mxu0 %v8690
        %v9144 = vpop.f32.mrf.mxu0
        %v9145 = vadd.f32 %v8664, %v9144
        %9146 = vmatmul.f32.gmra.mxu0 %v8693
        %v9147 = vpop.f32.mrf.mxu0
        %v9148 = vadd.f32 %v8669, %v9147
        %9149 = vmatmul.f32.gmra.mxu0 %v8696
        %v9150 = vpop.f32.mrf.mxu0
        %v9151 = vadd.f32 %v8674, %v9150
        %9152 = vmatmul.f32.gmra.mxu0 %v8699
        %v9153 = vpop.f32.mrf.mxu0
        %v9154 = vadd.f32 %v8679, %v9153
        %9155 = vmatmul.f32.gmra.mxu0 %v8702
        %v9156 = vpop.f32.mrf.mxu0
        %v9157 = vadd.f32 %v8684, %v9156
        %9158 = vdwg.mxu0
        %9159 = vmatpush.msra.mxu0 0.0
        %9160 = vmatpush.msra.mxu0 0.0
        %9161 = vmatpush.msra.mxu0 0.0
        %9162 = vmatpush.msra.mxu0 0.0
        %9163 = vmatpush.msra.mxu0 0.0
        %9164 = vmatpush.msra.mxu0 0.0
        %9165 = vmatpush.msra.mxu0 0.0
        %9166 = vmatpush.msra.mxu0 0.0
        %9167 = vmatpush.msra.mxu0 0.0
        %9168 = vmatpush.msra.mxu0 0.0
        %9169 = vmatpush.msra.mxu0 0.0
        %9170 = vmatpush.msra.mxu0 0.0
        %9171 = vmatpush.msra.mxu0 0.0
        %9172 = vmatpush.msra.mxu0 0.0
        %9173 = vmatpush.msra.mxu0 0.0
        %9174 = vmatpush.msra.mxu0 %v8647
        %9175 = vmatmul.f32.gmra.mxu0 %v8687
        %v9176 = vpop.f32.mrf.mxu0
        %v9177 = vadd.f32 %v8659, %v9176
        %9178 = vmatmul.f32.gmra.mxu0 %v8690
        %v9179 = vpop.f32.mrf.mxu0
        %v9180 = vadd.f32 %v8664, %v9179
        %9181 = vmatmul.f32.gmra.mxu0 %v8693
        %v9182 = vpop.f32.mrf.mxu0
        %v9183 = vadd.f32 %v8669, %v9182
        %9184 = vmatmul.f32.gmra.mxu0 %v8696
        %v9185 = vpop.f32.mrf.mxu0
        %v9186 = vadd.f32 %v8674, %v9185
        %9187 = vmatmul.f32.gmra.mxu0 %v8699
        %v9188 = vpop.f32.mrf.mxu0
        %v9189 = vadd.f32 %v8679, %v9188
        %9190 = vmatmul.f32.gmra.mxu0 %v8702
        %v9191 = vpop.f32.mrf.mxu0
        %v9192 = vadd.f32 %v8684, %v9191
        %9193 = vdwg.mxu0
        %9194 = vmatpush.msra.mxu0 0.0
        %9195 = vmatpush.msra.mxu0 0.0
        %9196 = vmatpush.msra.mxu0 0.0
        %9197 = vmatpush.msra.mxu0 0.0
        %9198 = vmatpush.msra.mxu0 0.0
        %9199 = vmatpush.msra.mxu0 0.0
        %9200 = vmatpush.msra.mxu0 0.0
        %9201 = vmatpush.msra.mxu0 0.0
        %9202 = vmatpush.msra.mxu0 0.0
        %9203 = vmatpush.msra.mxu0 0.0
        %9204 = vmatpush.msra.mxu0 0.0
        %9205 = vmatpush.msra.mxu0 0.0
        %9206 = vmatpush.msra.mxu0 0.0
        %9207 = vmatpush.msra.mxu0 0.0
        %9208 = vmatpush.msra.mxu0 0.0
        %9209 = vmatpush.msra.mxu0 %v8648
        %9210 = vmatmul.f32.gmra.mxu0 %v8687
        %v9211 = vpop.f32.mrf.mxu0
        %v9212 = vadd.f32 %v8659, %v9211
        %9213 = vmatmul.f32.gmra.mxu0 %v8690
        %v9214 = vpop.f32.mrf.mxu0
        %v9215 = vadd.f32 %v8664, %v9214
        %9216 = vmatmul.f32.gmra.mxu0 %v8693
        %v9217 = vpop.f32.mrf.mxu0
        %v9218 = vadd.f32 %v8669, %v9217
        %9219 = vmatmul.f32.gmra.mxu0 %v8696
        %v9220 = vpop.f32.mrf.mxu0
        %v9221 = vadd.f32 %v8674, %v9220
        %9222 = vmatmul.f32.gmra.mxu0 %v8699
        %v9223 = vpop.f32.mrf.mxu0
        %v9224 = vadd.f32 %v8679, %v9223
        %9225 = vmatmul.f32.gmra.mxu0 %v8702
        %v9226 = vpop.f32.mrf.mxu0
        %v9227 = vadd.f32 %v8684, %v9226
        %9228 = vdwg.mxu0
        %9229 = vmatpush.msra.mxu0 0.0
        %9230 = vmatpush.msra.mxu0 0.0
        %9231 = vmatpush.msra.mxu0 0.0
        %9232 = vmatpush.msra.mxu0 0.0
        %9233 = vmatpush.msra.mxu0 0.0
        %9234 = vmatpush.msra.mxu0 0.0
        %9235 = vmatpush.msra.mxu0 0.0
        %9236 = vmatpush.msra.mxu0 0.0
        %9237 = vmatpush.msra.mxu0 0.0
        %9238 = vmatpush.msra.mxu0 0.0
        %9239 = vmatpush.msra.mxu0 0.0
        %9240 = vmatpush.msra.mxu0 0.0
        %9241 = vmatpush.msra.mxu0 0.0
        %9242 = vmatpush.msra.mxu0 0.0
        %9243 = vmatpush.msra.mxu0 0.0
        %9244 = vmatpush.msra.mxu0 %v8649
        %9245 = vmatmul.f32.gmra.mxu0 %v8687
        %v9246 = vpop.f32.mrf.mxu0
        %v9247 = vadd.f32 %v8659, %v9246
        %9248 = vmatmul.f32.gmra.mxu0 %v8690
        %v9249 = vpop.f32.mrf.mxu0
        %v9250 = vadd.f32 %v8664, %v9249
        %9251 = vmatmul.f32.gmra.mxu0 %v8693
        %v9252 = vpop.f32.mrf.mxu0
        %v9253 = vadd.f32 %v8669, %v9252
        %9254 = vmatmul.f32.gmra.mxu0 %v8696
        %v9255 = vpop.f32.mrf.mxu0
        %v9256 = vadd.f32 %v8674, %v9255
        %9257 = vmatmul.f32.gmra.mxu0 %v8699
        %v9258 = vpop.f32.mrf.mxu0
        %v9259 = vadd.f32 %v8679, %v9258
        %9260 = vmatmul.f32.gmra.mxu0 %v8702
        %v9261 = vpop.f32.mrf.mxu0
        %v9262 = vadd.f32 %v8684, %v9261
        %9263 = vdwg.mxu0
        %v9264 = vld [vmem:[%s11] sm:$0xff]
        %v9265 = vld [vmem:[%s11 + $0x8] sm:$0xff]
        %v9266 = vld [vmem:[%s11 + $0x10] sm:$0xff]
        %v9267 = vld [vmem:[%s11 + $0x18] sm:$0xff]
        %v9268 = vld [vmem:[%s11 + $0x20] sm:$0xff]
        %v9269 = vld [vmem:[%s11 + $0x28] sm:$0xff]
        %v9270 = vld [vmem:[%s12] sm:$0xff]
        %v9271 = vld [vmem:[%s12 + $0x8] sm:$0xff]
        %v9272 = vld [vmem:[%s12 + $0x10] sm:$0xff]
        %v9273 = vld [vmem:[%s12 + $0x18] sm:$0xff]
        %v9274 = vld [vmem:[%s12 + $0x20] sm:$0xff]
        %v9275 = vld [vmem:[%s12 + $0x28] sm:$0xff]
        %9277 = vset.pattern.permute.xlu0 0
        %9278 = vperm.xlu0 %9277, %v9270
        %v9279 = vpop.permute.xlu0 %9278
        %9282 = vset.pattern.permute.xlu0 0
        %9283 = vperm.xlu0 %9282, %v9271
        %v9284 = vpop.permute.xlu0 %9283
        %9287 = vset.pattern.permute.xlu0 0
        %9288 = vperm.xlu0 %9287, %v9272
        %v9289 = vpop.permute.xlu0 %9288
        %9292 = vset.pattern.permute.xlu0 0
        %9293 = vperm.xlu0 %9292, %v9273
        %v9294 = vpop.permute.xlu0 %9293
        %9297 = vset.pattern.permute.xlu0 0
        %9298 = vperm.xlu0 %9297, %v9274
        %v9299 = vpop.permute.xlu0 %9298
        %9302 = vset.pattern.permute.xlu0 0
        %9303 = vperm.xlu0 %9302, %v9275
        %v9304 = vpop.permute.xlu0 %9303
        %vm9306 = vcmask 130048
        %v9308 = vsel %vm9306, %v9264, 0
        %v9311 = vsel %vm9306, %v9265, 0
        %v9314 = vsel %vm9306, %v9266, 0
        %v9317 = vsel %vm9306, %v9267, 0
        %v9320 = vsel %vm9306, %v9268, 0
        %v9323 = vsel %vm9306, %v9269, 0
        %9325 = vmatpush.msra.mxu0 0.0
        %9326 = vmatpush.msra.mxu0 0.0
        %9327 = vmatpush.msra.mxu0 0.0
        %9328 = vmatpush.msra.mxu0 0.0
        %9329 = vmatpush.msra.mxu0 0.0
        %9330 = vmatpush.msra.mxu0 0.0
        %9331 = vmatpush.msra.mxu0 0.0
        %9332 = vmatpush.msra.mxu0 0.0
        %9333 = vmatpush.msra.mxu0 0.0
        %9334 = vmatpush.msra.mxu0 0.0
        %9335 = vmatpush.msra.mxu0 0.0
        %9336 = vmatpush.msra.mxu0 0.0
        %9337 = vmatpush.msra.mxu0 0.0
        %9338 = vmatpush.msra.mxu0 0.0
        %9339 = vmatpush.msra.mxu0 %v8612
        %9340 = vmatpush.msra.mxu0 %v8596
        %9341 = vmatmul.f32.gmra.mxu0 %v9308
        %v9342 = vpop.f32.mrf.mxu0
        %v9343 = vadd.f32 %v9279, %v9342
        %9344 = vmatmul.f32.gmra.mxu0 %v9311
        %v9345 = vpop.f32.mrf.mxu0
        %v9346 = vadd.f32 %v9284, %v9345
        %9347 = vmatmul.f32.gmra.mxu0 %v9314
        %v9348 = vpop.f32.mrf.mxu0
        %v9349 = vadd.f32 %v9289, %v9348
        %9350 = vmatmul.f32.gmra.mxu0 %v9317
        %v9351 = vpop.f32.mrf.mxu0
        %v9352 = vadd.f32 %v9294, %v9351
        %9353 = vmatmul.f32.gmra.mxu0 %v9320
        %v9354 = vpop.f32.mrf.mxu0
        %v9355 = vadd.f32 %v9299, %v9354
        %9356 = vmatmul.f32.gmra.mxu0 %v9323
        %v9357 = vpop.f32.mrf.mxu0
        %v9358 = vadd.f32 %v9304, %v9357
        %9359 = vdwg.mxu0
        %9360 = vmatpush.msra.mxu0 0.0
        %9361 = vmatpush.msra.mxu0 0.0
        %9362 = vmatpush.msra.mxu0 0.0
        %9363 = vmatpush.msra.mxu0 0.0
        %9364 = vmatpush.msra.mxu0 0.0
        %9365 = vmatpush.msra.mxu0 0.0
        %9366 = vmatpush.msra.mxu0 0.0
        %9367 = vmatpush.msra.mxu0 0.0
        %9368 = vmatpush.msra.mxu0 0.0
        %9369 = vmatpush.msra.mxu0 0.0
        %9370 = vmatpush.msra.mxu0 0.0
        %9371 = vmatpush.msra.mxu0 0.0
        %9372 = vmatpush.msra.mxu0 0.0
        %9373 = vmatpush.msra.mxu0 0.0
        %9374 = vmatpush.msra.mxu0 %v8613
        %9375 = vmatpush.msra.mxu0 %v8597
        %9376 = vmatmul.f32.gmra.mxu0 %v9308
        %v9377 = vpop.f32.mrf.mxu0
        %v9378 = vadd.f32 %v9279, %v9377
        %9379 = vmatmul.f32.gmra.mxu0 %v9311
        %v9380 = vpop.f32.mrf.mxu0
        %v9381 = vadd.f32 %v9284, %v9380
        %9382 = vmatmul.f32.gmra.mxu0 %v9314
        %v9383 = vpop.f32.mrf.mxu0
        %v9384 = vadd.f32 %v9289, %v9383
        %9385 = vmatmul.f32.gmra.mxu0 %v9317
        %v9386 = vpop.f32.mrf.mxu0
        %v9387 = vadd.f32 %v9294, %v9386
        %9388 = vmatmul.f32.gmra.mxu0 %v9320
        %v9389 = vpop.f32.mrf.mxu0
        %v9390 = vadd.f32 %v9299, %v9389
        %9391 = vmatmul.f32.gmra.mxu0 %v9323
        %v9392 = vpop.f32.mrf.mxu0
        %v9393 = vadd.f32 %v9304, %v9392
        %9394 = vdwg.mxu0
        %9395 = vmatpush.msra.mxu0 0.0
        %9396 = vmatpush.msra.mxu0 0.0
        %9397 = vmatpush.msra.mxu0 0.0
        %9398 = vmatpush.msra.mxu0 0.0
        %9399 = vmatpush.msra.mxu0 0.0
        %9400 = vmatpush.msra.mxu0 0.0
        %9401 = vmatpush.msra.mxu0 0.0
        %9402 = vmatpush.msra.mxu0 0.0
        %9403 = vmatpush.msra.mxu0 0.0
        %9404 = vmatpush.msra.mxu0 0.0
        %9405 = vmatpush.msra.mxu0 0.0
        %9406 = vmatpush.msra.mxu0 0.0
        %9407 = vmatpush.msra.mxu0 0.0
        %9408 = vmatpush.msra.mxu0 0.0
        %9409 = vmatpush.msra.mxu0 %v8614
        %9410 = vmatpush.msra.mxu0 %v8598
        %9411 = vmatmul.f32.gmra.mxu0 %v9308
        %v9412 = vpop.f32.mrf.mxu0
        %v9413 = vadd.f32 %v9279, %v9412
        %9414 = vmatmul.f32.gmra.mxu0 %v9311
        %v9415 = vpop.f32.mrf.mxu0
        %v9416 = vadd.f32 %v9284, %v9415
        %9417 = vmatmul.f32.gmra.mxu0 %v9314
        %v9418 = vpop.f32.mrf.mxu0
        %v9419 = vadd.f32 %v9289, %v9418
        %9420 = vmatmul.f32.gmra.mxu0 %v9317
        %v9421 = vpop.f32.mrf.mxu0
        %v9422 = vadd.f32 %v9294, %v9421
        %9423 = vmatmul.f32.gmra.mxu0 %v9320
        %v9424 = vpop.f32.mrf.mxu0
        %v9425 = vadd.f32 %v9299, %v9424
        %9426 = vmatmul.f32.gmra.mxu0 %v9323
        %v9427 = vpop.f32.mrf.mxu0
        %v9428 = vadd.f32 %v9304, %v9427
        %9429 = vdwg.mxu0
        %9430 = vmatpush.msra.mxu0 0.0
        %9431 = vmatpush.msra.mxu0 0.0
        %9432 = vmatpush.msra.mxu0 0.0
        %9433 = vmatpush.msra.mxu0 0.0
        %9434 = vmatpush.msra.mxu0 0.0
        %9435 = vmatpush.msra.mxu0 0.0
        %9436 = vmatpush.msra.mxu0 0.0
        %9437 = vmatpush.msra.mxu0 0.0
        %9438 = vmatpush.msra.mxu0 0.0
        %9439 = vmatpush.msra.mxu0 0.0
        %9440 = vmatpush.msra.mxu0 0.0
        %9441 = vmatpush.msra.mxu0 0.0
        %9442 = vmatpush.msra.mxu0 0.0
        %9443 = vmatpush.msra.mxu0 0.0
        %9444 = vmatpush.msra.mxu0 %v8615
        %9445 = vmatpush.msra.mxu0 %v8599
        %9446 = vmatmul.f32.gmra.mxu0 %v9308
        %v9447 = vpop.f32.mrf.mxu0
        %v9448 = vadd.f32 %v9279, %v9447
        %9449 = vmatmul.f32.gmra.mxu0 %v9311
        %v9450 = vpop.f32.mrf.mxu0
        %v9451 = vadd.f32 %v9284, %v9450
        %9452 = vmatmul.f32.gmra.mxu0 %v9314
        %v9453 = vpop.f32.mrf.mxu0
        %v9454 = vadd.f32 %v9289, %v9453
        %9455 = vmatmul.f32.gmra.mxu0 %v9317
        %v9456 = vpop.f32.mrf.mxu0
        %v9457 = vadd.f32 %v9294, %v9456
        %9458 = vmatmul.f32.gmra.mxu0 %v9320
        %v9459 = vpop.f32.mrf.mxu0
        %v9460 = vadd.f32 %v9299, %v9459
        %9461 = vmatmul.f32.gmra.mxu0 %v9323
        %v9462 = vpop.f32.mrf.mxu0
        %v9463 = vadd.f32 %v9304, %v9462
        %9464 = vdwg.mxu0
        %9465 = vmatpush.msra.mxu0 0.0
        %9466 = vmatpush.msra.mxu0 0.0
        %9467 = vmatpush.msra.mxu0 0.0
        %9468 = vmatpush.msra.mxu0 0.0
        %9469 = vmatpush.msra.mxu0 0.0
        %9470 = vmatpush.msra.mxu0 0.0
        %9471 = vmatpush.msra.mxu0 0.0
        %9472 = vmatpush.msra.mxu0 0.0
        %9473 = vmatpush.msra.mxu0 0.0
        %9474 = vmatpush.msra.mxu0 0.0
        %9475 = vmatpush.msra.mxu0 0.0
        %9476 = vmatpush.msra.mxu0 0.0
        %9477 = vmatpush.msra.mxu0 0.0
        %9478 = vmatpush.msra.mxu0 0.0
        %9479 = vmatpush.msra.mxu0 %v8616
        %9480 = vmatpush.msra.mxu0 %v8600
        %9481 = vmatmul.f32.gmra.mxu0 %v9308
        %v9482 = vpop.f32.mrf.mxu0
        %v9483 = vadd.f32 %v9279, %v9482
        %9484 = vmatmul.f32.gmra.mxu0 %v9311
        %v9485 = vpop.f32.mrf.mxu0
        %v9486 = vadd.f32 %v9284, %v9485
        %9487 = vmatmul.f32.gmra.mxu0 %v9314
        %v9488 = vpop.f32.mrf.mxu0
        %v9489 = vadd.f32 %v9289, %v9488
        %9490 = vmatmul.f32.gmra.mxu0 %v9317
        %v9491 = vpop.f32.mrf.mxu0
        %v9492 = vadd.f32 %v9294, %v9491
        %9493 = vmatmul.f32.gmra.mxu0 %v9320
        %v9494 = vpop.f32.mrf.mxu0
        %v9495 = vadd.f32 %v9299, %v9494
        %9496 = vmatmul.f32.gmra.mxu0 %v9323
        %v9497 = vpop.f32.mrf.mxu0
        %v9498 = vadd.f32 %v9304, %v9497
        %9499 = vdwg.mxu0
        %9500 = vmatpush.msra.mxu0 0.0
        %9501 = vmatpush.msra.mxu0 0.0
        %9502 = vmatpush.msra.mxu0 0.0
        %9503 = vmatpush.msra.mxu0 0.0
        %9504 = vmatpush.msra.mxu0 0.0
        %9505 = vmatpush.msra.mxu0 0.0
        %9506 = vmatpush.msra.mxu0 0.0
        %9507 = vmatpush.msra.mxu0 0.0
        %9508 = vmatpush.msra.mxu0 0.0
        %9509 = vmatpush.msra.mxu0 0.0
        %9510 = vmatpush.msra.mxu0 0.0
        %9511 = vmatpush.msra.mxu0 0.0
        %9512 = vmatpush.msra.mxu0 0.0
        %9513 = vmatpush.msra.mxu0 0.0
        %9514 = vmatpush.msra.mxu0 %v8617
        %9515 = vmatpush.msra.mxu0 %v8601
        %9516 = vmatmul.f32.gmra.mxu0 %v9308
        %v9517 = vpop.f32.mrf.mxu0
        %v9518 = vadd.f32 %v9279, %v9517
        %9519 = vmatmul.f32.gmra.mxu0 %v9311
        %v9520 = vpop.f32.mrf.mxu0
        %v9521 = vadd.f32 %v9284, %v9520
        %9522 = vmatmul.f32.gmra.mxu0 %v9314
        %v9523 = vpop.f32.mrf.mxu0
        %v9524 = vadd.f32 %v9289, %v9523
        %9525 = vmatmul.f32.gmra.mxu0 %v9317
        %v9526 = vpop.f32.mrf.mxu0
        %v9527 = vadd.f32 %v9294, %v9526
        %9528 = vmatmul.f32.gmra.mxu0 %v9320
        %v9529 = vpop.f32.mrf.mxu0
        %v9530 = vadd.f32 %v9299, %v9529
        %9531 = vmatmul.f32.gmra.mxu0 %v9323
        %v9532 = vpop.f32.mrf.mxu0
        %v9533 = vadd.f32 %v9304, %v9532
        %9534 = vdwg.mxu0
        %9535 = vmatpush.msra.mxu0 0.0
        %9536 = vmatpush.msra.mxu0 0.0
        %9537 = vmatpush.msra.mxu0 0.0
        %9538 = vmatpush.msra.mxu0 0.0
        %9539 = vmatpush.msra.mxu0 0.0
        %9540 = vmatpush.msra.mxu0 0.0
        %9541 = vmatpush.msra.mxu0 0.0
        %9542 = vmatpush.msra.mxu0 0.0
        %9543 = vmatpush.msra.mxu0 0.0
        %9544 = vmatpush.msra.mxu0 0.0
        %9545 = vmatpush.msra.mxu0 0.0
        %9546 = vmatpush.msra.mxu0 0.0
        %9547 = vmatpush.msra.mxu0 0.0
        %9548 = vmatpush.msra.mxu0 0.0
        %9549 = vmatpush.msra.mxu0 %v8618
        %9550 = vmatpush.msra.mxu0 %v8602
        %9551 = vmatmul.f32.gmra.mxu0 %v9308
        %v9552 = vpop.f32.mrf.mxu0
        %v9553 = vadd.f32 %v9279, %v9552
        %9554 = vmatmul.f32.gmra.mxu0 %v9311
        %v9555 = vpop.f32.mrf.mxu0
        %v9556 = vadd.f32 %v9284, %v9555
        %9557 = vmatmul.f32.gmra.mxu0 %v9314
        %v9558 = vpop.f32.mrf.mxu0
        %v9559 = vadd.f32 %v9289, %v9558
        %9560 = vmatmul.f32.gmra.mxu0 %v9317
        %v9561 = vpop.f32.mrf.mxu0
        %v9562 = vadd.f32 %v9294, %v9561
        %9563 = vmatmul.f32.gmra.mxu0 %v9320
        %v9564 = vpop.f32.mrf.mxu0
        %v9565 = vadd.f32 %v9299, %v9564
        %9566 = vmatmul.f32.gmra.mxu0 %v9323
        %v9567 = vpop.f32.mrf.mxu0
        %v9568 = vadd.f32 %v9304, %v9567
        %9569 = vdwg.mxu0
        %9570 = vmatpush.msra.mxu0 0.0
        %9571 = vmatpush.msra.mxu0 0.0
        %9572 = vmatpush.msra.mxu0 0.0
        %9573 = vmatpush.msra.mxu0 0.0
        %9574 = vmatpush.msra.mxu0 0.0
        %9575 = vmatpush.msra.mxu0 0.0
        %9576 = vmatpush.msra.mxu0 0.0
        %9577 = vmatpush.msra.mxu0 0.0
        %9578 = vmatpush.msra.mxu0 0.0
        %9579 = vmatpush.msra.mxu0 0.0
        %9580 = vmatpush.msra.mxu0 0.0
        %9581 = vmatpush.msra.mxu0 0.0
        %9582 = vmatpush.msra.mxu0 0.0
        %9583 = vmatpush.msra.mxu0 0.0
        %9584 = vmatpush.msra.mxu0 %v8619
        %9585 = vmatpush.msra.mxu0 %v8603
        %9586 = vmatmul.f32.gmra.mxu0 %v9308
        %v9587 = vpop.f32.mrf.mxu0
        %v9588 = vadd.f32 %v9279, %v9587
        %9589 = vmatmul.f32.gmra.mxu0 %v9311
        %v9590 = vpop.f32.mrf.mxu0
        %v9591 = vadd.f32 %v9284, %v9590
        %9592 = vmatmul.f32.gmra.mxu0 %v9314
        %v9593 = vpop.f32.mrf.mxu0
        %v9594 = vadd.f32 %v9289, %v9593
        %9595 = vmatmul.f32.gmra.mxu0 %v9317
        %v9596 = vpop.f32.mrf.mxu0
        %v9597 = vadd.f32 %v9294, %v9596
        %9598 = vmatmul.f32.gmra.mxu0 %v9320
        %v9599 = vpop.f32.mrf.mxu0
        %v9600 = vadd.f32 %v9299, %v9599
        %9601 = vmatmul.f32.gmra.mxu0 %v9323
        %v9602 = vpop.f32.mrf.mxu0
        %v9603 = vadd.f32 %v9304, %v9602
        %9604 = vdwg.mxu0
        %9605 = vmatpush.msra.mxu0 0.0
        %9606 = vmatpush.msra.mxu0 0.0
        %9607 = vmatpush.msra.mxu0 0.0
        %9608 = vmatpush.msra.mxu0 0.0
        %9609 = vmatpush.msra.mxu0 0.0
        %9610 = vmatpush.msra.mxu0 0.0
        %9611 = vmatpush.msra.mxu0 0.0
        %9612 = vmatpush.msra.mxu0 0.0
        %9613 = vmatpush.msra.mxu0 0.0
        %9614 = vmatpush.msra.mxu0 0.0
        %9615 = vmatpush.msra.mxu0 0.0
        %9616 = vmatpush.msra.mxu0 0.0
        %9617 = vmatpush.msra.mxu0 0.0
        %9618 = vmatpush.msra.mxu0 0.0
        %9619 = vmatpush.msra.mxu0 %v8620
        %9620 = vmatpush.msra.mxu0 %v8604
        %9621 = vmatmul.f32.gmra.mxu0 %v9308
        %v9622 = vpop.f32.mrf.mxu0
        %v9623 = vadd.f32 %v9279, %v9622
        %9624 = vmatmul.f32.gmra.mxu0 %v9311
        %v9625 = vpop.f32.mrf.mxu0
        %v9626 = vadd.f32 %v9284, %v9625
        %9627 = vmatmul.f32.gmra.mxu0 %v9314
        %v9628 = vpop.f32.mrf.mxu0
        %v9629 = vadd.f32 %v9289, %v9628
        %9630 = vmatmul.f32.gmra.mxu0 %v9317
        %v9631 = vpop.f32.mrf.mxu0
        %v9632 = vadd.f32 %v9294, %v9631
        %9633 = vmatmul.f32.gmra.mxu0 %v9320
        %v9634 = vpop.f32.mrf.mxu0
        %v9635 = vadd.f32 %v9299, %v9634
        %9636 = vmatmul.f32.gmra.mxu0 %v9323
        %v9637 = vpop.f32.mrf.mxu0
        %v9638 = vadd.f32 %v9304, %v9637
        %9639 = vdwg.mxu0
        %9640 = vmatpush.msra.mxu0 0.0
        %9641 = vmatpush.msra.mxu0 0.0
        %9642 = vmatpush.msra.mxu0 0.0
        %9643 = vmatpush.msra.mxu0 0.0
        %9644 = vmatpush.msra.mxu0 0.0
        %9645 = vmatpush.msra.mxu0 0.0
        %9646 = vmatpush.msra.mxu0 0.0
        %9647 = vmatpush.msra.mxu0 0.0
        %9648 = vmatpush.msra.mxu0 0.0
        %9649 = vmatpush.msra.mxu0 0.0
        %9650 = vmatpush.msra.mxu0 0.0
        %9651 = vmatpush.msra.mxu0 0.0
        %9652 = vmatpush.msra.mxu0 0.0
        %9653 = vmatpush.msra.mxu0 0.0
        %9654 = vmatpush.msra.mxu0 %v8621
        %9655 = vmatpush.msra.mxu0 %v8605
        %9656 = vmatmul.f32.gmra.mxu0 %v9308
        %v9657 = vpop.f32.mrf.mxu0
        %v9658 = vadd.f32 %v9279, %v9657
        %9659 = vmatmul.f32.gmra.mxu0 %v9311
        %v9660 = vpop.f32.mrf.mxu0
        %v9661 = vadd.f32 %v9284, %v9660
        %9662 = vmatmul.f32.gmra.mxu0 %v9314
        %v9663 = vpop.f32.mrf.mxu0
        %v9664 = vadd.f32 %v9289, %v9663
        %9665 = vmatmul.f32.gmra.mxu0 %v9317
        %v9666 = vpop.f32.mrf.mxu0
        %v9667 = vadd.f32 %v9294, %v9666
        %9668 = vmatmul.f32.gmra.mxu0 %v9320
        %v9669 = vpop.f32.mrf.mxu0
        %v9670 = vadd.f32 %v9299, %v9669
        %9671 = vmatmul.f32.gmra.mxu0 %v9323
        %v9672 = vpop.f32.mrf.mxu0
        %v9673 = vadd.f32 %v9304, %v9672
        %9674 = vdwg.mxu0
        %9675 = vmatpush.msra.mxu0 0.0
        %9676 = vmatpush.msra.mxu0 0.0
        %9677 = vmatpush.msra.mxu0 0.0
        %9678 = vmatpush.msra.mxu0 0.0
        %9679 = vmatpush.msra.mxu0 0.0
        %9680 = vmatpush.msra.mxu0 0.0
        %9681 = vmatpush.msra.mxu0 0.0
        %9682 = vmatpush.msra.mxu0 0.0
        %9683 = vmatpush.msra.mxu0 0.0
        %9684 = vmatpush.msra.mxu0 0.0
        %9685 = vmatpush.msra.mxu0 0.0
        %9686 = vmatpush.msra.mxu0 0.0
        %9687 = vmatpush.msra.mxu0 0.0
        %9688 = vmatpush.msra.mxu0 0.0
        %9689 = vmatpush.msra.mxu0 %v8622
        %9690 = vmatpush.msra.mxu0 %v8606
        %9691 = vmatmul.f32.gmra.mxu0 %v9308
        %v9692 = vpop.f32.mrf.mxu0
        %v9693 = vadd.f32 %v9279, %v9692
        %9694 = vmatmul.f32.gmra.mxu0 %v9311
        %v9695 = vpop.f32.mrf.mxu0
        %v9696 = vadd.f32 %v9284, %v9695
        %9697 = vmatmul.f32.gmra.mxu0 %v9314
        %v9698 = vpop.f32.mrf.mxu0
        %v9699 = vadd.f32 %v9289, %v9698
        %9700 = vmatmul.f32.gmra.mxu0 %v9317
        %v9701 = vpop.f32.mrf.mxu0
        %v9702 = vadd.f32 %v9294, %v9701
        %9703 = vmatmul.f32.gmra.mxu0 %v9320
        %v9704 = vpop.f32.mrf.mxu0
        %v9705 = vadd.f32 %v9299, %v9704
        %9706 = vmatmul.f32.gmra.mxu0 %v9323
        %v9707 = vpop.f32.mrf.mxu0
        %v9708 = vadd.f32 %v9304, %v9707
        %9709 = vdwg.mxu0
        %9710 = vmatpush.msra.mxu0 0.0
        %9711 = vmatpush.msra.mxu0 0.0
        %9712 = vmatpush.msra.mxu0 0.0
        %9713 = vmatpush.msra.mxu0 0.0
        %9714 = vmatpush.msra.mxu0 0.0
        %9715 = vmatpush.msra.mxu0 0.0
        %9716 = vmatpush.msra.mxu0 0.0
        %9717 = vmatpush.msra.mxu0 0.0
        %9718 = vmatpush.msra.mxu0 0.0
        %9719 = vmatpush.msra.mxu0 0.0
        %9720 = vmatpush.msra.mxu0 0.0
        %9721 = vmatpush.msra.mxu0 0.0
        %9722 = vmatpush.msra.mxu0 0.0
        %9723 = vmatpush.msra.mxu0 0.0
        %9724 = vmatpush.msra.mxu0 %v8623
        %9725 = vmatpush.msra.mxu0 %v8607
        %9726 = vmatmul.f32.gmra.mxu0 %v9308
        %v9727 = vpop.f32.mrf.mxu0
        %v9728 = vadd.f32 %v9279, %v9727
        %9729 = vmatmul.f32.gmra.mxu0 %v9311
        %v9730 = vpop.f32.mrf.mxu0
        %v9731 = vadd.f32 %v9284, %v9730
        %9732 = vmatmul.f32.gmra.mxu0 %v9314
        %v9733 = vpop.f32.mrf.mxu0
        %v9734 = vadd.f32 %v9289, %v9733
        %9735 = vmatmul.f32.gmra.mxu0 %v9317
        %v9736 = vpop.f32.mrf.mxu0
        %v9737 = vadd.f32 %v9294, %v9736
        %9738 = vmatmul.f32.gmra.mxu0 %v9320
        %v9739 = vpop.f32.mrf.mxu0
        %v9740 = vadd.f32 %v9299, %v9739
        %9741 = vmatmul.f32.gmra.mxu0 %v9323
        %v9742 = vpop.f32.mrf.mxu0
        %v9743 = vadd.f32 %v9304, %v9742
        %9744 = vdwg.mxu0
        %9745 = vmatpush.msra.mxu0 0.0
        %9746 = vmatpush.msra.mxu0 0.0
        %9747 = vmatpush.msra.mxu0 0.0
        %9748 = vmatpush.msra.mxu0 0.0
        %9749 = vmatpush.msra.mxu0 0.0
        %9750 = vmatpush.msra.mxu0 0.0
        %9751 = vmatpush.msra.mxu0 0.0
        %9752 = vmatpush.msra.mxu0 0.0
        %9753 = vmatpush.msra.mxu0 0.0
        %9754 = vmatpush.msra.mxu0 0.0
        %9755 = vmatpush.msra.mxu0 0.0
        %9756 = vmatpush.msra.mxu0 0.0
        %9757 = vmatpush.msra.mxu0 0.0
        %9758 = vmatpush.msra.mxu0 0.0
        %9759 = vmatpush.msra.mxu0 %v8624
        %9760 = vmatpush.msra.mxu0 %v8608
        %9761 = vmatmul.f32.gmra.mxu0 %v9308
        %v9762 = vpop.f32.mrf.mxu0
        %v9763 = vadd.f32 %v9279, %v9762
        %9764 = vmatmul.f32.gmra.mxu0 %v9311
        %v9765 = vpop.f32.mrf.mxu0
        %v9766 = vadd.f32 %v9284, %v9765
        %9767 = vmatmul.f32.gmra.mxu0 %v9314
        %v9768 = vpop.f32.mrf.mxu0
        %v9769 = vadd.f32 %v9289, %v9768
        %9770 = vmatmul.f32.gmra.mxu0 %v9317
        %v9771 = vpop.f32.mrf.mxu0
        %v9772 = vadd.f32 %v9294, %v9771
        %9773 = vmatmul.f32.gmra.mxu0 %v9320
        %v9774 = vpop.f32.mrf.mxu0
        %v9775 = vadd.f32 %v9299, %v9774
        %9776 = vmatmul.f32.gmra.mxu0 %v9323
        %v9777 = vpop.f32.mrf.mxu0
        %v9778 = vadd.f32 %v9304, %v9777
        %9779 = vdwg.mxu0
        %9780 = vmatpush.msra.mxu0 0.0
        %9781 = vmatpush.msra.mxu0 0.0
        %9782 = vmatpush.msra.mxu0 0.0
        %9783 = vmatpush.msra.mxu0 0.0
        %9784 = vmatpush.msra.mxu0 0.0
        %9785 = vmatpush.msra.mxu0 0.0
        %9786 = vmatpush.msra.mxu0 0.0
        %9787 = vmatpush.msra.mxu0 0.0
        %9788 = vmatpush.msra.mxu0 0.0
        %9789 = vmatpush.msra.mxu0 0.0
        %9790 = vmatpush.msra.mxu0 0.0
        %9791 = vmatpush.msra.mxu0 0.0
        %9792 = vmatpush.msra.mxu0 0.0
        %9793 = vmatpush.msra.mxu0 0.0
        %9794 = vmatpush.msra.mxu0 %v8625
        %9795 = vmatpush.msra.mxu0 %v8609
        %9796 = vmatmul.f32.gmra.mxu0 %v9308
        %v9797 = vpop.f32.mrf.mxu0
        %v9798 = vadd.f32 %v9279, %v9797
        %9799 = vmatmul.f32.gmra.mxu0 %v9311
        %v9800 = vpop.f32.mrf.mxu0
        %v9801 = vadd.f32 %v9284, %v9800
        %9802 = vmatmul.f32.gmra.mxu0 %v9314
        %v9803 = vpop.f32.mrf.mxu0
        %v9804 = vadd.f32 %v9289, %v9803
        %9805 = vmatmul.f32.gmra.mxu0 %v9317
        %v9806 = vpop.f32.mrf.mxu0
        %v9807 = vadd.f32 %v9294, %v9806
        %9808 = vmatmul.f32.gmra.mxu0 %v9320
        %v9809 = vpop.f32.mrf.mxu0
        %v9810 = vadd.f32 %v9299, %v9809
        %9811 = vmatmul.f32.gmra.mxu0 %v9323
        %v9812 = vpop.f32.mrf.mxu0
        %v9813 = vadd.f32 %v9304, %v9812
        %9814 = vdwg.mxu0
        %9815 = vmatpush.msra.mxu0 0.0
        %9816 = vmatpush.msra.mxu0 0.0
        %9817 = vmatpush.msra.mxu0 0.0
        %9818 = vmatpush.msra.mxu0 0.0
        %9819 = vmatpush.msra.mxu0 0.0
        %9820 = vmatpush.msra.mxu0 0.0
        %9821 = vmatpush.msra.mxu0 0.0
        %9822 = vmatpush.msra.mxu0 0.0
        %9823 = vmatpush.msra.mxu0 0.0
        %9824 = vmatpush.msra.mxu0 0.0
        %9825 = vmatpush.msra.mxu0 0.0
        %9826 = vmatpush.msra.mxu0 0.0
        %9827 = vmatpush.msra.mxu0 0.0
        %9828 = vmatpush.msra.mxu0 0.0
        %9829 = vmatpush.msra.mxu0 %v8626
        %9830 = vmatpush.msra.mxu0 %v8610
        %9831 = vmatmul.f32.gmra.mxu0 %v9308
        %v9832 = vpop.f32.mrf.mxu0
        %v9833 = vadd.f32 %v9279, %v9832
        %9834 = vmatmul.f32.gmra.mxu0 %v9311
        %v9835 = vpop.f32.mrf.mxu0
        %v9836 = vadd.f32 %v9284, %v9835
        %9837 = vmatmul.f32.gmra.mxu0 %v9314
        %v9838 = vpop.f32.mrf.mxu0
        %v9839 = vadd.f32 %v9289, %v9838
        %9840 = vmatmul.f32.gmra.mxu0 %v9317
        %v9841 = vpop.f32.mrf.mxu0
        %v9842 = vadd.f32 %v9294, %v9841
        %9843 = vmatmul.f32.gmra.mxu0 %v9320
        %v9844 = vpop.f32.mrf.mxu0
        %v9845 = vadd.f32 %v9299, %v9844
        %9846 = vmatmul.f32.gmra.mxu0 %v9323
        %v9847 = vpop.f32.mrf.mxu0
        %v9848 = vadd.f32 %v9304, %v9847
        %9849 = vdwg.mxu0
        %9850 = vmatpush.msra.mxu0 0.0
        %9851 = vmatpush.msra.mxu0 0.0
        %9852 = vmatpush.msra.mxu0 0.0
        %9853 = vmatpush.msra.mxu0 0.0
        %9854 = vmatpush.msra.mxu0 0.0
        %9855 = vmatpush.msra.mxu0 0.0
        %9856 = vmatpush.msra.mxu0 0.0
        %9857 = vmatpush.msra.mxu0 0.0
        %9858 = vmatpush.msra.mxu0 0.0
        %9859 = vmatpush.msra.mxu0 0.0
        %9860 = vmatpush.msra.mxu0 0.0
        %9861 = vmatpush.msra.mxu0 0.0
        %9862 = vmatpush.msra.mxu0 0.0
        %9863 = vmatpush.msra.mxu0 0.0
        %9864 = vmatpush.msra.mxu0 %v8627
        %9865 = vmatpush.msra.mxu0 %v8611
        %9866 = vmatmul.f32.gmra.mxu0 %v9308
        %v9867 = vpop.f32.mrf.mxu0
        %v9868 = vadd.f32 %v9279, %v9867
        %9869 = vmatmul.f32.gmra.mxu0 %v9311
        %v9870 = vpop.f32.mrf.mxu0
        %v9871 = vadd.f32 %v9284, %v9870
        %9872 = vmatmul.f32.gmra.mxu0 %v9314
        %v9873 = vpop.f32.mrf.mxu0
        %v9874 = vadd.f32 %v9289, %v9873
        %9875 = vmatmul.f32.gmra.mxu0 %v9317
        %v9876 = vpop.f32.mrf.mxu0
        %v9877 = vadd.f32 %v9294, %v9876
        %9878 = vmatmul.f32.gmra.mxu0 %v9320
        %v9879 = vpop.f32.mrf.mxu0
        %v9880 = vadd.f32 %v9299, %v9879
        %9881 = vmatmul.f32.gmra.mxu0 %v9323
        %v9882 = vpop.f32.mrf.mxu0
        %v9883 = vadd.f32 %v9304, %v9882
        %9884 = vdwg.mxu0
        %v9885 = vmul.f32 %v8722, %v9343
        %v9886 = vmul.f32 %v8757, %v9378
        %v9887 = vmul.f32 %v8792, %v9413
        %v9888 = vmul.f32 %v8827, %v9448
        %v9889 = vmul.f32 %v8862, %v9483
        %v9890 = vmul.f32 %v8897, %v9518
        %v9891 = vmul.f32 %v8932, %v9553
        %v9892 = vmul.f32 %v8967, %v9588
        %v9893 = vmul.f32 %v9002, %v9623
        %v9894 = vmul.f32 %v9037, %v9658
        %v9895 = vmul.f32 %v9072, %v9693
        %v9896 = vmul.f32 %v9107, %v9728
        %v9897 = vmul.f32 %v9142, %v9763
        %v9898 = vmul.f32 %v9177, %v9798
        %v9899 = vmul.f32 %v9212, %v9833
        %v9900 = vmul.f32 %v9247, %v9868
        %v9901 = vmul.f32 %v8725, %v9346
        %v9902 = vmul.f32 %v8760, %v9381
        %v9903 = vmul.f32 %v8795, %v9416
        %v9904 = vmul.f32 %v8830, %v9451
        %v9905 = vmul.f32 %v8865, %v9486
        %v9906 = vmul.f32 %v8900, %v9521
        %v9907 = vmul.f32 %v8935, %v9556
        %v9908 = vmul.f32 %v8970, %v9591
        %v9909 = vmul.f32 %v9005, %v9626
        %v9910 = vmul.f32 %v9040, %v9661
        %v9911 = vmul.f32 %v9075, %v9696
        %v9912 = vmul.f32 %v9110, %v9731
        %v9913 = vmul.f32 %v9145, %v9766
        %v9914 = vmul.f32 %v9180, %v9801
        %v9915 = vmul.f32 %v9215, %v9836
        %v9916 = vmul.f32 %v9250, %v9871
        %v9917 = vadd.f32 %v8728, %v9349
        %v9918 = vadd.f32 %v8763, %v9384
        %v9919 = vadd.f32 %v8798, %v9419
        %v9920 = vadd.f32 %v8833, %v9454
        %v9921 = vadd.f32 %v8868, %v9489
        %v9922 = vadd.f32 %v8903, %v9524
        %v9923 = vadd.f32 %v8938, %v9559
        %v9924 = vadd.f32 %v8973, %v9594
        %v9925 = vadd.f32 %v9008, %v9629
        %v9926 = vadd.f32 %v9043, %v9664
        %v9927 = vadd.f32 %v9078, %v9699
        %v9928 = vadd.f32 %v9113, %v9734
        %v9929 = vadd.f32 %v9148, %v9769
        %v9930 = vadd.f32 %v9183, %v9804
        %v9931 = vadd.f32 %v9218, %v9839
        %v9932 = vadd.f32 %v9253, %v9874
        %v9933 = vadd.f32 %v8731, %v9352
        %v9934 = vadd.f32 %v8766, %v9387
        %v9935 = vadd.f32 %v8801, %v9422
        %v9936 = vadd.f32 %v8836, %v9457
        %v9937 = vadd.f32 %v8871, %v9492
        %v9938 = vadd.f32 %v8906, %v9527
        %v9939 = vadd.f32 %v8941, %v9562
        %v9940 = vadd.f32 %v8976, %v9597
        %v9941 = vadd.f32 %v9011, %v9632
        %v9942 = vadd.f32 %v9046, %v9667
        %v9943 = vadd.f32 %v9081, %v9702
        %v9944 = vadd.f32 %v9116, %v9737
        %v9945 = vadd.f32 %v9151, %v9772
        %v9946 = vadd.f32 %v9186, %v9807
        %v9947 = vadd.f32 %v9221, %v9842
        %v9948 = vadd.f32 %v9256, %v9877
        %v9949 = vadd.f32 %v8734, %v9355
        %v9950 = vadd.f32 %v8769, %v9390
        %v9951 = vadd.f32 %v8804, %v9425
        %v9952 = vadd.f32 %v8839, %v9460
        %v9953 = vadd.f32 %v8874, %v9495
        %v9954 = vadd.f32 %v8909, %v9530
        %v9955 = vadd.f32 %v8944, %v9565
        %v9956 = vadd.f32 %v8979, %v9600
        %v9957 = vadd.f32 %v9014, %v9635
        %v9958 = vadd.f32 %v9049, %v9670
        %v9959 = vadd.f32 %v9084, %v9705
        %v9960 = vadd.f32 %v9119, %v9740
        %v9961 = vadd.f32 %v9154, %v9775
        %v9962 = vadd.f32 %v9189, %v9810
        %v9963 = vadd.f32 %v9224, %v9845
        %v9964 = vadd.f32 %v9259, %v9880
        %v9965 = vadd.f32 %v8737, %v9358
        %v9966 = vadd.f32 %v8772, %v9393
        %v9967 = vadd.f32 %v8807, %v9428
        %v9968 = vadd.f32 %v8842, %v9463
        %v9969 = vadd.f32 %v8877, %v9498
        %v9970 = vadd.f32 %v8912, %v9533
        %v9971 = vadd.f32 %v8947, %v9568
        %v9972 = vadd.f32 %v8982, %v9603
        %v9973 = vadd.f32 %v9017, %v9638
        %v9974 = vadd.f32 %v9052, %v9673
        %v9975 = vadd.f32 %v9087, %v9708
        %v9976 = vadd.f32 %v9122, %v9743
        %v9977 = vadd.f32 %v9157, %v9778
        %v9978 = vadd.f32 %v9192, %v9813
        %v9979 = vadd.f32 %v9227, %v9848
        %v9980 = vadd.f32 %v9262, %v9883
        %v9981 = vld [vmem:[%s13] sm:$0xff]
        %v9982 = vld [vmem:[%s13 + $0x8] sm:$0xff]
        %v9983 = vld [vmem:[%s13 + $0x10] sm:$0xff]
        %v9984 = vld [vmem:[%s13 + $0x18] sm:$0xff]
        %v9986 = vsel %vm9306, %v9981, 0
        %v9989 = vsel %vm9306, %v9982, 0
        %v9992 = vsel %vm9306, %v9983, 0
        %v9995 = vsel %vm9306, %v9984, 0
        %9997 = vmatpush.msra.mxu0 0.0
        %9998 = vmatpush.msra.mxu0 0.0
        %9999 = vmatpush.msra.mxu0 0.0
        %10000 = vmatpush.msra.mxu0 0.0
        %10001 = vmatpush.msra.mxu0 0.0
        %10002 = vmatpush.msra.mxu0 0.0
        %10003 = vmatpush.msra.mxu0 0.0
        %10004 = vmatpush.msra.mxu0 0.0
        %10005 = vmatpush.msra.mxu0 0.0
        %10006 = vmatpush.msra.mxu0 0.0
        %10007 = vmatpush.msra.mxu0 0.0
        %10008 = vmatpush.msra.mxu0 0.0
        %10009 = vmatpush.msra.mxu0 0.0
        %10010 = vmatpush.msra.mxu0 0.0
        %10011 = vmatpush.msra.mxu0 %v9901
        %10012 = vmatpush.msra.mxu0 %v9885
        %10013 = vmatmul.f32.gmra.mxu0 %v9986
        %v10014 = vpop.f32.mrf.mxu0
        %v10015 = vadd.f32 0.0, %v10014
        %10016 = vmatmul.f32.gmra.mxu0 %v9989
        %v10017 = vpop.f32.mrf.mxu0
        %v10018 = vadd.f32 0.0, %v10017
        %10019 = vmatmul.f32.gmra.mxu0 %v9992
        %v10020 = vpop.f32.mrf.mxu0
        %v10021 = vadd.f32 0.0, %v10020
        %10022 = vmatmul.f32.gmra.mxu0 %v9995
        %v10023 = vpop.f32.mrf.mxu0
        %v10024 = vadd.f32 0.0, %v10023
        %10025 = vdwg.mxu0
        %10026 = vmatpush.msra.mxu0 0.0
        %10027 = vmatpush.msra.mxu0 0.0
        %10028 = vmatpush.msra.mxu0 0.0
        %10029 = vmatpush.msra.mxu0 0.0
        %10030 = vmatpush.msra.mxu0 0.0
        %10031 = vmatpush.msra.mxu0 0.0
        %10032 = vmatpush.msra.mxu0 0.0
        %10033 = vmatpush.msra.mxu0 0.0
        %10034 = vmatpush.msra.mxu0 0.0
        %10035 = vmatpush.msra.mxu0 0.0
        %10036 = vmatpush.msra.mxu0 0.0
        %10037 = vmatpush.msra.mxu0 0.0
        %10038 = vmatpush.msra.mxu0 0.0
        %10039 = vmatpush.msra.mxu0 0.0
        %10040 = vmatpush.msra.mxu0 %v9902
        %10041 = vmatpush.msra.mxu0 %v9886
        %10042 = vmatmul.f32.gmra.mxu0 %v9986
        %v10043 = vpop.f32.mrf.mxu0
        %v10044 = vadd.f32 0.0, %v10043
        %10045 = vmatmul.f32.gmra.mxu0 %v9989
        %v10046 = vpop.f32.mrf.mxu0
        %v10047 = vadd.f32 0.0, %v10046
        %10048 = vmatmul.f32.gmra.mxu0 %v9992
        %v10049 = vpop.f32.mrf.mxu0
        %v10050 = vadd.f32 0.0, %v10049
        %10051 = vmatmul.f32.gmra.mxu0 %v9995
        %v10052 = vpop.f32.mrf.mxu0
        %v10053 = vadd.f32 0.0, %v10052
        %10054 = vdwg.mxu0
        %10055 = vmatpush.msra.mxu0 0.0
        %10056 = vmatpush.msra.mxu0 0.0
        %10057 = vmatpush.msra.mxu0 0.0
        %10058 = vmatpush.msra.mxu0 0.0
        %10059 = vmatpush.msra.mxu0 0.0
        %10060 = vmatpush.msra.mxu0 0.0
        %10061 = vmatpush.msra.mxu0 0.0
        %10062 = vmatpush.msra.mxu0 0.0
        %10063 = vmatpush.msra.mxu0 0.0
        %10064 = vmatpush.msra.mxu0 0.0
        %10065 = vmatpush.msra.mxu0 0.0
        %10066 = vmatpush.msra.mxu0 0.0
        %10067 = vmatpush.msra.mxu0 0.0
        %10068 = vmatpush.msra.mxu0 0.0
        %10069 = vmatpush.msra.mxu0 %v9903
        %10070 = vmatpush.msra.mxu0 %v9887
        %10071 = vmatmul.f32.gmra.mxu0 %v9986
        %v10072 = vpop.f32.mrf.mxu0
        %v10073 = vadd.f32 0.0, %v10072
        %10074 = vmatmul.f32.gmra.mxu0 %v9989
        %v10075 = vpop.f32.mrf.mxu0
        %v10076 = vadd.f32 0.0, %v10075
        %10077 = vmatmul.f32.gmra.mxu0 %v9992
        %v10078 = vpop.f32.mrf.mxu0
        %v10079 = vadd.f32 0.0, %v10078
        %10080 = vmatmul.f32.gmra.mxu0 %v9995
        %v10081 = vpop.f32.mrf.mxu0
        %v10082 = vadd.f32 0.0, %v10081
        %10083 = vdwg.mxu0
        %10084 = vmatpush.msra.mxu0 0.0
        %10085 = vmatpush.msra.mxu0 0.0
        %10086 = vmatpush.msra.mxu0 0.0
        %10087 = vmatpush.msra.mxu0 0.0
        %10088 = vmatpush.msra.mxu0 0.0
        %10089 = vmatpush.msra.mxu0 0.0
        %10090 = vmatpush.msra.mxu0 0.0
        %10091 = vmatpush.msra.mxu0 0.0
        %10092 = vmatpush.msra.mxu0 0.0
        %10093 = vmatpush.msra.mxu0 0.0
        %10094 = vmatpush.msra.mxu0 0.0
        %10095 = vmatpush.msra.mxu0 0.0
        %10096 = vmatpush.msra.mxu0 0.0
        %10097 = vmatpush.msra.mxu0 0.0
        %10098 = vmatpush.msra.mxu0 %v9904
        %10099 = vmatpush.msra.mxu0 %v9888
        %10100 = vmatmul.f32.gmra.mxu0 %v9986
        %v10101 = vpop.f32.mrf.mxu0
        %v10102 = vadd.f32 0.0, %v10101
        %10103 = vmatmul.f32.gmra.mxu0 %v9989
        %v10104 = vpop.f32.mrf.mxu0
        %v10105 = vadd.f32 0.0, %v10104
        %10106 = vmatmul.f32.gmra.mxu0 %v9992
        %v10107 = vpop.f32.mrf.mxu0
        %v10108 = vadd.f32 0.0, %v10107
        %10109 = vmatmul.f32.gmra.mxu0 %v9995
        %v10110 = vpop.f32.mrf.mxu0
        %v10111 = vadd.f32 0.0, %v10110
        %10112 = vdwg.mxu0
        %10113 = vmatpush.msra.mxu0 0.0
        %10114 = vmatpush.msra.mxu0 0.0
        %10115 = vmatpush.msra.mxu0 0.0
        %10116 = vmatpush.msra.mxu0 0.0
        %10117 = vmatpush.msra.mxu0 0.0
        %10118 = vmatpush.msra.mxu0 0.0
        %10119 = vmatpush.msra.mxu0 0.0
        %10120 = vmatpush.msra.mxu0 0.0
        %10121 = vmatpush.msra.mxu0 0.0
        %10122 = vmatpush.msra.mxu0 0.0
        %10123 = vmatpush.msra.mxu0 0.0
        %10124 = vmatpush.msra.mxu0 0.0
        %10125 = vmatpush.msra.mxu0 0.0
        %10126 = vmatpush.msra.mxu0 0.0
        %10127 = vmatpush.msra.mxu0 %v9905
        %10128 = vmatpush.msra.mxu0 %v9889
        %10129 = vmatmul.f32.gmra.mxu0 %v9986
        %v10130 = vpop.f32.mrf.mxu0
        %v10131 = vadd.f32 0.0, %v10130
        %10132 = vmatmul.f32.gmra.mxu0 %v9989
        %v10133 = vpop.f32.mrf.mxu0
        %v10134 = vadd.f32 0.0, %v10133
        %10135 = vmatmul.f32.gmra.mxu0 %v9992
        %v10136 = vpop.f32.mrf.mxu0
        %v10137 = vadd.f32 0.0, %v10136
        %10138 = vmatmul.f32.gmra.mxu0 %v9995
        %v10139 = vpop.f32.mrf.mxu0
        %v10140 = vadd.f32 0.0, %v10139
        %10141 = vdwg.mxu0
        %10142 = vmatpush.msra.mxu0 0.0
        %10143 = vmatpush.msra.mxu0 0.0
        %10144 = vmatpush.msra.mxu0 0.0
        %10145 = vmatpush.msra.mxu0 0.0
        %10146 = vmatpush.msra.mxu0 0.0
        %10147 = vmatpush.msra.mxu0 0.0
        %10148 = vmatpush.msra.mxu0 0.0
        %10149 = vmatpush.msra.mxu0 0.0
        %10150 = vmatpush.msra.mxu0 0.0
        %10151 = vmatpush.msra.mxu0 0.0
        %10152 = vmatpush.msra.mxu0 0.0
        %10153 = vmatpush.msra.mxu0 0.0
        %10154 = vmatpush.msra.mxu0 0.0
        %10155 = vmatpush.msra.mxu0 0.0
        %10156 = vmatpush.msra.mxu0 %v9906
        %10157 = vmatpush.msra.mxu0 %v9890
        %10158 = vmatmul.f32.gmra.mxu0 %v9986
        %v10159 = vpop.f32.mrf.mxu0
        %v10160 = vadd.f32 0.0, %v10159
        %10161 = vmatmul.f32.gmra.mxu0 %v9989
        %v10162 = vpop.f32.mrf.mxu0
        %v10163 = vadd.f32 0.0, %v10162
        %10164 = vmatmul.f32.gmra.mxu0 %v9992
        %v10165 = vpop.f32.mrf.mxu0
        %v10166 = vadd.f32 0.0, %v10165
        %10167 = vmatmul.f32.gmra.mxu0 %v9995
        %v10168 = vpop.f32.mrf.mxu0
        %v10169 = vadd.f32 0.0, %v10168
        %10170 = vdwg.mxu0
        %10171 = vmatpush.msra.mxu0 0.0
        %10172 = vmatpush.msra.mxu0 0.0
        %10173 = vmatpush.msra.mxu0 0.0
        %10174 = vmatpush.msra.mxu0 0.0
        %10175 = vmatpush.msra.mxu0 0.0
        %10176 = vmatpush.msra.mxu0 0.0
        %10177 = vmatpush.msra.mxu0 0.0
        %10178 = vmatpush.msra.mxu0 0.0
        %10179 = vmatpush.msra.mxu0 0.0
        %10180 = vmatpush.msra.mxu0 0.0
        %10181 = vmatpush.msra.mxu0 0.0
        %10182 = vmatpush.msra.mxu0 0.0
        %10183 = vmatpush.msra.mxu0 0.0
        %10184 = vmatpush.msra.mxu0 0.0
        %10185 = vmatpush.msra.mxu0 %v9907
        %10186 = vmatpush.msra.mxu0 %v9891
        %10187 = vmatmul.f32.gmra.mxu0 %v9986
        %v10188 = vpop.f32.mrf.mxu0
        %v10189 = vadd.f32 0.0, %v10188
        %10190 = vmatmul.f32.gmra.mxu0 %v9989
        %v10191 = vpop.f32.mrf.mxu0
        %v10192 = vadd.f32 0.0, %v10191
        %10193 = vmatmul.f32.gmra.mxu0 %v9992
        %v10194 = vpop.f32.mrf.mxu0
        %v10195 = vadd.f32 0.0, %v10194
        %10196 = vmatmul.f32.gmra.mxu0 %v9995
        %v10197 = vpop.f32.mrf.mxu0
        %v10198 = vadd.f32 0.0, %v10197
        %10199 = vdwg.mxu0
        %10200 = vmatpush.msra.mxu0 0.0
        %10201 = vmatpush.msra.mxu0 0.0
        %10202 = vmatpush.msra.mxu0 0.0
        %10203 = vmatpush.msra.mxu0 0.0
        %10204 = vmatpush.msra.mxu0 0.0
        %10205 = vmatpush.msra.mxu0 0.0
        %10206 = vmatpush.msra.mxu0 0.0
        %10207 = vmatpush.msra.mxu0 0.0
        %10208 = vmatpush.msra.mxu0 0.0
        %10209 = vmatpush.msra.mxu0 0.0
        %10210 = vmatpush.msra.mxu0 0.0
        %10211 = vmatpush.msra.mxu0 0.0
        %10212 = vmatpush.msra.mxu0 0.0
        %10213 = vmatpush.msra.mxu0 0.0
        %10214 = vmatpush.msra.mxu0 %v9908
        %10215 = vmatpush.msra.mxu0 %v9892
        %10216 = vmatmul.f32.gmra.mxu0 %v9986
        %v10217 = vpop.f32.mrf.mxu0
        %v10218 = vadd.f32 0.0, %v10217
        %10219 = vmatmul.f32.gmra.mxu0 %v9989
        %v10220 = vpop.f32.mrf.mxu0
        %v10221 = vadd.f32 0.0, %v10220
        %10222 = vmatmul.f32.gmra.mxu0 %v9992
        %v10223 = vpop.f32.mrf.mxu0
        %v10224 = vadd.f32 0.0, %v10223
        %10225 = vmatmul.f32.gmra.mxu0 %v9995
        %v10226 = vpop.f32.mrf.mxu0
        %v10227 = vadd.f32 0.0, %v10226
        %10228 = vdwg.mxu0
        %10229 = vmatpush.msra.mxu0 0.0
        %10230 = vmatpush.msra.mxu0 0.0
        %10231 = vmatpush.msra.mxu0 0.0
        %10232 = vmatpush.msra.mxu0 0.0
        %10233 = vmatpush.msra.mxu0 0.0
        %10234 = vmatpush.msra.mxu0 0.0
        %10235 = vmatpush.msra.mxu0 0.0
        %10236 = vmatpush.msra.mxu0 0.0
        %10237 = vmatpush.msra.mxu0 0.0
        %10238 = vmatpush.msra.mxu0 0.0
        %10239 = vmatpush.msra.mxu0 0.0
        %10240 = vmatpush.msra.mxu0 0.0
        %10241 = vmatpush.msra.mxu0 0.0
        %10242 = vmatpush.msra.mxu0 0.0
        %10243 = vmatpush.msra.mxu0 %v9909
        %10244 = vmatpush.msra.mxu0 %v9893
        %10245 = vmatmul.f32.gmra.mxu0 %v9986
        %v10246 = vpop.f32.mrf.mxu0
        %v10247 = vadd.f32 0.0, %v10246
        %10248 = vmatmul.f32.gmra.mxu0 %v9989
        %v10249 = vpop.f32.mrf.mxu0
        %v10250 = vadd.f32 0.0, %v10249
        %10251 = vmatmul.f32.gmra.mxu0 %v9992
        %v10252 = vpop.f32.mrf.mxu0
        %v10253 = vadd.f32 0.0, %v10252
        %10254 = vmatmul.f32.gmra.mxu0 %v9995
        %v10255 = vpop.f32.mrf.mxu0
        %v10256 = vadd.f32 0.0, %v10255
        %10257 = vdwg.mxu0
        %10258 = vmatpush.msra.mxu0 0.0
        %10259 = vmatpush.msra.mxu0 0.0
        %10260 = vmatpush.msra.mxu0 0.0
        %10261 = vmatpush.msra.mxu0 0.0
        %10262 = vmatpush.msra.mxu0 0.0
        %10263 = vmatpush.msra.mxu0 0.0
        %10264 = vmatpush.msra.mxu0 0.0
        %10265 = vmatpush.msra.mxu0 0.0
        %10266 = vmatpush.msra.mxu0 0.0
        %10267 = vmatpush.msra.mxu0 0.0
        %10268 = vmatpush.msra.mxu0 0.0
        %10269 = vmatpush.msra.mxu0 0.0
        %10270 = vmatpush.msra.mxu0 0.0
        %10271 = vmatpush.msra.mxu0 0.0
        %10272 = vmatpush.msra.mxu0 %v9910
        %10273 = vmatpush.msra.mxu0 %v9894
        %10274 = vmatmul.f32.gmra.mxu0 %v9986
        %v10275 = vpop.f32.mrf.mxu0
        %v10276 = vadd.f32 0.0, %v10275
        %10277 = vmatmul.f32.gmra.mxu0 %v9989
        %v10278 = vpop.f32.mrf.mxu0
        %v10279 = vadd.f32 0.0, %v10278
        %10280 = vmatmul.f32.gmra.mxu0 %v9992
        %v10281 = vpop.f32.mrf.mxu0
        %v10282 = vadd.f32 0.0, %v10281
        %10283 = vmatmul.f32.gmra.mxu0 %v9995
        %v10284 = vpop.f32.mrf.mxu0
        %v10285 = vadd.f32 0.0, %v10284
        %10286 = vdwg.mxu0
        %10287 = vmatpush.msra.mxu0 0.0
        %10288 = vmatpush.msra.mxu0 0.0
        %10289 = vmatpush.msra.mxu0 0.0
        %10290 = vmatpush.msra.mxu0 0.0
        %10291 = vmatpush.msra.mxu0 0.0
        %10292 = vmatpush.msra.mxu0 0.0
        %10293 = vmatpush.msra.mxu0 0.0
        %10294 = vmatpush.msra.mxu0 0.0
        %10295 = vmatpush.msra.mxu0 0.0
        %10296 = vmatpush.msra.mxu0 0.0
        %10297 = vmatpush.msra.mxu0 0.0
        %10298 = vmatpush.msra.mxu0 0.0
        %10299 = vmatpush.msra.mxu0 0.0
        %10300 = vmatpush.msra.mxu0 0.0
        %10301 = vmatpush.msra.mxu0 %v9911
        %10302 = vmatpush.msra.mxu0 %v9895
        %10303 = vmatmul.f32.gmra.mxu0 %v9986
        %v10304 = vpop.f32.mrf.mxu0
        %v10305 = vadd.f32 0.0, %v10304
        %10306 = vmatmul.f32.gmra.mxu0 %v9989
        %v10307 = vpop.f32.mrf.mxu0
        %v10308 = vadd.f32 0.0, %v10307
        %10309 = vmatmul.f32.gmra.mxu0 %v9992
        %v10310 = vpop.f32.mrf.mxu0
        %v10311 = vadd.f32 0.0, %v10310
        %10312 = vmatmul.f32.gmra.mxu0 %v9995
        %v10313 = vpop.f32.mrf.mxu0
        %v10314 = vadd.f32 0.0, %v10313
        %10315 = vdwg.mxu0
        %10316 = vmatpush.msra.mxu0 0.0
        %10317 = vmatpush.msra.mxu0 0.0
        %10318 = vmatpush.msra.mxu0 0.0
        %10319 = vmatpush.msra.mxu0 0.0
        %10320 = vmatpush.msra.mxu0 0.0
        %10321 = vmatpush.msra.mxu0 0.0
        %10322 = vmatpush.msra.mxu0 0.0
        %10323 = vmatpush.msra.mxu0 0.0
        %10324 = vmatpush.msra.mxu0 0.0
        %10325 = vmatpush.msra.mxu0 0.0
        %10326 = vmatpush.msra.mxu0 0.0
        %10327 = vmatpush.msra.mxu0 0.0
        %10328 = vmatpush.msra.mxu0 0.0
        %10329 = vmatpush.msra.mxu0 0.0
        %10330 = vmatpush.msra.mxu0 %v9912
        %10331 = vmatpush.msra.mxu0 %v9896
        %10332 = vmatmul.f32.gmra.mxu0 %v9986
        %v10333 = vpop.f32.mrf.mxu0
        %v10334 = vadd.f32 0.0, %v10333
        %10335 = vmatmul.f32.gmra.mxu0 %v9989
        %v10336 = vpop.f32.mrf.mxu0
        %v10337 = vadd.f32 0.0, %v10336
        %10338 = vmatmul.f32.gmra.mxu0 %v9992
        %v10339 = vpop.f32.mrf.mxu0
        %v10340 = vadd.f32 0.0, %v10339
        %10341 = vmatmul.f32.gmra.mxu0 %v9995
        %v10342 = vpop.f32.mrf.mxu0
        %v10343 = vadd.f32 0.0, %v10342
        %10344 = vdwg.mxu0
        %10345 = vmatpush.msra.mxu0 0.0
        %10346 = vmatpush.msra.mxu0 0.0
        %10347 = vmatpush.msra.mxu0 0.0
        %10348 = vmatpush.msra.mxu0 0.0
        %10349 = vmatpush.msra.mxu0 0.0
        %10350 = vmatpush.msra.mxu0 0.0
        %10351 = vmatpush.msra.mxu0 0.0
        %10352 = vmatpush.msra.mxu0 0.0
        %10353 = vmatpush.msra.mxu0 0.0
        %10354 = vmatpush.msra.mxu0 0.0
        %10355 = vmatpush.msra.mxu0 0.0
        %10356 = vmatpush.msra.mxu0 0.0
        %10357 = vmatpush.msra.mxu0 0.0
        %10358 = vmatpush.msra.mxu0 0.0
        %10359 = vmatpush.msra.mxu0 %v9913
        %10360 = vmatpush.msra.mxu0 %v9897
        %10361 = vmatmul.f32.gmra.mxu0 %v9986
        %v10362 = vpop.f32.mrf.mxu0
        %v10363 = vadd.f32 0.0, %v10362
        %10364 = vmatmul.f32.gmra.mxu0 %v9989
        %v10365 = vpop.f32.mrf.mxu0
        %v10366 = vadd.f32 0.0, %v10365
        %10367 = vmatmul.f32.gmra.mxu0 %v9992
        %v10368 = vpop.f32.mrf.mxu0
        %v10369 = vadd.f32 0.0, %v10368
        %10370 = vmatmul.f32.gmra.mxu0 %v9995
        %v10371 = vpop.f32.mrf.mxu0
        %v10372 = vadd.f32 0.0, %v10371
        %10373 = vdwg.mxu0
        %10374 = vmatpush.msra.mxu0 0.0
        %10375 = vmatpush.msra.mxu0 0.0
        %10376 = vmatpush.msra.mxu0 0.0
        %10377 = vmatpush.msra.mxu0 0.0
        %10378 = vmatpush.msra.mxu0 0.0
        %10379 = vmatpush.msra.mxu0 0.0
        %10380 = vmatpush.msra.mxu0 0.0
        %10381 = vmatpush.msra.mxu0 0.0
        %10382 = vmatpush.msra.mxu0 0.0
        %10383 = vmatpush.msra.mxu0 0.0
        %10384 = vmatpush.msra.mxu0 0.0
        %10385 = vmatpush.msra.mxu0 0.0
        %10386 = vmatpush.msra.mxu0 0.0
        %10387 = vmatpush.msra.mxu0 0.0
        %10388 = vmatpush.msra.mxu0 %v9914
        %10389 = vmatpush.msra.mxu0 %v9898
        %10390 = vmatmul.f32.gmra.mxu0 %v9986
        %v10391 = vpop.f32.mrf.mxu0
        %v10392 = vadd.f32 0.0, %v10391
        %10393 = vmatmul.f32.gmra.mxu0 %v9989
        %v10394 = vpop.f32.mrf.mxu0
        %v10395 = vadd.f32 0.0, %v10394
        %10396 = vmatmul.f32.gmra.mxu0 %v9992
        %v10397 = vpop.f32.mrf.mxu0
        %v10398 = vadd.f32 0.0, %v10397
        %10399 = vmatmul.f32.gmra.mxu0 %v9995
        %v10400 = vpop.f32.mrf.mxu0
        %v10401 = vadd.f32 0.0, %v10400
        %10402 = vdwg.mxu0
        %10403 = vmatpush.msra.mxu0 0.0
        %10404 = vmatpush.msra.mxu0 0.0
        %10405 = vmatpush.msra.mxu0 0.0
        %10406 = vmatpush.msra.mxu0 0.0
        %10407 = vmatpush.msra.mxu0 0.0
        %10408 = vmatpush.msra.mxu0 0.0
        %10409 = vmatpush.msra.mxu0 0.0
        %10410 = vmatpush.msra.mxu0 0.0
        %10411 = vmatpush.msra.mxu0 0.0
        %10412 = vmatpush.msra.mxu0 0.0
        %10413 = vmatpush.msra.mxu0 0.0
        %10414 = vmatpush.msra.mxu0 0.0
        %10415 = vmatpush.msra.mxu0 0.0
        %10416 = vmatpush.msra.mxu0 0.0
        %10417 = vmatpush.msra.mxu0 %v9915
        %10418 = vmatpush.msra.mxu0 %v9899
        %10419 = vmatmul.f32.gmra.mxu0 %v9986
        %v10420 = vpop.f32.mrf.mxu0
        %v10421 = vadd.f32 0.0, %v10420
        %10422 = vmatmul.f32.gmra.mxu0 %v9989
        %v10423 = vpop.f32.mrf.mxu0
        %v10424 = vadd.f32 0.0, %v10423
        %10425 = vmatmul.f32.gmra.mxu0 %v9992
        %v10426 = vpop.f32.mrf.mxu0
        %v10427 = vadd.f32 0.0, %v10426
        %10428 = vmatmul.f32.gmra.mxu0 %v9995
        %v10429 = vpop.f32.mrf.mxu0
        %v10430 = vadd.f32 0.0, %v10429
        %10431 = vdwg.mxu0
        %10432 = vmatpush.msra.mxu0 0.0
        %10433 = vmatpush.msra.mxu0 0.0
        %10434 = vmatpush.msra.mxu0 0.0
        %10435 = vmatpush.msra.mxu0 0.0
        %10436 = vmatpush.msra.mxu0 0.0
        %10437 = vmatpush.msra.mxu0 0.0
        %10438 = vmatpush.msra.mxu0 0.0
        %10439 = vmatpush.msra.mxu0 0.0
        %10440 = vmatpush.msra.mxu0 0.0
        %10441 = vmatpush.msra.mxu0 0.0
        %10442 = vmatpush.msra.mxu0 0.0
        %10443 = vmatpush.msra.mxu0 0.0
        %10444 = vmatpush.msra.mxu0 0.0
        %10445 = vmatpush.msra.mxu0 0.0
        %10446 = vmatpush.msra.mxu0 %v9916
        %10447 = vmatpush.msra.mxu0 %v9900
        %10448 = vmatmul.f32.gmra.mxu0 %v9986
        %v10449 = vpop.f32.mrf.mxu0
        %v10450 = vadd.f32 0.0, %v10449
        %10451 = vmatmul.f32.gmra.mxu0 %v9989
        %v10452 = vpop.f32.mrf.mxu0
        %v10453 = vadd.f32 0.0, %v10452
        %10454 = vmatmul.f32.gmra.mxu0 %v9992
        %v10455 = vpop.f32.mrf.mxu0
        %v10456 = vadd.f32 0.0, %v10455
        %10457 = vmatmul.f32.gmra.mxu0 %v9995
        %v10458 = vpop.f32.mrf.mxu0
        %v10459 = vadd.f32 0.0, %v10458
        %10460 = vdwg.mxu0
        %v10461 = vadd.f32 %v9917, %v10015
        %v10462 = vadd.f32 %v9918, %v10044
        %v10463 = vadd.f32 %v9919, %v10073
        %v10464 = vadd.f32 %v9920, %v10102
        %v10465 = vadd.f32 %v9921, %v10131
        %v10466 = vadd.f32 %v9922, %v10160
        %v10467 = vadd.f32 %v9923, %v10189
        %v10468 = vadd.f32 %v9924, %v10218
        %v10469 = vadd.f32 %v9925, %v10247
        %v10470 = vadd.f32 %v9926, %v10276
        %v10471 = vadd.f32 %v9927, %v10305
        %v10472 = vadd.f32 %v9928, %v10334
        %v10473 = vadd.f32 %v9929, %v10363
        %v10474 = vadd.f32 %v9930, %v10392
        %v10475 = vadd.f32 %v9931, %v10421
        %v10476 = vadd.f32 %v9932, %v10450
        %v10477 = vadd.f32 %v9933, %v10018
        %v10478 = vadd.f32 %v9934, %v10047
        %v10479 = vadd.f32 %v9935, %v10076
        %v10480 = vadd.f32 %v9936, %v10105
        %v10481 = vadd.f32 %v9937, %v10134
        %v10482 = vadd.f32 %v9938, %v10163
        %v10483 = vadd.f32 %v9939, %v10192
        %v10484 = vadd.f32 %v9940, %v10221
        %v10485 = vadd.f32 %v9941, %v10250
        %v10486 = vadd.f32 %v9942, %v10279
        %v10487 = vadd.f32 %v9943, %v10308
        %v10488 = vadd.f32 %v9944, %v10337
        %v10489 = vadd.f32 %v9945, %v10366
        %v10490 = vadd.f32 %v9946, %v10395
        %v10491 = vadd.f32 %v9947, %v10424
        %v10492 = vadd.f32 %v9948, %v10453
        %v10493 = vadd.f32 %v9949, %v10021
        %v10494 = vadd.f32 %v9950, %v10050
        %v10495 = vadd.f32 %v9951, %v10079
        %v10496 = vadd.f32 %v9952, %v10108
        %v10497 = vadd.f32 %v9953, %v10137
        %v10498 = vadd.f32 %v9954, %v10166
        %v10499 = vadd.f32 %v9955, %v10195
        %v10500 = vadd.f32 %v9956, %v10224
        %v10501 = vadd.f32 %v9957, %v10253
        %v10502 = vadd.f32 %v9958, %v10282
        %v10503 = vadd.f32 %v9959, %v10311
        %v10504 = vadd.f32 %v9960, %v10340
        %v10505 = vadd.f32 %v9961, %v10369
        %v10506 = vadd.f32 %v9962, %v10398
        %v10507 = vadd.f32 %v9963, %v10427
        %v10508 = vadd.f32 %v9964, %v10456
        %v10509 = vadd.f32 %v9965, %v10024
        %v10510 = vadd.f32 %v9966, %v10053
        %v10511 = vadd.f32 %v9967, %v10082
        %v10512 = vadd.f32 %v9968, %v10111
        %v10513 = vadd.f32 %v9969, %v10140
        %v10514 = vadd.f32 %v9970, %v10169
        %v10515 = vadd.f32 %v9971, %v10198
        %v10516 = vadd.f32 %v9972, %v10227
        %v10517 = vadd.f32 %v9973, %v10256
        %v10518 = vadd.f32 %v9974, %v10285
        %v10519 = vadd.f32 %v9975, %v10314
        %v10520 = vadd.f32 %v9976, %v10343
        %v10521 = vadd.f32 %v9977, %v10372
        %v10522 = vadd.f32 %v9978, %v10401
        %v10523 = vadd.f32 %v9979, %v10430
        %v10524 = vadd.f32 %v9980, %v10459
        %10525 = vst [vmem:[%s525] sm:$0xff] %v10461
        %10526 = vst [vmem:[%s525 + $0x8] sm:$0xff] %v10462
        %10527 = vst [vmem:[%s525 + $0x10] sm:$0xff] %v10463
        %10528 = vst [vmem:[%s525 + $0x18] sm:$0xff] %v10464
        %10529 = vst [vmem:[%s525 + $0x20] sm:$0xff] %v10465
        %10530 = vst [vmem:[%s525 + $0x28] sm:$0xff] %v10466
        %10531 = vst [vmem:[%s525 + $0x30] sm:$0xff] %v10467
        %10532 = vst [vmem:[%s525 + $0x38] sm:$0xff] %v10468
        %10533 = vst [vmem:[%s525 + $0x40] sm:$0xff] %v10469
        %10534 = vst [vmem:[%s525 + $0x48] sm:$0xff] %v10470
        %10535 = vst [vmem:[%s525 + $0x50] sm:$0xff] %v10471
        %10536 = vst [vmem:[%s525 + $0x58] sm:$0xff] %v10472
        %10537 = vst [vmem:[%s525 + $0x60] sm:$0xff] %v10473
        %10538 = vst [vmem:[%s525 + $0x68] sm:$0xff] %v10474
        %10539 = vst [vmem:[%s525 + $0x70] sm:$0xff] %v10475
        %10540 = vst [vmem:[%s525 + $0x78] sm:$0xff] %v10476
        %10541 = vst [vmem:[%s525 + $0x80] sm:$0xff] %v10477
        %10542 = vst [vmem:[%s525 + $0x88] sm:$0xff] %v10478
        %10543 = vst [vmem:[%s525 + $0x90] sm:$0xff] %v10479
        %10544 = vst [vmem:[%s525 + $0x98] sm:$0xff] %v10480
        %10545 = vst [vmem:[%s525 + $0xa0] sm:$0xff] %v10481
        %10546 = vst [vmem:[%s525 + $0xa8] sm:$0xff] %v10482
        %10547 = vst [vmem:[%s525 + $0xb0] sm:$0xff] %v10483
        %10548 = vst [vmem:[%s525 + $0xb8] sm:$0xff] %v10484
        %10549 = vst [vmem:[%s525 + $0xc0] sm:$0xff] %v10485
        %10550 = vst [vmem:[%s525 + $0xc8] sm:$0xff] %v10486
        %10551 = vst [vmem:[%s525 + $0xd0] sm:$0xff] %v10487
        %10552 = vst [vmem:[%s525 + $0xd8] sm:$0xff] %v10488
        %10553 = vst [vmem:[%s525 + $0xe0] sm:$0xff] %v10489
        %10554 = vst [vmem:[%s525 + $0xe8] sm:$0xff] %v10490
        %10555 = vst [vmem:[%s525 + $0xf0] sm:$0xff] %v10491
        %10556 = vst [vmem:[%s525 + $0xf8] sm:$0xff] %v10492
        %10557 = vst [vmem:[%s525 + $0x100] sm:$0xff] %v10493
        %10558 = vst [vmem:[%s525 + $0x108] sm:$0xff] %v10494
        %10559 = vst [vmem:[%s525 + $0x110] sm:$0xff] %v10495
        %10560 = vst [vmem:[%s525 + $0x118] sm:$0xff] %v10496
        %10561 = vst [vmem:[%s525 + $0x120] sm:$0xff] %v10497
        %10562 = vst [vmem:[%s525 + $0x128] sm:$0xff] %v10498
        %10563 = vst [vmem:[%s525 + $0x130] sm:$0xff] %v10499
        %10564 = vst [vmem:[%s525 + $0x138] sm:$0xff] %v10500
        %10565 = vst [vmem:[%s525 + $0x140] sm:$0xff] %v10501
        %10566 = vst [vmem:[%s525 + $0x148] sm:$0xff] %v10502
        %10567 = vst [vmem:[%s525 + $0x150] sm:$0xff] %v10503
        %10568 = vst [vmem:[%s525 + $0x158] sm:$0xff] %v10504
        %10569 = vst [vmem:[%s525 + $0x160] sm:$0xff] %v10505
        %10570 = vst [vmem:[%s525 + $0x168] sm:$0xff] %v10506
        %10571 = vst [vmem:[%s525 + $0x170] sm:$0xff] %v10507
        %10572 = vst [vmem:[%s525 + $0x178] sm:$0xff] %v10508
        %10573 = vst [vmem:[%s525 + $0x180] sm:$0xff] %v10509
        %10574 = vst [vmem:[%s525 + $0x188] sm:$0xff] %v10510
        %10575 = vst [vmem:[%s525 + $0x190] sm:$0xff] %v10511
        %10576 = vst [vmem:[%s525 + $0x198] sm:$0xff] %v10512
        %10577 = vst [vmem:[%s525 + $0x1a0] sm:$0xff] %v10513
        %10578 = vst [vmem:[%s525 + $0x1a8] sm:$0xff] %v10514
        %10579 = vst [vmem:[%s525 + $0x1b0] sm:$0xff] %v10515
        %10580 = vst [vmem:[%s525 + $0x1b8] sm:$0xff] %v10516
        %10581 = vst [vmem:[%s525 + $0x1c0] sm:$0xff] %v10517
        %10582 = vst [vmem:[%s525 + $0x1c8] sm:$0xff] %v10518
        %10583 = vst [vmem:[%s525 + $0x1d0] sm:$0xff] %v10519
        %10584 = vst [vmem:[%s525 + $0x1d8] sm:$0xff] %v10520
        %10585 = vst [vmem:[%s525 + $0x1e0] sm:$0xff] %v10521
        %10586 = vst [vmem:[%s525 + $0x1e8] sm:$0xff] %v10522
        %10587 = vst [vmem:[%s525 + $0x1f0] sm:$0xff] %v10523
        %10588 = vst [vmem:[%s525 + $0x1f8] sm:$0xff] %v10524
        %s10589 = sand.u32 %s346, 1
        %s10590 = scalar_lea.sflag [#allocation4], %s10589
        %s10591 = sand.u32 %s346, 1
        %s10592 = smul.addr %s10591, 512
        %s10593 = scalar_lea.vmem [#allocation7], %s10592
        // Predicated region
        $region85: #{tpu_custom_call.1} parent=75 // pred_check
          %p10594 = pneg %p356
        $region86: #{tpu_custom_call.1} parent=75 // pred_check_branch
          %10596 = sbr.rel (%p10594) target = $region88
        $region87: #{tpu_custom_call.1} parent=75 // pred_region
          %s10597 = smul.u32 16, %s34
          %10599 = vsyncadd %s10590, 0
          %s10600 = smul.addr %s10597, 8
          %s10601 = scalar_lea.hbm %s14, %s10600
          %s10602 = sshll.u32 %s10593, 4
          %s10603 = int_to_ptr.vmem [resolvable:$true] %s10602
          %s10604 = sshll.u32 %s10601, 4
          %s10605 = int_to_ptr.hbm [resolvable:$true] %s10604
          %10610 = dma.vmem_to_hbm [thread:$0]  %s10603, 8192, %s10605, %s10590, 2048, 4096, 128
        $region88: #{tpu_custom_call.1} parent=75 // pred_fallthru
          _
      $region76: #{tpu_custom_call.1} parent=5 // pred_fallthru
        _
      %p10611 = scmp.le.s32.totalorder 2, %s29
      // Predicated region
      $region89: #{tpu_custom_call.1} parent=5 // pred_check
        %p10612 = pneg %p10611
      $region90: #{tpu_custom_call.1} parent=5 // pred_check_branch
        %10614 = sbr.rel (%p10612) target = $region92
      $region91: #{tpu_custom_call.1} parent=5 // pred_region
        %s10615 = ssub.s32 %s29, 2
        // Predicated region
        $region93: #{tpu_custom_call.1} parent=91 // pred_check
          %p10616 = pneg %p362
        $region94: #{tpu_custom_call.1} parent=91 // pred_check_branch
          %10618 = sbr.rel (%p10616) target = $region96
        $region95: #{tpu_custom_call.1} parent=91 // pred_region
          %s10619 = sand.u32 %s347, 1
          %s10620 = scalar_lea.sflag [#allocation4], %s10619
          %s10621 = sand.u32 %s347, 1
          %s10622 = smul.addr %s10621, 512
          %s10623 = scalar_lea.vmem [#allocation7], %s10622
          %10625 = dma.done %s10620, 8192
        $region96: #{tpu_custom_call.1} parent=91 // pred_fallthru
          _
      $region92: #{tpu_custom_call.1} parent=5 // pred_fallthru
        _
    $region6: #{tpu_custom_call.1} parent=1 // loop_footer
      %s33 = sadd.s32 1, %s29
    $region7: #{tpu_custom_call.1} parent=1 // loop_footer_branch
      %28 = sbr.rel target = $region3
    $region8: #{tpu_custom_call.1} parent=1 // loop_exit
      _
    %10626 = vsyncpa [#allocation3], 1
    %s10627 = scalar_lea.sflag [#allocation3], 1
    %10628 = vsyncpa %s10627, 1
    %10629 = vsyncpa [#allocation6], 1
    %s10630 = scalar_lea.sflag [#allocation6], 1
    %10631 = vsyncpa %s10630, 1
    %10632 = vsyncpa [#allocation4], 1
    %s10633 = scalar_lea.sflag [#allocation4], 1
    %10634 = vsyncpa %s10633, 1

</llo_original>
